<compile_context>
chip_gen: v5e
topology: v5e:2x2
jax: 0.10.0
libtpu: 0.0.40
codegen_flags: <defaults>
</compile_context>

<pallas_src>
import math

import jax
import jax.numpy as jnp
from jax import lax
from jax.experimental import pallas as pl
from jax.experimental.pallas import tpu as pltpu

# ---------------- small synthetic configuration ----------------
B = 1                  # the ONNX/TensorRT export assumes batch 1 (keeps the
                       # `topi + enc_x_num_pads` broadcast semantics exact)
IMG = 16
PATCH = 4
IN_CHANS = 3
SWIN_DIM = 32          # internal width of the (simplified) visual backbone
SWIN_OUT = 1536        # output dim expected by input_linear (hard-coded 1536 in the module)
D_MODEL = 32
N_ENC = 2
N_DEC = 2
FF = 64
NUM_HEADS = 4
NUM_EXP_ENC_LIST = [4, 4]
MAX_NUM_ENC = sum(NUM_EXP_ENC_LIST)
NUM_EXP_DEC = 4        # decoder expansion size (unused by the simplified decoder stand-in)
VOCAB = 40
VOCAB_PAD = 128        # vocab projection padded to 128 lanes (unmasked stores / full MXU row)
MAX_SEQ_LEN = 32
NUM_STEPS = 20
DEC_LEN = NUM_STEPS    # KV-cache length (max number of generated tokens)
NEG = -1e9


# ---------------- in-kernel helpers (traced inside the Pallas kernels) ----------------
def _ln(x, g, b):
    mu = jnp.mean(x, axis=-1, keepdims=True)
    var = jnp.mean(jnp.square(x - mu), axis=-1, keepdims=True)
    return (x - mu) * lax.rsqrt(var + 1e-5) * g + b


def _softmax(s):
    # exact softmax (no approx reciprocal) so greedy ties match the reference
    s = s - jnp.max(s, axis=-1, keepdims=True)
    p = jnp.exp(s)
    return p / jnp.sum(p, axis=-1, keepdims=True)


def _attn(q, k, v, w_o, b_o, bias):
    """Multi-head attention given already-projected Q/K/V.  Per-head lane slices,
    single fused output projection (one matmul instead of one per head)."""
    dm = q.shape[-1]
    dh = dm // NUM_HEADS
    scale = 1.0 / math.sqrt(dh)
    f32 = jnp.float32
    heads = []
    for h in range(NUM_HEADS):                           # static unroll, heads stay in-kernel
        sl = slice(h * dh, (h + 1) * dh)
        s = lax.dot_general(q[:, sl], k[:, sl], (((1,), (1,)), ((), ())),
                            preferred_element_type=f32) * scale + bias
        heads.append(jnp.dot(_softmax(s), v[:, sl], preferred_element_type=f32))
    att = jnp.concatenate(heads, axis=-1)
    return jnp.dot(att, w_o, preferred_element_type=f32) + b_o


def _mha(q_in, kv_in, w_qkv, b_qkv, w_o, b_o, bias):
    """Multi-head attention with a fused (D, 3D) QKV weight."""
    dm = q_in.shape[-1]
    f32 = jnp.float32
    q = jnp.dot(q_in, w_qkv[:, :dm], preferred_element_type=f32) + b_qkv[:, :dm]
    kv = jnp.dot(kv_in, w_qkv[:, dm:], preferred_element_type=f32) + b_qkv[:, dm:]
    return _attn(q, kv[:, :dm], kv[:, dm:], w_o, b_o, bias)


# ---------------- fused encoder kernel (one grid-less pallas_call per image) ----------------
def _encoder_kernel(xp_ref, bias_fw_ref, bias_bw_ref,
                    embed_w_ref, sw_wd_ref, sw_mlp_w2_ref, sw_vec_ref,
                    sw_qkv_b_ref, sw_mlp_b1_ref,
                    exp_embed_ref, e_qkv_w_ref, e_qkv_b_ref, e_o_w_ref, e_o_b_ref,
                    e_ff_w1_ref, e_ff_b1_ref, e_ff_w2_ref, e_ff_b2_ref, e_ln_ref,
                    red_w_ref, red_vec_ref, ckv_w_ref, ckv_b_ref,
                    kv_out_ref):
    f32 = jnp.float32
    d = SWIN_DIM                                   # == D_MODEL in this configuration
    swd = sw_wd_ref[...]                           # (d, 7d): [qkv | o | mlp_w1 | fused_proj]
    vec = sw_vec_ref[...]                          # (10, d) packed biases / LN params

    # --- simplified Swin backbone (patch embed + 1 global attention block + MLP) ---
    # TODO(synk): SwinTransformer_ONNX_TensorRT source is not provided; this simplified
    # backbone stands in for it.  Its 1536-d output projection is algebraically fused
    # with input_linear on the host (exact; dropout = identity).
    h = jnp.dot(xp_ref[...], embed_w_ref[...], preferred_element_type=f32) + vec[0:1]
    h = _ln(h, vec[1:2], vec[2:3])
    att = _mha(h, h, swd[:, 0:3 * d], sw_qkv_b_ref[...], swd[:, 3 * d:4 * d], vec[3:4], 0.0)
    h = _ln(h + att, vec[4:5], vec[5:6])
    f = jnp.maximum(jnp.dot(h, swd[:, 4 * d:6 * d], preferred_element_type=f32)
                    + sw_mlp_b1_ref[...], 0.0)
    f = jnp.dot(f, sw_mlp_w2_ref[...], preferred_element_type=f32) + vec[6:7]
    h = _ln(h + f, vec[7:8], vec[8:9])
    # fused (swin 1536-d projection @ input_linear) collapsed to a single (d, d) matmul
    x = jnp.dot(h, swd[:, 6 * d:7 * d], preferred_element_type=f32) + vec[9:10]

    bias_fw = bias_fw_ref[...]
    bias_bw = bias_bw_ref[...]

    # --- N_enc static-expansion encoder layers ---
    # TODO(synk): EncoderLayer (static expansion) source is not provided; a forward-expand /
    # backward-contract attention pair driven by the module's pad mask stands in for it.
    x_list = []
    for l in range(N_ENC):
        expanded = _mha(exp_embed_ref[l], x, e_qkv_w_ref[l, 0], e_qkv_b_ref[l, 0],
                        e_o_w_ref[l, 0], e_o_b_ref[l, 0], bias_fw)
        contracted = _mha(x, expanded, e_qkv_w_ref[l, 1], e_qkv_b_ref[l, 1],
                          e_o_w_ref[l, 1], e_o_b_ref[l, 1], bias_bw)
        x = _ln(x + contracted, e_ln_ref[l, 0:1, :], e_ln_ref[l, 1:2, :])
        f = jnp.maximum(jnp.dot(x, e_ff_w1_ref[l], preferred_element_type=f32)
                        + e_ff_b1_ref[l], 0.0)
        f = jnp.dot(f, e_ff_w2_ref[l], preferred_element_type=f32) + e_ff_b2_ref[l]
        x = _ln(x + f, e_ln_ref[l, 2:3, :], e_ln_ref[l, 3:4, :])
        x_list.append(x)

    # enc_reduce_group over concat(x_list) expressed as a sum of per-layer matmuls.
    red = red_vec_ref[0:1, :]
    for l in range(N_ENC):
        red = red + jnp.dot(x_list[l], red_w_ref[l * D_MODEL:(l + 1) * D_MODEL, :],
                            preferred_element_type=f32)
    x = _ln(x + red, red_vec_ref[1:2, :], red_vec_ref[2:3, :])

    # Decoder cross-attention K/V precomputed once, emitted as ONE lane-dense (S, 128)
    # slab laid out as [K0 | V0 | K1 | V1]; reused by every decode step.
    pieces = []
    for l in range(N_DEC):
        pieces.append(jnp.dot(x, ckv_w_ref[l], preferred_element_type=f32) + ckv_b_ref[l])
    kv_out_ref[...] = jnp.concatenate(pieces, axis=-1)


# ---------------- fused decode-loop kernel (ONE pallas_call for all NUM_STEPS tokens) --------
def _decoder_loop_kernel(scalars_ref,                         # SMEM: [sos_idx, enc_num_pads]
                         kv_cross_ref, cross_bias_ref, out_embed_ref, pos_embed_ref,
                         dwA_ref, dwF_ref, dbias_ref, dln_ref,
                         red_w_ref, red_vec_ref, voc_w_ref, voc_b_ref,
                         pred_ref, logp_ref,                  # SMEM outputs, resident
                         *cache_refs):                        # VMEM KV cache scratch
    f32 = jnp.float32
    d = D_MODEL
    t = pl.program_id(0)

    @pl.when(t == 0)
    def _init():
        pred_ref[0] = scalars_ref[0]                          # sos token
        logp_ref[0] = jnp.float32(0.0)
        for ref in cache_refs:                                # zero uninitialized KV cache
            ref[...] = jnp.zeros_like(ref)

    # packed weight / bias column offsets in dwA / dbias
    o_sqkv, o_cq, o_so, o_co, o_ff1 = 0, 3 * d, 4 * d, 5 * d, 6 * d
    o_ff2b = 6 * d + FF

    # token embedding + positional encoding of the newest token (dropout = identity)
    # TODO(synk): EmbeddingLayer source is not provided; plain lookup stands in for it.
    tok = jnp.clip(pred_ref[t], 0, VOCAB - 1)                 # clip = safety; exact for pads==0
    y = out_embed_ref[pl.ds(tok, 1), :] + pos_embed_ref[pl.ds(t, 1), :]   # (1, d)

    key_pos = lax.broadcasted_iota(jnp.int32, (1, DEC_LEN), 1)
    self_bias = jnp.where(key_pos <= t, 0.0, NEG).astype(f32)             # causal row t
    cross_bias = cross_bias_ref[...]                                      # (1, S) enc pad bias
    kvc = kv_cross_ref[...]                                               # (S, 2*N_DEC*d)

    # TODO(synk): DecoderLayer (dynamic expansion) source is not provided; masked
    # self-attention (with KV cache) + cross-attention + FFN stands in for it.
    y_list = []
    for l in range(N_DEC):
        wA = dwA_ref[l]                                       # (d, 256) packed weights
        bA = dbias_ref[l]                                     # (1, 288) packed biases
        k_cache, v_cache = cache_refs[2 * l], cache_refs[2 * l + 1]

        # ---- masked self attention over the KV cache (only the new row is computed) ----
        qkv = jnp.dot(y, wA[:, o_sqkv:o_sqkv + 3 * d], preferred_element_type=f32) \
            + bA[:, o_sqkv:o_sqkv + 3 * d]
        q, k_new, v_new = qkv[:, :d], qkv[:, d:2 * d], qkv[:, 2 * d:3 * d]
        k_cache[pl.ds(t, 1), :] = k_new                       # single dynamic-row cache update
        v_cache[pl.ds(t, 1), :] = v_new
        att = _attn(q, k_cache[...], v_cache[...],
                    wA[:, o_so:o_so + d], bA[:, o_so:o_so + d], self_bias)
        y = _ln(y + att, dln_ref[l, 0:1, :], dln_ref[l, 1:2, :])

        # ---- cross attention against the precomputed encoder K/V ----
        qc = jnp.dot(y, wA[:, o_cq:o_cq + d], preferred_element_type=f32) \
            + bA[:, o_cq:o_cq + d]
        kc = kvc[:, 2 * d * l:2 * d * l + d]
        vc = kvc[:, 2 * d * l + d:2 * d * (l + 1)]
        catt = _attn(qc, kc, vc, wA[:, o_co:o_co + d], bA[:, o_co:o_co + d], cross_bias)
        y = _ln(y + catt, dln_ref[l, 2:3, :], dln_ref[l, 3:4, :])

        # ---- feed forward ----
        f = jnp.maximum(jnp.dot(y, wA[:, o_ff1:o_ff1 + FF], preferred_element_type=f32)
                        + bA[:, o_ff1:o_ff1 + FF], 0.0)
        f = jnp.dot(f, dwF_ref[l], preferred_element_type=f32) + bA[:, o_ff2b:o_ff2b + d]
        y = _ln(y + f, dln_ref[l, 4:5, :], dln_ref[l, 5:6, :])
        y_list.append(y)

    # dec_reduce_group over concat(y_list) as a sum of per-layer matmuls (dropout = identity)
    red = red_vec_ref[0:1, :]
    for l in range(N_DEC):
        red = red + jnp.dot(y_list[l], red_w_ref[l * d:(l + 1) * d, :],
                            preferred_element_type=f32)
    y = _ln(y + red, red_vec_ref[1:2, :], red_vec_ref[2:3, :])

    # 128-lane vocab projection + exact log_softmax + greedy top-1, all in-kernel.
    logits = jnp.dot(y, voc_w_ref[...], preferred_element_type=f32) + voc_b_ref[...]  # (1,128)
    m = jnp.max(logits, axis=-1, keepdims=True)
    sumexp = jnp.sum(jnp.exp(logits - m), axis=-1, keepdims=True)
    topv = -jnp.log(sumexp)[0, 0]                 # log_softmax value at the argmax (exact)
    lane = lax.broadcasted_iota(jnp.int32, logits.shape, 1)
    topi = jnp.min(jnp.where(logits >= m, lane, VOCAB_PAD), axis=-1)[0]

    # reference: loop_pred appends (topi + enc_x_num_pads); that value is fed back next step.
    pred_ref[t + 1] = topi + scalars_ref[1]
    logp_ref[t + 1] = topv


# ---------------- plain-JAX glue ----------------
def patchify(x):
    b, c, hh, ww = x.shape
    hp, wp = hh // PATCH, ww // PATCH
    x = x.reshape(b, c, hp, PATCH, wp, PATCH).transpose(0, 2, 4, 1, 3, 5)
    return x.reshape(b, hp * wp, c * PATCH * PATCH)


@jax.jit
def forward(params, enc_x, enc_x_num_pads, sos_idx):
    # Batch size 1 assumed (as in the ONNX/TensorRT export).
    d = D_MODEL
    xp = patchify(enc_x)[0]                               # (S, C*p*p)
    S = xp.shape[0]
    E = MAX_NUM_ENC
    npads = enc_x_num_pads[0].astype(jnp.int32)

    # pad-mask additive biases, built ONCE per forward (faithful to create_pad_mask /
    # create_no_peak_and_pad_mask; the causal part is generated inside the decode kernel).
    rows_e = (jnp.arange(E) < (E - npads)).astype(jnp.float32)
    cols_s = (jnp.arange(S) < (S - npads)).astype(jnp.float32)
    bias_fw = jnp.where(rows_e[:, None] * cols_s[None, :] > 0.5, 0.0, NEG).astype(jnp.float32)
    bias_bw = bias_fw.T
    cross_bias = jnp.where(cols_s > 0.5, 0.0, NEG).astype(jnp.float32)[None, :]   # (1, S)

    sw, en, de = params["swin"], params["enc"], params["dec"]

    # ---- one-time host-side weight packing (tiny XLA ops, done outside the kernels) ----
    # exact algebraic collapse of the swin 1536-d projection with input_linear (dropout = id)
    fused_proj_w = sw["proj_w"] @ params["input_linear_w"]                       # (32, 32)
    fused_proj_b = sw["proj_b"] @ params["input_linear_w"] + params["input_linear_b"]
    sw_wd = jnp.concatenate([sw["qkv_w"], sw["o_w"], sw["mlp_w1"], fused_proj_w], axis=-1)
    sw_vec = jnp.concatenate([sw["embed_b"], sw["ln0_g"], sw["ln0_b"], sw["o_b"],
                              sw["ln1_g"], sw["ln1_b"], sw["mlp_b2"],
                              sw["ln2_g"], sw["ln2_b"], fused_proj_b], axis=0)   # (10, 32)
    e_qkv_w = jnp.stack([en["fw_qkv_w"], en["bw_qkv_w"]], axis=1)
    e_qkv_b = jnp.stack([en["fw_qkv_b"], en["bw_qkv_b"]], axis=1)
    e_o_w = jnp.stack([en["fw_o_w"], en["bw_o_w"]], axis=1)
    e_o_b = jnp.stack([en["fw_o_b"], en["bw_o_b"]], axis=1)
    e_ln = jnp.concatenate([en["ln1_g"], en["ln1_b"], en["ln2_g"], en["ln2_b"]], axis=1)
    enc_red_vec = jnp.concatenate([params["enc_red_b"], params["enc_red_ln_g"],
                                   params["enc_red_ln_b"]], axis=0)
    ckv_w = jnp.concatenate([de["cross_k_w"], de["cross_v_w"]], axis=-1)
    ckv_b = jnp.concatenate([de["cross_k_b"], de["cross_v_b"]], axis=-1)

    # ---- fused encoder (grid-less pallas_call; single lane-dense (S,128) output) ----
    kv_cross = pl.pallas_call(
        _encoder_kernel,
        out_shape=jax.ShapeDtypeStruct((S, 2 * N_DEC * d), jnp.float32),
    )(xp, bias_fw, bias_bw,
      sw["embed_w"], sw_wd, sw["mlp_w2"], sw_vec, sw["qkv_b"], sw["mlp_b1"],
      en["exp_embed"], e_qkv_w, e_qkv_b, e_o_w, e_o_b,
      en["ff_w1"], en["ff_b1"], en["ff_w2"], en["ff_b2"], e_ln,
      params["enc_red_w"], enc_red_vec, ckv_w, ckv_b)

    # ---- decoder weight slabs (packed: few input refs, DMA'd once for the whole loop) ----
    dwA = jnp.concatenate([de["self_qkv_w"], de["cross_q_w"], de["self_o_w"],
                           de["cross_o_w"], de["ff_w1"]], axis=-1)               # (N_DEC,d,256)
    dbias = jnp.concatenate([de["self_qkv_b"], de["cross_q_b"], de["self_o_b"],
                             de["cross_o_b"], de["ff_b1"], de["ff_b2"]], axis=-1)
    dln = jnp.concatenate([de["ln1_g"], de["ln1_b"], de["ln2_g"], de["ln2_b"],
                           de["ln3_g"], de["ln3_b"]], axis=1)                    # (N_DEC,6,d)
    dec_red_vec = jnp.concatenate([params["dec_red_b"], params["dec_red_ln_g"],
                                   params["dec_red_ln_b"]], axis=0)
    voc_w = jnp.pad(params["vocab_w"], ((0, 0), (0, VOCAB_PAD - VOCAB)))
    voc_b = jnp.pad(params["vocab_b"], ((0, 0), (0, VOCAB_PAD - VOCAB)),
                    constant_values=NEG)

    scalars = jnp.stack([jnp.asarray(sos_idx, jnp.int32), npads])                # SMEM prefetch

    dec_inputs = (kv_cross, cross_bias, params["out_embed"], params["pos_embed"],
                  dwA, de["ff_w2"], dbias, dln,
                  params["dec_red_w"], dec_red_vec, voc_w, voc_b)
    # constant index maps: every weight block is fetched once and stays resident in VMEM
    in_specs = [pl.BlockSpec(a.shape, lambda i, s, n=a.ndim: (0,) * n) for a in dec_inputs]

    grid_spec = pltpu.PrefetchScalarGridSpec(
        num_scalar_prefetch=1,
        grid=(NUM_STEPS,),
        in_specs=in_specs,
        out_specs=(pl.BlockSpec(memory_space=pltpu.MemorySpace.SMEM),
                   pl.BlockSpec(memory_space=pltpu.MemorySpace.SMEM)),
        scratch_shapes=[pltpu.VMEM((DEC_LEN, d), jnp.float32)
                        for _ in range(2 * N_DEC)],          # per-layer K and V caches
    )
    pred, logp = pl.pallas_call(
        _decoder_loop_kernel,
        out_shape=(jax.ShapeDtypeStruct((1 + NUM_STEPS,), jnp.int32),
                   jax.ShapeDtypeStruct((1 + NUM_STEPS,), jnp.float32)),
        grid_spec=grid_spec,
        compiler_params=pltpu.CompilerParams(dimension_semantics=("arbitrary",)),
    )(scalars, *dec_inputs)

    return pred[None, :], logp[None, :]


# ---------------- deterministic parameter initialization ----------------
class KeyGen:
    def __init__(self, key):
        self._key = key

    def __call__(self):
        self._key, sub = jax.random.split(self._key)
        return sub


def xavier(key, shape):
    fan_in, fan_out = shape[-2], shape[-1]
    bound = math.sqrt(6.0 / (fan_in + fan_out))
    return jax.random.uniform(key, shape, jnp.float32, -bound, bound)


def init_params(key):
    kg = KeyGen(key)
    d, ff, E = D_MODEL, FF, MAX_NUM_ENC

    def zeros(*s):
        return jnp.zeros(s, jnp.float32)

    def ones(*s):
        return jnp.ones(s, jnp.float32)

    swin = {
        "embed_w": xavier(kg(), (IN_CHANS * PATCH * PATCH, SWIN_DIM)),
        "embed_b": zeros(1, SWIN_DIM),
        "ln0_g": ones(1, SWIN_DIM), "ln0_b": zeros(1, SWIN_DIM),
        "qkv_w": xavier(kg(), (SWIN_DIM, 3 * SWIN_DIM)), "qkv_b": zeros(1, 3 * SWIN_DIM),
        "o_w": xavier(kg(), (SWIN_DIM, SWIN_DIM)), "o_b": zeros(1, SWIN_DIM),
        "ln1_g": ones(1, SWIN_DIM), "ln1_b": zeros(1, SWIN_DIM),
        "mlp_w1": xavier(kg(), (SWIN_DIM, 2 * SWIN_DIM)), "mlp_b1": zeros(1, 2 * SWIN_DIM),
        "mlp_w2": xavier(kg(), (2 * SWIN_DIM, SWIN_DIM)), "mlp_b2": zeros(1, SWIN_DIM),
        "ln2_g": ones(1, SWIN_DIM), "ln2_b": zeros(1, SWIN_DIM),
        "proj_w": xavier(kg(), (SWIN_DIM, SWIN_OUT)), "proj_b": zeros(1, SWIN_OUT),
    }
    enc = {
        "exp_embed": xavier(kg(), (N_ENC, E, d)),
        "fw_qkv_w": xavier(kg(), (N_ENC, d, 3 * d)), "fw_qkv_b": zeros(N_ENC, 1, 3 * d),
        "fw_o_w": xavier(kg(), (N_ENC, d, d)), "fw_o_b": zeros(N_ENC, 1, d),
        "bw_qkv_w": xavier(kg(), (N_ENC, d, 3 * d)), "bw_qkv_b": zeros(N_ENC, 1, 3 * d),
        "bw_o_w": xavier(kg(), (N_ENC, d, d)), "bw_o_b": zeros(N_ENC, 1, d),
        "ff_w1": xavier(kg(), (N_ENC, d, ff)), "ff_b1": zeros(N_ENC, 1, ff),
        "ff_w2": xavier(kg(), (N_ENC, ff, d)), "ff_b2": zeros(N_ENC, 1, d),
        "ln1_g": ones(N_ENC, 1, d), "ln1_b": zeros(N_ENC, 1, d),
        "ln2_g": ones(N_ENC, 1, d), "ln2_b": zeros(N_ENC, 1, d),
    }
    dec = {
        "self_qkv_w": xavier(kg(), (N_DEC, d, 3 * d)), "self_qkv_b": zeros(N_DEC, 1, 3 * d),
        "self_o_w": xavier(kg(), (N_DEC, d, d)), "self_o_b": zeros(N_DEC, 1, d),
        "cross_q_w": xavier(kg(), (N_DEC, d, d)), "cross_q_b": zeros(N_DEC, 1, d),
        "cross_k_w": xavier(kg(), (N_DEC, d, d)), "cross_k_b": zeros(N_DEC, 1, d),
        "cross_v_w": xavier(kg(), (N_DEC, d, d)), "cross_v_b": zeros(N_DEC, 1, d),
        "cross_o_w": xavier(kg(), (N_DEC, d, d)), "cross_o_b": zeros(N_DEC, 1, d),
        "ff_w1": xavier(kg(), (N_DEC, d, ff)), "ff_b1": zeros(N_DEC, 1, ff),
        "ff_w2": xavier(kg(), (N_DEC, ff, d)), "ff_b2": zeros(N_DEC, 1, d),
        "ln1_g": ones(N_DEC, 1, d), "ln1_b": zeros(N_DEC, 1, d),
        "ln2_g": ones(N_DEC, 1, d), "ln2_b": zeros(N_DEC, 1, d),
        "ln3_g": ones(N_DEC, 1, d), "ln3_b": zeros(N_DEC, 1, d),
    }
    return {
        "swin": swin, "enc": enc, "dec": dec,
        "input_linear_w": xavier(kg(), (SWIN_OUT, d)), "input_linear_b": zeros(1, d),
        "enc_red_w": xavier(kg(), (d * N_ENC, d)), "enc_red_b": zeros(1, d),
        "enc_red_ln_g": ones(1, d), "enc_red_ln_b": zeros(1, d),
        "dec_red_w": xavier(kg(), (d * N_DEC, d)), "dec_red_b": zeros(1, d),
        "dec_red_ln_g": ones(1, d), "dec_red_ln_b": zeros(1, d),
        "out_embed": xavier(kg(), (VOCAB, d)),
        "pos_embed": xavier(kg(), (MAX_SEQ_LEN, d)),
        "vocab_w": xavier(kg(), (d, VOCAB)), "vocab_b": zeros(1, VOCAB),
    }


if __name__ == "__main__":
    root = jax.random.PRNGKey(0)
    k_param, k_input = jax.random.split(root)
    params = init_params(k_param)

    enc_x = jax.random.normal(k_input, (B, IN_CHANS, IMG, IMG), jnp.float32)  # NCHW like PyTorch
    enc_x_num_pads = jnp.zeros((B,), jnp.int32)
    sos_idx = jnp.int32(2)

    loop_pred, loop_logprobs = forward(params, enc_x, enc_x_num_pads, sos_idx)
    jax.block_until_ready((loop_pred, loop_logprobs))

    assert loop_pred.shape == (B, 1 + NUM_STEPS) and loop_pred.dtype == jnp.int32
    assert loop_logprobs.shape == (B, 1 + NUM_STEPS) and loop_logprobs.dtype == jnp.float32
    assert bool(jnp.all(jnp.isfinite(loop_logprobs)))
    print("KERNEL_OK")
</pallas_src>

<mosaic_0001>
module attributes {stable_mosaic.version = 11 : i64} {
  func.func @_encoder_kernel(%arg0: memref<16x48xf32, #tpu.memory_space<vmem>>, %arg1: memref<8x16xf32, #tpu.memory_space<vmem>>, %arg2: memref<16x8xf32, #tpu.memory_space<vmem>>, %arg3: memref<48x32xf32, #tpu.memory_space<vmem>>, %arg4: memref<32x224xf32, #tpu.memory_space<vmem>>, %arg5: memref<64x32xf32, #tpu.memory_space<vmem>>, %arg6: memref<10x32xf32, #tpu.memory_space<vmem>>, %arg7: memref<1x96xf32, #tpu.memory_space<vmem>>, %arg8: memref<1x64xf32, #tpu.memory_space<vmem>>, %arg9: memref<2x8x32xf32, #tpu.memory_space<vmem>>, %arg10: memref<2x2x32x96xf32, #tpu.memory_space<vmem>>, %arg11: memref<2x2x1x96xf32, #tpu.memory_space<vmem>>, %arg12: memref<2x2x32x32xf32, #tpu.memory_space<vmem>>, %arg13: memref<2x2x1x32xf32, #tpu.memory_space<vmem>>, %arg14: memref<2x32x64xf32, #tpu.memory_space<vmem>>, %arg15: memref<2x1x64xf32, #tpu.memory_space<vmem>>, %arg16: memref<2x64x32xf32, #tpu.memory_space<vmem>>, %arg17: memref<2x1x32xf32, #tpu.memory_space<vmem>>, %arg18: memref<2x4x32xf32, #tpu.memory_space<vmem>>, %arg19: memref<64x32xf32, #tpu.memory_space<vmem>>, %arg20: memref<3x32xf32, #tpu.memory_space<vmem>>, %arg21: memref<2x32x64xf32, #tpu.memory_space<vmem>>, %arg22: memref<2x1x64xf32, #tpu.memory_space<vmem>>, %arg23: memref<16x128xf32, #tpu.memory_space<vmem>>) attributes {dimension_semantics = [], scalar_prefetch = 0 : i64, scratch_operands = 0 : i64, tpu.core_type = #tpu.core_type<tc>} {
    %c0 = arith.constant 0 : index
    %c0_0 = arith.constant 0 : index
    %0 = vector.load %arg4[%c0, %c0_0] : memref<32x224xf32, #tpu.memory_space<vmem>>, vector<32x224xf32>
    %c0_1 = arith.constant 0 : index
    %c0_2 = arith.constant 0 : index
    %1 = vector.load %arg6[%c0_1, %c0_2] : memref<10x32xf32, #tpu.memory_space<vmem>>, vector<10x32xf32>
    %c0_3 = arith.constant 0 : index
    %c0_4 = arith.constant 0 : index
    %2 = vector.load %arg0[%c0_3, %c0_4] : memref<16x48xf32, #tpu.memory_space<vmem>>, vector<16x48xf32>
    %c0_5 = arith.constant 0 : index
    %c0_6 = arith.constant 0 : index
    %3 = vector.load %arg3[%c0_5, %c0_6] : memref<48x32xf32, #tpu.memory_space<vmem>>, vector<48x32xf32>
    %cst = arith.constant dense<0.000000e+00> : vector<16x32xf32>
    %4 = tpu.matmul %2, %3, %cst {dimension_numbers = #tpu.dot_dimension_numbers<[1], [0], [0], [1], [0, 0, 1, 1], [], []>} : vector<16x48xf32>, vector<48x32xf32>, vector<16x32xf32> -> vector<16x32xf32>
    %5 = vector.extract_strided_slice %1 {offsets = [0, 0], sizes = [1, 32], strides = [1, 1]} : vector<10x32xf32> to vector<1x32xf32>
    %6 = vector.broadcast %5 : vector<1x32xf32> to vector<16x32xf32>
    %7 = arith.addf %4, %6 : vector<16x32xf32>
    %8 = vector.extract_strided_slice %1 {offsets = [1, 0], sizes = [1, 32], strides = [1, 1]} : vector<10x32xf32> to vector<1x32xf32>
    %9 = vector.extract_strided_slice %1 {offsets = [2, 0], sizes = [1, 32], strides = [1, 1]} : vector<10x32xf32> to vector<1x32xf32>
    %cst_7 = arith.constant dense<0.000000e+00> : vector<16xf32>
    %10 = vector.multi_reduction <add>, %7, %cst_7 [1] : vector<16x32xf32> to vector<16xf32>
    %11 = vector.shape_cast %10 : vector<16xf32> to vector<16x1xf32>
    %cst_8 = arith.constant 3.200000e+01 : f32
    %12 = vector.broadcast %cst_8 : f32 to vector<16x1xf32>
    %13 = arith.divf %11, %12 : vector<16x1xf32>
    %14 = vector.broadcast %13 : vector<16x1xf32> to vector<16x32xf32>
    %15 = arith.subf %7, %14 : vector<16x32xf32>
    %16 = arith.mulf %15, %15 : vector<16x32xf32>
    %cst_9 = arith.constant dense<0.000000e+00> : vector<16xf32>
    %17 = vector.multi_reduction <add>, %16, %cst_9 [1] : vector<16x32xf32> to vector<16xf32>
    %18 = vector.shape_cast %17 : vector<16xf32> to vector<16x1xf32>
    %cst_10 = arith.constant 3.200000e+01 : f32
    %19 = vector.broadcast %cst_10 : f32 to vector<16x1xf32>
    %20 = arith.divf %18, %19 : vector<16x1xf32>
    %21 = vector.broadcast %13 : vector<16x1xf32> to vector<16x32xf32>
    %22 = arith.subf %7, %21 : vector<16x32xf32>
    %cst_11 = arith.constant 9.99999974E-6 : f32
    %23 = vector.broadcast %cst_11 : f32 to vector<16x1xf32>
    %24 = arith.addf %20, %23 : vector<16x1xf32>
    %25 = math.rsqrt %24 : vector<16x1xf32>
    %26 = vector.broadcast %25 : vector<16x1xf32> to vector<16x32xf32>
    %27 = arith.mulf %22, %26 : vector<16x32xf32>
    %28 = vector.broadcast %8 : vector<1x32xf32> to vector<16x32xf32>
    %29 = arith.mulf %27, %28 : vector<16x32xf32>
    %30 = vector.broadcast %9 : vector<1x32xf32> to vector<16x32xf32>
    %31 = arith.addf %29, %30 : vector<16x32xf32>
    %32 = vector.extract_strided_slice %0 {offsets = [0, 0], sizes = [32, 96], strides = [1, 1]} : vector<32x224xf32> to vector<32x96xf32>
    %c0_12 = arith.constant 0 : index
    %c0_13 = arith.constant 0 : index
    %33 = vector.load %arg7[%c0_12, %c0_13] : memref<1x96xf32, #tpu.memory_space<vmem>>, vector<1x96xf32>
    %34 = vector.extract_strided_slice %0 {offsets = [0, 96], sizes = [32, 32], strides = [1, 1]} : vector<32x224xf32> to vector<32x32xf32>
    %35 = vector.extract_strided_slice %1 {offsets = [3, 0], sizes = [1, 32], strides = [1, 1]} : vector<10x32xf32> to vector<1x32xf32>
    %36 = vector.extract_strided_slice %32 {offsets = [0, 0], sizes = [32, 32], strides = [1, 1]} : vector<32x96xf32> to vector<32x32xf32>
    %cst_14 = arith.constant dense<0.000000e+00> : vector<16x32xf32>
    %37 = tpu.matmul %31, %36, %cst_14 {dimension_numbers = #tpu.dot_dimension_numbers<[1], [0], [0], [1], [0, 0, 1, 1], [], []>} : vector<16x32xf32>, vector<32x32xf32>, vector<16x32xf32> -> vector<16x32xf32>
    %38 = vector.extract_strided_slice %33 {offsets = [0, 0], sizes = [1, 32], strides = [1, 1]} : vector<1x96xf32> to vector<1x32xf32>
    %39 = vector.broadcast %38 : vector<1x32xf32> to vector<16x32xf32>
    %40 = arith.addf %37, %39 : vector<16x32xf32>
    %41 = vector.extract_strided_slice %32 {offsets = [0, 32], sizes = [32, 64], strides = [1, 1]} : vector<32x96xf32> to vector<32x64xf32>
    %cst_15 = arith.constant dense<0.000000e+00> : vector<16x64xf32>
    %42 = tpu.matmul %31, %41, %cst_15 {dimension_numbers = #tpu.dot_dimension_numbers<[1], [0], [0], [1], [0, 0, 1, 1], [], []>} : vector<16x32xf32>, vector<32x64xf32>, vector<16x64xf32> -> vector<16x64xf32>
    %43 = vector.extract_strided_slice %33 {offsets = [0, 32], sizes = [1, 64], strides = [1, 1]} : vector<1x96xf32> to vector<1x64xf32>
    %44 = vector.broadcast %43 : vector<1x64xf32> to vector<16x64xf32>
    %45 = arith.addf %42, %44 : vector<16x64xf32>
    %46 = vector.extract_strided_slice %45 {offsets = [0, 0], sizes = [16, 32], strides = [1, 1]} : vector<16x64xf32> to vector<16x32xf32>
    %47 = vector.extract_strided_slice %45 {offsets = [0, 32], sizes = [16, 32], strides = [1, 1]} : vector<16x64xf32> to vector<16x32xf32>
    %48 = vector.extract_strided_slice %40 {offsets = [0, 0], sizes = [16, 8], strides = [1, 1]} : vector<16x32xf32> to vector<16x8xf32>
    %49 = vector.extract_strided_slice %46 {offsets = [0, 0], sizes = [16, 8], strides = [1, 1]} : vector<16x32xf32> to vector<16x8xf32>
    %cst_16 = arith.constant dense<0.000000e+00> : vector<16x16xf32>
    %50 = tpu.matmul %48, %49, %cst_16 {dimension_numbers = #tpu.dot_dimension_numbers<[1], [1], [0], [0], [0, 0, 1, 0], [], []>} : vector<16x8xf32>, vector<16x8xf32>, vector<16x16xf32> -> vector<16x16xf32>
    %cst_17 = arith.constant 0.353553385 : f32
    %51 = vector.broadcast %cst_17 : f32 to vector<16x16xf32>
    %52 = arith.mulf %50, %51 : vector<16x16xf32>
    %cst_18 = arith.constant 0.000000e+00 : f32
    %53 = vector.broadcast %cst_18 : f32 to vector<16x16xf32>
    %54 = arith.addf %52, %53 : vector<16x16xf32>
    %cst_19 = arith.constant dense<0xFF800000> : vector<16xf32>
    %55 = vector.multi_reduction <maximumf>, %54, %cst_19 [1] : vector<16x16xf32> to vector<16xf32>
    %56 = vector.shape_cast %55 : vector<16xf32> to vector<16x1xf32>
    %57 = vector.broadcast %56 : vector<16x1xf32> to vector<16x16xf32>
    %58 = arith.subf %54, %57 : vector<16x16xf32>
    %59 = math.exp %58 : vector<16x16xf32>
    %cst_20 = arith.constant dense<0.000000e+00> : vector<16xf32>
    %60 = vector.multi_reduction <add>, %59, %cst_20 [1] : vector<16x16xf32> to vector<16xf32>
    %61 = vector.shape_cast %60 : vector<16xf32> to vector<16x1xf32>
    %62 = vector.broadcast %61 : vector<16x1xf32> to vector<16x16xf32>
    %63 = arith.divf %59, %62 : vector<16x16xf32>
    %64 = vector.extract_strided_slice %47 {offsets = [0, 0], sizes = [16, 8], strides = [1, 1]} : vector<16x32xf32> to vector<16x8xf32>
    %cst_21 = arith.constant dense<0.000000e+00> : vector<16x8xf32>
    %65 = tpu.matmul %63, %64, %cst_21 {dimension_numbers = #tpu.dot_dimension_numbers<[1], [0], [0], [1], [0, 0, 1, 1], [], []>} : vector<16x16xf32>, vector<16x8xf32>, vector<16x8xf32> -> vector<16x8xf32>
    %66 = vector.extract_strided_slice %40 {offsets = [0, 8], sizes = [16, 8], strides = [1, 1]} : vector<16x32xf32> to vector<16x8xf32>
    %67 = vector.extract_strided_slice %46 {offsets = [0, 8], sizes = [16, 8], strides = [1, 1]} : vector<16x32xf32> to vector<16x8xf32>
    %cst_22 = arith.constant dense<0.000000e+00> : vector<16x16xf32>
    %68 = tpu.matmul %66, %67, %cst_22 {dimension_numbers = #tpu.dot_dimension_numbers<[1], [1], [0], [0], [0, 0, 1, 0], [], []>} : vector<16x8xf32>, vector<16x8xf32>, vector<16x16xf32> -> vector<16x16xf32>
    %cst_23 = arith.constant 0.353553385 : f32
    %69 = vector.broadcast %cst_23 : f32 to vector<16x16xf32>
    %70 = arith.mulf %68, %69 : vector<16x16xf32>
    %cst_24 = arith.constant 0.000000e+00 : f32
    %71 = vector.broadcast %cst_24 : f32 to vector<16x16xf32>
    %72 = arith.addf %70, %71 : vector<16x16xf32>
    %cst_25 = arith.constant dense<0xFF800000> : vector<16xf32>
    %73 = vector.multi_reduction <maximumf>, %72, %cst_25 [1] : vector<16x16xf32> to vector<16xf32>
    %74 = vector.shape_cast %73 : vector<16xf32> to vector<16x1xf32>
    %75 = vector.broadcast %74 : vector<16x1xf32> to vector<16x16xf32>
    %76 = arith.subf %72, %75 : vector<16x16xf32>
    %77 = math.exp %76 : vector<16x16xf32>
    %cst_26 = arith.constant dense<0.000000e+00> : vector<16xf32>
    %78 = vector.multi_reduction <add>, %77, %cst_26 [1] : vector<16x16xf32> to vector<16xf32>
    %79 = vector.shape_cast %78 : vector<16xf32> to vector<16x1xf32>
    %80 = vector.broadcast %79 : vector<16x1xf32> to vector<16x16xf32>
    %81 = arith.divf %77, %80 : vector<16x16xf32>
    %82 = vector.extract_strided_slice %47 {offsets = [0, 8], sizes = [16, 8], strides = [1, 1]} : vector<16x32xf32> to vector<16x8xf32>
    %cst_27 = arith.constant dense<0.000000e+00> : vector<16x8xf32>
    %83 = tpu.matmul %81, %82, %cst_27 {dimension_numbers = #tpu.dot_dimension_numbers<[1], [0], [0], [1], [0, 0, 1, 1], [], []>} : vector<16x16xf32>, vector<16x8xf32>, vector<16x8xf32> -> vector<16x8xf32>
    %84 = vector.extract_strided_slice %40 {offsets = [0, 16], sizes = [16, 8], strides = [1, 1]} : vector<16x32xf32> to vector<16x8xf32>
    %85 = vector.extract_strided_slice %46 {offsets = [0, 16], sizes = [16, 8], strides = [1, 1]} : vector<16x32xf32> to vector<16x8xf32>
    %cst_28 = arith.constant dense<0.000000e+00> : vector<16x16xf32>
    %86 = tpu.matmul %84, %85, %cst_28 {dimension_numbers = #tpu.dot_dimension_numbers<[1], [1], [0], [0], [0, 0, 1, 0], [], []>} : vector<16x8xf32>, vector<16x8xf32>, vector<16x16xf32> -> vector<16x16xf32>
    %cst_29 = arith.constant 0.353553385 : f32
    %87 = vector.broadcast %cst_29 : f32 to vector<16x16xf32>
    %88 = arith.mulf %86, %87 : vector<16x16xf32>
    %cst_30 = arith.constant 0.000000e+00 : f32
    %89 = vector.broadcast %cst_30 : f32 to vector<16x16xf32>
    %90 = arith.addf %88, %89 : vector<16x16xf32>
    %cst_31 = arith.constant dense<0xFF800000> : vector<16xf32>
    %91 = vector.multi_reduction <maximumf>, %90, %cst_31 [1] : vector<16x16xf32> to vector<16xf32>
    %92 = vector.shape_cast %91 : vector<16xf32> to vector<16x1xf32>
    %93 = vector.broadcast %92 : vector<16x1xf32> to vector<16x16xf32>
    %94 = arith.subf %90, %93 : vector<16x16xf32>
    %95 = math.exp %94 : vector<16x16xf32>
    %cst_32 = arith.constant dense<0.000000e+00> : vector<16xf32>
    %96 = vector.multi_reduction <add>, %95, %cst_32 [1] : vector<16x16xf32> to vector<16xf32>
    %97 = vector.shape_cast %96 : vector<16xf32> to vector<16x1xf32>
    %98 = vector.broadcast %97 : vector<16x1xf32> to vector<16x16xf32>
    %99 = arith.divf %95, %98 : vector<16x16xf32>
    %100 = vector.extract_strided_slice %47 {offsets = [0, 16], sizes = [16, 8], strides = [1, 1]} : vector<16x32xf32> to vector<16x8xf32>
    %cst_33 = arith.constant dense<0.000000e+00> : vector<16x8xf32>
    %101 = tpu.matmul %99, %100, %cst_33 {dimension_numbers = #tpu.dot_dimension_numbers<[1], [0], [0], [1], [0, 0, 1, 1], [], []>} : vector<16x16xf32>, vector<16x8xf32>, vector<16x8xf32> -> vector<16x8xf32>
    %102 = vector.extract_strided_slice %40 {offsets = [0, 24], sizes = [16, 8], strides = [1, 1]} : vector<16x32xf32> to vector<16x8xf32>
    %103 = vector.extract_strided_slice %46 {offsets = [0, 24], sizes = [16, 8], strides = [1, 1]} : vector<16x32xf32> to vector<16x8xf32>
    %cst_34 = arith.constant dense<0.000000e+00> : vector<16x16xf32>
    %104 = tpu.matmul %102, %103, %cst_34 {dimension_numbers = #tpu.dot_dimension_numbers<[1], [1], [0], [0], [0, 0, 1, 0], [], []>} : vector<16x8xf32>, vector<16x8xf32>, vector<16x16xf32> -> vector<16x16xf32>
    %cst_35 = arith.constant 0.353553385 : f32
    %105 = vector.broadcast %cst_35 : f32 to vector<16x16xf32>
    %106 = arith.mulf %104, %105 : vector<16x16xf32>
    %cst_36 = arith.constant 0.000000e+00 : f32
    %107 = vector.broadcast %cst_36 : f32 to vector<16x16xf32>
    %108 = arith.addf %106, %107 : vector<16x16xf32>
    %cst_37 = arith.constant dense<0xFF800000> : vector<16xf32>
    %109 = vector.multi_reduction <maximumf>, %108, %cst_37 [1] : vector<16x16xf32> to vector<16xf32>
    %110 = vector.shape_cast %109 : vector<16xf32> to vector<16x1xf32>
    %111 = vector.broadcast %110 : vector<16x1xf32> to vector<16x16xf32>
    %112 = arith.subf %108, %111 : vector<16x16xf32>
    %113 = math.exp %112 : vector<16x16xf32>
    %cst_38 = arith.constant dense<0.000000e+00> : vector<16xf32>
    %114 = vector.multi_reduction <add>, %113, %cst_38 [1] : vector<16x16xf32> to vector<16xf32>
    %115 = vector.shape_cast %114 : vector<16xf32> to vector<16x1xf32>
    %116 = vector.broadcast %115 : vector<16x1xf32> to vector<16x16xf32>
    %117 = arith.divf %113, %116 : vector<16x16xf32>
    %118 = vector.extract_strided_slice %47 {offsets = [0, 24], sizes = [16, 8], strides = [1, 1]} : vector<16x32xf32> to vector<16x8xf32>
    %cst_39 = arith.constant dense<0.000000e+00> : vector<16x8xf32>
    %119 = tpu.matmul %117, %118, %cst_39 {dimension_numbers = #tpu.dot_dimension_numbers<[1], [0], [0], [1], [0, 0, 1, 1], [], []>} : vector<16x16xf32>, vector<16x8xf32>, vector<16x8xf32> -> vector<16x8xf32>
    %120 = tpu.concatenate %65, %83, %101, %119 in 1 : vector<16x8xf32>, vector<16x8xf32>, vector<16x8xf32>, vector<16x8xf32> -> vector<16x32xf32>
    %cst_40 = arith.constant dense<0.000000e+00> : vector<16x32xf32>
    %121 = tpu.matmul %120, %34, %cst_40 {dimension_numbers = #tpu.dot_dimension_numbers<[1], [0], [0], [1], [0, 0, 1, 1], [], []>} : vector<16x32xf32>, vector<32x32xf32>, vector<16x32xf32> -> vector<16x32xf32>
    %122 = vector.broadcast %35 : vector<1x32xf32> to vector<16x32xf32>
    %123 = arith.addf %121, %122 : vector<16x32xf32>
    %124 = arith.addf %31, %123 : vector<16x32xf32>
    %125 = vector.extract_strided_slice %1 {offsets = [4, 0], sizes = [1, 32], strides = [1, 1]} : vector<10x32xf32> to vector<1x32xf32>
    %126 = vector.extract_strided_slice %1 {offsets = [5, 0], sizes = [1, 32], strides = [1, 1]} : vector<10x32xf32> to vector<1x32xf32>
    %cst_41 = arith.constant dense<0.000000e+00> : vector<16xf32>
    %127 = vector.multi_reduction <add>, %124, %cst_41 [1] : vector<16x32xf32> to vector<16xf32>
    %128 = vector.shape_cast %127 : vector<16xf32> to vector<16x1xf32>
    %cst_42 = arith.constant 3.200000e+01 : f32
    %129 = vector.broadcast %cst_42 : f32 to vector<16x1xf32>
    %130 = arith.divf %128, %129 : vector<16x1xf32>
    %131 = vector.broadcast %130 : vector<16x1xf32> to vector<16x32xf32>
    %132 = arith.subf %124, %131 : vector<16x32xf32>
    %133 = arith.mulf %132, %132 : vector<16x32xf32>
    %cst_43 = arith.constant dense<0.000000e+00> : vector<16xf32>
    %134 = vector.multi_reduction <add>, %133, %cst_43 [1] : vector<16x32xf32> to vector<16xf32>
    %135 = vector.shape_cast %134 : vector<16xf32> to vector<16x1xf32>
    %cst_44 = arith.constant 3.200000e+01 : f32
    %136 = vector.broadcast %cst_44 : f32 to vector<16x1xf32>
    %137 = arith.divf %135, %136 : vector<16x1xf32>
    %138 = vector.broadcast %130 : vector<16x1xf32> to vector<16x32xf32>
    %139 = arith.subf %124, %138 : vector<16x32xf32>
    %cst_45 = arith.constant 9.99999974E-6 : f32
    %140 = vector.broadcast %cst_45 : f32 to vector<16x1xf32>
    %141 = arith.addf %137, %140 : vector<16x1xf32>
    %142 = math.rsqrt %141 : vector<16x1xf32>
    %143 = vector.broadcast %142 : vector<16x1xf32> to vector<16x32xf32>
    %144 = arith.mulf %139, %143 : vector<16x32xf32>
    %145 = vector.broadcast %125 : vector<1x32xf32> to vector<16x32xf32>
    %146 = arith.mulf %144, %145 : vector<16x32xf32>
    %147 = vector.broadcast %126 : vector<1x32xf32> to vector<16x32xf32>
    %148 = arith.addf %146, %147 : vector<16x32xf32>
    %149 = vector.extract_strided_slice %0 {offsets = [0, 128], sizes = [32, 64], strides = [1, 1]} : vector<32x224xf32> to vector<32x64xf32>
    %cst_46 = arith.constant dense<0.000000e+00> : vector<16x64xf32>
    %150 = tpu.matmul %148, %149, %cst_46 {dimension_numbers = #tpu.dot_dimension_numbers<[1], [0], [0], [1], [0, 0, 1, 1], [], []>} : vector<16x32xf32>, vector<32x64xf32>, vector<16x64xf32> -> vector<16x64xf32>
    %c0_47 = arith.constant 0 : index
    %c0_48 = arith.constant 0 : index
    %151 = vector.load %arg8[%c0_47, %c0_48] : memref<1x64xf32, #tpu.memory_space<vmem>>, vector<1x64xf32>
    %152 = vector.broadcast %151 : vector<1x64xf32> to vector<16x64xf32>
    %153 = arith.addf %150, %152 : vector<16x64xf32>
    %cst_49 = arith.constant 0.000000e+00 : f32
    %154 = vector.broadcast %cst_49 : f32 to vector<16x64xf32>
    %155 = arith.maximumf %153, %154 : vector<16x64xf32>
    %c0_50 = arith.constant 0 : index
    %c0_51 = arith.constant 0 : index
    %156 = vector.load %arg5[%c0_50, %c0_51] : memref<64x32xf32, #tpu.memory_space<vmem>>, vector<64x32xf32>
    %cst_52 = arith.constant dense<0.000000e+00> : vector<16x32xf32>
    %157 = tpu.matmul %155, %156, %cst_52 {dimension_numbers = #tpu.dot_dimension_numbers<[1], [0], [0], [1], [0, 0, 1, 1], [], []>} : vector<16x64xf32>, vector<64x32xf32>, vector<16x32xf32> -> vector<16x32xf32>
    %158 = vector.extract_strided_slice %1 {offsets = [6, 0], sizes = [1, 32], strides = [1, 1]} : vector<10x32xf32> to vector<1x32xf32>
    %159 = vector.broadcast %158 : vector<1x32xf32> to vector<16x32xf32>
    %160 = arith.addf %157, %159 : vector<16x32xf32>
    %161 = arith.addf %148, %160 : vector<16x32xf32>
    %162 = vector.extract_strided_slice %1 {offsets = [7, 0], sizes = [1, 32], strides = [1, 1]} : vector<10x32xf32> to vector<1x32xf32>
    %163 = vector.extract_strided_slice %1 {offsets = [8, 0], sizes = [1, 32], strides = [1, 1]} : vector<10x32xf32> to vector<1x32xf32>
    %cst_53 = arith.constant dense<0.000000e+00> : vector<16xf32>
    %164 = vector.multi_reduction <add>, %161, %cst_53 [1] : vector<16x32xf32> to vector<16xf32>
    %165 = vector.shape_cast %164 : vector<16xf32> to vector<16x1xf32>
    %cst_54 = arith.constant 3.200000e+01 : f32
    %166 = vector.broadcast %cst_54 : f32 to vector<16x1xf32>
    %167 = arith.divf %165, %166 : vector<16x1xf32>
    %168 = vector.broadcast %167 : vector<16x1xf32> to vector<16x32xf32>
    %169 = arith.subf %161, %168 : vector<16x32xf32>
    %170 = arith.mulf %169, %169 : vector<16x32xf32>
    %cst_55 = arith.constant dense<0.000000e+00> : vector<16xf32>
    %171 = vector.multi_reduction <add>, %170, %cst_55 [1] : vector<16x32xf32> to vector<16xf32>
    %172 = vector.shape_cast %171 : vector<16xf32> to vector<16x1xf32>
    %cst_56 = arith.constant 3.200000e+01 : f32
    %173 = vector.broadcast %cst_56 : f32 to vector<16x1xf32>
    %174 = arith.divf %172, %173 : vector<16x1xf32>
    %175 = vector.broadcast %167 : vector<16x1xf32> to vector<16x32xf32>
    %176 = arith.subf %161, %175 : vector<16x32xf32>
    %cst_57 = arith.constant 9.99999974E-6 : f32
    %177 = vector.broadcast %cst_57 : f32 to vector<16x1xf32>
    %178 = arith.addf %174, %177 : vector<16x1xf32>
    %179 = math.rsqrt %178 : vector<16x1xf32>
    %180 = vector.broadcast %179 : vector<16x1xf32> to vector<16x32xf32>
    %181 = arith.mulf %176, %180 : vector<16x32xf32>
    %182 = vector.broadcast %162 : vector<1x32xf32> to vector<16x32xf32>
    %183 = arith.mulf %181, %182 : vector<16x32xf32>
    %184 = vector.broadcast %163 : vector<1x32xf32> to vector<16x32xf32>
    %185 = arith.addf %183, %184 : vector<16x32xf32>
    %186 = vector.extract_strided_slice %0 {offsets = [0, 192], sizes = [32, 32], strides = [1, 1]} : vector<32x224xf32> to vector<32x32xf32>
    %cst_58 = arith.constant dense<0.000000e+00> : vector<16x32xf32>
    %187 = tpu.matmul %185, %186, %cst_58 {dimension_numbers = #tpu.dot_dimension_numbers<[1], [0], [0], [1], [0, 0, 1, 1], [], []>} : vector<16x32xf32>, vector<32x32xf32>, vector<16x32xf32> -> vector<16x32xf32>
    %188 = vector.extract_strided_slice %1 {offsets = [9, 0], sizes = [1, 32], strides = [1, 1]} : vector<10x32xf32> to vector<1x32xf32>
    %189 = vector.broadcast %188 : vector<1x32xf32> to vector<16x32xf32>
    %190 = arith.addf %187, %189 : vector<16x32xf32>
    %c0_59 = arith.constant 0 : index
    %c0_60 = arith.constant 0 : index
    %191 = vector.load %arg1[%c0_59, %c0_60] : memref<8x16xf32, #tpu.memory_space<vmem>>, vector<8x16xf32>
    %c0_61 = arith.constant 0 : index
    %c0_62 = arith.constant 0 : index
    %192 = vector.load %arg2[%c0_61, %c0_62] : memref<16x8xf32, #tpu.memory_space<vmem>>, vector<16x8xf32>
    %c0_63 = arith.constant 0 : index
    %c0_64 = arith.constant 0 : index
    %c0_65 = arith.constant 0 : index
    %193 = vector.load %arg9[%c0_63, %c0_64, %c0_65] : memref<2x8x32xf32, #tpu.memory_space<vmem>>, vector<1x8x32xf32>
    %194 = vector.shape_cast %193 : vector<1x8x32xf32> to vector<8x32xf32>
    %c0_66 = arith.constant 0 : index
    %c0_67 = arith.constant 0 : index
    %c0_68 = arith.constant 0 : index
    %c0_69 = arith.constant 0 : index
    %195 = vector.load %arg10[%c0_66, %c0_67, %c0_68, %c0_69] : memref<2x2x32x96xf32, #tpu.memory_space<vmem>>, vector<1x1x32x96xf32>
    %196 = vector.shape_cast %195 : vector<1x1x32x96xf32> to vector<32x96xf32>
    %c0_70 = arith.constant 0 : index
    %c0_71 = arith.constant 0 : index
    %c0_72 = arith.constant 0 : index
    %c0_73 = arith.constant 0 : index
    %197 = vector.load %arg11[%c0_70, %c0_71, %c0_72, %c0_73] : memref<2x2x1x96xf32, #tpu.memory_space<vmem>>, vector<1x1x1x96xf32>
    %198 = vector.shape_cast %197 : vector<1x1x1x96xf32> to vector<1x96xf32>
    %c0_74 = arith.constant 0 : index
    %c0_75 = arith.constant 0 : index
    %c0_76 = arith.constant 0 : index
    %c0_77 = arith.constant 0 : index
    %199 = vector.load %arg12[%c0_74, %c0_75, %c0_76, %c0_77] : memref<2x2x32x32xf32, #tpu.memory_space<vmem>>, vector<1x1x32x32xf32>
    %200 = vector.shape_cast %199 : vector<1x1x32x32xf32> to vector<32x32xf32>
    %c0_78 = arith.constant 0 : index
    %c0_79 = arith.constant 0 : index
    %c0_80 = arith.constant 0 : index
    %c0_81 = arith.constant 0 : index
    %201 = vector.load %arg13[%c0_78, %c0_79, %c0_80, %c0_81] : memref<2x2x1x32xf32, #tpu.memory_space<vmem>>, vector<1x1x1x32xf32>
    %202 = vector.shape_cast %201 : vector<1x1x1x32xf32> to vector<1x32xf32>
    %203 = vector.extract_strided_slice %196 {offsets = [0, 0], sizes = [32, 32], strides = [1, 1]} : vector<32x96xf32> to vector<32x32xf32>
    %cst_82 = arith.constant dense<0.000000e+00> : vector<8x32xf32>
    %204 = tpu.matmul %194, %203, %cst_82 {dimension_numbers = #tpu.dot_dimension_numbers<[1], [0], [0], [1], [0, 0, 1, 1], [], []>} : vector<8x32xf32>, vector<32x32xf32>, vector<8x32xf32> -> vector<8x32xf32>
    %205 = vector.extract_strided_slice %198 {offsets = [0, 0], sizes = [1, 32], strides = [1, 1]} : vector<1x96xf32> to vector<1x32xf32>
    %206 = vector.broadcast %205 : vector<1x32xf32> to vector<8x32xf32>
    %207 = arith.addf %204, %206 : vector<8x32xf32>
    %208 = vector.extract_strided_slice %196 {offsets = [0, 32], sizes = [32, 64], strides = [1, 1]} : vector<32x96xf32> to vector<32x64xf32>
    %cst_83 = arith.constant dense<0.000000e+00> : vector<16x64xf32>
    %209 = tpu.matmul %190, %208, %cst_83 {dimension_numbers = #tpu.dot_dimension_numbers<[1], [0], [0], [1], [0, 0, 1, 1], [], []>} : vector<16x32xf32>, vector<32x64xf32>, vector<16x64xf32> -> vector<16x64xf32>
    %210 = vector.extract_strided_slice %198 {offsets = [0, 32], sizes = [1, 64], strides = [1, 1]} : vector<1x96xf32> to vector<1x64xf32>
    %211 = vector.broadcast %210 : vector<1x64xf32> to vector<16x64xf32>
    %212 = arith.addf %209, %211 : vector<16x64xf32>
    %213 = vector.extract_strided_slice %212 {offsets = [0, 0], sizes = [16, 32], strides = [1, 1]} : vector<16x64xf32> to vector<16x32xf32>
    %214 = vector.extract_strided_slice %212 {offsets = [0, 32], sizes = [16, 32], strides = [1, 1]} : vector<16x64xf32> to vector<16x32xf32>
    %215 = vector.extract_strided_slice %207 {offsets = [0, 0], sizes = [8, 8], strides = [1, 1]} : vector<8x32xf32> to vector<8x8xf32>
    %216 = vector.extract_strided_slice %213 {offsets = [0, 0], sizes = [16, 8], strides = [1, 1]} : vector<16x32xf32> to vector<16x8xf32>
    %cst_84 = arith.constant dense<0.000000e+00> : vector<8x16xf32>
    %217 = tpu.matmul %215, %216, %cst_84 {dimension_numbers = #tpu.dot_dimension_numbers<[1], [1], [0], [0], [0, 0, 1, 0], [], []>} : vector<8x8xf32>, vector<16x8xf32>, vector<8x16xf32> -> vector<8x16xf32>
    %cst_85 = arith.constant 0.353553385 : f32
    %218 = vector.broadcast %cst_85 : f32 to vector<8x16xf32>
    %219 = arith.mulf %217, %218 : vector<8x16xf32>
    %220 = arith.addf %219, %191 : vector<8x16xf32>
    %cst_86 = arith.constant dense<0xFF800000> : vector<8xf32>
    %221 = vector.multi_reduction <maximumf>, %220, %cst_86 [1] : vector<8x16xf32> to vector<8xf32>
    %222 = vector.shape_cast %221 : vector<8xf32> to vector<8x1xf32>
    %223 = vector.broadcast %222 : vector<8x1xf32> to vector<8x16xf32>
    %224 = arith.subf %220, %223 : vector<8x16xf32>
    %225 = math.exp %224 : vector<8x16xf32>
    %cst_87 = arith.constant dense<0.000000e+00> : vector<8xf32>
    %226 = vector.multi_reduction <add>, %225, %cst_87 [1] : vector<8x16xf32> to vector<8xf32>
    %227 = vector.shape_cast %226 : vector<8xf32> to vector<8x1xf32>
    %228 = vector.broadcast %227 : vector<8x1xf32> to vector<8x16xf32>
    %229 = arith.divf %225, %228 : vector<8x16xf32>
    %230 = vector.extract_strided_slice %214 {offsets = [0, 0], sizes = [16, 8], strides = [1, 1]} : vector<16x32xf32> to vector<16x8xf32>
    %cst_88 = arith.constant dense<0.000000e+00> : vector<8x8xf32>
    %231 = tpu.matmul %229, %230, %cst_88 {dimension_numbers = #tpu.dot_dimension_numbers<[1], [0], [0], [1], [0, 0, 1, 1], [], []>} : vector<8x16xf32>, vector<16x8xf32>, vector<8x8xf32> -> vector<8x8xf32>
    %232 = vector.extract_strided_slice %207 {offsets = [0, 8], sizes = [8, 8], strides = [1, 1]} : vector<8x32xf32> to vector<8x8xf32>
    %233 = vector.extract_strided_slice %213 {offsets = [0, 8], sizes = [16, 8], strides = [1, 1]} : vector<16x32xf32> to vector<16x8xf32>
    %cst_89 = arith.constant dense<0.000000e+00> : vector<8x16xf32>
    %234 = tpu.matmul %232, %233, %cst_89 {dimension_numbers = #tpu.dot_dimension_numbers<[1], [1], [0], [0], [0, 0, 1, 0], [], []>} : vector<8x8xf32>, vector<16x8xf32>, vector<8x16xf32> -> vector<8x16xf32>
    %cst_90 = arith.constant 0.353553385 : f32
    %235 = vector.broadcast %cst_90 : f32 to vector<8x16xf32>
    %236 = arith.mulf %234, %235 : vector<8x16xf32>
    %237 = arith.addf %236, %191 : vector<8x16xf32>
    %cst_91 = arith.constant dense<0xFF800000> : vector<8xf32>
    %238 = vector.multi_reduction <maximumf>, %237, %cst_91 [1] : vector<8x16xf32> to vector<8xf32>
    %239 = vector.shape_cast %238 : vector<8xf32> to vector<8x1xf32>
    %240 = vector.broadcast %239 : vector<8x1xf32> to vector<8x16xf32>
    %241 = arith.subf %237, %240 : vector<8x16xf32>
    %242 = math.exp %241 : vector<8x16xf32>
    %cst_92 = arith.constant dense<0.000000e+00> : vector<8xf32>
    %243 = vector.multi_reduction <add>, %242, %cst_92 [1] : vector<8x16xf32> to vector<8xf32>
    %244 = vector.shape_cast %243 : vector<8xf32> to vector<8x1xf32>
    %245 = vector.broadcast %244 : vector<8x1xf32> to vector<8x16xf32>
    %246 = arith.divf %242, %245 : vector<8x16xf32>
    %247 = vector.extract_strided_slice %214 {offsets = [0, 8], sizes = [16, 8], strides = [1, 1]} : vector<16x32xf32> to vector<16x8xf32>
    %cst_93 = arith.constant dense<0.000000e+00> : vector<8x8xf32>
    %248 = tpu.matmul %246, %247, %cst_93 {dimension_numbers = #tpu.dot_dimension_numbers<[1], [0], [0], [1], [0, 0, 1, 1], [], []>} : vector<8x16xf32>, vector<16x8xf32>, vector<8x8xf32> -> vector<8x8xf32>
    %249 = vector.extract_strided_slice %207 {offsets = [0, 16], sizes = [8, 8], strides = [1, 1]} : vector<8x32xf32> to vector<8x8xf32>
    %250 = vector.extract_strided_slice %213 {offsets = [0, 16], sizes = [16, 8], strides = [1, 1]} : vector<16x32xf32> to vector<16x8xf32>
    %cst_94 = arith.constant dense<0.000000e+00> : vector<8x16xf32>
    %251 = tpu.matmul %249, %250, %cst_94 {dimension_numbers = #tpu.dot_dimension_numbers<[1], [1], [0], [0], [0, 0, 1, 0], [], []>} : vector<8x8xf32>, vector<16x8xf32>, vector<8x16xf32> -> vector<8x16xf32>
    %cst_95 = arith.constant 0.353553385 : f32
    %252 = vector.broadcast %cst_95 : f32 to vector<8x16xf32>
    %253 = arith.mulf %251, %252 : vector<8x16xf32>
    %254 = arith.addf %253, %191 : vector<8x16xf32>
    %cst_96 = arith.constant dense<0xFF800000> : vector<8xf32>
    %255 = vector.multi_reduction <maximumf>, %254, %cst_96 [1] : vector<8x16xf32> to vector<8xf32>
    %256 = vector.shape_cast %255 : vector<8xf32> to vector<8x1xf32>
    %257 = vector.broadcast %256 : vector<8x1xf32> to vector<8x16xf32>
    %258 = arith.subf %254, %257 : vector<8x16xf32>
    %259 = math.exp %258 : vector<8x16xf32>
    %cst_97 = arith.constant dense<0.000000e+00> : vector<8xf32>
    %260 = vector.multi_reduction <add>, %259, %cst_97 [1] : vector<8x16xf32> to vector<8xf32>
    %261 = vector.shape_cast %260 : vector<8xf32> to vector<8x1xf32>
    %262 = vector.broadcast %261 : vector<8x1xf32> to vector<8x16xf32>
    %263 = arith.divf %259, %262 : vector<8x16xf32>
    %264 = vector.extract_strided_slice %214 {offsets = [0, 16], sizes = [16, 8], strides = [1, 1]} : vector<16x32xf32> to vector<16x8xf32>
    %cst_98 = arith.constant dense<0.000000e+00> : vector<8x8xf32>
    %265 = tpu.matmul %263, %264, %cst_98 {dimension_numbers = #tpu.dot_dimension_numbers<[1], [0], [0], [1], [0, 0, 1, 1], [], []>} : vector<8x16xf32>, vector<16x8xf32>, vector<8x8xf32> -> vector<8x8xf32>
    %266 = vector.extract_strided_slice %207 {offsets = [0, 24], sizes = [8, 8], strides = [1, 1]} : vector<8x32xf32> to vector<8x8xf32>
    %267 = vector.extract_strided_slice %213 {offsets = [0, 24], sizes = [16, 8], strides = [1, 1]} : vector<16x32xf32> to vector<16x8xf32>
    %cst_99 = arith.constant dense<0.000000e+00> : vector<8x16xf32>
    %268 = tpu.matmul %266, %267, %cst_99 {dimension_numbers = #tpu.dot_dimension_numbers<[1], [1], [0], [0], [0, 0, 1, 0], [], []>} : vector<8x8xf32>, vector<16x8xf32>, vector<8x16xf32> -> vector<8x16xf32>
    %cst_100 = arith.constant 0.353553385 : f32
    %269 = vector.broadcast %cst_100 : f32 to vector<8x16xf32>
    %270 = arith.mulf %268, %269 : vector<8x16xf32>
    %271 = arith.addf %270, %191 : vector<8x16xf32>
    %cst_101 = arith.constant dense<0xFF800000> : vector<8xf32>
    %272 = vector.multi_reduction <maximumf>, %271, %cst_101 [1] : vector<8x16xf32> to vector<8xf32>
    %273 = vector.shape_cast %272 : vector<8xf32> to vector<8x1xf32>
    %274 = vector.broadcast %273 : vector<8x1xf32> to vector<8x16xf32>
    %275 = arith.subf %271, %274 : vector<8x16xf32>
    %276 = math.exp %275 : vector<8x16xf32>
    %cst_102 = arith.constant dense<0.000000e+00> : vector<8xf32>
    %277 = vector.multi_reduction <add>, %276, %cst_102 [1] : vector<8x16xf32> to vector<8xf32>
    %278 = vector.shape_cast %277 : vector<8xf32> to vector<8x1xf32>
    %279 = vector.broadcast %278 : vector<8x1xf32> to vector<8x16xf32>
    %280 = arith.divf %276, %279 : vector<8x16xf32>
    %281 = vector.extract_strided_slice %214 {offsets = [0, 24], sizes = [16, 8], strides = [1, 1]} : vector<16x32xf32> to vector<16x8xf32>
    %cst_103 = arith.constant dense<0.000000e+00> : vector<8x8xf32>
    %282 = tpu.matmul %280, %281, %cst_103 {dimension_numbers = #tpu.dot_dimension_numbers<[1], [0], [0], [1], [0, 0, 1, 1], [], []>} : vector<8x16xf32>, vector<16x8xf32>, vector<8x8xf32> -> vector<8x8xf32>
    %283 = tpu.concatenate %231, %248, %265, %282 in 1 : vector<8x8xf32>, vector<8x8xf32>, vector<8x8xf32>, vector<8x8xf32> -> vector<8x32xf32>
    %cst_104 = arith.constant dense<0.000000e+00> : vector<8x32xf32>
    %284 = tpu.matmul %283, %200, %cst_104 {dimension_numbers = #tpu.dot_dimension_numbers<[1], [0], [0], [1], [0, 0, 1, 1], [], []>} : vector<8x32xf32>, vector<32x32xf32>, vector<8x32xf32> -> vector<8x32xf32>
    %285 = vector.broadcast %202 : vector<1x32xf32> to vector<8x32xf32>
    %286 = arith.addf %284, %285 : vector<8x32xf32>
    %c0_105 = arith.constant 0 : index
    %c1 = arith.constant 1 : index
    %c0_106 = arith.constant 0 : index
    %c0_107 = arith.constant 0 : index
    %287 = vector.load %arg10[%c0_105, %c1, %c0_106, %c0_107] : memref<2x2x32x96xf32, #tpu.memory_space<vmem>>, vector<1x1x32x96xf32>
    %288 = vector.shape_cast %287 : vector<1x1x32x96xf32> to vector<32x96xf32>
    %c0_108 = arith.constant 0 : index
    %c1_109 = arith.constant 1 : index
    %c0_110 = arith.constant 0 : index
    %c0_111 = arith.constant 0 : index
    %289 = vector.load %arg11[%c0_108, %c1_109, %c0_110, %c0_111] : memref<2x2x1x96xf32, #tpu.memory_space<vmem>>, vector<1x1x1x96xf32>
    %290 = vector.shape_cast %289 : vector<1x1x1x96xf32> to vector<1x96xf32>
    %c0_112 = arith.constant 0 : index
    %c1_113 = arith.constant 1 : index
    %c0_114 = arith.constant 0 : index
    %c0_115 = arith.constant 0 : index
    %291 = vector.load %arg12[%c0_112, %c1_113, %c0_114, %c0_115] : memref<2x2x32x32xf32, #tpu.memory_space<vmem>>, vector<1x1x32x32xf32>
    %292 = vector.shape_cast %291 : vector<1x1x32x32xf32> to vector<32x32xf32>
    %c0_116 = arith.constant 0 : index
    %c1_117 = arith.constant 1 : index
    %c0_118 = arith.constant 0 : index
    %c0_119 = arith.constant 0 : index
    %293 = vector.load %arg13[%c0_116, %c1_117, %c0_118, %c0_119] : memref<2x2x1x32xf32, #tpu.memory_space<vmem>>, vector<1x1x1x32xf32>
    %294 = vector.shape_cast %293 : vector<1x1x1x32xf32> to vector<1x32xf32>
    %295 = vector.extract_strided_slice %288 {offsets = [0, 0], sizes = [32, 32], strides = [1, 1]} : vector<32x96xf32> to vector<32x32xf32>
    %cst_120 = arith.constant dense<0.000000e+00> : vector<16x32xf32>
    %296 = tpu.matmul %190, %295, %cst_120 {dimension_numbers = #tpu.dot_dimension_numbers<[1], [0], [0], [1], [0, 0, 1, 1], [], []>} : vector<16x32xf32>, vector<32x32xf32>, vector<16x32xf32> -> vector<16x32xf32>
    %297 = vector.extract_strided_slice %290 {offsets = [0, 0], sizes = [1, 32], strides = [1, 1]} : vector<1x96xf32> to vector<1x32xf32>
    %298 = vector.broadcast %297 : vector<1x32xf32> to vector<16x32xf32>
    %299 = arith.addf %296, %298 : vector<16x32xf32>
    %300 = vector.extract_strided_slice %288 {offsets = [0, 32], sizes = [32, 64], strides = [1, 1]} : vector<32x96xf32> to vector<32x64xf32>
    %cst_121 = arith.constant dense<0.000000e+00> : vector<8x64xf32>
    %301 = tpu.matmul %286, %300, %cst_121 {dimension_numbers = #tpu.dot_dimension_numbers<[1], [0], [0], [1], [0, 0, 1, 1], [], []>} : vector<8x32xf32>, vector<32x64xf32>, vector<8x64xf32> -> vector<8x64xf32>
    %302 = vector.extract_strided_slice %290 {offsets = [0, 32], sizes = [1, 64], strides = [1, 1]} : vector<1x96xf32> to vector<1x64xf32>
    %303 = vector.broadcast %302 : vector<1x64xf32> to vector<8x64xf32>
    %304 = arith.addf %301, %303 : vector<8x64xf32>
    %305 = vector.extract_strided_slice %304 {offsets = [0, 0], sizes = [8, 32], strides = [1, 1]} : vector<8x64xf32> to vector<8x32xf32>
    %306 = vector.extract_strided_slice %304 {offsets = [0, 32], sizes = [8, 32], strides = [1, 1]} : vector<8x64xf32> to vector<8x32xf32>
    %307 = vector.extract_strided_slice %299 {offsets = [0, 0], sizes = [16, 8], strides = [1, 1]} : vector<16x32xf32> to vector<16x8xf32>
    %308 = vector.extract_strided_slice %305 {offsets = [0, 0], sizes = [8, 8], strides = [1, 1]} : vector<8x32xf32> to vector<8x8xf32>
    %cst_122 = arith.constant dense<0.000000e+00> : vector<16x8xf32>
    %309 = tpu.matmul %307, %308, %cst_122 {dimension_numbers = #tpu.dot_dimension_numbers<[1], [1], [0], [0], [0, 0, 1, 0], [], []>} : vector<16x8xf32>, vector<8x8xf32>, vector<16x8xf32> -> vector<16x8xf32>
    %cst_123 = arith.constant 0.353553385 : f32
    %310 = vector.broadcast %cst_123 : f32 to vector<16x8xf32>
    %311 = arith.mulf %309, %310 : vector<16x8xf32>
    %312 = arith.addf %311, %192 : vector<16x8xf32>
    %cst_124 = arith.constant dense<0xFF800000> : vector<16xf32>
    %313 = vector.multi_reduction <maximumf>, %312, %cst_124 [1] : vector<16x8xf32> to vector<16xf32>
    %314 = vector.shape_cast %313 : vector<16xf32> to vector<16x1xf32>
    %315 = vector.broadcast %314 : vector<16x1xf32> to vector<16x8xf32>
    %316 = arith.subf %312, %315 : vector<16x8xf32>
    %317 = math.exp %316 : vector<16x8xf32>
    %cst_125 = arith.constant dense<0.000000e+00> : vector<16xf32>
    %318 = vector.multi_reduction <add>, %317, %cst_125 [1] : vector<16x8xf32> to vector<16xf32>
    %319 = vector.shape_cast %318 : vector<16xf32> to vector<16x1xf32>
    %320 = vector.broadcast %319 : vector<16x1xf32> to vector<16x8xf32>
    %321 = arith.divf %317, %320 : vector<16x8xf32>
    %322 = vector.extract_strided_slice %306 {offsets = [0, 0], sizes = [8, 8], strides = [1, 1]} : vector<8x32xf32> to vector<8x8xf32>
    %cst_126 = arith.constant dense<0.000000e+00> : vector<16x8xf32>
    %323 = tpu.matmul %321, %322, %cst_126 {dimension_numbers = #tpu.dot_dimension_numbers<[1], [0], [0], [1], [0, 0, 1, 1], [], []>} : vector<16x8xf32>, vector<8x8xf32>, vector<16x8xf32> -> vector<16x8xf32>
    %324 = vector.extract_strided_slice %299 {offsets = [0, 8], sizes = [16, 8], strides = [1, 1]} : vector<16x32xf32> to vector<16x8xf32>
    %325 = vector.extract_strided_slice %305 {offsets = [0, 8], sizes = [8, 8], strides = [1, 1]} : vector<8x32xf32> to vector<8x8xf32>
    %cst_127 = arith.constant dense<0.000000e+00> : vector<16x8xf32>
    %326 = tpu.matmul %324, %325, %cst_127 {dimension_numbers = #tpu.dot_dimension_numbers<[1], [1], [0], [0], [0, 0, 1, 0], [], []>} : vector<16x8xf32>, vector<8x8xf32>, vector<16x8xf32> -> vector<16x8xf32>
    %cst_128 = arith.constant 0.353553385 : f32
    %327 = vector.broadcast %cst_128 : f32 to vector<16x8xf32>
    %328 = arith.mulf %326, %327 : vector<16x8xf32>
    %329 = arith.addf %328, %192 : vector<16x8xf32>
    %cst_129 = arith.constant dense<0xFF800000> : vector<16xf32>
    %330 = vector.multi_reduction <maximumf>, %329, %cst_129 [1] : vector<16x8xf32> to vector<16xf32>
    %331 = vector.shape_cast %330 : vector<16xf32> to vector<16x1xf32>
    %332 = vector.broadcast %331 : vector<16x1xf32> to vector<16x8xf32>
    %333 = arith.subf %329, %332 : vector<16x8xf32>
    %334 = math.exp %333 : vector<16x8xf32>
    %cst_130 = arith.constant dense<0.000000e+00> : vector<16xf32>
    %335 = vector.multi_reduction <add>, %334, %cst_130 [1] : vector<16x8xf32> to vector<16xf32>
    %336 = vector.shape_cast %335 : vector<16xf32> to vector<16x1xf32>
    %337 = vector.broadcast %336 : vector<16x1xf32> to vector<16x8xf32>
    %338 = arith.divf %334, %337 : vector<16x8xf32>
    %339 = vector.extract_strided_slice %306 {offsets = [0, 8], sizes = [8, 8], strides = [1, 1]} : vector<8x32xf32> to vector<8x8xf32>
    %cst_131 = arith.constant dense<0.000000e+00> : vector<16x8xf32>
    %340 = tpu.matmul %338, %339, %cst_131 {dimension_numbers = #tpu.dot_dimension_numbers<[1], [0], [0], [1], [0, 0, 1, 1], [], []>} : vector<16x8xf32>, vector<8x8xf32>, vector<16x8xf32> -> vector<16x8xf32>
    %341 = vector.extract_strided_slice %299 {offsets = [0, 16], sizes = [16, 8], strides = [1, 1]} : vector<16x32xf32> to vector<16x8xf32>
    %342 = vector.extract_strided_slice %305 {offsets = [0, 16], sizes = [8, 8], strides = [1, 1]} : vector<8x32xf32> to vector<8x8xf32>
    %cst_132 = arith.constant dense<0.000000e+00> : vector<16x8xf32>
    %343 = tpu.matmul %341, %342, %cst_132 {dimension_numbers = #tpu.dot_dimension_numbers<[1], [1], [0], [0], [0, 0, 1, 0], [], []>} : vector<16x8xf32>, vector<8x8xf32>, vector<16x8xf32> -> vector<16x8xf32>
    %cst_133 = arith.constant 0.353553385 : f32
    %344 = vector.broadcast %cst_133 : f32 to vector<16x8xf32>
    %345 = arith.mulf %343, %344 : vector<16x8xf32>
    %346 = arith.addf %345, %192 : vector<16x8xf32>
    %cst_134 = arith.constant dense<0xFF800000> : vector<16xf32>
    %347 = vector.multi_reduction <maximumf>, %346, %cst_134 [1] : vector<16x8xf32> to vector<16xf32>
    %348 = vector.shape_cast %347 : vector<16xf32> to vector<16x1xf32>
    %349 = vector.broadcast %348 : vector<16x1xf32> to vector<16x8xf32>
    %350 = arith.subf %346, %349 : vector<16x8xf32>
    %351 = math.exp %350 : vector<16x8xf32>
    %cst_135 = arith.constant dense<0.000000e+00> : vector<16xf32>
    %352 = vector.multi_reduction <add>, %351, %cst_135 [1] : vector<16x8xf32> to vector<16xf32>
    %353 = vector.shape_cast %352 : vector<16xf32> to vector<16x1xf32>
    %354 = vector.broadcast %353 : vector<16x1xf32> to vector<16x8xf32>
    %355 = arith.divf %351, %354 : vector<16x8xf32>
    %356 = vector.extract_strided_slice %306 {offsets = [0, 16], sizes = [8, 8], strides = [1, 1]} : vector<8x32xf32> to vector<8x8xf32>
    %cst_136 = arith.constant dense<0.000000e+00> : vector<16x8xf32>
    %357 = tpu.matmul %355, %356, %cst_136 {dimension_numbers = #tpu.dot_dimension_numbers<[1], [0], [0], [1], [0, 0, 1, 1], [], []>} : vector<16x8xf32>, vector<8x8xf32>, vector<16x8xf32> -> vector<16x8xf32>
    %358 = vector.extract_strided_slice %299 {offsets = [0, 24], sizes = [16, 8], strides = [1, 1]} : vector<16x32xf32> to vector<16x8xf32>
    %359 = vector.extract_strided_slice %305 {offsets = [0, 24], sizes = [8, 8], strides = [1, 1]} : vector<8x32xf32> to vector<8x8xf32>
    %cst_137 = arith.constant dense<0.000000e+00> : vector<16x8xf32>
    %360 = tpu.matmul %358, %359, %cst_137 {dimension_numbers = #tpu.dot_dimension_numbers<[1], [1], [0], [0], [0, 0, 1, 0], [], []>} : vector<16x8xf32>, vector<8x8xf32>, vector<16x8xf32> -> vector<16x8xf32>
    %cst_138 = arith.constant 0.353553385 : f32
    %361 = vector.broadcast %cst_138 : f32 to vector<16x8xf32>
    %362 = arith.mulf %360, %361 : vector<16x8xf32>
    %363 = arith.addf %362, %192 : vector<16x8xf32>
    %cst_139 = arith.constant dense<0xFF800000> : vector<16xf32>
    %364 = vector.multi_reduction <maximumf>, %363, %cst_139 [1] : vector<16x8xf32> to vector<16xf32>
    %365 = vector.shape_cast %364 : vector<16xf32> to vector<16x1xf32>
    %366 = vector.broadcast %365 : vector<16x1xf32> to vector<16x8xf32>
    %367 = arith.subf %363, %366 : vector<16x8xf32>
    %368 = math.exp %367 : vector<16x8xf32>
    %cst_140 = arith.constant dense<0.000000e+00> : vector<16xf32>
    %369 = vector.multi_reduction <add>, %368, %cst_140 [1] : vector<16x8xf32> to vector<16xf32>
    %370 = vector.shape_cast %369 : vector<16xf32> to vector<16x1xf32>
    %371 = vector.broadcast %370 : vector<16x1xf32> to vector<16x8xf32>
    %372 = arith.divf %368, %371 : vector<16x8xf32>
    %373 = vector.extract_strided_slice %306 {offsets = [0, 24], sizes = [8, 8], strides = [1, 1]} : vector<8x32xf32> to vector<8x8xf32>
    %cst_141 = arith.constant dense<0.000000e+00> : vector<16x8xf32>
    %374 = tpu.matmul %372, %373, %cst_141 {dimension_numbers = #tpu.dot_dimension_numbers<[1], [0], [0], [1], [0, 0, 1, 1], [], []>} : vector<16x8xf32>, vector<8x8xf32>, vector<16x8xf32> -> vector<16x8xf32>
    %375 = tpu.concatenate %323, %340, %357, %374 in 1 : vector<16x8xf32>, vector<16x8xf32>, vector<16x8xf32>, vector<16x8xf32> -> vector<16x32xf32>
    %cst_142 = arith.constant dense<0.000000e+00> : vector<16x32xf32>
    %376 = tpu.matmul %375, %292, %cst_142 {dimension_numbers = #tpu.dot_dimension_numbers<[1], [0], [0], [1], [0, 0, 1, 1], [], []>} : vector<16x32xf32>, vector<32x32xf32>, vector<16x32xf32> -> vector<16x32xf32>
    %377 = vector.broadcast %294 : vector<1x32xf32> to vector<16x32xf32>
    %378 = arith.addf %376, %377 : vector<16x32xf32>
    %379 = arith.addf %190, %378 : vector<16x32xf32>
    %c0_143 = arith.constant 0 : index
    %c0_144 = arith.constant 0 : index
    %c0_145 = arith.constant 0 : index
    %380 = vector.load %arg18[%c0_143, %c0_144, %c0_145] : memref<2x4x32xf32, #tpu.memory_space<vmem>>, vector<1x1x32xf32>
    %381 = vector.shape_cast %380 : vector<1x1x32xf32> to vector<1x32xf32>
    %c0_146 = arith.constant 0 : index
    %c1_147 = arith.constant 1 : index
    %c0_148 = arith.constant 0 : index
    %382 = vector.load %arg18[%c0_146, %c1_147, %c0_148] : memref<2x4x32xf32, #tpu.memory_space<vmem>>, vector<1x1x32xf32>
    %383 = vector.shape_cast %382 : vector<1x1x32xf32> to vector<1x32xf32>
    %cst_149 = arith.constant dense<0.000000e+00> : vector<16xf32>
    %384 = vector.multi_reduction <add>, %379, %cst_149 [1] : vector<16x32xf32> to vector<16xf32>
    %385 = vector.shape_cast %384 : vector<16xf32> to vector<16x1xf32>
    %cst_150 = arith.constant 3.200000e+01 : f32
    %386 = vector.broadcast %cst_150 : f32 to vector<16x1xf32>
    %387 = arith.divf %385, %386 : vector<16x1xf32>
    %388 = vector.broadcast %387 : vector<16x1xf32> to vector<16x32xf32>
    %389 = arith.subf %379, %388 : vector<16x32xf32>
    %390 = arith.mulf %389, %389 : vector<16x32xf32>
    %cst_151 = arith.constant dense<0.000000e+00> : vector<16xf32>
    %391 = vector.multi_reduction <add>, %390, %cst_151 [1] : vector<16x32xf32> to vector<16xf32>
    %392 = vector.shape_cast %391 : vector<16xf32> to vector<16x1xf32>
    %cst_152 = arith.constant 3.200000e+01 : f32
    %393 = vector.broadcast %cst_152 : f32 to vector<16x1xf32>
    %394 = arith.divf %392, %393 : vector<16x1xf32>
    %395 = vector.broadcast %387 : vector<16x1xf32> to vector<16x32xf32>
    %396 = arith.subf %379, %395 : vector<16x32xf32>
    %cst_153 = arith.constant 9.99999974E-6 : f32
    %397 = vector.broadcast %cst_153 : f32 to vector<16x1xf32>
    %398 = arith.addf %394, %397 : vector<16x1xf32>
    %399 = math.rsqrt %398 : vector<16x1xf32>
    %400 = vector.broadcast %399 : vector<16x1xf32> to vector<16x32xf32>
    %401 = arith.mulf %396, %400 : vector<16x32xf32>
    %402 = vector.broadcast %381 : vector<1x32xf32> to vector<16x32xf32>
    %403 = arith.mulf %401, %402 : vector<16x32xf32>
    %404 = vector.broadcast %383 : vector<1x32xf32> to vector<16x32xf32>
    %405 = arith.addf %403, %404 : vector<16x32xf32>
    %c0_154 = arith.constant 0 : index
    %c0_155 = arith.constant 0 : index
    %c0_156 = arith.constant 0 : index
    %406 = vector.load %arg14[%c0_154, %c0_155, %c0_156] : memref<2x32x64xf32, #tpu.memory_space<vmem>>, vector<1x32x64xf32>
    %407 = vector.shape_cast %406 : vector<1x32x64xf32> to vector<32x64xf32>
    %cst_157 = arith.constant dense<0.000000e+00> : vector<16x64xf32>
    %408 = tpu.matmul %405, %407, %cst_157 {dimension_numbers = #tpu.dot_dimension_numbers<[1], [0], [0], [1], [0, 0, 1, 1], [], []>} : vector<16x32xf32>, vector<32x64xf32>, vector<16x64xf32> -> vector<16x64xf32>
    %c0_158 = arith.constant 0 : index
    %c0_159 = arith.constant 0 : index
    %c0_160 = arith.constant 0 : index
    %409 = vector.load %arg15[%c0_158, %c0_159, %c0_160] : memref<2x1x64xf32, #tpu.memory_space<vmem>>, vector<1x1x64xf32>
    %410 = vector.shape_cast %409 : vector<1x1x64xf32> to vector<1x64xf32>
    %411 = vector.broadcast %410 : vector<1x64xf32> to vector<16x64xf32>
    %412 = arith.addf %408, %411 : vector<16x64xf32>
    %cst_161 = arith.constant 0.000000e+00 : f32
    %413 = vector.broadcast %cst_161 : f32 to vector<16x64xf32>
    %414 = arith.maximumf %412, %413 : vector<16x64xf32>
    %c0_162 = arith.constant 0 : index
    %c0_163 = arith.constant 0 : index
    %c0_164 = arith.constant 0 : index
    %415 = vector.load %arg16[%c0_162, %c0_163, %c0_164] : memref<2x64x32xf32, #tpu.memory_space<vmem>>, vector<1x64x32xf32>
    %416 = vector.shape_cast %415 : vector<1x64x32xf32> to vector<64x32xf32>
    %cst_165 = arith.constant dense<0.000000e+00> : vector<16x32xf32>
    %417 = tpu.matmul %414, %416, %cst_165 {dimension_numbers = #tpu.dot_dimension_numbers<[1], [0], [0], [1], [0, 0, 1, 1], [], []>} : vector<16x64xf32>, vector<64x32xf32>, vector<16x32xf32> -> vector<16x32xf32>
    %c0_166 = arith.constant 0 : index
    %c0_167 = arith.constant 0 : index
    %c0_168 = arith.constant 0 : index
    %418 = vector.load %arg17[%c0_166, %c0_167, %c0_168] : memref<2x1x32xf32, #tpu.memory_space<vmem>>, vector<1x1x32xf32>
    %419 = vector.shape_cast %418 : vector<1x1x32xf32> to vector<1x32xf32>
    %420 = vector.broadcast %419 : vector<1x32xf32> to vector<16x32xf32>
    %421 = arith.addf %417, %420 : vector<16x32xf32>
    %422 = arith.addf %405, %421 : vector<16x32xf32>
    %c0_169 = arith.constant 0 : index
    %c2 = arith.constant 2 : index
    %c0_170 = arith.constant 0 : index
    %423 = vector.load %arg18[%c0_169, %c2, %c0_170] : memref<2x4x32xf32, #tpu.memory_space<vmem>>, vector<1x1x32xf32>
    %424 = vector.shape_cast %423 : vector<1x1x32xf32> to vector<1x32xf32>
    %c0_171 = arith.constant 0 : index
    %c3 = arith.constant 3 : index
    %c0_172 = arith.constant 0 : index
    %425 = vector.load %arg18[%c0_171, %c3, %c0_172] : memref<2x4x32xf32, #tpu.memory_space<vmem>>, vector<1x1x32xf32>
    %426 = vector.shape_cast %425 : vector<1x1x32xf32> to vector<1x32xf32>
    %cst_173 = arith.constant dense<0.000000e+00> : vector<16xf32>
    %427 = vector.multi_reduction <add>, %422, %cst_173 [1] : vector<16x32xf32> to vector<16xf32>
    %428 = vector.shape_cast %427 : vector<16xf32> to vector<16x1xf32>
    %cst_174 = arith.constant 3.200000e+01 : f32
    %429 = vector.broadcast %cst_174 : f32 to vector<16x1xf32>
    %430 = arith.divf %428, %429 : vector<16x1xf32>
    %431 = vector.broadcast %430 : vector<16x1xf32> to vector<16x32xf32>
    %432 = arith.subf %422, %431 : vector<16x32xf32>
    %433 = arith.mulf %432, %432 : vector<16x32xf32>
    %cst_175 = arith.constant dense<0.000000e+00> : vector<16xf32>
    %434 = vector.multi_reduction <add>, %433, %cst_175 [1] : vector<16x32xf32> to vector<16xf32>
    %435 = vector.shape_cast %434 : vector<16xf32> to vector<16x1xf32>
    %cst_176 = arith.constant 3.200000e+01 : f32
    %436 = vector.broadcast %cst_176 : f32 to vector<16x1xf32>
    %437 = arith.divf %435, %436 : vector<16x1xf32>
    %438 = vector.broadcast %430 : vector<16x1xf32> to vector<16x32xf32>
    %439 = arith.subf %422, %438 : vector<16x32xf32>
    %cst_177 = arith.constant 9.99999974E-6 : f32
    %440 = vector.broadcast %cst_177 : f32 to vector<16x1xf32>
    %441 = arith.addf %437, %440 : vector<16x1xf32>
    %442 = math.rsqrt %441 : vector<16x1xf32>
    %443 = vector.broadcast %442 : vector<16x1xf32> to vector<16x32xf32>
    %444 = arith.mulf %439, %443 : vector<16x32xf32>
    %445 = vector.broadcast %424 : vector<1x32xf32> to vector<16x32xf32>
    %446 = arith.mulf %444, %445 : vector<16x32xf32>
    %447 = vector.broadcast %426 : vector<1x32xf32> to vector<16x32xf32>
    %448 = arith.addf %446, %447 : vector<16x32xf32>
    %c1_178 = arith.constant 1 : index
    %c0_179 = arith.constant 0 : index
    %c0_180 = arith.constant 0 : index
    %449 = vector.load %arg9[%c1_178, %c0_179, %c0_180] : memref<2x8x32xf32, #tpu.memory_space<vmem>>, vector<1x8x32xf32>
    %450 = vector.shape_cast %449 : vector<1x8x32xf32> to vector<8x32xf32>
    %c1_181 = arith.constant 1 : index
    %c0_182 = arith.constant 0 : index
    %c0_183 = arith.constant 0 : index
    %c0_184 = arith.constant 0 : index
    %451 = vector.load %arg10[%c1_181, %c0_182, %c0_183, %c0_184] : memref<2x2x32x96xf32, #tpu.memory_space<vmem>>, vector<1x1x32x96xf32>
    %452 = vector.shape_cast %451 : vector<1x1x32x96xf32> to vector<32x96xf32>
    %c1_185 = arith.constant 1 : index
    %c0_186 = arith.constant 0 : index
    %c0_187 = arith.constant 0 : index
    %c0_188 = arith.constant 0 : index
    %453 = vector.load %arg11[%c1_185, %c0_186, %c0_187, %c0_188] : memref<2x2x1x96xf32, #tpu.memory_space<vmem>>, vector<1x1x1x96xf32>
    %454 = vector.shape_cast %453 : vector<1x1x1x96xf32> to vector<1x96xf32>
    %c1_189 = arith.constant 1 : index
    %c0_190 = arith.constant 0 : index
    %c0_191 = arith.constant 0 : index
    %c0_192 = arith.constant 0 : index
    %455 = vector.load %arg12[%c1_189, %c0_190, %c0_191, %c0_192] : memref<2x2x32x32xf32, #tpu.memory_space<vmem>>, vector<1x1x32x32xf32>
    %456 = vector.shape_cast %455 : vector<1x1x32x32xf32> to vector<32x32xf32>
    %c1_193 = arith.constant 1 : index
    %c0_194 = arith.constant 0 : index
    %c0_195 = arith.constant 0 : index
    %c0_196 = arith.constant 0 : index
    %457 = vector.load %arg13[%c1_193, %c0_194, %c0_195, %c0_196] : memref<2x2x1x32xf32, #tpu.memory_space<vmem>>, vector<1x1x1x32xf32>
    %458 = vector.shape_cast %457 : vector<1x1x1x32xf32> to vector<1x32xf32>
    %459 = vector.extract_strided_slice %452 {offsets = [0, 0], sizes = [32, 32], strides = [1, 1]} : vector<32x96xf32> to vector<32x32xf32>
    %cst_197 = arith.constant dense<0.000000e+00> : vector<8x32xf32>
    %460 = tpu.matmul %450, %459, %cst_197 {dimension_numbers = #tpu.dot_dimension_numbers<[1], [0], [0], [1], [0, 0, 1, 1], [], []>} : vector<8x32xf32>, vector<32x32xf32>, vector<8x32xf32> -> vector<8x32xf32>
    %461 = vector.extract_strided_slice %454 {offsets = [0, 0], sizes = [1, 32], strides = [1, 1]} : vector<1x96xf32> to vector<1x32xf32>
    %462 = vector.broadcast %461 : vector<1x32xf32> to vector<8x32xf32>
    %463 = arith.addf %460, %462 : vector<8x32xf32>
    %464 = vector.extract_strided_slice %452 {offsets = [0, 32], sizes = [32, 64], strides = [1, 1]} : vector<32x96xf32> to vector<32x64xf32>
    %cst_198 = arith.constant dense<0.000000e+00> : vector<16x64xf32>
    %465 = tpu.matmul %448, %464, %cst_198 {dimension_numbers = #tpu.dot_dimension_numbers<[1], [0], [0], [1], [0, 0, 1, 1], [], []>} : vector<16x32xf32>, vector<32x64xf32>, vector<16x64xf32> -> vector<16x64xf32>
    %466 = vector.extract_strided_slice %454 {offsets = [0, 32], sizes = [1, 64], strides = [1, 1]} : vector<1x96xf32> to vector<1x64xf32>
    %467 = vector.broadcast %466 : vector<1x64xf32> to vector<16x64xf32>
    %468 = arith.addf %465, %467 : vector<16x64xf32>
    %469 = vector.extract_strided_slice %468 {offsets = [0, 0], sizes = [16, 32], strides = [1, 1]} : vector<16x64xf32> to vector<16x32xf32>
    %470 = vector.extract_strided_slice %468 {offsets = [0, 32], sizes = [16, 32], strides = [1, 1]} : vector<16x64xf32> to vector<16x32xf32>
    %471 = vector.extract_strided_slice %463 {offsets = [0, 0], sizes = [8, 8], strides = [1, 1]} : vector<8x32xf32> to vector<8x8xf32>
    %472 = vector.extract_strided_slice %469 {offsets = [0, 0], sizes = [16, 8], strides = [1, 1]} : vector<16x32xf32> to vector<16x8xf32>
    %cst_199 = arith.constant dense<0.000000e+00> : vector<8x16xf32>
    %473 = tpu.matmul %471, %472, %cst_199 {dimension_numbers = #tpu.dot_dimension_numbers<[1], [1], [0], [0], [0, 0, 1, 0], [], []>} : vector<8x8xf32>, vector<16x8xf32>, vector<8x16xf32> -> vector<8x16xf32>
    %cst_200 = arith.constant 0.353553385 : f32
    %474 = vector.broadcast %cst_200 : f32 to vector<8x16xf32>
    %475 = arith.mulf %473, %474 : vector<8x16xf32>
    %476 = arith.addf %475, %191 : vector<8x16xf32>
    %cst_201 = arith.constant dense<0xFF800000> : vector<8xf32>
    %477 = vector.multi_reduction <maximumf>, %476, %cst_201 [1] : vector<8x16xf32> to vector<8xf32>
    %478 = vector.shape_cast %477 : vector<8xf32> to vector<8x1xf32>
    %479 = vector.broadcast %478 : vector<8x1xf32> to vector<8x16xf32>
    %480 = arith.subf %476, %479 : vector<8x16xf32>
    %481 = math.exp %480 : vector<8x16xf32>
    %cst_202 = arith.constant dense<0.000000e+00> : vector<8xf32>
    %482 = vector.multi_reduction <add>, %481, %cst_202 [1] : vector<8x16xf32> to vector<8xf32>
    %483 = vector.shape_cast %482 : vector<8xf32> to vector<8x1xf32>
    %484 = vector.broadcast %483 : vector<8x1xf32> to vector<8x16xf32>
    %485 = arith.divf %481, %484 : vector<8x16xf32>
    %486 = vector.extract_strided_slice %470 {offsets = [0, 0], sizes = [16, 8], strides = [1, 1]} : vector<16x32xf32> to vector<16x8xf32>
    %cst_203 = arith.constant dense<0.000000e+00> : vector<8x8xf32>
    %487 = tpu.matmul %485, %486, %cst_203 {dimension_numbers = #tpu.dot_dimension_numbers<[1], [0], [0], [1], [0, 0, 1, 1], [], []>} : vector<8x16xf32>, vector<16x8xf32>, vector<8x8xf32> -> vector<8x8xf32>
    %488 = vector.extract_strided_slice %463 {offsets = [0, 8], sizes = [8, 8], strides = [1, 1]} : vector<8x32xf32> to vector<8x8xf32>
    %489 = vector.extract_strided_slice %469 {offsets = [0, 8], sizes = [16, 8], strides = [1, 1]} : vector<16x32xf32> to vector<16x8xf32>
    %cst_204 = arith.constant dense<0.000000e+00> : vector<8x16xf32>
    %490 = tpu.matmul %488, %489, %cst_204 {dimension_numbers = #tpu.dot_dimension_numbers<[1], [1], [0], [0], [0, 0, 1, 0], [], []>} : vector<8x8xf32>, vector<16x8xf32>, vector<8x16xf32> -> vector<8x16xf32>
    %cst_205 = arith.constant 0.353553385 : f32
    %491 = vector.broadcast %cst_205 : f32 to vector<8x16xf32>
    %492 = arith.mulf %490, %491 : vector<8x16xf32>
    %493 = arith.addf %492, %191 : vector<8x16xf32>
    %cst_206 = arith.constant dense<0xFF800000> : vector<8xf32>
    %494 = vector.multi_reduction <maximumf>, %493, %cst_206 [1] : vector<8x16xf32> to vector<8xf32>
    %495 = vector.shape_cast %494 : vector<8xf32> to vector<8x1xf32>
    %496 = vector.broadcast %495 : vector<8x1xf32> to vector<8x16xf32>
    %497 = arith.subf %493, %496 : vector<8x16xf32>
    %498 = math.exp %497 : vector<8x16xf32>
    %cst_207 = arith.constant dense<0.000000e+00> : vector<8xf32>
    %499 = vector.multi_reduction <add>, %498, %cst_207 [1] : vector<8x16xf32> to vector<8xf32>
    %500 = vector.shape_cast %499 : vector<8xf32> to vector<8x1xf32>
    %501 = vector.broadcast %500 : vector<8x1xf32> to vector<8x16xf32>
    %502 = arith.divf %498, %501 : vector<8x16xf32>
    %503 = vector.extract_strided_slice %470 {offsets = [0, 8], sizes = [16, 8], strides = [1, 1]} : vector<16x32xf32> to vector<16x8xf32>
    %cst_208 = arith.constant dense<0.000000e+00> : vector<8x8xf32>
    %504 = tpu.matmul %502, %503, %cst_208 {dimension_numbers = #tpu.dot_dimension_numbers<[1], [0], [0], [1], [0, 0, 1, 1], [], []>} : vector<8x16xf32>, vector<16x8xf32>, vector<8x8xf32> -> vector<8x8xf32>
    %505 = vector.extract_strided_slice %463 {offsets = [0, 16], sizes = [8, 8], strides = [1, 1]} : vector<8x32xf32> to vector<8x8xf32>
    %506 = vector.extract_strided_slice %469 {offsets = [0, 16], sizes = [16, 8], strides = [1, 1]} : vector<16x32xf32> to vector<16x8xf32>
    %cst_209 = arith.constant dense<0.000000e+00> : vector<8x16xf32>
    %507 = tpu.matmul %505, %506, %cst_209 {dimension_numbers = #tpu.dot_dimension_numbers<[1], [1], [0], [0], [0, 0, 1, 0], [], []>} : vector<8x8xf32>, vector<16x8xf32>, vector<8x16xf32> -> vector<8x16xf32>
    %cst_210 = arith.constant 0.353553385 : f32
    %508 = vector.broadcast %cst_210 : f32 to vector<8x16xf32>
    %509 = arith.mulf %507, %508 : vector<8x16xf32>
    %510 = arith.addf %509, %191 : vector<8x16xf32>
    %cst_211 = arith.constant dense<0xFF800000> : vector<8xf32>
    %511 = vector.multi_reduction <maximumf>, %510, %cst_211 [1] : vector<8x16xf32> to vector<8xf32>
    %512 = vector.shape_cast %511 : vector<8xf32> to vector<8x1xf32>
    %513 = vector.broadcast %512 : vector<8x1xf32> to vector<8x16xf32>
    %514 = arith.subf %510, %513 : vector<8x16xf32>
    %515 = math.exp %514 : vector<8x16xf32>
    %cst_212 = arith.constant dense<0.000000e+00> : vector<8xf32>
    %516 = vector.multi_reduction <add>, %515, %cst_212 [1] : vector<8x16xf32> to vector<8xf32>
    %517 = vector.shape_cast %516 : vector<8xf32> to vector<8x1xf32>
    %518 = vector.broadcast %517 : vector<8x1xf32> to vector<8x16xf32>
    %519 = arith.divf %515, %518 : vector<8x16xf32>
    %520 = vector.extract_strided_slice %470 {offsets = [0, 16], sizes = [16, 8], strides = [1, 1]} : vector<16x32xf32> to vector<16x8xf32>
    %cst_213 = arith.constant dense<0.000000e+00> : vector<8x8xf32>
    %521 = tpu.matmul %519, %520, %cst_213 {dimension_numbers = #tpu.dot_dimension_numbers<[1], [0], [0], [1], [0, 0, 1, 1], [], []>} : vector<8x16xf32>, vector<16x8xf32>, vector<8x8xf32> -> vector<8x8xf32>
    %522 = vector.extract_strided_slice %463 {offsets = [0, 24], sizes = [8, 8], strides = [1, 1]} : vector<8x32xf32> to vector<8x8xf32>
    %523 = vector.extract_strided_slice %469 {offsets = [0, 24], sizes = [16, 8], strides = [1, 1]} : vector<16x32xf32> to vector<16x8xf32>
    %cst_214 = arith.constant dense<0.000000e+00> : vector<8x16xf32>
    %524 = tpu.matmul %522, %523, %cst_214 {dimension_numbers = #tpu.dot_dimension_numbers<[1], [1], [0], [0], [0, 0, 1, 0], [], []>} : vector<8x8xf32>, vector<16x8xf32>, vector<8x16xf32> -> vector<8x16xf32>
    %cst_215 = arith.constant 0.353553385 : f32
    %525 = vector.broadcast %cst_215 : f32 to vector<8x16xf32>
    %526 = arith.mulf %524, %525 : vector<8x16xf32>
    %527 = arith.addf %526, %191 : vector<8x16xf32>
    %cst_216 = arith.constant dense<0xFF800000> : vector<8xf32>
    %528 = vector.multi_reduction <maximumf>, %527, %cst_216 [1] : vector<8x16xf32> to vector<8xf32>
    %529 = vector.shape_cast %528 : vector<8xf32> to vector<8x1xf32>
    %530 = vector.broadcast %529 : vector<8x1xf32> to vector<8x16xf32>
    %531 = arith.subf %527, %530 : vector<8x16xf32>
    %532 = math.exp %531 : vector<8x16xf32>
    %cst_217 = arith.constant dense<0.000000e+00> : vector<8xf32>
    %533 = vector.multi_reduction <add>, %532, %cst_217 [1] : vector<8x16xf32> to vector<8xf32>
    %534 = vector.shape_cast %533 : vector<8xf32> to vector<8x1xf32>
    %535 = vector.broadcast %534 : vector<8x1xf32> to vector<8x16xf32>
    %536 = arith.divf %532, %535 : vector<8x16xf32>
    %537 = vector.extract_strided_slice %470 {offsets = [0, 24], sizes = [16, 8], strides = [1, 1]} : vector<16x32xf32> to vector<16x8xf32>
    %cst_218 = arith.constant dense<0.000000e+00> : vector<8x8xf32>
    %538 = tpu.matmul %536, %537, %cst_218 {dimension_numbers = #tpu.dot_dimension_numbers<[1], [0], [0], [1], [0, 0, 1, 1], [], []>} : vector<8x16xf32>, vector<16x8xf32>, vector<8x8xf32> -> vector<8x8xf32>
    %539 = tpu.concatenate %487, %504, %521, %538 in 1 : vector<8x8xf32>, vector<8x8xf32>, vector<8x8xf32>, vector<8x8xf32> -> vector<8x32xf32>
    %cst_219 = arith.constant dense<0.000000e+00> : vector<8x32xf32>
    %540 = tpu.matmul %539, %456, %cst_219 {dimension_numbers = #tpu.dot_dimension_numbers<[1], [0], [0], [1], [0, 0, 1, 1], [], []>} : vector<8x32xf32>, vector<32x32xf32>, vector<8x32xf32> -> vector<8x32xf32>
    %541 = vector.broadcast %458 : vector<1x32xf32> to vector<8x32xf32>
    %542 = arith.addf %540, %541 : vector<8x32xf32>
    %c1_220 = arith.constant 1 : index
    %c1_221 = arith.constant 1 : index
    %c0_222 = arith.constant 0 : index
    %c0_223 = arith.constant 0 : index
    %543 = vector.load %arg10[%c1_220, %c1_221, %c0_222, %c0_223] : memref<2x2x32x96xf32, #tpu.memory_space<vmem>>, vector<1x1x32x96xf32>
    %544 = vector.shape_cast %543 : vector<1x1x32x96xf32> to vector<32x96xf32>
    %c1_224 = arith.constant 1 : index
    %c1_225 = arith.constant 1 : index
    %c0_226 = arith.constant 0 : index
    %c0_227 = arith.constant 0 : index
    %545 = vector.load %arg11[%c1_224, %c1_225, %c0_226, %c0_227] : memref<2x2x1x96xf32, #tpu.memory_space<vmem>>, vector<1x1x1x96xf32>
    %546 = vector.shape_cast %545 : vector<1x1x1x96xf32> to vector<1x96xf32>
    %c1_228 = arith.constant 1 : index
    %c1_229 = arith.constant 1 : index
    %c0_230 = arith.constant 0 : index
    %c0_231 = arith.constant 0 : index
    %547 = vector.load %arg12[%c1_228, %c1_229, %c0_230, %c0_231] : memref<2x2x32x32xf32, #tpu.memory_space<vmem>>, vector<1x1x32x32xf32>
    %548 = vector.shape_cast %547 : vector<1x1x32x32xf32> to vector<32x32xf32>
    %c1_232 = arith.constant 1 : index
    %c1_233 = arith.constant 1 : index
    %c0_234 = arith.constant 0 : index
    %c0_235 = arith.constant 0 : index
    %549 = vector.load %arg13[%c1_232, %c1_233, %c0_234, %c0_235] : memref<2x2x1x32xf32, #tpu.memory_space<vmem>>, vector<1x1x1x32xf32>
    %550 = vector.shape_cast %549 : vector<1x1x1x32xf32> to vector<1x32xf32>
    %551 = vector.extract_strided_slice %544 {offsets = [0, 0], sizes = [32, 32], strides = [1, 1]} : vector<32x96xf32> to vector<32x32xf32>
    %cst_236 = arith.constant dense<0.000000e+00> : vector<16x32xf32>
    %552 = tpu.matmul %448, %551, %cst_236 {dimension_numbers = #tpu.dot_dimension_numbers<[1], [0], [0], [1], [0, 0, 1, 1], [], []>} : vector<16x32xf32>, vector<32x32xf32>, vector<16x32xf32> -> vector<16x32xf32>
    %553 = vector.extract_strided_slice %546 {offsets = [0, 0], sizes = [1, 32], strides = [1, 1]} : vector<1x96xf32> to vector<1x32xf32>
    %554 = vector.broadcast %553 : vector<1x32xf32> to vector<16x32xf32>
    %555 = arith.addf %552, %554 : vector<16x32xf32>
    %556 = vector.extract_strided_slice %544 {offsets = [0, 32], sizes = [32, 64], strides = [1, 1]} : vector<32x96xf32> to vector<32x64xf32>
    %cst_237 = arith.constant dense<0.000000e+00> : vector<8x64xf32>
    %557 = tpu.matmul %542, %556, %cst_237 {dimension_numbers = #tpu.dot_dimension_numbers<[1], [0], [0], [1], [0, 0, 1, 1], [], []>} : vector<8x32xf32>, vector<32x64xf32>, vector<8x64xf32> -> vector<8x64xf32>
    %558 = vector.extract_strided_slice %546 {offsets = [0, 32], sizes = [1, 64], strides = [1, 1]} : vector<1x96xf32> to vector<1x64xf32>
    %559 = vector.broadcast %558 : vector<1x64xf32> to vector<8x64xf32>
    %560 = arith.addf %557, %559 : vector<8x64xf32>
    %561 = vector.extract_strided_slice %560 {offsets = [0, 0], sizes = [8, 32], strides = [1, 1]} : vector<8x64xf32> to vector<8x32xf32>
    %562 = vector.extract_strided_slice %560 {offsets = [0, 32], sizes = [8, 32], strides = [1, 1]} : vector<8x64xf32> to vector<8x32xf32>
    %563 = vector.extract_strided_slice %555 {offsets = [0, 0], sizes = [16, 8], strides = [1, 1]} : vector<16x32xf32> to vector<16x8xf32>
    %564 = vector.extract_strided_slice %561 {offsets = [0, 0], sizes = [8, 8], strides = [1, 1]} : vector<8x32xf32> to vector<8x8xf32>
    %cst_238 = arith.constant dense<0.000000e+00> : vector<16x8xf32>
    %565 = tpu.matmul %563, %564, %cst_238 {dimension_numbers = #tpu.dot_dimension_numbers<[1], [1], [0], [0], [0, 0, 1, 0], [], []>} : vector<16x8xf32>, vector<8x8xf32>, vector<16x8xf32> -> vector<16x8xf32>
    %cst_239 = arith.constant 0.353553385 : f32
    %566 = vector.broadcast %cst_239 : f32 to vector<16x8xf32>
    %567 = arith.mulf %565, %566 : vector<16x8xf32>
    %568 = arith.addf %567, %192 : vector<16x8xf32>
    %cst_240 = arith.constant dense<0xFF800000> : vector<16xf32>
    %569 = vector.multi_reduction <maximumf>, %568, %cst_240 [1] : vector<16x8xf32> to vector<16xf32>
    %570 = vector.shape_cast %569 : vector<16xf32> to vector<16x1xf32>
    %571 = vector.broadcast %570 : vector<16x1xf32> to vector<16x8xf32>
    %572 = arith.subf %568, %571 : vector<16x8xf32>
    %573 = math.exp %572 : vector<16x8xf32>
    %cst_241 = arith.constant dense<0.000000e+00> : vector<16xf32>
    %574 = vector.multi_reduction <add>, %573, %cst_241 [1] : vector<16x8xf32> to vector<16xf32>
    %575 = vector.shape_cast %574 : vector<16xf32> to vector<16x1xf32>
    %576 = vector.broadcast %575 : vector<16x1xf32> to vector<16x8xf32>
    %577 = arith.divf %573, %576 : vector<16x8xf32>
    %578 = vector.extract_strided_slice %562 {offsets = [0, 0], sizes = [8, 8], strides = [1, 1]} : vector<8x32xf32> to vector<8x8xf32>
    %cst_242 = arith.constant dense<0.000000e+00> : vector<16x8xf32>
    %579 = tpu.matmul %577, %578, %cst_242 {dimension_numbers = #tpu.dot_dimension_numbers<[1], [0], [0], [1], [0, 0, 1, 1], [], []>} : vector<16x8xf32>, vector<8x8xf32>, vector<16x8xf32> -> vector<16x8xf32>
    %580 = vector.extract_strided_slice %555 {offsets = [0, 8], sizes = [16, 8], strides = [1, 1]} : vector<16x32xf32> to vector<16x8xf32>
    %581 = vector.extract_strided_slice %561 {offsets = [0, 8], sizes = [8, 8], strides = [1, 1]} : vector<8x32xf32> to vector<8x8xf32>
    %cst_243 = arith.constant dense<0.000000e+00> : vector<16x8xf32>
    %582 = tpu.matmul %580, %581, %cst_243 {dimension_numbers = #tpu.dot_dimension_numbers<[1], [1], [0], [0], [0, 0, 1, 0], [], []>} : vector<16x8xf32>, vector<8x8xf32>, vector<16x8xf32> -> vector<16x8xf32>
    %cst_244 = arith.constant 0.353553385 : f32
    %583 = vector.broadcast %cst_244 : f32 to vector<16x8xf32>
    %584 = arith.mulf %582, %583 : vector<16x8xf32>
    %585 = arith.addf %584, %192 : vector<16x8xf32>
    %cst_245 = arith.constant dense<0xFF800000> : vector<16xf32>
    %586 = vector.multi_reduction <maximumf>, %585, %cst_245 [1] : vector<16x8xf32> to vector<16xf32>
    %587 = vector.shape_cast %586 : vector<16xf32> to vector<16x1xf32>
    %588 = vector.broadcast %587 : vector<16x1xf32> to vector<16x8xf32>
    %589 = arith.subf %585, %588 : vector<16x8xf32>
    %590 = math.exp %589 : vector<16x8xf32>
    %cst_246 = arith.constant dense<0.000000e+00> : vector<16xf32>
    %591 = vector.multi_reduction <add>, %590, %cst_246 [1] : vector<16x8xf32> to vector<16xf32>
    %592 = vector.shape_cast %591 : vector<16xf32> to vector<16x1xf32>
    %593 = vector.broadcast %592 : vector<16x1xf32> to vector<16x8xf32>
    %594 = arith.divf %590, %593 : vector<16x8xf32>
    %595 = vector.extract_strided_slice %562 {offsets = [0, 8], sizes = [8, 8], strides = [1, 1]} : vector<8x32xf32> to vector<8x8xf32>
    %cst_247 = arith.constant dense<0.000000e+00> : vector<16x8xf32>
    %596 = tpu.matmul %594, %595, %cst_247 {dimension_numbers = #tpu.dot_dimension_numbers<[1], [0], [0], [1], [0, 0, 1, 1], [], []>} : vector<16x8xf32>, vector<8x8xf32>, vector<16x8xf32> -> vector<16x8xf32>
    %597 = vector.extract_strided_slice %555 {offsets = [0, 16], sizes = [16, 8], strides = [1, 1]} : vector<16x32xf32> to vector<16x8xf32>
    %598 = vector.extract_strided_slice %561 {offsets = [0, 16], sizes = [8, 8], strides = [1, 1]} : vector<8x32xf32> to vector<8x8xf32>
    %cst_248 = arith.constant dense<0.000000e+00> : vector<16x8xf32>
    %599 = tpu.matmul %597, %598, %cst_248 {dimension_numbers = #tpu.dot_dimension_numbers<[1], [1], [0], [0], [0, 0, 1, 0], [], []>} : vector<16x8xf32>, vector<8x8xf32>, vector<16x8xf32> -> vector<16x8xf32>
    %cst_249 = arith.constant 0.353553385 : f32
    %600 = vector.broadcast %cst_249 : f32 to vector<16x8xf32>
    %601 = arith.mulf %599, %600 : vector<16x8xf32>
    %602 = arith.addf %601, %192 : vector<16x8xf32>
    %cst_250 = arith.constant dense<0xFF800000> : vector<16xf32>
    %603 = vector.multi_reduction <maximumf>, %602, %cst_250 [1] : vector<16x8xf32> to vector<16xf32>
    %604 = vector.shape_cast %603 : vector<16xf32> to vector<16x1xf32>
    %605 = vector.broadcast %604 : vector<16x1xf32> to vector<16x8xf32>
    %606 = arith.subf %602, %605 : vector<16x8xf32>
    %607 = math.exp %606 : vector<16x8xf32>
    %cst_251 = arith.constant dense<0.000000e+00> : vector<16xf32>
    %608 = vector.multi_reduction <add>, %607, %cst_251 [1] : vector<16x8xf32> to vector<16xf32>
    %609 = vector.shape_cast %608 : vector<16xf32> to vector<16x1xf32>
    %610 = vector.broadcast %609 : vector<16x1xf32> to vector<16x8xf32>
    %611 = arith.divf %607, %610 : vector<16x8xf32>
    %612 = vector.extract_strided_slice %562 {offsets = [0, 16], sizes = [8, 8], strides = [1, 1]} : vector<8x32xf32> to vector<8x8xf32>
    %cst_252 = arith.constant dense<0.000000e+00> : vector<16x8xf32>
    %613 = tpu.matmul %611, %612, %cst_252 {dimension_numbers = #tpu.dot_dimension_numbers<[1], [0], [0], [1], [0, 0, 1, 1], [], []>} : vector<16x8xf32>, vector<8x8xf32>, vector<16x8xf32> -> vector<16x8xf32>
    %614 = vector.extract_strided_slice %555 {offsets = [0, 24], sizes = [16, 8], strides = [1, 1]} : vector<16x32xf32> to vector<16x8xf32>
    %615 = vector.extract_strided_slice %561 {offsets = [0, 24], sizes = [8, 8], strides = [1, 1]} : vector<8x32xf32> to vector<8x8xf32>
    %cst_253 = arith.constant dense<0.000000e+00> : vector<16x8xf32>
    %616 = tpu.matmul %614, %615, %cst_253 {dimension_numbers = #tpu.dot_dimension_numbers<[1], [1], [0], [0], [0, 0, 1, 0], [], []>} : vector<16x8xf32>, vector<8x8xf32>, vector<16x8xf32> -> vector<16x8xf32>
    %cst_254 = arith.constant 0.353553385 : f32
    %617 = vector.broadcast %cst_254 : f32 to vector<16x8xf32>
    %618 = arith.mulf %616, %617 : vector<16x8xf32>
    %619 = arith.addf %618, %192 : vector<16x8xf32>
    %cst_255 = arith.constant dense<0xFF800000> : vector<16xf32>
    %620 = vector.multi_reduction <maximumf>, %619, %cst_255 [1] : vector<16x8xf32> to vector<16xf32>
    %621 = vector.shape_cast %620 : vector<16xf32> to vector<16x1xf32>
    %622 = vector.broadcast %621 : vector<16x1xf32> to vector<16x8xf32>
    %623 = arith.subf %619, %622 : vector<16x8xf32>
    %624 = math.exp %623 : vector<16x8xf32>
    %cst_256 = arith.constant dense<0.000000e+00> : vector<16xf32>
    %625 = vector.multi_reduction <add>, %624, %cst_256 [1] : vector<16x8xf32> to vector<16xf32>
    %626 = vector.shape_cast %625 : vector<16xf32> to vector<16x1xf32>
    %627 = vector.broadcast %626 : vector<16x1xf32> to vector<16x8xf32>
    %628 = arith.divf %624, %627 : vector<16x8xf32>
    %629 = vector.extract_strided_slice %562 {offsets = [0, 24], sizes = [8, 8], strides = [1, 1]} : vector<8x32xf32> to vector<8x8xf32>
    %cst_257 = arith.constant dense<0.000000e+00> : vector<16x8xf32>
    %630 = tpu.matmul %628, %629, %cst_257 {dimension_numbers = #tpu.dot_dimension_numbers<[1], [0], [0], [1], [0, 0, 1, 1], [], []>} : vector<16x8xf32>, vector<8x8xf32>, vector<16x8xf32> -> vector<16x8xf32>
    %631 = tpu.concatenate %579, %596, %613, %630 in 1 : vector<16x8xf32>, vector<16x8xf32>, vector<16x8xf32>, vector<16x8xf32> -> vector<16x32xf32>
    %cst_258 = arith.constant dense<0.000000e+00> : vector<16x32xf32>
    %632 = tpu.matmul %631, %548, %cst_258 {dimension_numbers = #tpu.dot_dimension_numbers<[1], [0], [0], [1], [0, 0, 1, 1], [], []>} : vector<16x32xf32>, vector<32x32xf32>, vector<16x32xf32> -> vector<16x32xf32>
    %633 = vector.broadcast %550 : vector<1x32xf32> to vector<16x32xf32>
    %634 = arith.addf %632, %633 : vector<16x32xf32>
    %635 = arith.addf %448, %634 : vector<16x32xf32>
    %c1_259 = arith.constant 1 : index
    %c0_260 = arith.constant 0 : index
    %c0_261 = arith.constant 0 : index
    %636 = vector.load %arg18[%c1_259, %c0_260, %c0_261] : memref<2x4x32xf32, #tpu.memory_space<vmem>>, vector<1x1x32xf32>
    %637 = vector.shape_cast %636 : vector<1x1x32xf32> to vector<1x32xf32>
    %c1_262 = arith.constant 1 : index
    %c1_263 = arith.constant 1 : index
    %c0_264 = arith.constant 0 : index
    %638 = vector.load %arg18[%c1_262, %c1_263, %c0_264] : memref<2x4x32xf32, #tpu.memory_space<vmem>>, vector<1x1x32xf32>
    %639 = vector.shape_cast %638 : vector<1x1x32xf32> to vector<1x32xf32>
    %cst_265 = arith.constant dense<0.000000e+00> : vector<16xf32>
    %640 = vector.multi_reduction <add>, %635, %cst_265 [1] : vector<16x32xf32> to vector<16xf32>
    %641 = vector.shape_cast %640 : vector<16xf32> to vector<16x1xf32>
    %cst_266 = arith.constant 3.200000e+01 : f32
    %642 = vector.broadcast %cst_266 : f32 to vector<16x1xf32>
    %643 = arith.divf %641, %642 : vector<16x1xf32>
    %644 = vector.broadcast %643 : vector<16x1xf32> to vector<16x32xf32>
    %645 = arith.subf %635, %644 : vector<16x32xf32>
    %646 = arith.mulf %645, %645 : vector<16x32xf32>
    %cst_267 = arith.constant dense<0.000000e+00> : vector<16xf32>
    %647 = vector.multi_reduction <add>, %646, %cst_267 [1] : vector<16x32xf32> to vector<16xf32>
    %648 = vector.shape_cast %647 : vector<16xf32> to vector<16x1xf32>
    %cst_268 = arith.constant 3.200000e+01 : f32
    %649 = vector.broadcast %cst_268 : f32 to vector<16x1xf32>
    %650 = arith.divf %648, %649 : vector<16x1xf32>
    %651 = vector.broadcast %643 : vector<16x1xf32> to vector<16x32xf32>
    %652 = arith.subf %635, %651 : vector<16x32xf32>
    %cst_269 = arith.constant 9.99999974E-6 : f32
    %653 = vector.broadcast %cst_269 : f32 to vector<16x1xf32>
    %654 = arith.addf %650, %653 : vector<16x1xf32>
    %655 = math.rsqrt %654 : vector<16x1xf32>
    %656 = vector.broadcast %655 : vector<16x1xf32> to vector<16x32xf32>
    %657 = arith.mulf %652, %656 : vector<16x32xf32>
    %658 = vector.broadcast %637 : vector<1x32xf32> to vector<16x32xf32>
    %659 = arith.mulf %657, %658 : vector<16x32xf32>
    %660 = vector.broadcast %639 : vector<1x32xf32> to vector<16x32xf32>
    %661 = arith.addf %659, %660 : vector<16x32xf32>
    %c1_270 = arith.constant 1 : index
    %c0_271 = arith.constant 0 : index
    %c0_272 = arith.constant 0 : index
    %662 = vector.load %arg14[%c1_270, %c0_271, %c0_272] : memref<2x32x64xf32, #tpu.memory_space<vmem>>, vector<1x32x64xf32>
    %663 = vector.shape_cast %662 : vector<1x32x64xf32> to vector<32x64xf32>
    %cst_273 = arith.constant dense<0.000000e+00> : vector<16x64xf32>
    %664 = tpu.matmul %661, %663, %cst_273 {dimension_numbers = #tpu.dot_dimension_numbers<[1], [0], [0], [1], [0, 0, 1, 1], [], []>} : vector<16x32xf32>, vector<32x64xf32>, vector<16x64xf32> -> vector<16x64xf32>
    %c1_274 = arith.constant 1 : index
    %c0_275 = arith.constant 0 : index
    %c0_276 = arith.constant 0 : index
    %665 = vector.load %arg15[%c1_274, %c0_275, %c0_276] : memref<2x1x64xf32, #tpu.memory_space<vmem>>, vector<1x1x64xf32>
    %666 = vector.shape_cast %665 : vector<1x1x64xf32> to vector<1x64xf32>
    %667 = vector.broadcast %666 : vector<1x64xf32> to vector<16x64xf32>
    %668 = arith.addf %664, %667 : vector<16x64xf32>
    %cst_277 = arith.constant 0.000000e+00 : f32
    %669 = vector.broadcast %cst_277 : f32 to vector<16x64xf32>
    %670 = arith.maximumf %668, %669 : vector<16x64xf32>
    %c1_278 = arith.constant 1 : index
    %c0_279 = arith.constant 0 : index
    %c0_280 = arith.constant 0 : index
    %671 = vector.load %arg16[%c1_278, %c0_279, %c0_280] : memref<2x64x32xf32, #tpu.memory_space<vmem>>, vector<1x64x32xf32>
    %672 = vector.shape_cast %671 : vector<1x64x32xf32> to vector<64x32xf32>
    %cst_281 = arith.constant dense<0.000000e+00> : vector<16x32xf32>
    %673 = tpu.matmul %670, %672, %cst_281 {dimension_numbers = #tpu.dot_dimension_numbers<[1], [0], [0], [1], [0, 0, 1, 1], [], []>} : vector<16x64xf32>, vector<64x32xf32>, vector<16x32xf32> -> vector<16x32xf32>
    %c1_282 = arith.constant 1 : index
    %c0_283 = arith.constant 0 : index
    %c0_284 = arith.constant 0 : index
    %674 = vector.load %arg17[%c1_282, %c0_283, %c0_284] : memref<2x1x32xf32, #tpu.memory_space<vmem>>, vector<1x1x32xf32>
    %675 = vector.shape_cast %674 : vector<1x1x32xf32> to vector<1x32xf32>
    %676 = vector.broadcast %675 : vector<1x32xf32> to vector<16x32xf32>
    %677 = arith.addf %673, %676 : vector<16x32xf32>
    %678 = arith.addf %661, %677 : vector<16x32xf32>
    %c1_285 = arith.constant 1 : index
    %c2_286 = arith.constant 2 : index
    %c0_287 = arith.constant 0 : index
    %679 = vector.load %arg18[%c1_285, %c2_286, %c0_287] : memref<2x4x32xf32, #tpu.memory_space<vmem>>, vector<1x1x32xf32>
    %680 = vector.shape_cast %679 : vector<1x1x32xf32> to vector<1x32xf32>
    %c1_288 = arith.constant 1 : index
    %c3_289 = arith.constant 3 : index
    %c0_290 = arith.constant 0 : index
    %681 = vector.load %arg18[%c1_288, %c3_289, %c0_290] : memref<2x4x32xf32, #tpu.memory_space<vmem>>, vector<1x1x32xf32>
    %682 = vector.shape_cast %681 : vector<1x1x32xf32> to vector<1x32xf32>
    %cst_291 = arith.constant dense<0.000000e+00> : vector<16xf32>
    %683 = vector.multi_reduction <add>, %678, %cst_291 [1] : vector<16x32xf32> to vector<16xf32>
    %684 = vector.shape_cast %683 : vector<16xf32> to vector<16x1xf32>
    %cst_292 = arith.constant 3.200000e+01 : f32
    %685 = vector.broadcast %cst_292 : f32 to vector<16x1xf32>
    %686 = arith.divf %684, %685 : vector<16x1xf32>
    %687 = vector.broadcast %686 : vector<16x1xf32> to vector<16x32xf32>
    %688 = arith.subf %678, %687 : vector<16x32xf32>
    %689 = arith.mulf %688, %688 : vector<16x32xf32>
    %cst_293 = arith.constant dense<0.000000e+00> : vector<16xf32>
    %690 = vector.multi_reduction <add>, %689, %cst_293 [1] : vector<16x32xf32> to vector<16xf32>
    %691 = vector.shape_cast %690 : vector<16xf32> to vector<16x1xf32>
    %cst_294 = arith.constant 3.200000e+01 : f32
    %692 = vector.broadcast %cst_294 : f32 to vector<16x1xf32>
    %693 = arith.divf %691, %692 : vector<16x1xf32>
    %694 = vector.broadcast %686 : vector<16x1xf32> to vector<16x32xf32>
    %695 = arith.subf %678, %694 : vector<16x32xf32>
    %cst_295 = arith.constant 9.99999974E-6 : f32
    %696 = vector.broadcast %cst_295 : f32 to vector<16x1xf32>
    %697 = arith.addf %693, %696 : vector<16x1xf32>
    %698 = math.rsqrt %697 : vector<16x1xf32>
    %699 = vector.broadcast %698 : vector<16x1xf32> to vector<16x32xf32>
    %700 = arith.mulf %695, %699 : vector<16x32xf32>
    %701 = vector.broadcast %680 : vector<1x32xf32> to vector<16x32xf32>
    %702 = arith.mulf %700, %701 : vector<16x32xf32>
    %703 = vector.broadcast %682 : vector<1x32xf32> to vector<16x32xf32>
    %704 = arith.addf %702, %703 : vector<16x32xf32>
    %c0_296 = arith.constant 0 : index
    %c0_297 = arith.constant 0 : index
    %705 = vector.load %arg20[%c0_296, %c0_297] : memref<3x32xf32, #tpu.memory_space<vmem>>, vector<1x32xf32>
    %c0_298 = arith.constant 0 : index
    %c0_299 = arith.constant 0 : index
    %706 = vector.load %arg19[%c0_298, %c0_299] : memref<64x32xf32, #tpu.memory_space<vmem>>, vector<32x32xf32>
    %cst_300 = arith.constant dense<0.000000e+00> : vector<16x32xf32>
    %707 = tpu.matmul %448, %706, %cst_300 {dimension_numbers = #tpu.dot_dimension_numbers<[1], [0], [0], [1], [0, 0, 1, 1], [], []>} : vector<16x32xf32>, vector<32x32xf32>, vector<16x32xf32> -> vector<16x32xf32>
    %708 = vector.broadcast %705 : vector<1x32xf32> to vector<16x32xf32>
    %709 = arith.addf %708, %707 : vector<16x32xf32>
    %c32 = arith.constant 32 : index
    %c0_301 = arith.constant 0 : index
    %710 = vector.load %arg19[%c32, %c0_301] : memref<64x32xf32, #tpu.memory_space<vmem>>, vector<32x32xf32>
    %cst_302 = arith.constant dense<0.000000e+00> : vector<16x32xf32>
    %711 = tpu.matmul %704, %710, %cst_302 {dimension_numbers = #tpu.dot_dimension_numbers<[1], [0], [0], [1], [0, 0, 1, 1], [], []>} : vector<16x32xf32>, vector<32x32xf32>, vector<16x32xf32> -> vector<16x32xf32>
    %712 = arith.addf %709, %711 : vector<16x32xf32>
    %713 = arith.addf %704, %712 : vector<16x32xf32>
    %c1_303 = arith.constant 1 : index
    %c0_304 = arith.constant 0 : index
    %714 = vector.load %arg20[%c1_303, %c0_304] : memref<3x32xf32, #tpu.memory_space<vmem>>, vector<1x32xf32>
    %c2_305 = arith.constant 2 : index
    %c0_306 = arith.constant 0 : index
    %715 = vector.load %arg20[%c2_305, %c0_306] : memref<3x32xf32, #tpu.memory_space<vmem>>, vector<1x32xf32>
    %cst_307 = arith.constant dense<0.000000e+00> : vector<16xf32>
    %716 = vector.multi_reduction <add>, %713, %cst_307 [1] : vector<16x32xf32> to vector<16xf32>
    %717 = vector.shape_cast %716 : vector<16xf32> to vector<16x1xf32>
    %cst_308 = arith.constant 3.200000e+01 : f32
    %718 = vector.broadcast %cst_308 : f32 to vector<16x1xf32>
    %719 = arith.divf %717, %718 : vector<16x1xf32>
    %720 = vector.broadcast %719 : vector<16x1xf32> to vector<16x32xf32>
    %721 = arith.subf %713, %720 : vector<16x32xf32>
    %722 = arith.mulf %721, %721 : vector<16x32xf32>
    %cst_309 = arith.constant dense<0.000000e+00> : vector<16xf32>
    %723 = vector.multi_reduction <add>, %722, %cst_309 [1] : vector<16x32xf32> to vector<16xf32>
    %724 = vector.shape_cast %723 : vector<16xf32> to vector<16x1xf32>
    %cst_310 = arith.constant 3.200000e+01 : f32
    %725 = vector.broadcast %cst_310 : f32 to vector<16x1xf32>
    %726 = arith.divf %724, %725 : vector<16x1xf32>
    %727 = vector.broadcast %719 : vector<16x1xf32> to vector<16x32xf32>
    %728 = arith.subf %713, %727 : vector<16x32xf32>
    %cst_311 = arith.constant 9.99999974E-6 : f32
    %729 = vector.broadcast %cst_311 : f32 to vector<16x1xf32>
    %730 = arith.addf %726, %729 : vector<16x1xf32>
    %731 = math.rsqrt %730 : vector<16x1xf32>
    %732 = vector.broadcast %731 : vector<16x1xf32> to vector<16x32xf32>
    %733 = arith.mulf %728, %732 : vector<16x32xf32>
    %734 = vector.broadcast %714 : vector<1x32xf32> to vector<16x32xf32>
    %735 = arith.mulf %733, %734 : vector<16x32xf32>
    %736 = vector.broadcast %715 : vector<1x32xf32> to vector<16x32xf32>
    %737 = arith.addf %735, %736 : vector<16x32xf32>
    %c0_312 = arith.constant 0 : index
    %c0_313 = arith.constant 0 : index
    %c0_314 = arith.constant 0 : index
    %738 = vector.load %arg21[%c0_312, %c0_313, %c0_314] : memref<2x32x64xf32, #tpu.memory_space<vmem>>, vector<1x32x64xf32>
    %739 = vector.shape_cast %738 : vector<1x32x64xf32> to vector<32x64xf32>
    %cst_315 = arith.constant dense<0.000000e+00> : vector<16x64xf32>
    %740 = tpu.matmul %737, %739, %cst_315 {dimension_numbers = #tpu.dot_dimension_numbers<[1], [0], [0], [1], [0, 0, 1, 1], [], []>} : vector<16x32xf32>, vector<32x64xf32>, vector<16x64xf32> -> vector<16x64xf32>
    %c0_316 = arith.constant 0 : index
    %c0_317 = arith.constant 0 : index
    %c0_318 = arith.constant 0 : index
    %741 = vector.load %arg22[%c0_316, %c0_317, %c0_318] : memref<2x1x64xf32, #tpu.memory_space<vmem>>, vector<1x1x64xf32>
    %742 = vector.shape_cast %741 : vector<1x1x64xf32> to vector<1x64xf32>
    %743 = vector.broadcast %742 : vector<1x64xf32> to vector<16x64xf32>
    %744 = arith.addf %740, %743 : vector<16x64xf32>
    %c1_319 = arith.constant 1 : index
    %c0_320 = arith.constant 0 : index
    %c0_321 = arith.constant 0 : index
    %745 = vector.load %arg21[%c1_319, %c0_320, %c0_321] : memref<2x32x64xf32, #tpu.memory_space<vmem>>, vector<1x32x64xf32>
    %746 = vector.shape_cast %745 : vector<1x32x64xf32> to vector<32x64xf32>
    %cst_322 = arith.constant dense<0.000000e+00> : vector<16x64xf32>
    %747 = tpu.matmul %737, %746, %cst_322 {dimension_numbers = #tpu.dot_dimension_numbers<[1], [0], [0], [1], [0, 0, 1, 1], [], []>} : vector<16x32xf32>, vector<32x64xf32>, vector<16x64xf32> -> vector<16x64xf32>
    %c1_323 = arith.constant 1 : index
    %c0_324 = arith.constant 0 : index
    %c0_325 = arith.constant 0 : index
    %748 = vector.load %arg22[%c1_323, %c0_324, %c0_325] : memref<2x1x64xf32, #tpu.memory_space<vmem>>, vector<1x1x64xf32>
    %749 = vector.shape_cast %748 : vector<1x1x64xf32> to vector<1x64xf32>
    %750 = vector.broadcast %749 : vector<1x64xf32> to vector<16x64xf32>
    %751 = arith.addf %747, %750 : vector<16x64xf32>
    %752 = tpu.concatenate %744, %751 in 1 : vector<16x64xf32>, vector<16x64xf32> -> vector<16x128xf32>
    %c0_326 = arith.constant 0 : index
    %c0_327 = arith.constant 0 : index
    %753 = vector.load %arg23[%c0_326, %c0_327] : memref<16x128xf32, #tpu.memory_space<vmem>>, vector<16x128xf32>
    tpu.vector_store %arg23[%c0_326, %c0_327], %752 {strides = array<i32>} : memref<16x128xf32, #tpu.memory_space<vmem>>, vector<16x128xf32>,
    return
  }
}

module attributes {stable_mosaic.version = 11 : i64} {
  func.func @_decoder_loop_kernel(%arg0: i32, %arg1: memref<2xi32, #tpu.memory_space<smem>>, %arg2: memref<16x128xf32, #tpu.memory_space<vmem>>, %arg3: memref<1x16xf32, #tpu.memory_space<vmem>>, %arg4: memref<40x32xf32, #tpu.memory_space<vmem>>, %arg5: memref<32x32xf32, #tpu.memory_space<vmem>>, %arg6: memref<2x32x256xf32, #tpu.memory_space<vmem>>, %arg7: memref<2x64x32xf32, #tpu.memory_space<vmem>>, %arg8: memref<2x1x288xf32, #tpu.memory_space<vmem>>, %arg9: memref<2x6x32xf32, #tpu.memory_space<vmem>>, %arg10: memref<64x32xf32, #tpu.memory_space<vmem>>, %arg11: memref<3x32xf32, #tpu.memory_space<vmem>>, %arg12: memref<32x128xf32, #tpu.memory_space<vmem>>, %arg13: memref<1x128xf32, #tpu.memory_space<vmem>>, %arg14: memref<21xi32, #tpu.memory_space<smem>>, %arg15: memref<21xf32, #tpu.memory_space<smem>>, %arg16: memref<20x32xf32, #tpu.memory_space<vmem>>, %arg17: memref<20x32xf32, #tpu.memory_space<vmem>>, %arg18: memref<20x32xf32, #tpu.memory_space<vmem>>, %arg19: memref<20x32xf32, #tpu.memory_space<vmem>>) attributes {dimension_semantics = [#tpu.dimension_semantics<arbitrary>], iteration_bounds = array<i64: 20>, scalar_prefetch = 1 : i64, scratch_operands = 4 : i64, tpu.core_type = #tpu.core_type<tc>, window_params = [{pipeline_mode = #tpu.pipeline_mode<synchronous>, transform_indices = @transform_0, window_bounds = array<i64: 16, 128>}, {pipeline_mode = #tpu.pipeline_mode<synchronous>, transform_indices = @transform_1, window_bounds = array<i64: 1, 16>}, {pipeline_mode = #tpu.pipeline_mode<synchronous>, transform_indices = @transform_2, window_bounds = array<i64: 40, 32>}, {pipeline_mode = #tpu.pipeline_mode<synchronous>, transform_indices = @transform_3, window_bounds = array<i64: 32, 32>}, {pipeline_mode = #tpu.pipeline_mode<synchronous>, transform_indices = @transform_4, window_bounds = array<i64: 2, 32, 256>}, {pipeline_mode = #tpu.pipeline_mode<synchronous>, transform_indices = @transform_5, window_bounds = array<i64: 2, 64, 32>}, {pipeline_mode = #tpu.pipeline_mode<synchronous>, transform_indices = @transform_6, window_bounds = array<i64: 2, 1, 288>}, {pipeline_mode = #tpu.pipeline_mode<synchronous>, transform_indices = @transform_7, window_bounds = array<i64: 2, 6, 32>}, {pipeline_mode = #tpu.pipeline_mode<synchronous>, transform_indices = @transform_8, window_bounds = array<i64: 64, 32>}, {pipeline_mode = #tpu.pipeline_mode<synchronous>, transform_indices = @transform_9, window_bounds = array<i64: 3, 32>}, {pipeline_mode = #tpu.pipeline_mode<synchronous>, transform_indices = @transform_10, window_bounds = array<i64: 32, 128>}, {pipeline_mode = #tpu.pipeline_mode<synchronous>, transform_indices = @transform_11, window_bounds = array<i64: 1, 128>}, {transform_indices = @transform_12, window_bounds = array<i64: 21>}, {transform_indices = @transform_13, window_bounds = array<i64: 21>}]} {
    %c0_i32 = arith.constant 0 : i32
    %0 = arith.cmpi eq, %arg0, %c0_i32 : i32
    %1 = arith.extui %0 : i1 to i32
    %c0_i32_0 = arith.constant 0 : i32
    %2 = arith.cmpi ne, %1, %c0_i32_0 : i32
    scf.if %2 {
      %c0_220 = arith.constant 0 : index
      %589 = memref.load %arg1[%c0_220] : memref<2xi32, #tpu.memory_space<smem>>
      %c0_221 = arith.constant 0 : index
      %590 = memref.load %arg14[%c0_221] : memref<21xi32, #tpu.memory_space<smem>>
      memref.store %589, %arg14[%c0_221] : memref<21xi32, #tpu.memory_space<smem>>
      %cst_222 = arith.constant 0.000000e+00 : f32
      %c0_223 = arith.constant 0 : index
      %591 = memref.load %arg15[%c0_223] : memref<21xf32, #tpu.memory_space<smem>>
      memref.store %cst_222, %arg15[%c0_223] : memref<21xf32, #tpu.memory_space<smem>>
      %cst_224 = arith.constant 0.000000e+00 : f32
      %592 = vector.broadcast %cst_224 : f32 to vector<20x32xf32>
      %c0_225 = arith.constant 0 : index
      %c0_226 = arith.constant 0 : index
      %593 = vector.load %arg16[%c0_225, %c0_226] : memref<20x32xf32, #tpu.memory_space<vmem>>, vector<20x32xf32>
      tpu.vector_store %arg16[%c0_225, %c0_226], %592 {strides = array<i32>} : memref<20x32xf32, #tpu.memory_space<vmem>>, vector<20x32xf32>,
      %cst_227 = arith.constant 0.000000e+00 : f32
      %594 = vector.broadcast %cst_227 : f32 to vector<20x32xf32>
      %c0_228 = arith.constant 0 : index
      %c0_229 = arith.constant 0 : index
      %595 = vector.load %arg17[%c0_228, %c0_229] : memref<20x32xf32, #tpu.memory_space<vmem>>, vector<20x32xf32>
      tpu.vector_store %arg17[%c0_228, %c0_229], %594 {strides = array<i32>} : memref<20x32xf32, #tpu.memory_space<vmem>>, vector<20x32xf32>,
      %cst_230 = arith.constant 0.000000e+00 : f32
      %596 = vector.broadcast %cst_230 : f32 to vector<20x32xf32>
      %c0_231 = arith.constant 0 : index
      %c0_232 = arith.constant 0 : index
      %597 = vector.load %arg18[%c0_231, %c0_232] : memref<20x32xf32, #tpu.memory_space<vmem>>, vector<20x32xf32>
      tpu.vector_store %arg18[%c0_231, %c0_232], %596 {strides = array<i32>} : memref<20x32xf32, #tpu.memory_space<vmem>>, vector<20x32xf32>,
      %cst_233 = arith.constant 0.000000e+00 : f32
      %598 = vector.broadcast %cst_233 : f32 to vector<20x32xf32>
      %c0_234 = arith.constant 0 : index
      %c0_235 = arith.constant 0 : index
      %599 = vector.load %arg19[%c0_234, %c0_235] : memref<20x32xf32, #tpu.memory_space<vmem>>, vector<20x32xf32>
      tpu.vector_store %arg19[%c0_234, %c0_235], %598 {strides = array<i32>} : memref<20x32xf32, #tpu.memory_space<vmem>>, vector<20x32xf32>,
    } else {
    }
    %3 = arith.index_cast %arg0 : i32 to index
    %4 = memref.load %arg14[%3] : memref<21xi32, #tpu.memory_space<smem>>
    %c0_i32_1 = arith.constant 0 : i32
    %c39_i32 = arith.constant 39 : i32
    %5 = arith.maxsi %c0_i32_1, %4 : i32
    %6 = arith.minsi %c39_i32, %5 : i32
    %7 = arith.index_cast %6 : i32 to index
    %c0 = arith.constant 0 : index
    %8 = vector.load %arg4[%7, %c0] : memref<40x32xf32, #tpu.memory_space<vmem>>, vector<1x32xf32>
    %9 = arith.index_cast %arg0 : i32 to index
    %c0_2 = arith.constant 0 : index
    %10 = vector.load %arg5[%9, %c0_2] : memref<32x32xf32, #tpu.memory_space<vmem>>, vector<1x32xf32>
    %11 = arith.addf %8, %10 : vector<1x32xf32>
    %12 = tpu.iota {dimensions = array<i32: 1>} : vector<1x20xi32>
    %13 = vector.broadcast %arg0 : i32 to vector<1x20xi32>
    %14 = arith.cmpi sle, %12, %13 : vector<1x20xi32>
    %cst = arith.constant 0.000000e+00 : f32
    %cst_3 = arith.constant -1.000000e+09 : f32
    %15 = vector.broadcast %cst : f32 to vector<1x20xf32>
    %16 = vector.broadcast %cst_3 : f32 to vector<1x20xf32>
    %17 = arith.select %14, %15, %16 : vector<1x20xi1>, vector<1x20xf32>
    %c0_4 = arith.constant 0 : index
    %c0_5 = arith.constant 0 : index
    %18 = vector.load %arg3[%c0_4, %c0_5] : memref<1x16xf32, #tpu.memory_space<vmem>>, vector<1x16xf32>
    %c0_6 = arith.constant 0 : index
    %c0_7 = arith.constant 0 : index
    %19 = vector.load %arg2[%c0_6, %c0_7] : memref<16x128xf32, #tpu.memory_space<vmem>>, vector<16x128xf32>
    %c0_8 = arith.constant 0 : index
    %c0_9 = arith.constant 0 : index
    %c0_10 = arith.constant 0 : index
    %20 = vector.load %arg6[%c0_8, %c0_9, %c0_10] : memref<2x32x256xf32, #tpu.memory_space<vmem>>, vector<1x32x256xf32>
    %21 = vector.shape_cast %20 : vector<1x32x256xf32> to vector<32x256xf32>
    %c0_11 = arith.constant 0 : index
    %c0_12 = arith.constant 0 : index
    %c0_13 = arith.constant 0 : index
    %22 = vector.load %arg8[%c0_11, %c0_12, %c0_13] : memref<2x1x288xf32, #tpu.memory_space<vmem>>, vector<1x1x288xf32>
    %23 = vector.shape_cast %22 : vector<1x1x288xf32> to vector<1x288xf32>
    %24 = vector.extract_strided_slice %21 {offsets = [0, 0], sizes = [32, 96], strides = [1, 1]} : vector<32x256xf32> to vector<32x96xf32>
    %cst_14 = arith.constant dense<0.000000e+00> : vector<1x96xf32>
    %25 = tpu.matmul %11, %24, %cst_14 {dimension_numbers = #tpu.dot_dimension_numbers<[1], [0], [0], [1], [0, 0, 1, 1], [], []>} : vector<1x32xf32>, vector<32x96xf32>, vector<1x96xf32> -> vector<1x96xf32>
    %26 = vector.extract_strided_slice %23 {offsets = [0, 0], sizes = [1, 96], strides = [1, 1]} : vector<1x288xf32> to vector<1x96xf32>
    %27 = arith.addf %25, %26 : vector<1x96xf32>
    %28 = vector.extract_strided_slice %27 {offsets = [0, 0], sizes = [1, 32], strides = [1, 1]} : vector<1x96xf32> to vector<1x32xf32>
    %29 = vector.extract_strided_slice %27 {offsets = [0, 32], sizes = [1, 32], strides = [1, 1]} : vector<1x96xf32> to vector<1x32xf32>
    %30 = vector.extract_strided_slice %27 {offsets = [0, 64], sizes = [1, 32], strides = [1, 1]} : vector<1x96xf32> to vector<1x32xf32>
    %31 = arith.index_cast %arg0 : i32 to index
    %c0_15 = arith.constant 0 : index
    %32 = vector.load %arg16[%31, %c0_15] : memref<20x32xf32, #tpu.memory_space<vmem>>, vector<1x32xf32>
    tpu.vector_store %arg16[%31, %c0_15], %29 {strides = array<i32>} : memref<20x32xf32, #tpu.memory_space<vmem>>, vector<1x32xf32>,
    %33 = arith.index_cast %arg0 : i32 to index
    %c0_16 = arith.constant 0 : index
    %34 = vector.load %arg17[%33, %c0_16] : memref<20x32xf32, #tpu.memory_space<vmem>>, vector<1x32xf32>
    tpu.vector_store %arg17[%33, %c0_16], %30 {strides = array<i32>} : memref<20x32xf32, #tpu.memory_space<vmem>>, vector<1x32xf32>,
    %c0_17 = arith.constant 0 : index
    %c0_18 = arith.constant 0 : index
    %35 = vector.load %arg16[%c0_17, %c0_18] : memref<20x32xf32, #tpu.memory_space<vmem>>, vector<20x32xf32>
    %c0_19 = arith.constant 0 : index
    %c0_20 = arith.constant 0 : index
    %36 = vector.load %arg17[%c0_19, %c0_20] : memref<20x32xf32, #tpu.memory_space<vmem>>, vector<20x32xf32>
    %37 = vector.extract_strided_slice %21 {offsets = [0, 128], sizes = [32, 32], strides = [1, 1]} : vector<32x256xf32> to vector<32x32xf32>
    %38 = vector.extract_strided_slice %23 {offsets = [0, 128], sizes = [1, 32], strides = [1, 1]} : vector<1x288xf32> to vector<1x32xf32>
    %39 = vector.extract_strided_slice %28 {offsets = [0, 0], sizes = [1, 8], strides = [1, 1]} : vector<1x32xf32> to vector<1x8xf32>
    %40 = vector.extract_strided_slice %35 {offsets = [0, 0], sizes = [20, 8], strides = [1, 1]} : vector<20x32xf32> to vector<20x8xf32>
    %cst_21 = arith.constant dense<0.000000e+00> : vector<1x20xf32>
    %41 = tpu.matmul %39, %40, %cst_21 {dimension_numbers = #tpu.dot_dimension_numbers<[1], [1], [0], [0], [0, 0, 1, 0], [], []>} : vector<1x8xf32>, vector<20x8xf32>, vector<1x20xf32> -> vector<1x20xf32>
    %cst_22 = arith.constant 0.353553385 : f32
    %42 = vector.broadcast %cst_22 : f32 to vector<1x20xf32>
    %43 = arith.mulf %41, %42 : vector<1x20xf32>
    %44 = arith.addf %43, %17 : vector<1x20xf32>
    %cst_23 = arith.constant dense<0xFF800000> : vector<1xf32>
    %45 = vector.multi_reduction <maximumf>, %44, %cst_23 [1] : vector<1x20xf32> to vector<1xf32>
    %46 = vector.shape_cast %45 : vector<1xf32> to vector<1x1xf32>
    %47 = vector.broadcast %46 : vector<1x1xf32> to vector<1x20xf32>
    %48 = arith.subf %44, %47 : vector<1x20xf32>
    %49 = math.exp %48 : vector<1x20xf32>
    %cst_24 = arith.constant dense<0.000000e+00> : vector<1xf32>
    %50 = vector.multi_reduction <add>, %49, %cst_24 [1] : vector<1x20xf32> to vector<1xf32>
    %51 = vector.shape_cast %50 : vector<1xf32> to vector<1x1xf32>
    %52 = vector.broadcast %51 : vector<1x1xf32> to vector<1x20xf32>
    %53 = arith.divf %49, %52 : vector<1x20xf32>
    %54 = vector.extract_strided_slice %36 {offsets = [0, 0], sizes = [20, 8], strides = [1, 1]} : vector<20x32xf32> to vector<20x8xf32>
    %cst_25 = arith.constant dense<0.000000e+00> : vector<1x8xf32>
    %55 = tpu.matmul %53, %54, %cst_25 {dimension_numbers = #tpu.dot_dimension_numbers<[1], [0], [0], [1], [0, 0, 1, 1], [], []>} : vector<1x20xf32>, vector<20x8xf32>, vector<1x8xf32> -> vector<1x8xf32>
    %56 = vector.extract_strided_slice %28 {offsets = [0, 8], sizes = [1, 8], strides = [1, 1]} : vector<1x32xf32> to vector<1x8xf32>
    %57 = vector.extract_strided_slice %35 {offsets = [0, 8], sizes = [20, 8], strides = [1, 1]} : vector<20x32xf32> to vector<20x8xf32>
    %cst_26 = arith.constant dense<0.000000e+00> : vector<1x20xf32>
    %58 = tpu.matmul %56, %57, %cst_26 {dimension_numbers = #tpu.dot_dimension_numbers<[1], [1], [0], [0], [0, 0, 1, 0], [], []>} : vector<1x8xf32>, vector<20x8xf32>, vector<1x20xf32> -> vector<1x20xf32>
    %cst_27 = arith.constant 0.353553385 : f32
    %59 = vector.broadcast %cst_27 : f32 to vector<1x20xf32>
    %60 = arith.mulf %58, %59 : vector<1x20xf32>
    %61 = arith.addf %60, %17 : vector<1x20xf32>
    %cst_28 = arith.constant dense<0xFF800000> : vector<1xf32>
    %62 = vector.multi_reduction <maximumf>, %61, %cst_28 [1] : vector<1x20xf32> to vector<1xf32>
    %63 = vector.shape_cast %62 : vector<1xf32> to vector<1x1xf32>
    %64 = vector.broadcast %63 : vector<1x1xf32> to vector<1x20xf32>
    %65 = arith.subf %61, %64 : vector<1x20xf32>
    %66 = math.exp %65 : vector<1x20xf32>
    %cst_29 = arith.constant dense<0.000000e+00> : vector<1xf32>
    %67 = vector.multi_reduction <add>, %66, %cst_29 [1] : vector<1x20xf32> to vector<1xf32>
    %68 = vector.shape_cast %67 : vector<1xf32> to vector<1x1xf32>
    %69 = vector.broadcast %68 : vector<1x1xf32> to vector<1x20xf32>
    %70 = arith.divf %66, %69 : vector<1x20xf32>
    %71 = vector.extract_strided_slice %36 {offsets = [0, 8], sizes = [20, 8], strides = [1, 1]} : vector<20x32xf32> to vector<20x8xf32>
    %cst_30 = arith.constant dense<0.000000e+00> : vector<1x8xf32>
    %72 = tpu.matmul %70, %71, %cst_30 {dimension_numbers = #tpu.dot_dimension_numbers<[1], [0], [0], [1], [0, 0, 1, 1], [], []>} : vector<1x20xf32>, vector<20x8xf32>, vector<1x8xf32> -> vector<1x8xf32>
    %73 = vector.extract_strided_slice %28 {offsets = [0, 16], sizes = [1, 8], strides = [1, 1]} : vector<1x32xf32> to vector<1x8xf32>
    %74 = vector.extract_strided_slice %35 {offsets = [0, 16], sizes = [20, 8], strides = [1, 1]} : vector<20x32xf32> to vector<20x8xf32>
    %cst_31 = arith.constant dense<0.000000e+00> : vector<1x20xf32>
    %75 = tpu.matmul %73, %74, %cst_31 {dimension_numbers = #tpu.dot_dimension_numbers<[1], [1], [0], [0], [0, 0, 1, 0], [], []>} : vector<1x8xf32>, vector<20x8xf32>, vector<1x20xf32> -> vector<1x20xf32>
    %cst_32 = arith.constant 0.353553385 : f32
    %76 = vector.broadcast %cst_32 : f32 to vector<1x20xf32>
    %77 = arith.mulf %75, %76 : vector<1x20xf32>
    %78 = arith.addf %77, %17 : vector<1x20xf32>
    %cst_33 = arith.constant dense<0xFF800000> : vector<1xf32>
    %79 = vector.multi_reduction <maximumf>, %78, %cst_33 [1] : vector<1x20xf32> to vector<1xf32>
    %80 = vector.shape_cast %79 : vector<1xf32> to vector<1x1xf32>
    %81 = vector.broadcast %80 : vector<1x1xf32> to vector<1x20xf32>
    %82 = arith.subf %78, %81 : vector<1x20xf32>
    %83 = math.exp %82 : vector<1x20xf32>
    %cst_34 = arith.constant dense<0.000000e+00> : vector<1xf32>
    %84 = vector.multi_reduction <add>, %83, %cst_34 [1] : vector<1x20xf32> to vector<1xf32>
    %85 = vector.shape_cast %84 : vector<1xf32> to vector<1x1xf32>
    %86 = vector.broadcast %85 : vector<1x1xf32> to vector<1x20xf32>
    %87 = arith.divf %83, %86 : vector<1x20xf32>
    %88 = vector.extract_strided_slice %36 {offsets = [0, 16], sizes = [20, 8], strides = [1, 1]} : vector<20x32xf32> to vector<20x8xf32>
    %cst_35 = arith.constant dense<0.000000e+00> : vector<1x8xf32>
    %89 = tpu.matmul %87, %88, %cst_35 {dimension_numbers = #tpu.dot_dimension_numbers<[1], [0], [0], [1], [0, 0, 1, 1], [], []>} : vector<1x20xf32>, vector<20x8xf32>, vector<1x8xf32> -> vector<1x8xf32>
    %90 = vector.extract_strided_slice %28 {offsets = [0, 24], sizes = [1, 8], strides = [1, 1]} : vector<1x32xf32> to vector<1x8xf32>
    %91 = vector.extract_strided_slice %35 {offsets = [0, 24], sizes = [20, 8], strides = [1, 1]} : vector<20x32xf32> to vector<20x8xf32>
    %cst_36 = arith.constant dense<0.000000e+00> : vector<1x20xf32>
    %92 = tpu.matmul %90, %91, %cst_36 {dimension_numbers = #tpu.dot_dimension_numbers<[1], [1], [0], [0], [0, 0, 1, 0], [], []>} : vector<1x8xf32>, vector<20x8xf32>, vector<1x20xf32> -> vector<1x20xf32>
    %cst_37 = arith.constant 0.353553385 : f32
    %93 = vector.broadcast %cst_37 : f32 to vector<1x20xf32>
    %94 = arith.mulf %92, %93 : vector<1x20xf32>
    %95 = arith.addf %94, %17 : vector<1x20xf32>
    %cst_38 = arith.constant dense<0xFF800000> : vector<1xf32>
    %96 = vector.multi_reduction <maximumf>, %95, %cst_38 [1] : vector<1x20xf32> to vector<1xf32>
    %97 = vector.shape_cast %96 : vector<1xf32> to vector<1x1xf32>
    %98 = vector.broadcast %97 : vector<1x1xf32> to vector<1x20xf32>
    %99 = arith.subf %95, %98 : vector<1x20xf32>
    %100 = math.exp %99 : vector<1x20xf32>
    %cst_39 = arith.constant dense<0.000000e+00> : vector<1xf32>
    %101 = vector.multi_reduction <add>, %100, %cst_39 [1] : vector<1x20xf32> to vector<1xf32>
    %102 = vector.shape_cast %101 : vector<1xf32> to vector<1x1xf32>
    %103 = vector.broadcast %102 : vector<1x1xf32> to vector<1x20xf32>
    %104 = arith.divf %100, %103 : vector<1x20xf32>
    %105 = vector.extract_strided_slice %36 {offsets = [0, 24], sizes = [20, 8], strides = [1, 1]} : vector<20x32xf32> to vector<20x8xf32>
    %cst_40 = arith.constant dense<0.000000e+00> : vector<1x8xf32>
    %106 = tpu.matmul %104, %105, %cst_40 {dimension_numbers = #tpu.dot_dimension_numbers<[1], [0], [0], [1], [0, 0, 1, 1], [], []>} : vector<1x20xf32>, vector<20x8xf32>, vector<1x8xf32> -> vector<1x8xf32>
    %107 = tpu.concatenate %55, %72, %89, %106 in 1 : vector<1x8xf32>, vector<1x8xf32>, vector<1x8xf32>, vector<1x8xf32> -> vector<1x32xf32>
    %cst_41 = arith.constant dense<0.000000e+00> : vector<1x32xf32>
    %108 = tpu.matmul %107, %37, %cst_41 {dimension_numbers = #tpu.dot_dimension_numbers<[1], [0], [0], [1], [0, 0, 1, 1], [], []>} : vector<1x32xf32>, vector<32x32xf32>, vector<1x32xf32> -> vector<1x32xf32>
    %109 = arith.addf %108, %38 : vector<1x32xf32>
    %110 = arith.addf %11, %109 : vector<1x32xf32>
    %c0_42 = arith.constant 0 : index
    %c0_43 = arith.constant 0 : index
    %c0_44 = arith.constant 0 : index
    %111 = vector.load %arg9[%c0_42, %c0_43, %c0_44] : memref<2x6x32xf32, #tpu.memory_space<vmem>>, vector<1x1x32xf32>
    %112 = vector.shape_cast %111 : vector<1x1x32xf32> to vector<1x32xf32>
    %c0_45 = arith.constant 0 : index
    %c1 = arith.constant 1 : index
    %c0_46 = arith.constant 0 : index
    %113 = vector.load %arg9[%c0_45, %c1, %c0_46] : memref<2x6x32xf32, #tpu.memory_space<vmem>>, vector<1x1x32xf32>
    %114 = vector.shape_cast %113 : vector<1x1x32xf32> to vector<1x32xf32>
    %cst_47 = arith.constant dense<0.000000e+00> : vector<1xf32>
    %115 = vector.multi_reduction <add>, %110, %cst_47 [1] : vector<1x32xf32> to vector<1xf32>
    %116 = vector.shape_cast %115 : vector<1xf32> to vector<1x1xf32>
    %cst_48 = arith.constant 3.200000e+01 : f32
    %117 = vector.broadcast %cst_48 : f32 to vector<1x1xf32>
    %118 = arith.divf %116, %117 : vector<1x1xf32>
    %119 = vector.broadcast %118 : vector<1x1xf32> to vector<1x32xf32>
    %120 = arith.subf %110, %119 : vector<1x32xf32>
    %121 = arith.mulf %120, %120 : vector<1x32xf32>
    %cst_49 = arith.constant dense<0.000000e+00> : vector<1xf32>
    %122 = vector.multi_reduction <add>, %121, %cst_49 [1] : vector<1x32xf32> to vector<1xf32>
    %123 = vector.shape_cast %122 : vector<1xf32> to vector<1x1xf32>
    %cst_50 = arith.constant 3.200000e+01 : f32
    %124 = vector.broadcast %cst_50 : f32 to vector<1x1xf32>
    %125 = arith.divf %123, %124 : vector<1x1xf32>
    %126 = vector.broadcast %118 : vector<1x1xf32> to vector<1x32xf32>
    %127 = arith.subf %110, %126 : vector<1x32xf32>
    %cst_51 = arith.constant 9.99999974E-6 : f32
    %128 = vector.broadcast %cst_51 : f32 to vector<1x1xf32>
    %129 = arith.addf %125, %128 : vector<1x1xf32>
    %130 = math.rsqrt %129 : vector<1x1xf32>
    %131 = vector.broadcast %130 : vector<1x1xf32> to vector<1x32xf32>
    %132 = arith.mulf %127, %131 : vector<1x32xf32>
    %133 = arith.mulf %132, %112 : vector<1x32xf32>
    %134 = arith.addf %133, %114 : vector<1x32xf32>
    %135 = vector.extract_strided_slice %21 {offsets = [0, 96], sizes = [32, 32], strides = [1, 1]} : vector<32x256xf32> to vector<32x32xf32>
    %cst_52 = arith.constant dense<0.000000e+00> : vector<1x32xf32>
    %136 = tpu.matmul %134, %135, %cst_52 {dimension_numbers = #tpu.dot_dimension_numbers<[1], [0], [0], [1], [0, 0, 1, 1], [], []>} : vector<1x32xf32>, vector<32x32xf32>, vector<1x32xf32> -> vector<1x32xf32>
    %137 = vector.extract_strided_slice %23 {offsets = [0, 96], sizes = [1, 32], strides = [1, 1]} : vector<1x288xf32> to vector<1x32xf32>
    %138 = arith.addf %136, %137 : vector<1x32xf32>
    %139 = vector.extract_strided_slice %19 {offsets = [0, 0], sizes = [16, 32], strides = [1, 1]} : vector<16x128xf32> to vector<16x32xf32>
    %140 = vector.extract_strided_slice %19 {offsets = [0, 32], sizes = [16, 32], strides = [1, 1]} : vector<16x128xf32> to vector<16x32xf32>
    %141 = vector.extract_strided_slice %21 {offsets = [0, 160], sizes = [32, 32], strides = [1, 1]} : vector<32x256xf32> to vector<32x32xf32>
    %142 = vector.extract_strided_slice %23 {offsets = [0, 160], sizes = [1, 32], strides = [1, 1]} : vector<1x288xf32> to vector<1x32xf32>
    %143 = vector.extract_strided_slice %138 {offsets = [0, 0], sizes = [1, 8], strides = [1, 1]} : vector<1x32xf32> to vector<1x8xf32>
    %144 = vector.extract_strided_slice %139 {offsets = [0, 0], sizes = [16, 8], strides = [1, 1]} : vector<16x32xf32> to vector<16x8xf32>
    %cst_53 = arith.constant dense<0.000000e+00> : vector<1x16xf32>
    %145 = tpu.matmul %143, %144, %cst_53 {dimension_numbers = #tpu.dot_dimension_numbers<[1], [1], [0], [0], [0, 0, 1, 0], [], []>} : vector<1x8xf32>, vector<16x8xf32>, vector<1x16xf32> -> vector<1x16xf32>
    %cst_54 = arith.constant 0.353553385 : f32
    %146 = vector.broadcast %cst_54 : f32 to vector<1x16xf32>
    %147 = arith.mulf %145, %146 : vector<1x16xf32>
    %148 = arith.addf %147, %18 : vector<1x16xf32>
    %cst_55 = arith.constant dense<0xFF800000> : vector<1xf32>
    %149 = vector.multi_reduction <maximumf>, %148, %cst_55 [1] : vector<1x16xf32> to vector<1xf32>
    %150 = vector.shape_cast %149 : vector<1xf32> to vector<1x1xf32>
    %151 = vector.broadcast %150 : vector<1x1xf32> to vector<1x16xf32>
    %152 = arith.subf %148, %151 : vector<1x16xf32>
    %153 = math.exp %152 : vector<1x16xf32>
    %cst_56 = arith.constant dense<0.000000e+00> : vector<1xf32>
    %154 = vector.multi_reduction <add>, %153, %cst_56 [1] : vector<1x16xf32> to vector<1xf32>
    %155 = vector.shape_cast %154 : vector<1xf32> to vector<1x1xf32>
    %156 = vector.broadcast %155 : vector<1x1xf32> to vector<1x16xf32>
    %157 = arith.divf %153, %156 : vector<1x16xf32>
    %158 = vector.extract_strided_slice %140 {offsets = [0, 0], sizes = [16, 8], strides = [1, 1]} : vector<16x32xf32> to vector<16x8xf32>
    %cst_57 = arith.constant dense<0.000000e+00> : vector<1x8xf32>
    %159 = tpu.matmul %157, %158, %cst_57 {dimension_numbers = #tpu.dot_dimension_numbers<[1], [0], [0], [1], [0, 0, 1, 1], [], []>} : vector<1x16xf32>, vector<16x8xf32>, vector<1x8xf32> -> vector<1x8xf32>
    %160 = vector.extract_strided_slice %138 {offsets = [0, 8], sizes = [1, 8], strides = [1, 1]} : vector<1x32xf32> to vector<1x8xf32>
    %161 = vector.extract_strided_slice %139 {offsets = [0, 8], sizes = [16, 8], strides = [1, 1]} : vector<16x32xf32> to vector<16x8xf32>
    %cst_58 = arith.constant dense<0.000000e+00> : vector<1x16xf32>
    %162 = tpu.matmul %160, %161, %cst_58 {dimension_numbers = #tpu.dot_dimension_numbers<[1], [1], [0], [0], [0, 0, 1, 0], [], []>} : vector<1x8xf32>, vector<16x8xf32>, vector<1x16xf32> -> vector<1x16xf32>
    %cst_59 = arith.constant 0.353553385 : f32
    %163 = vector.broadcast %cst_59 : f32 to vector<1x16xf32>
    %164 = arith.mulf %162, %163 : vector<1x16xf32>
    %165 = arith.addf %164, %18 : vector<1x16xf32>
    %cst_60 = arith.constant dense<0xFF800000> : vector<1xf32>
    %166 = vector.multi_reduction <maximumf>, %165, %cst_60 [1] : vector<1x16xf32> to vector<1xf32>
    %167 = vector.shape_cast %166 : vector<1xf32> to vector<1x1xf32>
    %168 = vector.broadcast %167 : vector<1x1xf32> to vector<1x16xf32>
    %169 = arith.subf %165, %168 : vector<1x16xf32>
    %170 = math.exp %169 : vector<1x16xf32>
    %cst_61 = arith.constant dense<0.000000e+00> : vector<1xf32>
    %171 = vector.multi_reduction <add>, %170, %cst_61 [1] : vector<1x16xf32> to vector<1xf32>
    %172 = vector.shape_cast %171 : vector<1xf32> to vector<1x1xf32>
    %173 = vector.broadcast %172 : vector<1x1xf32> to vector<1x16xf32>
    %174 = arith.divf %170, %173 : vector<1x16xf32>
    %175 = vector.extract_strided_slice %140 {offsets = [0, 8], sizes = [16, 8], strides = [1, 1]} : vector<16x32xf32> to vector<16x8xf32>
    %cst_62 = arith.constant dense<0.000000e+00> : vector<1x8xf32>
    %176 = tpu.matmul %174, %175, %cst_62 {dimension_numbers = #tpu.dot_dimension_numbers<[1], [0], [0], [1], [0, 0, 1, 1], [], []>} : vector<1x16xf32>, vector<16x8xf32>, vector<1x8xf32> -> vector<1x8xf32>
    %177 = vector.extract_strided_slice %138 {offsets = [0, 16], sizes = [1, 8], strides = [1, 1]} : vector<1x32xf32> to vector<1x8xf32>
    %178 = vector.extract_strided_slice %139 {offsets = [0, 16], sizes = [16, 8], strides = [1, 1]} : vector<16x32xf32> to vector<16x8xf32>
    %cst_63 = arith.constant dense<0.000000e+00> : vector<1x16xf32>
    %179 = tpu.matmul %177, %178, %cst_63 {dimension_numbers = #tpu.dot_dimension_numbers<[1], [1], [0], [0], [0, 0, 1, 0], [], []>} : vector<1x8xf32>, vector<16x8xf32>, vector<1x16xf32> -> vector<1x16xf32>
    %cst_64 = arith.constant 0.353553385 : f32
    %180 = vector.broadcast %cst_64 : f32 to vector<1x16xf32>
    %181 = arith.mulf %179, %180 : vector<1x16xf32>
    %182 = arith.addf %181, %18 : vector<1x16xf32>
    %cst_65 = arith.constant dense<0xFF800000> : vector<1xf32>
    %183 = vector.multi_reduction <maximumf>, %182, %cst_65 [1] : vector<1x16xf32> to vector<1xf32>
    %184 = vector.shape_cast %183 : vector<1xf32> to vector<1x1xf32>
    %185 = vector.broadcast %184 : vector<1x1xf32> to vector<1x16xf32>
    %186 = arith.subf %182, %185 : vector<1x16xf32>
    %187 = math.exp %186 : vector<1x16xf32>
    %cst_66 = arith.constant dense<0.000000e+00> : vector<1xf32>
    %188 = vector.multi_reduction <add>, %187, %cst_66 [1] : vector<1x16xf32> to vector<1xf32>
    %189 = vector.shape_cast %188 : vector<1xf32> to vector<1x1xf32>
    %190 = vector.broadcast %189 : vector<1x1xf32> to vector<1x16xf32>
    %191 = arith.divf %187, %190 : vector<1x16xf32>
    %192 = vector.extract_strided_slice %140 {offsets = [0, 16], sizes = [16, 8], strides = [1, 1]} : vector<16x32xf32> to vector<16x8xf32>
    %cst_67 = arith.constant dense<0.000000e+00> : vector<1x8xf32>
    %193 = tpu.matmul %191, %192, %cst_67 {dimension_numbers = #tpu.dot_dimension_numbers<[1], [0], [0], [1], [0, 0, 1, 1], [], []>} : vector<1x16xf32>, vector<16x8xf32>, vector<1x8xf32> -> vector<1x8xf32>
    %194 = vector.extract_strided_slice %138 {offsets = [0, 24], sizes = [1, 8], strides = [1, 1]} : vector<1x32xf32> to vector<1x8xf32>
    %195 = vector.extract_strided_slice %139 {offsets = [0, 24], sizes = [16, 8], strides = [1, 1]} : vector<16x32xf32> to vector<16x8xf32>
    %cst_68 = arith.constant dense<0.000000e+00> : vector<1x16xf32>
    %196 = tpu.matmul %194, %195, %cst_68 {dimension_numbers = #tpu.dot_dimension_numbers<[1], [1], [0], [0], [0, 0, 1, 0], [], []>} : vector<1x8xf32>, vector<16x8xf32>, vector<1x16xf32> -> vector<1x16xf32>
    %cst_69 = arith.constant 0.353553385 : f32
    %197 = vector.broadcast %cst_69 : f32 to vector<1x16xf32>
    %198 = arith.mulf %196, %197 : vector<1x16xf32>
    %199 = arith.addf %198, %18 : vector<1x16xf32>
    %cst_70 = arith.constant dense<0xFF800000> : vector<1xf32>
    %200 = vector.multi_reduction <maximumf>, %199, %cst_70 [1] : vector<1x16xf32> to vector<1xf32>
    %201 = vector.shape_cast %200 : vector<1xf32> to vector<1x1xf32>
    %202 = vector.broadcast %201 : vector<1x1xf32> to vector<1x16xf32>
    %203 = arith.subf %199, %202 : vector<1x16xf32>
    %204 = math.exp %203 : vector<1x16xf32>
    %cst_71 = arith.constant dense<0.000000e+00> : vector<1xf32>
    %205 = vector.multi_reduction <add>, %204, %cst_71 [1] : vector<1x16xf32> to vector<1xf32>
    %206 = vector.shape_cast %205 : vector<1xf32> to vector<1x1xf32>
    %207 = vector.broadcast %206 : vector<1x1xf32> to vector<1x16xf32>
    %208 = arith.divf %204, %207 : vector<1x16xf32>
    %209 = vector.extract_strided_slice %140 {offsets = [0, 24], sizes = [16, 8], strides = [1, 1]} : vector<16x32xf32> to vector<16x8xf32>
    %cst_72 = arith.constant dense<0.000000e+00> : vector<1x8xf32>
    %210 = tpu.matmul %208, %209, %cst_72 {dimension_numbers = #tpu.dot_dimension_numbers<[1], [0], [0], [1], [0, 0, 1, 1], [], []>} : vector<1x16xf32>, vector<16x8xf32>, vector<1x8xf32> -> vector<1x8xf32>
    %211 = tpu.concatenate %159, %176, %193, %210 in 1 : vector<1x8xf32>, vector<1x8xf32>, vector<1x8xf32>, vector<1x8xf32> -> vector<1x32xf32>
    %cst_73 = arith.constant dense<0.000000e+00> : vector<1x32xf32>
    %212 = tpu.matmul %211, %141, %cst_73 {dimension_numbers = #tpu.dot_dimension_numbers<[1], [0], [0], [1], [0, 0, 1, 1], [], []>} : vector<1x32xf32>, vector<32x32xf32>, vector<1x32xf32> -> vector<1x32xf32>
    %213 = arith.addf %212, %142 : vector<1x32xf32>
    %214 = arith.addf %134, %213 : vector<1x32xf32>
    %c0_74 = arith.constant 0 : index
    %c2 = arith.constant 2 : index
    %c0_75 = arith.constant 0 : index
    %215 = vector.load %arg9[%c0_74, %c2, %c0_75] : memref<2x6x32xf32, #tpu.memory_space<vmem>>, vector<1x1x32xf32>
    %216 = vector.shape_cast %215 : vector<1x1x32xf32> to vector<1x32xf32>
    %c0_76 = arith.constant 0 : index
    %c3 = arith.constant 3 : index
    %c0_77 = arith.constant 0 : index
    %217 = vector.load %arg9[%c0_76, %c3, %c0_77] : memref<2x6x32xf32, #tpu.memory_space<vmem>>, vector<1x1x32xf32>
    %218 = vector.shape_cast %217 : vector<1x1x32xf32> to vector<1x32xf32>
    %cst_78 = arith.constant dense<0.000000e+00> : vector<1xf32>
    %219 = vector.multi_reduction <add>, %214, %cst_78 [1] : vector<1x32xf32> to vector<1xf32>
    %220 = vector.shape_cast %219 : vector<1xf32> to vector<1x1xf32>
    %cst_79 = arith.constant 3.200000e+01 : f32
    %221 = vector.broadcast %cst_79 : f32 to vector<1x1xf32>
    %222 = arith.divf %220, %221 : vector<1x1xf32>
    %223 = vector.broadcast %222 : vector<1x1xf32> to vector<1x32xf32>
    %224 = arith.subf %214, %223 : vector<1x32xf32>
    %225 = arith.mulf %224, %224 : vector<1x32xf32>
    %cst_80 = arith.constant dense<0.000000e+00> : vector<1xf32>
    %226 = vector.multi_reduction <add>, %225, %cst_80 [1] : vector<1x32xf32> to vector<1xf32>
    %227 = vector.shape_cast %226 : vector<1xf32> to vector<1x1xf32>
    %cst_81 = arith.constant 3.200000e+01 : f32
    %228 = vector.broadcast %cst_81 : f32 to vector<1x1xf32>
    %229 = arith.divf %227, %228 : vector<1x1xf32>
    %230 = vector.broadcast %222 : vector<1x1xf32> to vector<1x32xf32>
    %231 = arith.subf %214, %230 : vector<1x32xf32>
    %cst_82 = arith.constant 9.99999974E-6 : f32
    %232 = vector.broadcast %cst_82 : f32 to vector<1x1xf32>
    %233 = arith.addf %229, %232 : vector<1x1xf32>
    %234 = math.rsqrt %233 : vector<1x1xf32>
    %235 = vector.broadcast %234 : vector<1x1xf32> to vector<1x32xf32>
    %236 = arith.mulf %231, %235 : vector<1x32xf32>
    %237 = arith.mulf %236, %216 : vector<1x32xf32>
    %238 = arith.addf %237, %218 : vector<1x32xf32>
    %239 = vector.extract_strided_slice %21 {offsets = [0, 192], sizes = [32, 64], strides = [1, 1]} : vector<32x256xf32> to vector<32x64xf32>
    %cst_83 = arith.constant dense<0.000000e+00> : vector<1x64xf32>
    %240 = tpu.matmul %238, %239, %cst_83 {dimension_numbers = #tpu.dot_dimension_numbers<[1], [0], [0], [1], [0, 0, 1, 1], [], []>} : vector<1x32xf32>, vector<32x64xf32>, vector<1x64xf32> -> vector<1x64xf32>
    %241 = vector.extract_strided_slice %23 {offsets = [0, 192], sizes = [1, 64], strides = [1, 1]} : vector<1x288xf32> to vector<1x64xf32>
    %242 = arith.addf %240, %241 : vector<1x64xf32>
    %cst_84 = arith.constant 0.000000e+00 : f32
    %243 = vector.broadcast %cst_84 : f32 to vector<1x64xf32>
    %244 = arith.maximumf %242, %243 : vector<1x64xf32>
    %c0_85 = arith.constant 0 : index
    %c0_86 = arith.constant 0 : index
    %c0_87 = arith.constant 0 : index
    %245 = vector.load %arg7[%c0_85, %c0_86, %c0_87] : memref<2x64x32xf32, #tpu.memory_space<vmem>>, vector<1x64x32xf32>
    %246 = vector.shape_cast %245 : vector<1x64x32xf32> to vector<64x32xf32>
    %cst_88 = arith.constant dense<0.000000e+00> : vector<1x32xf32>
    %247 = tpu.matmul %244, %246, %cst_88 {dimension_numbers = #tpu.dot_dimension_numbers<[1], [0], [0], [1], [0, 0, 1, 1], [], []>} : vector<1x64xf32>, vector<64x32xf32>, vector<1x32xf32> -> vector<1x32xf32>
    %248 = vector.extract_strided_slice %23 {offsets = [0, 256], sizes = [1, 32], strides = [1, 1]} : vector<1x288xf32> to vector<1x32xf32>
    %249 = arith.addf %247, %248 : vector<1x32xf32>
    %250 = arith.addf %238, %249 : vector<1x32xf32>
    %c0_89 = arith.constant 0 : index
    %c4 = arith.constant 4 : index
    %c0_90 = arith.constant 0 : index
    %251 = vector.load %arg9[%c0_89, %c4, %c0_90] : memref<2x6x32xf32, #tpu.memory_space<vmem>>, vector<1x1x32xf32>
    %252 = vector.shape_cast %251 : vector<1x1x32xf32> to vector<1x32xf32>
    %c0_91 = arith.constant 0 : index
    %c5 = arith.constant 5 : index
    %c0_92 = arith.constant 0 : index
    %253 = vector.load %arg9[%c0_91, %c5, %c0_92] : memref<2x6x32xf32, #tpu.memory_space<vmem>>, vector<1x1x32xf32>
    %254 = vector.shape_cast %253 : vector<1x1x32xf32> to vector<1x32xf32>
    %cst_93 = arith.constant dense<0.000000e+00> : vector<1xf32>
    %255 = vector.multi_reduction <add>, %250, %cst_93 [1] : vector<1x32xf32> to vector<1xf32>
    %256 = vector.shape_cast %255 : vector<1xf32> to vector<1x1xf32>
    %cst_94 = arith.constant 3.200000e+01 : f32
    %257 = vector.broadcast %cst_94 : f32 to vector<1x1xf32>
    %258 = arith.divf %256, %257 : vector<1x1xf32>
    %259 = vector.broadcast %258 : vector<1x1xf32> to vector<1x32xf32>
    %260 = arith.subf %250, %259 : vector<1x32xf32>
    %261 = arith.mulf %260, %260 : vector<1x32xf32>
    %cst_95 = arith.constant dense<0.000000e+00> : vector<1xf32>
    %262 = vector.multi_reduction <add>, %261, %cst_95 [1] : vector<1x32xf32> to vector<1xf32>
    %263 = vector.shape_cast %262 : vector<1xf32> to vector<1x1xf32>
    %cst_96 = arith.constant 3.200000e+01 : f32
    %264 = vector.broadcast %cst_96 : f32 to vector<1x1xf32>
    %265 = arith.divf %263, %264 : vector<1x1xf32>
    %266 = vector.broadcast %258 : vector<1x1xf32> to vector<1x32xf32>
    %267 = arith.subf %250, %266 : vector<1x32xf32>
    %cst_97 = arith.constant 9.99999974E-6 : f32
    %268 = vector.broadcast %cst_97 : f32 to vector<1x1xf32>
    %269 = arith.addf %265, %268 : vector<1x1xf32>
    %270 = math.rsqrt %269 : vector<1x1xf32>
    %271 = vector.broadcast %270 : vector<1x1xf32> to vector<1x32xf32>
    %272 = arith.mulf %267, %271 : vector<1x32xf32>
    %273 = arith.mulf %272, %252 : vector<1x32xf32>
    %274 = arith.addf %273, %254 : vector<1x32xf32>
    %c1_98 = arith.constant 1 : index
    %c0_99 = arith.constant 0 : index
    %c0_100 = arith.constant 0 : index
    %275 = vector.load %arg6[%c1_98, %c0_99, %c0_100] : memref<2x32x256xf32, #tpu.memory_space<vmem>>, vector<1x32x256xf32>
    %276 = vector.shape_cast %275 : vector<1x32x256xf32> to vector<32x256xf32>
    %c1_101 = arith.constant 1 : index
    %c0_102 = arith.constant 0 : index
    %c0_103 = arith.constant 0 : index
    %277 = vector.load %arg8[%c1_101, %c0_102, %c0_103] : memref<2x1x288xf32, #tpu.memory_space<vmem>>, vector<1x1x288xf32>
    %278 = vector.shape_cast %277 : vector<1x1x288xf32> to vector<1x288xf32>
    %279 = vector.extract_strided_slice %276 {offsets = [0, 0], sizes = [32, 96], strides = [1, 1]} : vector<32x256xf32> to vector<32x96xf32>
    %cst_104 = arith.constant dense<0.000000e+00> : vector<1x96xf32>
    %280 = tpu.matmul %274, %279, %cst_104 {dimension_numbers = #tpu.dot_dimension_numbers<[1], [0], [0], [1], [0, 0, 1, 1], [], []>} : vector<1x32xf32>, vector<32x96xf32>, vector<1x96xf32> -> vector<1x96xf32>
    %281 = vector.extract_strided_slice %278 {offsets = [0, 0], sizes = [1, 96], strides = [1, 1]} : vector<1x288xf32> to vector<1x96xf32>
    %282 = arith.addf %280, %281 : vector<1x96xf32>
    %283 = vector.extract_strided_slice %282 {offsets = [0, 0], sizes = [1, 32], strides = [1, 1]} : vector<1x96xf32> to vector<1x32xf32>
    %284 = vector.extract_strided_slice %282 {offsets = [0, 32], sizes = [1, 32], strides = [1, 1]} : vector<1x96xf32> to vector<1x32xf32>
    %285 = vector.extract_strided_slice %282 {offsets = [0, 64], sizes = [1, 32], strides = [1, 1]} : vector<1x96xf32> to vector<1x32xf32>
    %286 = arith.index_cast %arg0 : i32 to index
    %c0_105 = arith.constant 0 : index
    %287 = vector.load %arg18[%286, %c0_105] : memref<20x32xf32, #tpu.memory_space<vmem>>, vector<1x32xf32>
    tpu.vector_store %arg18[%286, %c0_105], %284 {strides = array<i32>} : memref<20x32xf32, #tpu.memory_space<vmem>>, vector<1x32xf32>,
    %288 = arith.index_cast %arg0 : i32 to index
    %c0_106 = arith.constant 0 : index
    %289 = vector.load %arg19[%288, %c0_106] : memref<20x32xf32, #tpu.memory_space<vmem>>, vector<1x32xf32>
    tpu.vector_store %arg19[%288, %c0_106], %285 {strides = array<i32>} : memref<20x32xf32, #tpu.memory_space<vmem>>, vector<1x32xf32>,
    %c0_107 = arith.constant 0 : index
    %c0_108 = arith.constant 0 : index
    %290 = vector.load %arg18[%c0_107, %c0_108] : memref<20x32xf32, #tpu.memory_space<vmem>>, vector<20x32xf32>
    %c0_109 = arith.constant 0 : index
    %c0_110 = arith.constant 0 : index
    %291 = vector.load %arg19[%c0_109, %c0_110] : memref<20x32xf32, #tpu.memory_space<vmem>>, vector<20x32xf32>
    %292 = vector.extract_strided_slice %276 {offsets = [0, 128], sizes = [32, 32], strides = [1, 1]} : vector<32x256xf32> to vector<32x32xf32>
    %293 = vector.extract_strided_slice %278 {offsets = [0, 128], sizes = [1, 32], strides = [1, 1]} : vector<1x288xf32> to vector<1x32xf32>
    %294 = vector.extract_strided_slice %283 {offsets = [0, 0], sizes = [1, 8], strides = [1, 1]} : vector<1x32xf32> to vector<1x8xf32>
    %295 = vector.extract_strided_slice %290 {offsets = [0, 0], sizes = [20, 8], strides = [1, 1]} : vector<20x32xf32> to vector<20x8xf32>
    %cst_111 = arith.constant dense<0.000000e+00> : vector<1x20xf32>
    %296 = tpu.matmul %294, %295, %cst_111 {dimension_numbers = #tpu.dot_dimension_numbers<[1], [1], [0], [0], [0, 0, 1, 0], [], []>} : vector<1x8xf32>, vector<20x8xf32>, vector<1x20xf32> -> vector<1x20xf32>
    %cst_112 = arith.constant 0.353553385 : f32
    %297 = vector.broadcast %cst_112 : f32 to vector<1x20xf32>
    %298 = arith.mulf %296, %297 : vector<1x20xf32>
    %299 = arith.addf %298, %17 : vector<1x20xf32>
    %cst_113 = arith.constant dense<0xFF800000> : vector<1xf32>
    %300 = vector.multi_reduction <maximumf>, %299, %cst_113 [1] : vector<1x20xf32> to vector<1xf32>
    %301 = vector.shape_cast %300 : vector<1xf32> to vector<1x1xf32>
    %302 = vector.broadcast %301 : vector<1x1xf32> to vector<1x20xf32>
    %303 = arith.subf %299, %302 : vector<1x20xf32>
    %304 = math.exp %303 : vector<1x20xf32>
    %cst_114 = arith.constant dense<0.000000e+00> : vector<1xf32>
    %305 = vector.multi_reduction <add>, %304, %cst_114 [1] : vector<1x20xf32> to vector<1xf32>
    %306 = vector.shape_cast %305 : vector<1xf32> to vector<1x1xf32>
    %307 = vector.broadcast %306 : vector<1x1xf32> to vector<1x20xf32>
    %308 = arith.divf %304, %307 : vector<1x20xf32>
    %309 = vector.extract_strided_slice %291 {offsets = [0, 0], sizes = [20, 8], strides = [1, 1]} : vector<20x32xf32> to vector<20x8xf32>
    %cst_115 = arith.constant dense<0.000000e+00> : vector<1x8xf32>
    %310 = tpu.matmul %308, %309, %cst_115 {dimension_numbers = #tpu.dot_dimension_numbers<[1], [0], [0], [1], [0, 0, 1, 1], [], []>} : vector<1x20xf32>, vector<20x8xf32>, vector<1x8xf32> -> vector<1x8xf32>
    %311 = vector.extract_strided_slice %283 {offsets = [0, 8], sizes = [1, 8], strides = [1, 1]} : vector<1x32xf32> to vector<1x8xf32>
    %312 = vector.extract_strided_slice %290 {offsets = [0, 8], sizes = [20, 8], strides = [1, 1]} : vector<20x32xf32> to vector<20x8xf32>
    %cst_116 = arith.constant dense<0.000000e+00> : vector<1x20xf32>
    %313 = tpu.matmul %311, %312, %cst_116 {dimension_numbers = #tpu.dot_dimension_numbers<[1], [1], [0], [0], [0, 0, 1, 0], [], []>} : vector<1x8xf32>, vector<20x8xf32>, vector<1x20xf32> -> vector<1x20xf32>
    %cst_117 = arith.constant 0.353553385 : f32
    %314 = vector.broadcast %cst_117 : f32 to vector<1x20xf32>
    %315 = arith.mulf %313, %314 : vector<1x20xf32>
    %316 = arith.addf %315, %17 : vector<1x20xf32>
    %cst_118 = arith.constant dense<0xFF800000> : vector<1xf32>
    %317 = vector.multi_reduction <maximumf>, %316, %cst_118 [1] : vector<1x20xf32> to vector<1xf32>
    %318 = vector.shape_cast %317 : vector<1xf32> to vector<1x1xf32>
    %319 = vector.broadcast %318 : vector<1x1xf32> to vector<1x20xf32>
    %320 = arith.subf %316, %319 : vector<1x20xf32>
    %321 = math.exp %320 : vector<1x20xf32>
    %cst_119 = arith.constant dense<0.000000e+00> : vector<1xf32>
    %322 = vector.multi_reduction <add>, %321, %cst_119 [1] : vector<1x20xf32> to vector<1xf32>
    %323 = vector.shape_cast %322 : vector<1xf32> to vector<1x1xf32>
    %324 = vector.broadcast %323 : vector<1x1xf32> to vector<1x20xf32>
    %325 = arith.divf %321, %324 : vector<1x20xf32>
    %326 = vector.extract_strided_slice %291 {offsets = [0, 8], sizes = [20, 8], strides = [1, 1]} : vector<20x32xf32> to vector<20x8xf32>
    %cst_120 = arith.constant dense<0.000000e+00> : vector<1x8xf32>
    %327 = tpu.matmul %325, %326, %cst_120 {dimension_numbers = #tpu.dot_dimension_numbers<[1], [0], [0], [1], [0, 0, 1, 1], [], []>} : vector<1x20xf32>, vector<20x8xf32>, vector<1x8xf32> -> vector<1x8xf32>
    %328 = vector.extract_strided_slice %283 {offsets = [0, 16], sizes = [1, 8], strides = [1, 1]} : vector<1x32xf32> to vector<1x8xf32>
    %329 = vector.extract_strided_slice %290 {offsets = [0, 16], sizes = [20, 8], strides = [1, 1]} : vector<20x32xf32> to vector<20x8xf32>
    %cst_121 = arith.constant dense<0.000000e+00> : vector<1x20xf32>
    %330 = tpu.matmul %328, %329, %cst_121 {dimension_numbers = #tpu.dot_dimension_numbers<[1], [1], [0], [0], [0, 0, 1, 0], [], []>} : vector<1x8xf32>, vector<20x8xf32>, vector<1x20xf32> -> vector<1x20xf32>
    %cst_122 = arith.constant 0.353553385 : f32
    %331 = vector.broadcast %cst_122 : f32 to vector<1x20xf32>
    %332 = arith.mulf %330, %331 : vector<1x20xf32>
    %333 = arith.addf %332, %17 : vector<1x20xf32>
    %cst_123 = arith.constant dense<0xFF800000> : vector<1xf32>
    %334 = vector.multi_reduction <maximumf>, %333, %cst_123 [1] : vector<1x20xf32> to vector<1xf32>
    %335 = vector.shape_cast %334 : vector<1xf32> to vector<1x1xf32>
    %336 = vector.broadcast %335 : vector<1x1xf32> to vector<1x20xf32>
    %337 = arith.subf %333, %336 : vector<1x20xf32>
    %338 = math.exp %337 : vector<1x20xf32>
    %cst_124 = arith.constant dense<0.000000e+00> : vector<1xf32>
    %339 = vector.multi_reduction <add>, %338, %cst_124 [1] : vector<1x20xf32> to vector<1xf32>
    %340 = vector.shape_cast %339 : vector<1xf32> to vector<1x1xf32>
    %341 = vector.broadcast %340 : vector<1x1xf32> to vector<1x20xf32>
    %342 = arith.divf %338, %341 : vector<1x20xf32>
    %343 = vector.extract_strided_slice %291 {offsets = [0, 16], sizes = [20, 8], strides = [1, 1]} : vector<20x32xf32> to vector<20x8xf32>
    %cst_125 = arith.constant dense<0.000000e+00> : vector<1x8xf32>
    %344 = tpu.matmul %342, %343, %cst_125 {dimension_numbers = #tpu.dot_dimension_numbers<[1], [0], [0], [1], [0, 0, 1, 1], [], []>} : vector<1x20xf32>, vector<20x8xf32>, vector<1x8xf32> -> vector<1x8xf32>
    %345 = vector.extract_strided_slice %283 {offsets = [0, 24], sizes = [1, 8], strides = [1, 1]} : vector<1x32xf32> to vector<1x8xf32>
    %346 = vector.extract_strided_slice %290 {offsets = [0, 24], sizes = [20, 8], strides = [1, 1]} : vector<20x32xf32> to vector<20x8xf32>
    %cst_126 = arith.constant dense<0.000000e+00> : vector<1x20xf32>
    %347 = tpu.matmul %345, %346, %cst_126 {dimension_numbers = #tpu.dot_dimension_numbers<[1], [1], [0], [0], [0, 0, 1, 0], [], []>} : vector<1x8xf32>, vector<20x8xf32>, vector<1x20xf32> -> vector<1x20xf32>
    %cst_127 = arith.constant 0.353553385 : f32
    %348 = vector.broadcast %cst_127 : f32 to vector<1x20xf32>
    %349 = arith.mulf %347, %348 : vector<1x20xf32>
    %350 = arith.addf %349, %17 : vector<1x20xf32>
    %cst_128 = arith.constant dense<0xFF800000> : vector<1xf32>
    %351 = vector.multi_reduction <maximumf>, %350, %cst_128 [1] : vector<1x20xf32> to vector<1xf32>
    %352 = vector.shape_cast %351 : vector<1xf32> to vector<1x1xf32>
    %353 = vector.broadcast %352 : vector<1x1xf32> to vector<1x20xf32>
    %354 = arith.subf %350, %353 : vector<1x20xf32>
    %355 = math.exp %354 : vector<1x20xf32>
    %cst_129 = arith.constant dense<0.000000e+00> : vector<1xf32>
    %356 = vector.multi_reduction <add>, %355, %cst_129 [1] : vector<1x20xf32> to vector<1xf32>
    %357 = vector.shape_cast %356 : vector<1xf32> to vector<1x1xf32>
    %358 = vector.broadcast %357 : vector<1x1xf32> to vector<1x20xf32>
    %359 = arith.divf %355, %358 : vector<1x20xf32>
    %360 = vector.extract_strided_slice %291 {offsets = [0, 24], sizes = [20, 8], strides = [1, 1]} : vector<20x32xf32> to vector<20x8xf32>
    %cst_130 = arith.constant dense<0.000000e+00> : vector<1x8xf32>
    %361 = tpu.matmul %359, %360, %cst_130 {dimension_numbers = #tpu.dot_dimension_numbers<[1], [0], [0], [1], [0, 0, 1, 1], [], []>} : vector<1x20xf32>, vector<20x8xf32>, vector<1x8xf32> -> vector<1x8xf32>
    %362 = tpu.concatenate %310, %327, %344, %361 in 1 : vector<1x8xf32>, vector<1x8xf32>, vector<1x8xf32>, vector<1x8xf32> -> vector<1x32xf32>
    %cst_131 = arith.constant dense<0.000000e+00> : vector<1x32xf32>
    %363 = tpu.matmul %362, %292, %cst_131 {dimension_numbers = #tpu.dot_dimension_numbers<[1], [0], [0], [1], [0, 0, 1, 1], [], []>} : vector<1x32xf32>, vector<32x32xf32>, vector<1x32xf32> -> vector<1x32xf32>
    %364 = arith.addf %363, %293 : vector<1x32xf32>
    %365 = arith.addf %274, %364 : vector<1x32xf32>
    %c1_132 = arith.constant 1 : index
    %c0_133 = arith.constant 0 : index
    %c0_134 = arith.constant 0 : index
    %366 = vector.load %arg9[%c1_132, %c0_133, %c0_134] : memref<2x6x32xf32, #tpu.memory_space<vmem>>, vector<1x1x32xf32>
    %367 = vector.shape_cast %366 : vector<1x1x32xf32> to vector<1x32xf32>
    %c1_135 = arith.constant 1 : index
    %c1_136 = arith.constant 1 : index
    %c0_137 = arith.constant 0 : index
    %368 = vector.load %arg9[%c1_135, %c1_136, %c0_137] : memref<2x6x32xf32, #tpu.memory_space<vmem>>, vector<1x1x32xf32>
    %369 = vector.shape_cast %368 : vector<1x1x32xf32> to vector<1x32xf32>
    %cst_138 = arith.constant dense<0.000000e+00> : vector<1xf32>
    %370 = vector.multi_reduction <add>, %365, %cst_138 [1] : vector<1x32xf32> to vector<1xf32>
    %371 = vector.shape_cast %370 : vector<1xf32> to vector<1x1xf32>
    %cst_139 = arith.constant 3.200000e+01 : f32
    %372 = vector.broadcast %cst_139 : f32 to vector<1x1xf32>
    %373 = arith.divf %371, %372 : vector<1x1xf32>
    %374 = vector.broadcast %373 : vector<1x1xf32> to vector<1x32xf32>
    %375 = arith.subf %365, %374 : vector<1x32xf32>
    %376 = arith.mulf %375, %375 : vector<1x32xf32>
    %cst_140 = arith.constant dense<0.000000e+00> : vector<1xf32>
    %377 = vector.multi_reduction <add>, %376, %cst_140 [1] : vector<1x32xf32> to vector<1xf32>
    %378 = vector.shape_cast %377 : vector<1xf32> to vector<1x1xf32>
    %cst_141 = arith.constant 3.200000e+01 : f32
    %379 = vector.broadcast %cst_141 : f32 to vector<1x1xf32>
    %380 = arith.divf %378, %379 : vector<1x1xf32>
    %381 = vector.broadcast %373 : vector<1x1xf32> to vector<1x32xf32>
    %382 = arith.subf %365, %381 : vector<1x32xf32>
    %cst_142 = arith.constant 9.99999974E-6 : f32
    %383 = vector.broadcast %cst_142 : f32 to vector<1x1xf32>
    %384 = arith.addf %380, %383 : vector<1x1xf32>
    %385 = math.rsqrt %384 : vector<1x1xf32>
    %386 = vector.broadcast %385 : vector<1x1xf32> to vector<1x32xf32>
    %387 = arith.mulf %382, %386 : vector<1x32xf32>
    %388 = arith.mulf %387, %367 : vector<1x32xf32>
    %389 = arith.addf %388, %369 : vector<1x32xf32>
    %390 = vector.extract_strided_slice %276 {offsets = [0, 96], sizes = [32, 32], strides = [1, 1]} : vector<32x256xf32> to vector<32x32xf32>
    %cst_143 = arith.constant dense<0.000000e+00> : vector<1x32xf32>
    %391 = tpu.matmul %389, %390, %cst_143 {dimension_numbers = #tpu.dot_dimension_numbers<[1], [0], [0], [1], [0, 0, 1, 1], [], []>} : vector<1x32xf32>, vector<32x32xf32>, vector<1x32xf32> -> vector<1x32xf32>
    %392 = vector.extract_strided_slice %278 {offsets = [0, 96], sizes = [1, 32], strides = [1, 1]} : vector<1x288xf32> to vector<1x32xf32>
    %393 = arith.addf %391, %392 : vector<1x32xf32>
    %394 = vector.extract_strided_slice %19 {offsets = [0, 64], sizes = [16, 32], strides = [1, 1]} : vector<16x128xf32> to vector<16x32xf32>
    %395 = vector.extract_strided_slice %19 {offsets = [0, 96], sizes = [16, 32], strides = [1, 1]} : vector<16x128xf32> to vector<16x32xf32>
    %396 = vector.extract_strided_slice %276 {offsets = [0, 160], sizes = [32, 32], strides = [1, 1]} : vector<32x256xf32> to vector<32x32xf32>
    %397 = vector.extract_strided_slice %278 {offsets = [0, 160], sizes = [1, 32], strides = [1, 1]} : vector<1x288xf32> to vector<1x32xf32>
    %398 = vector.extract_strided_slice %393 {offsets = [0, 0], sizes = [1, 8], strides = [1, 1]} : vector<1x32xf32> to vector<1x8xf32>
    %399 = vector.extract_strided_slice %394 {offsets = [0, 0], sizes = [16, 8], strides = [1, 1]} : vector<16x32xf32> to vector<16x8xf32>
    %cst_144 = arith.constant dense<0.000000e+00> : vector<1x16xf32>
    %400 = tpu.matmul %398, %399, %cst_144 {dimension_numbers = #tpu.dot_dimension_numbers<[1], [1], [0], [0], [0, 0, 1, 0], [], []>} : vector<1x8xf32>, vector<16x8xf32>, vector<1x16xf32> -> vector<1x16xf32>
    %cst_145 = arith.constant 0.353553385 : f32
    %401 = vector.broadcast %cst_145 : f32 to vector<1x16xf32>
    %402 = arith.mulf %400, %401 : vector<1x16xf32>
    %403 = arith.addf %402, %18 : vector<1x16xf32>
    %cst_146 = arith.constant dense<0xFF800000> : vector<1xf32>
    %404 = vector.multi_reduction <maximumf>, %403, %cst_146 [1] : vector<1x16xf32> to vector<1xf32>
    %405 = vector.shape_cast %404 : vector<1xf32> to vector<1x1xf32>
    %406 = vector.broadcast %405 : vector<1x1xf32> to vector<1x16xf32>
    %407 = arith.subf %403, %406 : vector<1x16xf32>
    %408 = math.exp %407 : vector<1x16xf32>
    %cst_147 = arith.constant dense<0.000000e+00> : vector<1xf32>
    %409 = vector.multi_reduction <add>, %408, %cst_147 [1] : vector<1x16xf32> to vector<1xf32>
    %410 = vector.shape_cast %409 : vector<1xf32> to vector<1x1xf32>
    %411 = vector.broadcast %410 : vector<1x1xf32> to vector<1x16xf32>
    %412 = arith.divf %408, %411 : vector<1x16xf32>
    %413 = vector.extract_strided_slice %395 {offsets = [0, 0], sizes = [16, 8], strides = [1, 1]} : vector<16x32xf32> to vector<16x8xf32>
    %cst_148 = arith.constant dense<0.000000e+00> : vector<1x8xf32>
    %414 = tpu.matmul %412, %413, %cst_148 {dimension_numbers = #tpu.dot_dimension_numbers<[1], [0], [0], [1], [0, 0, 1, 1], [], []>} : vector<1x16xf32>, vector<16x8xf32>, vector<1x8xf32> -> vector<1x8xf32>
    %415 = vector.extract_strided_slice %393 {offsets = [0, 8], sizes = [1, 8], strides = [1, 1]} : vector<1x32xf32> to vector<1x8xf32>
    %416 = vector.extract_strided_slice %394 {offsets = [0, 8], sizes = [16, 8], strides = [1, 1]} : vector<16x32xf32> to vector<16x8xf32>
    %cst_149 = arith.constant dense<0.000000e+00> : vector<1x16xf32>
    %417 = tpu.matmul %415, %416, %cst_149 {dimension_numbers = #tpu.dot_dimension_numbers<[1], [1], [0], [0], [0, 0, 1, 0], [], []>} : vector<1x8xf32>, vector<16x8xf32>, vector<1x16xf32> -> vector<1x16xf32>
    %cst_150 = arith.constant 0.353553385 : f32
    %418 = vector.broadcast %cst_150 : f32 to vector<1x16xf32>
    %419 = arith.mulf %417, %418 : vector<1x16xf32>
    %420 = arith.addf %419, %18 : vector<1x16xf32>
    %cst_151 = arith.constant dense<0xFF800000> : vector<1xf32>
    %421 = vector.multi_reduction <maximumf>, %420, %cst_151 [1] : vector<1x16xf32> to vector<1xf32>
    %422 = vector.shape_cast %421 : vector<1xf32> to vector<1x1xf32>
    %423 = vector.broadcast %422 : vector<1x1xf32> to vector<1x16xf32>
    %424 = arith.subf %420, %423 : vector<1x16xf32>
    %425 = math.exp %424 : vector<1x16xf32>
    %cst_152 = arith.constant dense<0.000000e+00> : vector<1xf32>
    %426 = vector.multi_reduction <add>, %425, %cst_152 [1] : vector<1x16xf32> to vector<1xf32>
    %427 = vector.shape_cast %426 : vector<1xf32> to vector<1x1xf32>
    %428 = vector.broadcast %427 : vector<1x1xf32> to vector<1x16xf32>
    %429 = arith.divf %425, %428 : vector<1x16xf32>
    %430 = vector.extract_strided_slice %395 {offsets = [0, 8], sizes = [16, 8], strides = [1, 1]} : vector<16x32xf32> to vector<16x8xf32>
    %cst_153 = arith.constant dense<0.000000e+00> : vector<1x8xf32>
    %431 = tpu.matmul %429, %430, %cst_153 {dimension_numbers = #tpu.dot_dimension_numbers<[1], [0], [0], [1], [0, 0, 1, 1], [], []>} : vector<1x16xf32>, vector<16x8xf32>, vector<1x8xf32> -> vector<1x8xf32>
    %432 = vector.extract_strided_slice %393 {offsets = [0, 16], sizes = [1, 8], strides = [1, 1]} : vector<1x32xf32> to vector<1x8xf32>
    %433 = vector.extract_strided_slice %394 {offsets = [0, 16], sizes = [16, 8], strides = [1, 1]} : vector<16x32xf32> to vector<16x8xf32>
    %cst_154 = arith.constant dense<0.000000e+00> : vector<1x16xf32>
    %434 = tpu.matmul %432, %433, %cst_154 {dimension_numbers = #tpu.dot_dimension_numbers<[1], [1], [0], [0], [0, 0, 1, 0], [], []>} : vector<1x8xf32>, vector<16x8xf32>, vector<1x16xf32> -> vector<1x16xf32>
    %cst_155 = arith.constant 0.353553385 : f32
    %435 = vector.broadcast %cst_155 : f32 to vector<1x16xf32>
    %436 = arith.mulf %434, %435 : vector<1x16xf32>
    %437 = arith.addf %436, %18 : vector<1x16xf32>
    %cst_156 = arith.constant dense<0xFF800000> : vector<1xf32>
    %438 = vector.multi_reduction <maximumf>, %437, %cst_156 [1] : vector<1x16xf32> to vector<1xf32>
    %439 = vector.shape_cast %438 : vector<1xf32> to vector<1x1xf32>
    %440 = vector.broadcast %439 : vector<1x1xf32> to vector<1x16xf32>
    %441 = arith.subf %437, %440 : vector<1x16xf32>
    %442 = math.exp %441 : vector<1x16xf32>
    %cst_157 = arith.constant dense<0.000000e+00> : vector<1xf32>
    %443 = vector.multi_reduction <add>, %442, %cst_157 [1] : vector<1x16xf32> to vector<1xf32>
    %444 = vector.shape_cast %443 : vector<1xf32> to vector<1x1xf32>
    %445 = vector.broadcast %444 : vector<1x1xf32> to vector<1x16xf32>
    %446 = arith.divf %442, %445 : vector<1x16xf32>
    %447 = vector.extract_strided_slice %395 {offsets = [0, 16], sizes = [16, 8], strides = [1, 1]} : vector<16x32xf32> to vector<16x8xf32>
    %cst_158 = arith.constant dense<0.000000e+00> : vector<1x8xf32>
    %448 = tpu.matmul %446, %447, %cst_158 {dimension_numbers = #tpu.dot_dimension_numbers<[1], [0], [0], [1], [0, 0, 1, 1], [], []>} : vector<1x16xf32>, vector<16x8xf32>, vector<1x8xf32> -> vector<1x8xf32>
    %449 = vector.extract_strided_slice %393 {offsets = [0, 24], sizes = [1, 8], strides = [1, 1]} : vector<1x32xf32> to vector<1x8xf32>
    %450 = vector.extract_strided_slice %394 {offsets = [0, 24], sizes = [16, 8], strides = [1, 1]} : vector<16x32xf32> to vector<16x8xf32>
    %cst_159 = arith.constant dense<0.000000e+00> : vector<1x16xf32>
    %451 = tpu.matmul %449, %450, %cst_159 {dimension_numbers = #tpu.dot_dimension_numbers<[1], [1], [0], [0], [0, 0, 1, 0], [], []>} : vector<1x8xf32>, vector<16x8xf32>, vector<1x16xf32> -> vector<1x16xf32>
    %cst_160 = arith.constant 0.353553385 : f32
    %452 = vector.broadcast %cst_160 : f32 to vector<1x16xf32>
    %453 = arith.mulf %451, %452 : vector<1x16xf32>
    %454 = arith.addf %453, %18 : vector<1x16xf32>
    %cst_161 = arith.constant dense<0xFF800000> : vector<1xf32>
    %455 = vector.multi_reduction <maximumf>, %454, %cst_161 [1] : vector<1x16xf32> to vector<1xf32>
    %456 = vector.shape_cast %455 : vector<1xf32> to vector<1x1xf32>
    %457 = vector.broadcast %456 : vector<1x1xf32> to vector<1x16xf32>
    %458 = arith.subf %454, %457 : vector<1x16xf32>
    %459 = math.exp %458 : vector<1x16xf32>
    %cst_162 = arith.constant dense<0.000000e+00> : vector<1xf32>
    %460 = vector.multi_reduction <add>, %459, %cst_162 [1] : vector<1x16xf32> to vector<1xf32>
    %461 = vector.shape_cast %460 : vector<1xf32> to vector<1x1xf32>
    %462 = vector.broadcast %461 : vector<1x1xf32> to vector<1x16xf32>
    %463 = arith.divf %459, %462 : vector<1x16xf32>
    %464 = vector.extract_strided_slice %395 {offsets = [0, 24], sizes = [16, 8], strides = [1, 1]} : vector<16x32xf32> to vector<16x8xf32>
    %cst_163 = arith.constant dense<0.000000e+00> : vector<1x8xf32>
    %465 = tpu.matmul %463, %464, %cst_163 {dimension_numbers = #tpu.dot_dimension_numbers<[1], [0], [0], [1], [0, 0, 1, 1], [], []>} : vector<1x16xf32>, vector<16x8xf32>, vector<1x8xf32> -> vector<1x8xf32>
    %466 = tpu.concatenate %414, %431, %448, %465 in 1 : vector<1x8xf32>, vector<1x8xf32>, vector<1x8xf32>, vector<1x8xf32> -> vector<1x32xf32>
    %cst_164 = arith.constant dense<0.000000e+00> : vector<1x32xf32>
    %467 = tpu.matmul %466, %396, %cst_164 {dimension_numbers = #tpu.dot_dimension_numbers<[1], [0], [0], [1], [0, 0, 1, 1], [], []>} : vector<1x32xf32>, vector<32x32xf32>, vector<1x32xf32> -> vector<1x32xf32>
    %468 = arith.addf %467, %397 : vector<1x32xf32>
    %469 = arith.addf %389, %468 : vector<1x32xf32>
    %c1_165 = arith.constant 1 : index
    %c2_166 = arith.constant 2 : index
    %c0_167 = arith.constant 0 : index
    %470 = vector.load %arg9[%c1_165, %c2_166, %c0_167] : memref<2x6x32xf32, #tpu.memory_space<vmem>>, vector<1x1x32xf32>
    %471 = vector.shape_cast %470 : vector<1x1x32xf32> to vector<1x32xf32>
    %c1_168 = arith.constant 1 : index
    %c3_169 = arith.constant 3 : index
    %c0_170 = arith.constant 0 : index
    %472 = vector.load %arg9[%c1_168, %c3_169, %c0_170] : memref<2x6x32xf32, #tpu.memory_space<vmem>>, vector<1x1x32xf32>
    %473 = vector.shape_cast %472 : vector<1x1x32xf32> to vector<1x32xf32>
    %cst_171 = arith.constant dense<0.000000e+00> : vector<1xf32>
    %474 = vector.multi_reduction <add>, %469, %cst_171 [1] : vector<1x32xf32> to vector<1xf32>
    %475 = vector.shape_cast %474 : vector<1xf32> to vector<1x1xf32>
    %cst_172 = arith.constant 3.200000e+01 : f32
    %476 = vector.broadcast %cst_172 : f32 to vector<1x1xf32>
    %477 = arith.divf %475, %476 : vector<1x1xf32>
    %478 = vector.broadcast %477 : vector<1x1xf32> to vector<1x32xf32>
    %479 = arith.subf %469, %478 : vector<1x32xf32>
    %480 = arith.mulf %479, %479 : vector<1x32xf32>
    %cst_173 = arith.constant dense<0.000000e+00> : vector<1xf32>
    %481 = vector.multi_reduction <add>, %480, %cst_173 [1] : vector<1x32xf32> to vector<1xf32>
    %482 = vector.shape_cast %481 : vector<1xf32> to vector<1x1xf32>
    %cst_174 = arith.constant 3.200000e+01 : f32
    %483 = vector.broadcast %cst_174 : f32 to vector<1x1xf32>
    %484 = arith.divf %482, %483 : vector<1x1xf32>
    %485 = vector.broadcast %477 : vector<1x1xf32> to vector<1x32xf32>
    %486 = arith.subf %469, %485 : vector<1x32xf32>
    %cst_175 = arith.constant 9.99999974E-6 : f32
    %487 = vector.broadcast %cst_175 : f32 to vector<1x1xf32>
    %488 = arith.addf %484, %487 : vector<1x1xf32>
    %489 = math.rsqrt %488 : vector<1x1xf32>
    %490 = vector.broadcast %489 : vector<1x1xf32> to vector<1x32xf32>
    %491 = arith.mulf %486, %490 : vector<1x32xf32>
    %492 = arith.mulf %491, %471 : vector<1x32xf32>
    %493 = arith.addf %492, %473 : vector<1x32xf32>
    %494 = vector.extract_strided_slice %276 {offsets = [0, 192], sizes = [32, 64], strides = [1, 1]} : vector<32x256xf32> to vector<32x64xf32>
    %cst_176 = arith.constant dense<0.000000e+00> : vector<1x64xf32>
    %495 = tpu.matmul %493, %494, %cst_176 {dimension_numbers = #tpu.dot_dimension_numbers<[1], [0], [0], [1], [0, 0, 1, 1], [], []>} : vector<1x32xf32>, vector<32x64xf32>, vector<1x64xf32> -> vector<1x64xf32>
    %496 = vector.extract_strided_slice %278 {offsets = [0, 192], sizes = [1, 64], strides = [1, 1]} : vector<1x288xf32> to vector<1x64xf32>
    %497 = arith.addf %495, %496 : vector<1x64xf32>
    %cst_177 = arith.constant 0.000000e+00 : f32
    %498 = vector.broadcast %cst_177 : f32 to vector<1x64xf32>
    %499 = arith.maximumf %497, %498 : vector<1x64xf32>
    %c1_178 = arith.constant 1 : index
    %c0_179 = arith.constant 0 : index
    %c0_180 = arith.constant 0 : index
    %500 = vector.load %arg7[%c1_178, %c0_179, %c0_180] : memref<2x64x32xf32, #tpu.memory_space<vmem>>, vector<1x64x32xf32>
    %501 = vector.shape_cast %500 : vector<1x64x32xf32> to vector<64x32xf32>
    %cst_181 = arith.constant dense<0.000000e+00> : vector<1x32xf32>
    %502 = tpu.matmul %499, %501, %cst_181 {dimension_numbers = #tpu.dot_dimension_numbers<[1], [0], [0], [1], [0, 0, 1, 1], [], []>} : vector<1x64xf32>, vector<64x32xf32>, vector<1x32xf32> -> vector<1x32xf32>
    %503 = vector.extract_strided_slice %278 {offsets = [0, 256], sizes = [1, 32], strides = [1, 1]} : vector<1x288xf32> to vector<1x32xf32>
    %504 = arith.addf %502, %503 : vector<1x32xf32>
    %505 = arith.addf %493, %504 : vector<1x32xf32>
    %c1_182 = arith.constant 1 : index
    %c4_183 = arith.constant 4 : index
    %c0_184 = arith.constant 0 : index
    %506 = vector.load %arg9[%c1_182, %c4_183, %c0_184] : memref<2x6x32xf32, #tpu.memory_space<vmem>>, vector<1x1x32xf32>
    %507 = vector.shape_cast %506 : vector<1x1x32xf32> to vector<1x32xf32>
    %c1_185 = arith.constant 1 : index
    %c5_186 = arith.constant 5 : index
    %c0_187 = arith.constant 0 : index
    %508 = vector.load %arg9[%c1_185, %c5_186, %c0_187] : memref<2x6x32xf32, #tpu.memory_space<vmem>>, vector<1x1x32xf32>
    %509 = vector.shape_cast %508 : vector<1x1x32xf32> to vector<1x32xf32>
    %cst_188 = arith.constant dense<0.000000e+00> : vector<1xf32>
    %510 = vector.multi_reduction <add>, %505, %cst_188 [1] : vector<1x32xf32> to vector<1xf32>
    %511 = vector.shape_cast %510 : vector<1xf32> to vector<1x1xf32>
    %cst_189 = arith.constant 3.200000e+01 : f32
    %512 = vector.broadcast %cst_189 : f32 to vector<1x1xf32>
    %513 = arith.divf %511, %512 : vector<1x1xf32>
    %514 = vector.broadcast %513 : vector<1x1xf32> to vector<1x32xf32>
    %515 = arith.subf %505, %514 : vector<1x32xf32>
    %516 = arith.mulf %515, %515 : vector<1x32xf32>
    %cst_190 = arith.constant dense<0.000000e+00> : vector<1xf32>
    %517 = vector.multi_reduction <add>, %516, %cst_190 [1] : vector<1x32xf32> to vector<1xf32>
    %518 = vector.shape_cast %517 : vector<1xf32> to vector<1x1xf32>
    %cst_191 = arith.constant 3.200000e+01 : f32
    %519 = vector.broadcast %cst_191 : f32 to vector<1x1xf32>
    %520 = arith.divf %518, %519 : vector<1x1xf32>
    %521 = vector.broadcast %513 : vector<1x1xf32> to vector<1x32xf32>
    %522 = arith.subf %505, %521 : vector<1x32xf32>
    %cst_192 = arith.constant 9.99999974E-6 : f32
    %523 = vector.broadcast %cst_192 : f32 to vector<1x1xf32>
    %524 = arith.addf %520, %523 : vector<1x1xf32>
    %525 = math.rsqrt %524 : vector<1x1xf32>
    %526 = vector.broadcast %525 : vector<1x1xf32> to vector<1x32xf32>
    %527 = arith.mulf %522, %526 : vector<1x32xf32>
    %528 = arith.mulf %527, %507 : vector<1x32xf32>
    %529 = arith.addf %528, %509 : vector<1x32xf32>
    %c0_193 = arith.constant 0 : index
    %c0_194 = arith.constant 0 : index
    %530 = vector.load %arg11[%c0_193, %c0_194] : memref<3x32xf32, #tpu.memory_space<vmem>>, vector<1x32xf32>
    %c0_195 = arith.constant 0 : index
    %c0_196 = arith.constant 0 : index
    %531 = vector.load %arg10[%c0_195, %c0_196] : memref<64x32xf32, #tpu.memory_space<vmem>>, vector<32x32xf32>
    %cst_197 = arith.constant dense<0.000000e+00> : vector<1x32xf32>
    %532 = tpu.matmul %274, %531, %cst_197 {dimension_numbers = #tpu.dot_dimension_numbers<[1], [0], [0], [1], [0, 0, 1, 1], [], []>} : vector<1x32xf32>, vector<32x32xf32>, vector<1x32xf32> -> vector<1x32xf32>
    %533 = arith.addf %530, %532 : vector<1x32xf32>
    %c32 = arith.constant 32 : index
    %c0_198 = arith.constant 0 : index
    %534 = vector.load %arg10[%c32, %c0_198] : memref<64x32xf32, #tpu.memory_space<vmem>>, vector<32x32xf32>
    %cst_199 = arith.constant dense<0.000000e+00> : vector<1x32xf32>
    %535 = tpu.matmul %529, %534, %cst_199 {dimension_numbers = #tpu.dot_dimension_numbers<[1], [0], [0], [1], [0, 0, 1, 1], [], []>} : vector<1x32xf32>, vector<32x32xf32>, vector<1x32xf32> -> vector<1x32xf32>
    %536 = arith.addf %533, %535 : vector<1x32xf32>
    %537 = arith.addf %529, %536 : vector<1x32xf32>
    %c1_200 = arith.constant 1 : index
    %c0_201 = arith.constant 0 : index
    %538 = vector.load %arg11[%c1_200, %c0_201] : memref<3x32xf32, #tpu.memory_space<vmem>>, vector<1x32xf32>
    %c2_202 = arith.constant 2 : index
    %c0_203 = arith.constant 0 : index
    %539 = vector.load %arg11[%c2_202, %c0_203] : memref<3x32xf32, #tpu.memory_space<vmem>>, vector<1x32xf32>
    %cst_204 = arith.constant dense<0.000000e+00> : vector<1xf32>
    %540 = vector.multi_reduction <add>, %537, %cst_204 [1] : vector<1x32xf32> to vector<1xf32>
    %541 = vector.shape_cast %540 : vector<1xf32> to vector<1x1xf32>
    %cst_205 = arith.constant 3.200000e+01 : f32
    %542 = vector.broadcast %cst_205 : f32 to vector<1x1xf32>
    %543 = arith.divf %541, %542 : vector<1x1xf32>
    %544 = vector.broadcast %543 : vector<1x1xf32> to vector<1x32xf32>
    %545 = arith.subf %537, %544 : vector<1x32xf32>
    %546 = arith.mulf %545, %545 : vector<1x32xf32>
    %cst_206 = arith.constant dense<0.000000e+00> : vector<1xf32>
    %547 = vector.multi_reduction <add>, %546, %cst_206 [1] : vector<1x32xf32> to vector<1xf32>
    %548 = vector.shape_cast %547 : vector<1xf32> to vector<1x1xf32>
    %cst_207 = arith.constant 3.200000e+01 : f32
    %549 = vector.broadcast %cst_207 : f32 to vector<1x1xf32>
    %550 = arith.divf %548, %549 : vector<1x1xf32>
    %551 = vector.broadcast %543 : vector<1x1xf32> to vector<1x32xf32>
    %552 = arith.subf %537, %551 : vector<1x32xf32>
    %cst_208 = arith.constant 9.99999974E-6 : f32
    %553 = vector.broadcast %cst_208 : f32 to vector<1x1xf32>
    %554 = arith.addf %550, %553 : vector<1x1xf32>
    %555 = math.rsqrt %554 : vector<1x1xf32>
    %556 = vector.broadcast %555 : vector<1x1xf32> to vector<1x32xf32>
    %557 = arith.mulf %552, %556 : vector<1x32xf32>
    %558 = arith.mulf %557, %538 : vector<1x32xf32>
    %559 = arith.addf %558, %539 : vector<1x32xf32>
    %c0_209 = arith.constant 0 : index
    %c0_210 = arith.constant 0 : index
    %560 = vector.load %arg12[%c0_209, %c0_210] : memref<32x128xf32, #tpu.memory_space<vmem>>, vector<32x128xf32>
    %cst_211 = arith.constant dense<0.000000e+00> : vector<1x128xf32>
    %561 = tpu.matmul %559, %560, %cst_211 {dimension_numbers = #tpu.dot_dimension_numbers<[1], [0], [0], [1], [0, 0, 1, 1], [], []>} : vector<1x32xf32>, vector<32x128xf32>, vector<1x128xf32> -> vector<1x128xf32>
    %c0_212 = arith.constant 0 : index
    %c0_213 = arith.constant 0 : index
    %562 = vector.load %arg13[%c0_212, %c0_213] : memref<1x128xf32, #tpu.memory_space<vmem>>, vector<1x128xf32>
    %563 = arith.addf %561, %562 : vector<1x128xf32>
    %cst_214 = arith.constant dense<0xFF800000> : vector<1xf32>
    %564 = vector.multi_reduction <maximumf>, %563, %cst_214 [1] : vector<1x128xf32> to vector<1xf32>
    %565 = vector.shape_cast %564 : vector<1xf32> to vector<1x1xf32>
    %566 = vector.broadcast %565 : vector<1x1xf32> to vector<1x128xf32>
    %567 = arith.subf %563, %566 : vector<1x128xf32>
    %568 = math.exp %567 : vector<1x128xf32>
    %cst_215 = arith.constant dense<0.000000e+00> : vector<1xf32>
    %569 = vector.multi_reduction <add>, %568, %cst_215 [1] : vector<1x128xf32> to vector<1xf32>
    %570 = vector.shape_cast %569 : vector<1xf32> to vector<1x1xf32>
    %571 = math.log %570 : vector<1x1xf32>
    %572 = vector.extract %571[0, 0] : f32 from vector<1x1xf32>
    %cst_216 = arith.constant 0.000000e+00 : f32
    %573 = arith.subf %cst_216, %572 : f32
    %574 = tpu.iota {dimensions = array<i32: 1>} : vector<1x128xi32>
    %575 = vector.broadcast %565 : vector<1x1xf32> to vector<1x128xf32>
    %576 = arith.cmpf oge, %563, %575 : vector<1x128xf32>
    %c128_i32 = arith.constant 128 : i32
    %577 = vector.broadcast %c128_i32 : i32 to vector<1x128xi32>
    %578 = arith.select %576, %574, %577 : vector<1x128xi1>, vector<1x128xi32>
    %cst_217 = arith.constant dense<2147483647> : vector<1xi32>
    %579 = vector.multi_reduction <minsi>, %578, %cst_217 [1] : vector<1x128xi32> to vector<1xi32>
    %580 = vector.extract %579[0] : i32 from vector<1xi32>
    %c1_218 = arith.constant 1 : index
    %581 = memref.load %arg1[%c1_218] : memref<2xi32, #tpu.memory_space<smem>>
    %582 = arith.addi %580, %581 : i32
    %c1_i32 = arith.constant 1 : i32
    %583 = arith.addi %arg0, %c1_i32 : i32
    %584 = arith.index_cast %583 : i32 to index
    %585 = memref.load %arg14[%584] : memref<21xi32, #tpu.memory_space<smem>>
    memref.store %582, %arg14[%584] : memref<21xi32, #tpu.memory_space<smem>>
    %c1_i32_219 = arith.constant 1 : i32
    %586 = arith.addi %arg0, %c1_i32_219 : i32
    %587 = arith.index_cast %586 : i32 to index
    %588 = memref.load %arg15[%587] : memref<21xf32, #tpu.memory_space<smem>>
    memref.store %573, %arg15[%587] : memref<21xf32, #tpu.memory_space<smem>>
    return
  }
  func.func @transform_0(%arg0: i32, %arg1: memref<2xi32, #tpu.memory_space<smem>>) -> (i32, i32) {
    %c0_i32 = arith.constant 0 : i32
    %c0_i32_0 = arith.constant 0 : i32
    %c0_i32_1 = arith.constant 0 : i32
    return %c0_i32, %c0_i32_0 : i32, i32
  }
  func.func @transform_1(%arg0: i32, %arg1: memref<2xi32, #tpu.memory_space<smem>>) -> (i32, i32) {
    %c0_i32 = arith.constant 0 : i32
    %c0_i32_0 = arith.constant 0 : i32
    %c0_i32_1 = arith.constant 0 : i32
    return %c0_i32, %c0_i32_0 : i32, i32
  }
  func.func @transform_2(%arg0: i32, %arg1: memref<2xi32, #tpu.memory_space<smem>>) -> (i32, i32) {
    %c0_i32 = arith.constant 0 : i32
    %c0_i32_0 = arith.constant 0 : i32
    %c0_i32_1 = arith.constant 0 : i32
    return %c0_i32, %c0_i32_0 : i32, i32
  }
  func.func @transform_3(%arg0: i32, %arg1: memref<2xi32, #tpu.memory_space<smem>>) -> (i32, i32) {
    %c0_i32 = arith.constant 0 : i32
    %c0_i32_0 = arith.constant 0 : i32
    %c0_i32_1 = arith.constant 0 : i32
    return %c0_i32, %c0_i32_0 : i32, i32
  }
  func.func @transform_4(%arg0: i32, %arg1: memref<2xi32, #tpu.memory_space<smem>>) -> (i32, i32, i32) {
    %c0_i32 = arith.constant 0 : i32
    %c0_i32_0 = arith.constant 0 : i32
    %c0_i32_1 = arith.constant 0 : i32
    %c0_i32_2 = arith.constant 0 : i32
    return %c0_i32, %c0_i32_0, %c0_i32_1 : i32, i32, i32
  }
  func.func @transform_5(%arg0: i32, %arg1: memref<2xi32, #tpu.memory_space<smem>>) -> (i32, i32, i32) {
    %c0_i32 = arith.constant 0 : i32
    %c0_i32_0 = arith.constant 0 : i32
    %c0_i32_1 = arith.constant 0 : i32
    %c0_i32_2 = arith.constant 0 : i32
    return %c0_i32, %c0_i32_0, %c0_i32_1 : i32, i32, i32
  }
  func.func @transform_6(%arg0: i32, %arg1: memref<2xi32, #tpu.memory_space<smem>>) -> (i32, i32, i32) {
    %c0_i32 = arith.constant 0 : i32
    %c0_i32_0 = arith.constant 0 : i32
    %c0_i32_1 = arith.constant 0 : i32
    %c0_i32_2 = arith.constant 0 : i32
    return %c0_i32, %c0_i32_0, %c0_i32_1 : i32, i32, i32
  }
  func.func @transform_7(%arg0: i32, %arg1: memref<2xi32, #tpu.memory_space<smem>>) -> (i32, i32, i32) {
    %c0_i32 = arith.constant 0 : i32
    %c0_i32_0 = arith.constant 0 : i32
    %c0_i32_1 = arith.constant 0 : i32
    %c0_i32_2 = arith.constant 0 : i32
    return %c0_i32, %c0_i32_0, %c0_i32_1 : i32, i32, i32
  }
  func.func @transform_8(%arg0: i32, %arg1: memref<2xi32, #tpu.memory_space<smem>>) -> (i32, i32) {
    %c0_i32 = arith.constant 0 : i32
    %c0_i32_0 = arith.constant 0 : i32
    %c0_i32_1 = arith.constant 0 : i32
    return %c0_i32, %c0_i32_0 : i32, i32
  }
  func.func @transform_9(%arg0: i32, %arg1: memref<2xi32, #tpu.memory_space<smem>>) -> (i32, i32) {
    %c0_i32 = arith.constant 0 : i32
    %c0_i32_0 = arith.constant 0 : i32
    %c0_i32_1 = arith.constant 0 : i32
    return %c0_i32, %c0_i32_0 : i32, i32
  }
  func.func @transform_10(%arg0: i32, %arg1: memref<2xi32, #tpu.memory_space<smem>>) -> (i32, i32) {
    %c0_i32 = arith.constant 0 : i32
    %c0_i32_0 = arith.constant 0 : i32
    %c0_i32_1 = arith.constant 0 : i32
    return %c0_i32, %c0_i32_0 : i32, i32
  }
  func.func @transform_11(%arg0: i32, %arg1: memref<2xi32, #tpu.memory_space<smem>>) -> (i32, i32) {
    %c0_i32 = arith.constant 0 : i32
    %c0_i32_0 = arith.constant 0 : i32
    %c0_i32_1 = arith.constant 0 : i32
    return %c0_i32, %c0_i32_0 : i32, i32
  }
  func.func @transform_12(%arg0: i32, %arg1: memref<2xi32, #tpu.memory_space<smem>>) -> i32 {
    %c0_i32 = arith.constant 0 : i32
    %c0_i32_0 = arith.constant 0 : i32
    return %c0_i32 : i32
  }
  func.func @transform_13(%arg0: i32, %arg1: memref<2xi32, #tpu.memory_space<smem>>) -> i32 {
    %c0_i32 = arith.constant 0 : i32
    %c0_i32_0 = arith.constant 0 : i32
    return %c0_i32 : i32
  }
}

</mosaic_0001>

<llo_original>
// kernel: forward.3
$region0: #{forward.3}
  #allocation0 [shape = 'u32[]', space=smem, size = 0x4, offset = 0x4, fixed_abs, tag = 'smem constant byte address 0x4 - core index']
  #allocation1 [shape = 'u32[72,128]{1,0:T(1,128)}', space=vmem, size = 0x9000, scoped, tag = 'internal scratch']
  #allocation2 [shape = 'f32[20,32]{1,0:T(8,128)}', space=vmem, size = 0x3000, scoped, tag = 'scratch operand']
  #allocation3 [shape = 'f32[20,32]{1,0:T(8,128)}', space=vmem, size = 0x3000, scoped, tag = 'scratch operand']
  #allocation4 [shape = 'f32[20,32]{1,0:T(8,128)}', space=vmem, size = 0x3000, scoped, tag = 'scratch operand']
  #allocation5 [shape = 'f32[20,32]{1,0:T(8,128)}', space=vmem, size = 0x3000, scoped, tag = 'scratch operand']
  #allocation6 [shape = 's32[1]{0}', space=sflag, size = 0x4, scoped, tag = 'scoped memory for forward.3']
  #allocation7 [shape = 'u8[512]{0}', space=smem, size = 0x200, scoped, tag = 'prefetched SMEM operand 0']
  %s0 = inlined_call_operand.vmem [shape: s32[2], index: 0, kind: input, shape index: {}]
  %s1 = inlined_call_operand.vmem [shape: f32[16,128], index: 1, kind: input, shape index: {}]
  %s2 = inlined_call_operand.vmem [shape: f32[1,16], index: 2, kind: input, shape index: {}]
  %s3 = inlined_call_operand.vmem [shape: f32[40,32], index: 3, kind: input, shape index: {}]
  %s4 = inlined_call_operand.vmem [shape: f32[32,32], index: 4, kind: input, shape index: {}]
  %s5 = inlined_call_operand.vmem [shape: f32[2,32,256], index: 5, kind: input, shape index: {}]
  %s6 = inlined_call_operand.vmem [shape: f32[2,64,32], index: 6, kind: input, shape index: {}]
  %s7 = inlined_call_operand.vmem [shape: f32[2,1,288], index: 7, kind: input, shape index: {}]
  %s8 = inlined_call_operand.vmem [shape: f32[2,6,32], index: 8, kind: input, shape index: {}]
  %s9 = inlined_call_operand.vmem [shape: f32[64,32], index: 9, kind: input, shape index: {}]
  %s10 = inlined_call_operand.vmem [shape: f32[3,32], index: 10, kind: input, shape index: {}]
  %s11 = inlined_call_operand.vmem [shape: f32[32,128], index: 11, kind: input, shape index: {}]
  %s12 = inlined_call_operand.vmem [shape: f32[1,128], index: 12, kind: input, shape index: {}]
  %s13 = inlined_call_operand.hbm [shape: s32[21], index: 13, kind: output, shape index: {0}]
  %s14 = inlined_call_operand.hbm [shape: f32[21], index: 14, kind: output, shape index: {1}]
  %15 = xla_tuple %s13, %s14
  %s16 = sld [smem:[#allocation0]]
  $region93: #{forward.3} parent=0
    _
  %s18 = ssub.s32 1, %s16
  %s19 = scalar_select 0, %s18, %s16
  %s21 = sshll.u32 %s0, 4
  %s22 = int_to_ptr.vmem [resolvable:$true] %s21
  %24 = dma.vmem_to_smem %s22, 16, [#allocation7], [#allocation6]
  %26 = dma.done [#allocation6], 16
  %27 = sfence
  $region1: #{forward.3} parent=0
    #allocation8 [shape = 'u8[512]{0}', space=smem, size = 0x200, scoped, tag = 'output window, operand 0, single buffered']
    #allocation9 [shape = 's32[2]{0}', space=sflag, size = 0x8, scoped, tag = 'scoped memory for forward.3']
    #allocation10 [shape = 'u8[512]{0}', space=smem, size = 0x200, scoped, tag = 'output window, operand 1, single buffered']
    #allocation11 [shape = 's32[1]{0}', space=sflag, size = 0x4, scoped, tag = 'scoped memory for forward.3']
    %28 = vsyncpa [#allocation9], 0
    %29 = vsyncpa [#allocation11], 0
    loop: start=0, step=1, limit=22
    $region2: #{forward.3} parent=1 // loop_pre_header
      _
    $region3: #{forward.3} parent=1 // loop_header
      %s31 = sphi 0, %s35
      %p32 = scmp.ge.s32.totalorder %s31, 22
      %s39 = sphi 0, %s39
      %s41 = sphi 0, %s39
      %s42 = sphi 0, %s41
      %s56 = sphi 0, %s42
      %s60 = sphi 0, %s60
      %s62 = sphi 0, %s60
      %s63 = sphi 0, %s62
      %s77 = sphi 0, %s63
      %s81 = sphi 0, %s81
      %s83 = sphi 0, %s81
      %s84 = sphi 0, %s83
      %s98 = sphi 0, %s84
      %s102 = sphi 0, %s102
      %s104 = sphi 0, %s102
      %s105 = sphi 0, %s104
      %s119 = sphi 0, %s105
      %s123 = sphi 0, %s123
      %s125 = sphi 0, %s123
      %s126 = sphi 0, %s125
      %s140 = sphi 0, %s126
      %s144 = sphi 0, %s144
      %s146 = sphi 0, %s144
      %s147 = sphi 0, %s146
      %s161 = sphi 0, %s147
      %s165 = sphi 0, %s165
      %s167 = sphi 0, %s165
      %s168 = sphi 0, %s167
      %s182 = sphi 0, %s168
      %s186 = sphi 0, %s186
      %s188 = sphi 0, %s186
      %s189 = sphi 0, %s188
      %s203 = sphi 0, %s189
      %s207 = sphi 0, %s207
      %s209 = sphi 0, %s207
      %s210 = sphi 0, %s209
      %s224 = sphi 0, %s210
      %s228 = sphi 0, %s228
      %s230 = sphi 0, %s228
      %s231 = sphi 0, %s230
      %s245 = sphi 0, %s231
      %s249 = sphi 0, %s249
      %s251 = sphi 0, %s249
      %s252 = sphi 0, %s251
      %s266 = sphi 0, %s252
      %s270 = sphi 0, %s270
      %s272 = sphi 0, %s270
      %s273 = sphi 0, %s272
      %s287 = sphi 0, %s273
      %s291 = sphi 0, %s291
      %s293 = sphi 0, %s291
      %s294 = sphi 0, %s293
      %s308 = sphi 0, %s294
      %s312 = sphi 0, %s312
      %s314 = sphi 0, %s312
      %s315 = sphi 0, %s314
      %s329 = sphi 0, %s315
    $region4: #{forward.3} parent=1 // loop_header_branch
      %34 = sbr.rel (%p32) target = $region8
    $region5: #{forward.3} parent=1 // loop_body
      %s36 = ssub.s32 %s31, 1
      %s37 = ssub.s32 %s31, 2
      %s38 = sadd.s32 %s31, 1
      %s40 = sadd.s32 %s39, 1
      %p43 = scmp.eq.s32.totalorder %s31, 19
      %p44 = scmp.ne.s32.totalorder %s39, %s41
      %p45 = scmp.eq.s32.totalorder %s31, 0
      %p46 = por %p44, %p45
      %p47 = scmp.ne.s32.totalorder %s39, %s41
      %p48 = scmp.eq.s32.totalorder %s36, 19
      %p49 = por %p47, %p48
      %p50 = scmp.ne.s32.totalorder %s41, %s42
      %p51 = scmp.eq.s32.totalorder %s36, 0
      %p52 = por %p50, %p51
      %p53 = scmp.ne.s32.totalorder %s41, %s42
      %p54 = scmp.eq.s32.totalorder %s37, 19
      %p55 = por %p53, %p54
      %p57 = scmp.ne.s32.totalorder %s42, %s56
      %p58 = scmp.eq.s32.totalorder %s37, 0
      %p59 = por %p57, %p58
      %s61 = sadd.s32 %s60, 1
      %p64 = scmp.eq.s32.totalorder %s31, 19
      %p65 = scmp.ne.s32.totalorder %s60, %s62
      %p66 = scmp.eq.s32.totalorder %s31, 0
      %p67 = por %p65, %p66
      %p68 = scmp.ne.s32.totalorder %s60, %s62
      %p69 = scmp.eq.s32.totalorder %s36, 19
      %p70 = por %p68, %p69
      %p71 = scmp.ne.s32.totalorder %s62, %s63
      %p72 = scmp.eq.s32.totalorder %s36, 0
      %p73 = por %p71, %p72
      %p74 = scmp.ne.s32.totalorder %s62, %s63
      %p75 = scmp.eq.s32.totalorder %s37, 19
      %p76 = por %p74, %p75
      %p78 = scmp.ne.s32.totalorder %s63, %s77
      %p79 = scmp.eq.s32.totalorder %s37, 0
      %p80 = por %p78, %p79
      %s82 = sadd.s32 %s81, 1
      %p85 = scmp.eq.s32.totalorder %s31, 19
      %p86 = scmp.ne.s32.totalorder %s81, %s83
      %p87 = scmp.eq.s32.totalorder %s31, 0
      %p88 = por %p86, %p87
      %p89 = scmp.ne.s32.totalorder %s81, %s83
      %p90 = scmp.eq.s32.totalorder %s36, 19
      %p91 = por %p89, %p90
      %p92 = scmp.ne.s32.totalorder %s83, %s84
      %p93 = scmp.eq.s32.totalorder %s36, 0
      %p94 = por %p92, %p93
      %p95 = scmp.ne.s32.totalorder %s83, %s84
      %p96 = scmp.eq.s32.totalorder %s37, 19
      %p97 = por %p95, %p96
      %p99 = scmp.ne.s32.totalorder %s84, %s98
      %p100 = scmp.eq.s32.totalorder %s37, 0
      %p101 = por %p99, %p100
      %s103 = sadd.s32 %s102, 1
      %p106 = scmp.eq.s32.totalorder %s31, 19
      %p107 = scmp.ne.s32.totalorder %s102, %s104
      %p108 = scmp.eq.s32.totalorder %s31, 0
      %p109 = por %p107, %p108
      %p110 = scmp.ne.s32.totalorder %s102, %s104
      %p111 = scmp.eq.s32.totalorder %s36, 19
      %p112 = por %p110, %p111
      %p113 = scmp.ne.s32.totalorder %s104, %s105
      %p114 = scmp.eq.s32.totalorder %s36, 0
      %p115 = por %p113, %p114
      %p116 = scmp.ne.s32.totalorder %s104, %s105
      %p117 = scmp.eq.s32.totalorder %s37, 19
      %p118 = por %p116, %p117
      %p120 = scmp.ne.s32.totalorder %s105, %s119
      %p121 = scmp.eq.s32.totalorder %s37, 0
      %p122 = por %p120, %p121
      %s124 = sadd.s32 %s123, 1
      %p127 = scmp.eq.s32.totalorder %s31, 19
      %p128 = scmp.ne.s32.totalorder %s123, %s125
      %p129 = scmp.eq.s32.totalorder %s31, 0
      %p130 = por %p128, %p129
      %p131 = scmp.ne.s32.totalorder %s123, %s125
      %p132 = scmp.eq.s32.totalorder %s36, 19
      %p133 = por %p131, %p132
      %p134 = scmp.ne.s32.totalorder %s125, %s126
      %p135 = scmp.eq.s32.totalorder %s36, 0
      %p136 = por %p134, %p135
      %p137 = scmp.ne.s32.totalorder %s125, %s126
      %p138 = scmp.eq.s32.totalorder %s37, 19
      %p139 = por %p137, %p138
      %p141 = scmp.ne.s32.totalorder %s126, %s140
      %p142 = scmp.eq.s32.totalorder %s37, 0
      %p143 = por %p141, %p142
      %s145 = sadd.s32 %s144, 1
      %p148 = scmp.eq.s32.totalorder %s31, 19
      %p149 = scmp.ne.s32.totalorder %s144, %s146
      %p150 = scmp.eq.s32.totalorder %s31, 0
      %p151 = por %p149, %p150
      %p152 = scmp.ne.s32.totalorder %s144, %s146
      %p153 = scmp.eq.s32.totalorder %s36, 19
      %p154 = por %p152, %p153
      %p155 = scmp.ne.s32.totalorder %s146, %s147
      %p156 = scmp.eq.s32.totalorder %s36, 0
      %p157 = por %p155, %p156
      %p158 = scmp.ne.s32.totalorder %s146, %s147
      %p159 = scmp.eq.s32.totalorder %s37, 19
      %p160 = por %p158, %p159
      %p162 = scmp.ne.s32.totalorder %s147, %s161
      %p163 = scmp.eq.s32.totalorder %s37, 0
      %p164 = por %p162, %p163
      %s166 = sadd.s32 %s165, 1
      %p169 = scmp.eq.s32.totalorder %s31, 19
      %p170 = scmp.ne.s32.totalorder %s165, %s167
      %p171 = scmp.eq.s32.totalorder %s31, 0
      %p172 = por %p170, %p171
      %p173 = scmp.ne.s32.totalorder %s165, %s167
      %p174 = scmp.eq.s32.totalorder %s36, 19
      %p175 = por %p173, %p174
      %p176 = scmp.ne.s32.totalorder %s167, %s168
      %p177 = scmp.eq.s32.totalorder %s36, 0
      %p178 = por %p176, %p177
      %p179 = scmp.ne.s32.totalorder %s167, %s168
      %p180 = scmp.eq.s32.totalorder %s37, 19
      %p181 = por %p179, %p180
      %p183 = scmp.ne.s32.totalorder %s168, %s182
      %p184 = scmp.eq.s32.totalorder %s37, 0
      %p185 = por %p183, %p184
      %s187 = sadd.s32 %s186, 1
      %p190 = scmp.eq.s32.totalorder %s31, 19
      %p191 = scmp.ne.s32.totalorder %s186, %s188
      %p192 = scmp.eq.s32.totalorder %s31, 0
      %p193 = por %p191, %p192
      %p194 = scmp.ne.s32.totalorder %s186, %s188
      %p195 = scmp.eq.s32.totalorder %s36, 19
      %p196 = por %p194, %p195
      %p197 = scmp.ne.s32.totalorder %s188, %s189
      %p198 = scmp.eq.s32.totalorder %s36, 0
      %p199 = por %p197, %p198
      %p200 = scmp.ne.s32.totalorder %s188, %s189
      %p201 = scmp.eq.s32.totalorder %s37, 19
      %p202 = por %p200, %p201
      %p204 = scmp.ne.s32.totalorder %s189, %s203
      %p205 = scmp.eq.s32.totalorder %s37, 0
      %p206 = por %p204, %p205
      %s208 = sadd.s32 %s207, 1
      %p211 = scmp.eq.s32.totalorder %s31, 19
      %p212 = scmp.ne.s32.totalorder %s207, %s209
      %p213 = scmp.eq.s32.totalorder %s31, 0
      %p214 = por %p212, %p213
      %p215 = scmp.ne.s32.totalorder %s207, %s209
      %p216 = scmp.eq.s32.totalorder %s36, 19
      %p217 = por %p215, %p216
      %p218 = scmp.ne.s32.totalorder %s209, %s210
      %p219 = scmp.eq.s32.totalorder %s36, 0
      %p220 = por %p218, %p219
      %p221 = scmp.ne.s32.totalorder %s209, %s210
      %p222 = scmp.eq.s32.totalorder %s37, 19
      %p223 = por %p221, %p222
      %p225 = scmp.ne.s32.totalorder %s210, %s224
      %p226 = scmp.eq.s32.totalorder %s37, 0
      %p227 = por %p225, %p226
      %s229 = sadd.s32 %s228, 1
      %p232 = scmp.eq.s32.totalorder %s31, 19
      %p233 = scmp.ne.s32.totalorder %s228, %s230
      %p234 = scmp.eq.s32.totalorder %s31, 0
      %p235 = por %p233, %p234
      %p236 = scmp.ne.s32.totalorder %s228, %s230
      %p237 = scmp.eq.s32.totalorder %s36, 19
      %p238 = por %p236, %p237
      %p239 = scmp.ne.s32.totalorder %s230, %s231
      %p240 = scmp.eq.s32.totalorder %s36, 0
      %p241 = por %p239, %p240
      %p242 = scmp.ne.s32.totalorder %s230, %s231
      %p243 = scmp.eq.s32.totalorder %s37, 19
      %p244 = por %p242, %p243
      %p246 = scmp.ne.s32.totalorder %s231, %s245
      %p247 = scmp.eq.s32.totalorder %s37, 0
      %p248 = por %p246, %p247
      %s250 = sadd.s32 %s249, 1
      %p253 = scmp.eq.s32.totalorder %s31, 19
      %p254 = scmp.ne.s32.totalorder %s249, %s251
      %p255 = scmp.eq.s32.totalorder %s31, 0
      %p256 = por %p254, %p255
      %p257 = scmp.ne.s32.totalorder %s249, %s251
      %p258 = scmp.eq.s32.totalorder %s36, 19
      %p259 = por %p257, %p258
      %p260 = scmp.ne.s32.totalorder %s251, %s252
      %p261 = scmp.eq.s32.totalorder %s36, 0
      %p262 = por %p260, %p261
      %p263 = scmp.ne.s32.totalorder %s251, %s252
      %p264 = scmp.eq.s32.totalorder %s37, 19
      %p265 = por %p263, %p264
      %p267 = scmp.ne.s32.totalorder %s252, %s266
      %p268 = scmp.eq.s32.totalorder %s37, 0
      %p269 = por %p267, %p268
      %s271 = sadd.s32 %s270, 1
      %p274 = scmp.eq.s32.totalorder %s31, 19
      %p275 = scmp.ne.s32.totalorder %s270, %s272
      %p276 = scmp.eq.s32.totalorder %s31, 0
      %p277 = por %p275, %p276
      %p278 = scmp.ne.s32.totalorder %s270, %s272
      %p279 = scmp.eq.s32.totalorder %s36, 19
      %p280 = por %p278, %p279
      %p281 = scmp.ne.s32.totalorder %s272, %s273
      %p282 = scmp.eq.s32.totalorder %s36, 0
      %p283 = por %p281, %p282
      %p284 = scmp.ne.s32.totalorder %s272, %s273
      %p285 = scmp.eq.s32.totalorder %s37, 19
      %p286 = por %p284, %p285
      %p288 = scmp.ne.s32.totalorder %s273, %s287
      %p289 = scmp.eq.s32.totalorder %s37, 0
      %p290 = por %p288, %p289
      %s292 = sadd.s32 %s291, 1
      %p295 = scmp.eq.s32.totalorder %s31, 19
      %p296 = scmp.ne.s32.totalorder %s291, %s293
      %p297 = scmp.eq.s32.totalorder %s31, 0
      %p298 = por %p296, %p297
      %p299 = scmp.ne.s32.totalorder %s291, %s293
      %p300 = scmp.eq.s32.totalorder %s36, 19
      %p301 = por %p299, %p300
      %p302 = scmp.ne.s32.totalorder %s293, %s294
      %p303 = scmp.eq.s32.totalorder %s36, 0
      %p304 = por %p302, %p303
      %p305 = scmp.ne.s32.totalorder %s293, %s294
      %p306 = scmp.eq.s32.totalorder %s37, 19
      %p307 = por %p305, %p306
      %p309 = scmp.ne.s32.totalorder %s294, %s308
      %p310 = scmp.eq.s32.totalorder %s37, 0
      %p311 = por %p309, %p310
      %s313 = sadd.s32 %s312, 1
      %p316 = scmp.eq.s32.totalorder %s31, 19
      %p317 = scmp.ne.s32.totalorder %s312, %s314
      %p318 = scmp.eq.s32.totalorder %s31, 0
      %p319 = por %p317, %p318
      %p320 = scmp.ne.s32.totalorder %s312, %s314
      %p321 = scmp.eq.s32.totalorder %s36, 19
      %p322 = por %p320, %p321
      %p323 = scmp.ne.s32.totalorder %s314, %s315
      %p324 = scmp.eq.s32.totalorder %s36, 0
      %p325 = por %p323, %p324
      %p326 = scmp.ne.s32.totalorder %s314, %s315
      %p327 = scmp.eq.s32.totalorder %s37, 19
      %p328 = por %p326, %p327
      %p330 = scmp.ne.s32.totalorder %s315, %s329
      %p331 = scmp.eq.s32.totalorder %s37, 0
      %p332 = por %p330, %p331
      %p333 = scmp.le.s32.totalorder 1, %s31
      %p334 = scmp.lt.s32.totalorder %s31, 21
      %p335 = pnand %p333, %p334
      %p336 = pneg %p335
      // Predicated region
      $region9: #{forward.3} parent=5 // pred_check
        _
      $region10: #{forward.3} parent=5 // pred_check_branch
        %338 = sbr.rel (%p335) target = $region12
      $region11: #{forward.3} parent=5 // pred_region
        %s339 = ssub.s32 %s31, 1
        // Predicated region
        $region13: #{forward.3} parent=11 // pred_check
          %p340 = pneg %p52
        $region14: #{forward.3} parent=11 // pred_check_branch
          %342 = sbr.rel (%p340) target = $region16
        $region15: #{forward.3} parent=11 // pred_region
          _
        $region16: #{forward.3} parent=11 // pred_fallthru
          _
        // Predicated region
        $region17: #{forward.3} parent=11 // pred_check
          %p343 = pneg %p73
        $region18: #{forward.3} parent=11 // pred_check_branch
          %345 = sbr.rel (%p343) target = $region20
        $region19: #{forward.3} parent=11 // pred_region
          _
        $region20: #{forward.3} parent=11 // pred_fallthru
          _
        // Predicated region
        $region21: #{forward.3} parent=11 // pred_check
          %p346 = pneg %p94
        $region22: #{forward.3} parent=11 // pred_check_branch
          %348 = sbr.rel (%p346) target = $region24
        $region23: #{forward.3} parent=11 // pred_region
          _
        $region24: #{forward.3} parent=11 // pred_fallthru
          _
        // Predicated region
        $region25: #{forward.3} parent=11 // pred_check
          %p349 = pneg %p115
        $region26: #{forward.3} parent=11 // pred_check_branch
          %351 = sbr.rel (%p349) target = $region28
        $region27: #{forward.3} parent=11 // pred_region
          _
        $region28: #{forward.3} parent=11 // pred_fallthru
          _
        // Predicated region
        $region29: #{forward.3} parent=11 // pred_check
          %p352 = pneg %p136
        $region30: #{forward.3} parent=11 // pred_check_branch
          %354 = sbr.rel (%p352) target = $region32
        $region31: #{forward.3} parent=11 // pred_region
          _
        $region32: #{forward.3} parent=11 // pred_fallthru
          _
        // Predicated region
        $region33: #{forward.3} parent=11 // pred_check
          %p355 = pneg %p157
        $region34: #{forward.3} parent=11 // pred_check_branch
          %357 = sbr.rel (%p355) target = $region36
        $region35: #{forward.3} parent=11 // pred_region
          _
        $region36: #{forward.3} parent=11 // pred_fallthru
          _
        // Predicated region
        $region37: #{forward.3} parent=11 // pred_check
          %p358 = pneg %p178
        $region38: #{forward.3} parent=11 // pred_check_branch
          %360 = sbr.rel (%p358) target = $region40
        $region39: #{forward.3} parent=11 // pred_region
          _
        $region40: #{forward.3} parent=11 // pred_fallthru
          _
        // Predicated region
        $region41: #{forward.3} parent=11 // pred_check
          %p361 = pneg %p199
        $region42: #{forward.3} parent=11 // pred_check_branch
          %363 = sbr.rel (%p361) target = $region44
        $region43: #{forward.3} parent=11 // pred_region
          _
        $region44: #{forward.3} parent=11 // pred_fallthru
          _
        // Predicated region
        $region45: #{forward.3} parent=11 // pred_check
          %p364 = pneg %p220
        $region46: #{forward.3} parent=11 // pred_check_branch
          %366 = sbr.rel (%p364) target = $region48
        $region47: #{forward.3} parent=11 // pred_region
          _
        $region48: #{forward.3} parent=11 // pred_fallthru
          _
        // Predicated region
        $region49: #{forward.3} parent=11 // pred_check
          %p367 = pneg %p241
        $region50: #{forward.3} parent=11 // pred_check_branch
          %369 = sbr.rel (%p367) target = $region52
        $region51: #{forward.3} parent=11 // pred_region
          _
        $region52: #{forward.3} parent=11 // pred_fallthru
          _
        // Predicated region
        $region53: #{forward.3} parent=11 // pred_check
          %p370 = pneg %p262
        $region54: #{forward.3} parent=11 // pred_check_branch
          %372 = sbr.rel (%p370) target = $region56
        $region55: #{forward.3} parent=11 // pred_region
          _
        $region56: #{forward.3} parent=11 // pred_fallthru
          _
        // Predicated region
        $region57: #{forward.3} parent=11 // pred_check
          %p373 = pneg %p283
        $region58: #{forward.3} parent=11 // pred_check_branch
          %375 = sbr.rel (%p373) target = $region60
        $region59: #{forward.3} parent=11 // pred_region
          _
        $region60: #{forward.3} parent=11 // pred_fallthru
          _
      $region12: #{forward.3} parent=5 // pred_fallthru
        _
      %p376 = scmp.lt.s32.totalorder %s31, 20
      // Predicated region
      $region61: #{forward.3} parent=5 // pred_check
        %p377 = pneg %p376
      $region62: #{forward.3} parent=5 // pred_check_branch
        %379 = sbr.rel (%p377) target = $region64
      $region63: #{forward.3} parent=5 // pred_region
        _
      $region64: #{forward.3} parent=5 // pred_fallthru
        _
      %p380 = scmp.le.s32.totalorder 1, %s31
      %p381 = scmp.lt.s32.totalorder %s31, 21
      %p382 = pnand %p380, %p381
      %p383 = pneg %p382
      // Predicated region
      $region65: #{forward.3} parent=5 // pred_check
        _
      $region66: #{forward.3} parent=5 // pred_check_branch
        %385 = sbr.rel (%p382) target = $region68
      $region67: #{forward.3} parent=5 // pred_region
        %s386 = ssub.s32 %s31, 1
        %p387 = pneg %p52
        %p388 = pneg %p49
        %p389 = pneg %p73
        %p390 = pneg %p70
        %p391 = pneg %p94
        %p392 = pneg %p91
        %p393 = pneg %p115
        %p394 = pneg %p112
        %p395 = pneg %p136
        %p396 = pneg %p133
        %p397 = pneg %p157
        %p398 = pneg %p154
        %p399 = pneg %p178
        %p400 = pneg %p175
        %p401 = pneg %p199
        %p402 = pneg %p196
        %p403 = pneg %p220
        %p404 = pneg %p217
        %p405 = pneg %p241
        %p406 = pneg %p238
        %p407 = pneg %p262
        %p408 = pneg %p259
        %p409 = pneg %p283
        %p410 = pneg %p280
        %p411 = pneg %p304
        %p412 = pneg %p301
        %p413 = pneg %p325
        %p414 = pneg %p322
        %p415 = scmp.eq.s32.totalorder %s36, 0
        // Predicated region
        $region69: #{forward.3} parent=67 // pred_check
          %p416 = pneg %p415
        $region70: #{forward.3} parent=67 // pred_check_branch
          %418 = sbr.rel (%p416) target = $region72
        $region71: #{forward.3} parent=67 // pred_region
          %s419 = sld [smem:[#allocation7]]
          %s420 = scalar_lea.smem [#allocation8], 0
          %421 = sst [smem:[%s420]] %s419
          %s422 = scalar_lea.smem [#allocation10], 0
          %423 = sst [smem:[%s422]] 0.0
          %vm424 = vcmask 261120
          %425 = vst.msk [vmem:[#allocation2] sm:$0xff] %vm424, 0.0
          %426 = vst.msk [vmem:[#allocation2 + $0x8] sm:$0xff] %vm424, 0.0
          %vm427 = vcmask 257024
          %428 = vst.msk [vmem:[#allocation2 + $0x10] sm:$0xf] %vm427, 0.0
          %429 = vst.msk [vmem:[#allocation3] sm:$0xff] %vm424, 0.0
          %430 = vst.msk [vmem:[#allocation3 + $0x8] sm:$0xff] %vm424, 0.0
          %431 = vst.msk [vmem:[#allocation3 + $0x10] sm:$0xf] %vm427, 0.0
          %432 = vst.msk [vmem:[#allocation4] sm:$0xff] %vm424, 0.0
          %433 = vst.msk [vmem:[#allocation4 + $0x8] sm:$0xff] %vm424, 0.0
          %434 = vst.msk [vmem:[#allocation4 + $0x10] sm:$0xf] %vm427, 0.0
          %435 = vst.msk [vmem:[#allocation5] sm:$0xff] %vm424, 0.0
          %436 = vst.msk [vmem:[#allocation5 + $0x8] sm:$0xff] %vm424, 0.0
          %437 = vst.msk [vmem:[#allocation5 + $0x10] sm:$0xf] %vm427, 0.0
        $region72: #{forward.3} parent=67 // pred_fallthru
          _
        %s438 = sld [smem:[#allocation8 + %s36]]
        %p439 = scmp.gt.s32.totalorder %s438, 0
        %s440 = scalar_select %p439, %s438, 0
        %p441 = scmp.lt.s32.totalorder %s440, 39
        %s442 = scalar_select %p441, %s440, 39
        %s443 = scalar_lea.vmem %s3, %s442
        %v444 = vld [vmem:[%s443] sm:$0x1]
        %s445 = scalar_lea.vmem %s4, %s36
        %v446 = vld [vmem:[%s445] sm:$0x1]
        %v447 = vadd.f32 %v444, %v446
        %v448 = vlaneseq
        %v449 = vand.u32 %v448, 127
        %v450 = vstv %s36
        %vm451 = vcmp.le.s32.totalorder %v449, %v450
        %v452 = vsel %vm451, 0.0, -1e+09
        %v453 = vld [vmem:[%s2] sm:$0x1]
        %v454 = vld [vmem:[%s1] sm:$0xff]
        %v455 = vld [vmem:[%s1 + $0x8] sm:$0xff]
        %v456 = vld [vmem:[%s5] sm:$0xff]
        %v457 = vld [vmem:[%s5 + $0x8] sm:$0xff]
        %v458 = vld [vmem:[%s5 + $0x10] sm:$0xff]
        %v459 = vld [vmem:[%s5 + $0x18] sm:$0xff]
        %v460 = vld [vmem:[%s5 + $0x20] sm:$0xff]
        %v461 = vld [vmem:[%s5 + $0x28] sm:$0xff]
        %v462 = vld [vmem:[%s5 + $0x30] sm:$0xff]
        %v463 = vld [vmem:[%s5 + $0x38] sm:$0xff]
        %v464 = vld [vmem:[%s7] sm:$0x7]
        %vm465 = vcmask 261120
        %v467 = vsel %vm465, %v447, 0
        %469 = vmatpush.msra.mxu0 0.0
        %470 = vmatpush.msra.mxu0 0.0
        %471 = vmatpush.msra.mxu0 0.0
        %472 = vmatpush.msra.mxu0 0.0
        %473 = vmatpush.msra.mxu0 0.0
        %474 = vmatpush.msra.mxu0 0.0
        %475 = vmatpush.msra.mxu0 0.0
        %476 = vmatpush.msra.mxu0 0.0
        %477 = vmatpush.msra.mxu0 0.0
        %478 = vmatpush.msra.mxu0 0.0
        %479 = vmatpush.msra.mxu0 0.0
        %480 = vmatpush.msra.mxu0 0.0
        %481 = vmatpush.msra.mxu0 %v462
        %482 = vmatpush.msra.mxu0 %v460
        %483 = vmatpush.msra.mxu0 %v458
        %484 = vmatpush.msra.mxu0 %v456
        %485 = vmatmul.f32.gmra.mxu0 %v467
        %v486 = vpop.f32.mrf.mxu0
        %v487 = vadd.f32 %v464, %v486
        %488 = vdwg.mxu0
        %490 = vrot.lane.b32.xlu0 %v487, 96
        %v491 = vpop.permute.xlu0 %490
        %s493 = scalar_lea.vmem [#allocation2], %s36
        %vm494 = vcmask 253952
        %495 = vst.msk [vmem:[%s493] sm:$0x1] %vm494, %v491
        %496 = vrot.lane.b32.xlu0 %v487, 64
        %v497 = vpop.permute.xlu0 %496
        %s499 = scalar_lea.vmem [#allocation3], %s36
        %500 = vst.msk [vmem:[%s499] sm:$0x1] %vm494, %v497
        %v501 = vld [vmem:[#allocation2] sm:$0xff]
        %v502 = vld [vmem:[#allocation2 + $0x8] sm:$0xff]
        %v503 = vld [vmem:[#allocation2 + $0x10] sm:$0xf]
        %v504 = vld [vmem:[#allocation3] sm:$0xff]
        %v505 = vld [vmem:[#allocation3 + $0x8] sm:$0xff]
        %v506 = vld [vmem:[#allocation3 + $0x10] sm:$0xf]
        %vm507 = vcmask 64512
        %v508 = vsel %vm507, %v487, 0
        %v511 = vsel %vm507, %v501, 0
        %v514 = vsel %vm507, %v502, 0
        %v517 = vsel %vm507, %v503, 0
        %519 = vmatpush.xpose.msra.mxu0 0.0
        %520 = vmatpush.xpose.msra.mxu0 0.0
        %521 = vmatpush.xpose.msra.mxu0 0.0
        %522 = vmatpush.xpose.msra.mxu0 0.0
        %523 = vmatpush.xpose.msra.mxu0 0.0
        %524 = vmatpush.xpose.msra.mxu0 0.0
        %525 = vmatpush.xpose.msra.mxu0 0.0
        %526 = vmatpush.xpose.msra.mxu0 0.0
        %527 = vmatpush.xpose.msra.mxu0 0.0
        %528 = vmatpush.xpose.msra.mxu0 0.0
        %529 = vmatpush.xpose.msra.mxu0 0.0
        %530 = vmatpush.xpose.msra.mxu0 0.0
        %531 = vmatpush.xpose.msra.mxu0 0.0
        %532 = vmatpush.xpose.msra.mxu0 %v517
        %533 = vmatpush.xpose.msra.mxu0 %v514
        %534 = vmatpush.xpose.msra.mxu0 %v511
        %535 = vmatmul.f32.gmra.mxu0 %v508
        %v536 = vpop.f32.mrf.mxu0
        %v537 = vadd.f32 0.0, %v536
        %538 = vdwg.mxu0
        %v539 = vmul.f32 %v537, 0.35355338
        %v540 = vadd.f32 %v539, %v452
        %vm541 = vcmask 155648
        %v542 = vsel %vm541, %v540, -inf
        %543 = vmax.xlane.f32.xlu0 %v542
        %v544 = vpop.xlane.xlu0 %543
        %v545 = vsub.f32 %v540, %v544
        %v546 = vmul.f32 %v545, 1.442695
        %v547 = vpow.pop %v546
        %v548 = vsel %vm541, %v547, 0.0
        %549 = vadd.xlane.f32.xlu0 %v548
        %v550 = vpop.xlane.xlu0 %549
        %v551 = vrcp.pop %v550
        %v552 = vmul.f32 %v550, %v551
        %v553 = vsub.f32 1.0, %v552
        %v554 = vmul.f32 %v551, %v553
        %v555 = vadd.f32 %v551, %v554
        %vm556 = vweird.f32 %v550
        %vm557 = vweird.f32 %v551
        %vm558 = vmor %vm556, %vm557
        %v559 = vsel %vm558, %v551, %v555
        %v560 = vand.u32 2147483647, %v550
        %vm561 = vcmp.eq.f32.partialorder %v560, 8.507059e+37
        %v562 = vand.u32 %v550, 2147483648
        %v563 = vor.u32 1.1754944e-38, %v562
        %v564 = vsel %vm561, %v563, %v559
        %v565 = vmul.f32 %v547, %v564
        %vm566 = vcmask 162816
        %v568 = vsel %vm566, %v565, 0
        %vm570 = vcmask 1043456
        %v572 = vsel %vm570, %v506, 0
        %574 = vmatpush.msra.mxu0 0.0
        %575 = vmatpush.msra.mxu0 0.0
        %576 = vmatpush.msra.mxu0 0.0
        %577 = vmatpush.msra.mxu0 0.0
        %578 = vmatpush.msra.mxu0 0.0
        %579 = vmatpush.msra.mxu0 0.0
        %580 = vmatpush.msra.mxu0 0.0
        %581 = vmatpush.msra.mxu0 0.0
        %582 = vmatpush.msra.mxu0 0.0
        %583 = vmatpush.msra.mxu0 0.0
        %584 = vmatpush.msra.mxu0 0.0
        %585 = vmatpush.msra.mxu0 0.0
        %586 = vmatpush.msra.mxu0 0.0
        %587 = vmatpush.msra.mxu0 %v572
        %588 = vmatpush.msra.mxu0 %v505
        %589 = vmatpush.msra.mxu0 %v504
        %590 = vmatmul.f32.gmra.mxu0 %v568
        %v591 = vpop.f32.mrf.mxu0
        %v592 = vadd.f32 0.0, %v591
        %593 = vdwg.mxu0
        %594 = vrot.lane.b32.xlu0 %v487, 120
        %v595 = vpop.permute.xlu0 %594
        %596 = vrot.lane.b32.xlu0 %v501, 120
        %v597 = vpop.permute.xlu0 %596
        %598 = vrot.lane.b32.xlu0 %v502, 120
        %v599 = vpop.permute.xlu0 %598
        %600 = vrot.lane.b32.xlu0 %v503, 120
        %v601 = vpop.permute.xlu0 %600
        %v602 = vsel %vm507, %v595, 0
        %v604 = vsel %vm507, %v597, 0
        %v606 = vsel %vm507, %v599, 0
        %v608 = vsel %vm507, %v601, 0
        %610 = vmatpush.xpose.msra.mxu0 0.0
        %611 = vmatpush.xpose.msra.mxu0 0.0
        %612 = vmatpush.xpose.msra.mxu0 0.0
        %613 = vmatpush.xpose.msra.mxu0 0.0
        %614 = vmatpush.xpose.msra.mxu0 0.0
        %615 = vmatpush.xpose.msra.mxu0 0.0
        %616 = vmatpush.xpose.msra.mxu0 0.0
        %617 = vmatpush.xpose.msra.mxu0 0.0
        %618 = vmatpush.xpose.msra.mxu0 0.0
        %619 = vmatpush.xpose.msra.mxu0 0.0
        %620 = vmatpush.xpose.msra.mxu0 0.0
        %621 = vmatpush.xpose.msra.mxu0 0.0
        %622 = vmatpush.xpose.msra.mxu0 0.0
        %623 = vmatpush.xpose.msra.mxu0 %v608
        %624 = vmatpush.xpose.msra.mxu0 %v606
        %625 = vmatpush.xpose.msra.mxu0 %v604
        %626 = vmatmul.f32.gmra.mxu0 %v602
        %v627 = vpop.f32.mrf.mxu0
        %v628 = vadd.f32 0.0, %v627
        %629 = vdwg.mxu0
        %v630 = vmul.f32 %v628, 0.35355338
        %v631 = vadd.f32 %v630, %v452
        %v632 = vsel %vm541, %v631, -inf
        %633 = vmax.xlane.f32.xlu0 %v632
        %v634 = vpop.xlane.xlu0 %633
        %v635 = vsub.f32 %v631, %v634
        %v636 = vmul.f32 %v635, 1.442695
        %v637 = vpow.pop %v636
        %v638 = vsel %vm541, %v637, 0.0
        %639 = vadd.xlane.f32.xlu0 %v638
        %v640 = vpop.xlane.xlu0 %639
        %v641 = vrcp.pop %v640
        %v642 = vmul.f32 %v640, %v641
        %v643 = vsub.f32 1.0, %v642
        %v644 = vmul.f32 %v641, %v643
        %v645 = vadd.f32 %v641, %v644
        %vm646 = vweird.f32 %v640
        %vm647 = vweird.f32 %v641
        %vm648 = vmor %vm646, %vm647
        %v649 = vsel %vm648, %v641, %v645
        %v650 = vand.u32 2147483647, %v640
        %vm651 = vcmp.eq.f32.partialorder %v650, 8.507059e+37
        %v652 = vand.u32 %v640, 2147483648
        %v653 = vor.u32 1.1754944e-38, %v652
        %v654 = vsel %vm651, %v653, %v649
        %v655 = vmul.f32 %v637, %v654
        %658 = vrot.lane.b32.xlu0 %v504, 120
        %v659 = vpop.permute.xlu0 %658
        %660 = vrot.lane.b32.xlu0 %v505, 120
        %v661 = vpop.permute.xlu0 %660
        %662 = vrot.lane.b32.xlu0 %v506, 120
        %v663 = vpop.permute.xlu0 %662
        %v667 = vsel %vm566, %v655, 0
        %v669 = vsel %vm570, %v663, 0
        %671 = vmatpush.msra.mxu0 0.0
        %672 = vmatpush.msra.mxu0 0.0
        %673 = vmatpush.msra.mxu0 0.0
        %674 = vmatpush.msra.mxu0 0.0
        %675 = vmatpush.msra.mxu0 0.0
        %676 = vmatpush.msra.mxu0 0.0
        %677 = vmatpush.msra.mxu0 0.0
        %678 = vmatpush.msra.mxu0 0.0
        %679 = vmatpush.msra.mxu0 0.0
        %680 = vmatpush.msra.mxu0 0.0
        %681 = vmatpush.msra.mxu0 0.0
        %682 = vmatpush.msra.mxu0 0.0
        %683 = vmatpush.msra.mxu0 0.0
        %684 = vmatpush.msra.mxu0 %v669
        %685 = vmatpush.msra.mxu0 %v661
        %686 = vmatpush.msra.mxu0 %v659
        %687 = vmatmul.f32.gmra.mxu0 %v667
        %v688 = vpop.f32.mrf.mxu0
        %v689 = vadd.f32 0.0, %v688
        %690 = vdwg.mxu0
        %691 = vrot.lane.b32.xlu0 %v487, 112
        %v692 = vpop.permute.xlu0 %691
        %693 = vrot.lane.b32.xlu0 %v501, 112
        %v694 = vpop.permute.xlu0 %693
        %695 = vrot.lane.b32.xlu0 %v502, 112
        %v696 = vpop.permute.xlu0 %695
        %697 = vrot.lane.b32.xlu0 %v503, 112
        %v698 = vpop.permute.xlu0 %697
        %v699 = vsel %vm507, %v692, 0
        %v701 = vsel %vm507, %v694, 0
        %v703 = vsel %vm507, %v696, 0
        %v705 = vsel %vm507, %v698, 0
        %707 = vmatpush.xpose.msra.mxu0 0.0
        %708 = vmatpush.xpose.msra.mxu0 0.0
        %709 = vmatpush.xpose.msra.mxu0 0.0
        %710 = vmatpush.xpose.msra.mxu0 0.0
        %711 = vmatpush.xpose.msra.mxu0 0.0
        %712 = vmatpush.xpose.msra.mxu0 0.0
        %713 = vmatpush.xpose.msra.mxu0 0.0
        %714 = vmatpush.xpose.msra.mxu0 0.0
        %715 = vmatpush.xpose.msra.mxu0 0.0
        %716 = vmatpush.xpose.msra.mxu0 0.0
        %717 = vmatpush.xpose.msra.mxu0 0.0
        %718 = vmatpush.xpose.msra.mxu0 0.0
        %719 = vmatpush.xpose.msra.mxu0 0.0
        %720 = vmatpush.xpose.msra.mxu0 %v705
        %721 = vmatpush.xpose.msra.mxu0 %v703
        %722 = vmatpush.xpose.msra.mxu0 %v701
        %723 = vmatmul.f32.gmra.mxu0 %v699
        %v724 = vpop.f32.mrf.mxu0
        %v725 = vadd.f32 0.0, %v724
        %726 = vdwg.mxu0
        %v727 = vmul.f32 %v725, 0.35355338
        %v728 = vadd.f32 %v727, %v452
        %v729 = vsel %vm541, %v728, -inf
        %730 = vmax.xlane.f32.xlu0 %v729
        %v731 = vpop.xlane.xlu0 %730
        %v732 = vsub.f32 %v728, %v731
        %v733 = vmul.f32 %v732, 1.442695
        %v734 = vpow.pop %v733
        %v735 = vsel %vm541, %v734, 0.0
        %736 = vadd.xlane.f32.xlu0 %v735
        %v737 = vpop.xlane.xlu0 %736
        %v738 = vrcp.pop %v737
        %v739 = vmul.f32 %v737, %v738
        %v740 = vsub.f32 1.0, %v739
        %v741 = vmul.f32 %v738, %v740
        %v742 = vadd.f32 %v738, %v741
        %vm743 = vweird.f32 %v737
        %vm744 = vweird.f32 %v738
        %vm745 = vmor %vm743, %vm744
        %v746 = vsel %vm745, %v738, %v742
        %v747 = vand.u32 2147483647, %v737
        %vm748 = vcmp.eq.f32.partialorder %v747, 8.507059e+37
        %v749 = vand.u32 %v737, 2147483648
        %v750 = vor.u32 1.1754944e-38, %v749
        %v751 = vsel %vm748, %v750, %v746
        %v752 = vmul.f32 %v734, %v751
        %753 = vrot.lane.b32.xlu0 %v504, 112
        %v754 = vpop.permute.xlu0 %753
        %755 = vrot.lane.b32.xlu0 %v505, 112
        %v756 = vpop.permute.xlu0 %755
        %757 = vrot.lane.b32.xlu0 %v506, 112
        %v758 = vpop.permute.xlu0 %757
        %v762 = vsel %vm566, %v752, 0
        %v764 = vsel %vm570, %v758, 0
        %766 = vmatpush.msra.mxu0 0.0
        %767 = vmatpush.msra.mxu0 0.0
        %768 = vmatpush.msra.mxu0 0.0
        %769 = vmatpush.msra.mxu0 0.0
        %770 = vmatpush.msra.mxu0 0.0
        %771 = vmatpush.msra.mxu0 0.0
        %772 = vmatpush.msra.mxu0 0.0
        %773 = vmatpush.msra.mxu0 0.0
        %774 = vmatpush.msra.mxu0 0.0
        %775 = vmatpush.msra.mxu0 0.0
        %776 = vmatpush.msra.mxu0 0.0
        %777 = vmatpush.msra.mxu0 0.0
        %778 = vmatpush.msra.mxu0 0.0
        %779 = vmatpush.msra.mxu0 %v764
        %780 = vmatpush.msra.mxu0 %v756
        %781 = vmatpush.msra.mxu0 %v754
        %782 = vmatmul.f32.gmra.mxu0 %v762
        %v783 = vpop.f32.mrf.mxu0
        %v784 = vadd.f32 0.0, %v783
        %785 = vdwg.mxu0
        %786 = vrot.lane.b32.xlu0 %v487, 104
        %v787 = vpop.permute.xlu0 %786
        %788 = vrot.lane.b32.xlu0 %v501, 104
        %v789 = vpop.permute.xlu0 %788
        %790 = vrot.lane.b32.xlu0 %v502, 104
        %v791 = vpop.permute.xlu0 %790
        %792 = vrot.lane.b32.xlu0 %v503, 104
        %v793 = vpop.permute.xlu0 %792
        %v794 = vsel %vm507, %v787, 0
        %v796 = vsel %vm507, %v789, 0
        %v798 = vsel %vm507, %v791, 0
        %v800 = vsel %vm507, %v793, 0
        %802 = vmatpush.xpose.msra.mxu0 0.0
        %803 = vmatpush.xpose.msra.mxu0 0.0
        %804 = vmatpush.xpose.msra.mxu0 0.0
        %805 = vmatpush.xpose.msra.mxu0 0.0
        %806 = vmatpush.xpose.msra.mxu0 0.0
        %807 = vmatpush.xpose.msra.mxu0 0.0
        %808 = vmatpush.xpose.msra.mxu0 0.0
        %809 = vmatpush.xpose.msra.mxu0 0.0
        %810 = vmatpush.xpose.msra.mxu0 0.0
        %811 = vmatpush.xpose.msra.mxu0 0.0
        %812 = vmatpush.xpose.msra.mxu0 0.0
        %813 = vmatpush.xpose.msra.mxu0 0.0
        %814 = vmatpush.xpose.msra.mxu0 0.0
        %815 = vmatpush.xpose.msra.mxu0 %v800
        %816 = vmatpush.xpose.msra.mxu0 %v798
        %817 = vmatpush.xpose.msra.mxu0 %v796
        %818 = vmatmul.f32.gmra.mxu0 %v794
        %v819 = vpop.f32.mrf.mxu0
        %v820 = vadd.f32 0.0, %v819
        %821 = vdwg.mxu0
        %v822 = vmul.f32 %v820, 0.35355338
        %v823 = vadd.f32 %v822, %v452
        %v824 = vsel %vm541, %v823, -inf
        %825 = vmax.xlane.f32.xlu0 %v824
        %v826 = vpop.xlane.xlu0 %825
        %v827 = vsub.f32 %v823, %v826
        %v828 = vmul.f32 %v827, 1.442695
        %v829 = vpow.pop %v828
        %v830 = vsel %vm541, %v829, 0.0
        %831 = vadd.xlane.f32.xlu0 %v830
        %v832 = vpop.xlane.xlu0 %831
        %v833 = vrcp.pop %v832
        %v834 = vmul.f32 %v832, %v833
        %v835 = vsub.f32 1.0, %v834
        %v836 = vmul.f32 %v833, %v835
        %v837 = vadd.f32 %v833, %v836
        %vm838 = vweird.f32 %v832
        %vm839 = vweird.f32 %v833
        %vm840 = vmor %vm838, %vm839
        %v841 = vsel %vm840, %v833, %v837
        %v842 = vand.u32 2147483647, %v832
        %vm843 = vcmp.eq.f32.partialorder %v842, 8.507059e+37
        %v844 = vand.u32 %v832, 2147483648
        %v845 = vor.u32 1.1754944e-38, %v844
        %v846 = vsel %vm843, %v845, %v841
        %v847 = vmul.f32 %v829, %v846
        %848 = vrot.lane.b32.xlu0 %v504, 104
        %v849 = vpop.permute.xlu0 %848
        %850 = vrot.lane.b32.xlu0 %v505, 104
        %v851 = vpop.permute.xlu0 %850
        %852 = vrot.lane.b32.xlu0 %v506, 104
        %v853 = vpop.permute.xlu0 %852
        %v857 = vsel %vm566, %v847, 0
        %v859 = vsel %vm570, %v853, 0
        %861 = vmatpush.msra.mxu0 0.0
        %862 = vmatpush.msra.mxu0 0.0
        %863 = vmatpush.msra.mxu0 0.0
        %864 = vmatpush.msra.mxu0 0.0
        %865 = vmatpush.msra.mxu0 0.0
        %866 = vmatpush.msra.mxu0 0.0
        %867 = vmatpush.msra.mxu0 0.0
        %868 = vmatpush.msra.mxu0 0.0
        %869 = vmatpush.msra.mxu0 0.0
        %870 = vmatpush.msra.mxu0 0.0
        %871 = vmatpush.msra.mxu0 0.0
        %872 = vmatpush.msra.mxu0 0.0
        %873 = vmatpush.msra.mxu0 0.0
        %874 = vmatpush.msra.mxu0 %v859
        %875 = vmatpush.msra.mxu0 %v851
        %876 = vmatpush.msra.mxu0 %v849
        %877 = vmatmul.f32.gmra.mxu0 %v857
        %v878 = vpop.f32.mrf.mxu0
        %v879 = vadd.f32 0.0, %v878
        %880 = vdwg.mxu0
        %882 = vrot.lane.b32.xlu0 %v689, 8
        %v883 = vpop.permute.xlu0 %882
        %886 = vrot.lane.b32.xlu0 %v784, 16
        %v887 = vpop.permute.xlu0 %886
        %890 = vrot.lane.b32.xlu0 %v879, 24
        %v891 = vpop.permute.xlu0 %890
        %v893 = vsel %vm507, %v592, %v883
        %vm894 = vcmask 130048
        %v895 = vsel %vm894, %v893, %v887
        %vm896 = vcmask 195584
        %v897 = vsel %vm896, %v895, %v891
        %v899 = vperm.slane %v464, 1
        %v902 = vsel %vm465, %v897, 0
        %904 = vmatpush.msra.mxu0 0.0
        %905 = vmatpush.msra.mxu0 0.0
        %906 = vmatpush.msra.mxu0 0.0
        %907 = vmatpush.msra.mxu0 0.0
        %908 = vmatpush.msra.mxu0 0.0
        %909 = vmatpush.msra.mxu0 0.0
        %910 = vmatpush.msra.mxu0 0.0
        %911 = vmatpush.msra.mxu0 0.0
        %912 = vmatpush.msra.mxu0 0.0
        %913 = vmatpush.msra.mxu0 0.0
        %914 = vmatpush.msra.mxu0 0.0
        %915 = vmatpush.msra.mxu0 0.0
        %916 = vmatpush.msra.mxu0 %v463
        %917 = vmatpush.msra.mxu0 %v461
        %918 = vmatpush.msra.mxu0 %v459
        %919 = vmatpush.msra.mxu0 %v457
        %920 = vmatmul.f32.gmra.mxu0 %v902
        %v921 = vpop.f32.mrf.mxu0
        %v922 = vadd.f32 %v899, %v921
        %923 = vdwg.mxu0
        %v924 = vadd.f32 %v447, %v922
        %v925 = vld [vmem:[%s8] sm:$0x1]
        %v926 = vld [vmem:[%s8 + $0x1] sm:$0x1]
        %v927 = vsel %vm494, %v924, 0.0
        %928 = vadd.xlane.f32.xlu0 %v927
        %v929 = vpop.xlane.xlu0 %928
        %v930 = vrcp.pop 32.0
        %v931 = vmul.f32 32.0, %v930
        %v932 = vsub.f32 1.0, %v931
        %v933 = vmul.f32 %v930, %v932
        %v934 = vadd.f32 %v930, %v933
        %vm935 = vweird.f32 %v930
        %v936 = vsel %vm935, %v930, %v934
        %v937 = vmul.f32 %v929, %v936
        %v938 = vsub.f32 %v924, %v937
        %v939 = vmul.f32 %v938, %v938
        %v940 = vsel %vm494, %v939, 0.0
        %941 = vadd.xlane.f32.xlu0 %v940
        %v942 = vpop.xlane.xlu0 %941
        %v943 = vmul.f32 %v942, %v936
        %v944 = vadd.f32 %v943, 1e-05
        %v945 = vrsqrt.pop %v944
        %v946 = vmul.f32 %v945, %v944
        %v947 = vmul.f32 %v946, %v945
        %v948 = vmul.f32 0.5, %v947
        %v949 = vsub.f32 1.5, %v948
        %v950 = vmul.f32 %v945, %v949
        %vm951 = vweird.f32 %v944
        %vm952 = vweird.f32 %v945
        %vm953 = vmor %vm951, %vm952
        %v954 = vsel %vm953, %v945, %v950
        %v955 = vmul.f32 %v938, %v954
        %v956 = vmul.f32 %v955, %v925
        %v957 = vadd.f32 %v956, %v926
        %962 = vrot.lane.b32.xlu0 %v456, 32
        %v963 = vpop.permute.xlu0 %962
        %964 = vrot.lane.b32.xlu0 %v458, 32
        %v965 = vpop.permute.xlu0 %964
        %966 = vrot.lane.b32.xlu0 %v460, 32
        %v967 = vpop.permute.xlu0 %966
        %968 = vrot.lane.b32.xlu0 %v462, 32
        %v969 = vpop.permute.xlu0 %968
        %v974 = vperm.slane %v464, 0
        %975 = vrot.lane.b32.xlu0 %v974, 32
        %v976 = vpop.permute.xlu0 %975
        %v979 = vsel %vm465, %v957, 0
        %981 = vmatpush.msra.mxu0 0.0
        %982 = vmatpush.msra.mxu0 0.0
        %983 = vmatpush.msra.mxu0 0.0
        %984 = vmatpush.msra.mxu0 0.0
        %985 = vmatpush.msra.mxu0 0.0
        %986 = vmatpush.msra.mxu0 0.0
        %987 = vmatpush.msra.mxu0 0.0
        %988 = vmatpush.msra.mxu0 0.0
        %989 = vmatpush.msra.mxu0 0.0
        %990 = vmatpush.msra.mxu0 0.0
        %991 = vmatpush.msra.mxu0 0.0
        %992 = vmatpush.msra.mxu0 0.0
        %993 = vmatpush.msra.mxu0 %v969
        %994 = vmatpush.msra.mxu0 %v967
        %995 = vmatpush.msra.mxu0 %v965
        %996 = vmatpush.msra.mxu0 %v963
        %997 = vmatmul.f32.gmra.mxu0 %v979
        %v998 = vpop.f32.mrf.mxu0
        %v999 = vadd.f32 %v976, %v998
        %1000 = vdwg.mxu0
        %v1002 = vsel %vm507, %v999, 0
        %v1005 = vsel %vm507, %v454, 0
        %v1008 = vsel %vm507, %v455, 0
        %1010 = vmatpush.xpose.msra.mxu0 0.0
        %1011 = vmatpush.xpose.msra.mxu0 0.0
        %1012 = vmatpush.xpose.msra.mxu0 0.0
        %1013 = vmatpush.xpose.msra.mxu0 0.0
        %1014 = vmatpush.xpose.msra.mxu0 0.0
        %1015 = vmatpush.xpose.msra.mxu0 0.0
        %1016 = vmatpush.xpose.msra.mxu0 0.0
        %1017 = vmatpush.xpose.msra.mxu0 0.0
        %1018 = vmatpush.xpose.msra.mxu0 0.0
        %1019 = vmatpush.xpose.msra.mxu0 0.0
        %1020 = vmatpush.xpose.msra.mxu0 0.0
        %1021 = vmatpush.xpose.msra.mxu0 0.0
        %1022 = vmatpush.xpose.msra.mxu0 0.0
        %1023 = vmatpush.xpose.msra.mxu0 0.0
        %1024 = vmatpush.xpose.msra.mxu0 %v1008
        %1025 = vmatpush.xpose.msra.mxu0 %v1005
        %1026 = vmatmul.f32.gmra.mxu0 %v1002
        %v1027 = vpop.f32.mrf.mxu0
        %v1028 = vadd.f32 0.0, %v1027
        %1029 = vdwg.mxu0
        %v1030 = vmul.f32 %v1028, 0.35355338
        %v1031 = vadd.f32 %v1030, %v453
        %vm1032 = vcmask 122880
        %v1033 = vsel %vm1032, %v1031, -inf
        %1034 = vmax.xlane.f32.xlu0 %v1033
        %v1035 = vpop.xlane.xlu0 %1034
        %v1036 = vsub.f32 %v1031, %v1035
        %v1037 = vmul.f32 %v1036, 1.442695
        %v1038 = vpow.pop %v1037
        %v1039 = vsel %vm1032, %v1038, 0.0
        %1040 = vadd.xlane.f32.xlu0 %v1039
        %v1041 = vpop.xlane.xlu0 %1040
        %v1042 = vrcp.pop %v1041
        %v1043 = vmul.f32 %v1041, %v1042
        %v1044 = vsub.f32 1.0, %v1043
        %v1045 = vmul.f32 %v1042, %v1044
        %v1046 = vadd.f32 %v1042, %v1045
        %vm1047 = vweird.f32 %v1041
        %vm1048 = vweird.f32 %v1042
        %vm1049 = vmor %vm1047, %vm1048
        %v1050 = vsel %vm1049, %v1042, %v1046
        %v1051 = vand.u32 2147483647, %v1041
        %vm1052 = vcmp.eq.f32.partialorder %v1051, 8.507059e+37
        %v1053 = vand.u32 %v1041, 2147483648
        %v1054 = vor.u32 1.1754944e-38, %v1053
        %v1055 = vsel %vm1052, %v1054, %v1050
        %v1056 = vmul.f32 %v1038, %v1055
        %1057 = vrot.lane.b32.xlu0 %v454, 96
        %v1058 = vpop.permute.xlu0 %1057
        %1059 = vrot.lane.b32.xlu0 %v455, 96
        %v1060 = vpop.permute.xlu0 %1059
        %v1064 = vsel %vm894, %v1056, 0
        %1066 = vmatpush.msra.mxu0 0.0
        %1067 = vmatpush.msra.mxu0 0.0
        %1068 = vmatpush.msra.mxu0 0.0
        %1069 = vmatpush.msra.mxu0 0.0
        %1070 = vmatpush.msra.mxu0 0.0
        %1071 = vmatpush.msra.mxu0 0.0
        %1072 = vmatpush.msra.mxu0 0.0
        %1073 = vmatpush.msra.mxu0 0.0
        %1074 = vmatpush.msra.mxu0 0.0
        %1075 = vmatpush.msra.mxu0 0.0
        %1076 = vmatpush.msra.mxu0 0.0
        %1077 = vmatpush.msra.mxu0 0.0
        %1078 = vmatpush.msra.mxu0 0.0
        %1079 = vmatpush.msra.mxu0 0.0
        %1080 = vmatpush.msra.mxu0 %v1060
        %1081 = vmatpush.msra.mxu0 %v1058
        %1082 = vmatmul.f32.gmra.mxu0 %v1064
        %v1083 = vpop.f32.mrf.mxu0
        %v1084 = vadd.f32 0.0, %v1083
        %1085 = vdwg.mxu0
        %1086 = vrot.lane.b32.xlu0 %v999, 120
        %v1087 = vpop.permute.xlu0 %1086
        %1088 = vrot.lane.b32.xlu0 %v454, 120
        %v1089 = vpop.permute.xlu0 %1088
        %1090 = vrot.lane.b32.xlu0 %v455, 120
        %v1091 = vpop.permute.xlu0 %1090
        %v1092 = vsel %vm507, %v1087, 0
        %v1094 = vsel %vm507, %v1089, 0
        %v1096 = vsel %vm507, %v1091, 0
        %1098 = vmatpush.xpose.msra.mxu0 0.0
        %1099 = vmatpush.xpose.msra.mxu0 0.0
        %1100 = vmatpush.xpose.msra.mxu0 0.0
        %1101 = vmatpush.xpose.msra.mxu0 0.0
        %1102 = vmatpush.xpose.msra.mxu0 0.0
        %1103 = vmatpush.xpose.msra.mxu0 0.0
        %1104 = vmatpush.xpose.msra.mxu0 0.0
        %1105 = vmatpush.xpose.msra.mxu0 0.0
        %1106 = vmatpush.xpose.msra.mxu0 0.0
        %1107 = vmatpush.xpose.msra.mxu0 0.0
        %1108 = vmatpush.xpose.msra.mxu0 0.0
        %1109 = vmatpush.xpose.msra.mxu0 0.0
        %1110 = vmatpush.xpose.msra.mxu0 0.0
        %1111 = vmatpush.xpose.msra.mxu0 0.0
        %1112 = vmatpush.xpose.msra.mxu0 %v1096
        %1113 = vmatpush.xpose.msra.mxu0 %v1094
        %1114 = vmatmul.f32.gmra.mxu0 %v1092
        %v1115 = vpop.f32.mrf.mxu0
        %v1116 = vadd.f32 0.0, %v1115
        %1117 = vdwg.mxu0
        %v1118 = vmul.f32 %v1116, 0.35355338
        %v1119 = vadd.f32 %v1118, %v453
        %v1120 = vsel %vm1032, %v1119, -inf
        %1121 = vmax.xlane.f32.xlu0 %v1120
        %v1122 = vpop.xlane.xlu0 %1121
        %v1123 = vsub.f32 %v1119, %v1122
        %v1124 = vmul.f32 %v1123, 1.442695
        %v1125 = vpow.pop %v1124
        %v1126 = vsel %vm1032, %v1125, 0.0
        %1127 = vadd.xlane.f32.xlu0 %v1126
        %v1128 = vpop.xlane.xlu0 %1127
        %v1129 = vrcp.pop %v1128
        %v1130 = vmul.f32 %v1128, %v1129
        %v1131 = vsub.f32 1.0, %v1130
        %v1132 = vmul.f32 %v1129, %v1131
        %v1133 = vadd.f32 %v1129, %v1132
        %vm1134 = vweird.f32 %v1128
        %vm1135 = vweird.f32 %v1129
        %vm1136 = vmor %vm1134, %vm1135
        %v1137 = vsel %vm1136, %v1129, %v1133
        %v1138 = vand.u32 2147483647, %v1128
        %vm1139 = vcmp.eq.f32.partialorder %v1138, 8.507059e+37
        %v1140 = vand.u32 %v1128, 2147483648
        %v1141 = vor.u32 1.1754944e-38, %v1140
        %v1142 = vsel %vm1139, %v1141, %v1137
        %v1143 = vmul.f32 %v1125, %v1142
        %1144 = vrot.lane.b32.xlu0 %v454, 88
        %v1145 = vpop.permute.xlu0 %1144
        %1146 = vrot.lane.b32.xlu0 %v455, 88
        %v1147 = vpop.permute.xlu0 %1146
        %v1151 = vsel %vm894, %v1143, 0
        %1153 = vmatpush.msra.mxu0 0.0
        %1154 = vmatpush.msra.mxu0 0.0
        %1155 = vmatpush.msra.mxu0 0.0
        %1156 = vmatpush.msra.mxu0 0.0
        %1157 = vmatpush.msra.mxu0 0.0
        %1158 = vmatpush.msra.mxu0 0.0
        %1159 = vmatpush.msra.mxu0 0.0
        %1160 = vmatpush.msra.mxu0 0.0
        %1161 = vmatpush.msra.mxu0 0.0
        %1162 = vmatpush.msra.mxu0 0.0
        %1163 = vmatpush.msra.mxu0 0.0
        %1164 = vmatpush.msra.mxu0 0.0
        %1165 = vmatpush.msra.mxu0 0.0
        %1166 = vmatpush.msra.mxu0 0.0
        %1167 = vmatpush.msra.mxu0 %v1147
        %1168 = vmatpush.msra.mxu0 %v1145
        %1169 = vmatmul.f32.gmra.mxu0 %v1151
        %v1170 = vpop.f32.mrf.mxu0
        %v1171 = vadd.f32 0.0, %v1170
        %1172 = vdwg.mxu0
        %1173 = vrot.lane.b32.xlu0 %v999, 112
        %v1174 = vpop.permute.xlu0 %1173
        %1175 = vrot.lane.b32.xlu0 %v454, 112
        %v1176 = vpop.permute.xlu0 %1175
        %1177 = vrot.lane.b32.xlu0 %v455, 112
        %v1178 = vpop.permute.xlu0 %1177
        %v1179 = vsel %vm507, %v1174, 0
        %v1181 = vsel %vm507, %v1176, 0
        %v1183 = vsel %vm507, %v1178, 0
        %1185 = vmatpush.xpose.msra.mxu0 0.0
        %1186 = vmatpush.xpose.msra.mxu0 0.0
        %1187 = vmatpush.xpose.msra.mxu0 0.0
        %1188 = vmatpush.xpose.msra.mxu0 0.0
        %1189 = vmatpush.xpose.msra.mxu0 0.0
        %1190 = vmatpush.xpose.msra.mxu0 0.0
        %1191 = vmatpush.xpose.msra.mxu0 0.0
        %1192 = vmatpush.xpose.msra.mxu0 0.0
        %1193 = vmatpush.xpose.msra.mxu0 0.0
        %1194 = vmatpush.xpose.msra.mxu0 0.0
        %1195 = vmatpush.xpose.msra.mxu0 0.0
        %1196 = vmatpush.xpose.msra.mxu0 0.0
        %1197 = vmatpush.xpose.msra.mxu0 0.0
        %1198 = vmatpush.xpose.msra.mxu0 0.0
        %1199 = vmatpush.xpose.msra.mxu0 %v1183
        %1200 = vmatpush.xpose.msra.mxu0 %v1181
        %1201 = vmatmul.f32.gmra.mxu0 %v1179
        %v1202 = vpop.f32.mrf.mxu0
        %v1203 = vadd.f32 0.0, %v1202
        %1204 = vdwg.mxu0
        %v1205 = vmul.f32 %v1203, 0.35355338
        %v1206 = vadd.f32 %v1205, %v453
        %v1207 = vsel %vm1032, %v1206, -inf
        %1208 = vmax.xlane.f32.xlu0 %v1207
        %v1209 = vpop.xlane.xlu0 %1208
        %v1210 = vsub.f32 %v1206, %v1209
        %v1211 = vmul.f32 %v1210, 1.442695
        %v1212 = vpow.pop %v1211
        %v1213 = vsel %vm1032, %v1212, 0.0
        %1214 = vadd.xlane.f32.xlu0 %v1213
        %v1215 = vpop.xlane.xlu0 %1214
        %v1216 = vrcp.pop %v1215
        %v1217 = vmul.f32 %v1215, %v1216
        %v1218 = vsub.f32 1.0, %v1217
        %v1219 = vmul.f32 %v1216, %v1218
        %v1220 = vadd.f32 %v1216, %v1219
        %vm1221 = vweird.f32 %v1215
        %vm1222 = vweird.f32 %v1216
        %vm1223 = vmor %vm1221, %vm1222
        %v1224 = vsel %vm1223, %v1216, %v1220
        %v1225 = vand.u32 2147483647, %v1215
        %vm1226 = vcmp.eq.f32.partialorder %v1225, 8.507059e+37
        %v1227 = vand.u32 %v1215, 2147483648
        %v1228 = vor.u32 1.1754944e-38, %v1227
        %v1229 = vsel %vm1226, %v1228, %v1224
        %v1230 = vmul.f32 %v1212, %v1229
        %1231 = vrot.lane.b32.xlu0 %v454, 80
        %v1232 = vpop.permute.xlu0 %1231
        %1233 = vrot.lane.b32.xlu0 %v455, 80
        %v1234 = vpop.permute.xlu0 %1233
        %v1238 = vsel %vm894, %v1230, 0
        %1240 = vmatpush.msra.mxu0 0.0
        %1241 = vmatpush.msra.mxu0 0.0
        %1242 = vmatpush.msra.mxu0 0.0
        %1243 = vmatpush.msra.mxu0 0.0
        %1244 = vmatpush.msra.mxu0 0.0
        %1245 = vmatpush.msra.mxu0 0.0
        %1246 = vmatpush.msra.mxu0 0.0
        %1247 = vmatpush.msra.mxu0 0.0
        %1248 = vmatpush.msra.mxu0 0.0
        %1249 = vmatpush.msra.mxu0 0.0
        %1250 = vmatpush.msra.mxu0 0.0
        %1251 = vmatpush.msra.mxu0 0.0
        %1252 = vmatpush.msra.mxu0 0.0
        %1253 = vmatpush.msra.mxu0 0.0
        %1254 = vmatpush.msra.mxu0 %v1234
        %1255 = vmatpush.msra.mxu0 %v1232
        %1256 = vmatmul.f32.gmra.mxu0 %v1238
        %v1257 = vpop.f32.mrf.mxu0
        %v1258 = vadd.f32 0.0, %v1257
        %1259 = vdwg.mxu0
        %1260 = vrot.lane.b32.xlu0 %v999, 104
        %v1261 = vpop.permute.xlu0 %1260
        %1262 = vrot.lane.b32.xlu0 %v454, 104
        %v1263 = vpop.permute.xlu0 %1262
        %1264 = vrot.lane.b32.xlu0 %v455, 104
        %v1265 = vpop.permute.xlu0 %1264
        %v1266 = vsel %vm507, %v1261, 0
        %v1268 = vsel %vm507, %v1263, 0
        %v1270 = vsel %vm507, %v1265, 0
        %1272 = vmatpush.xpose.msra.mxu0 0.0
        %1273 = vmatpush.xpose.msra.mxu0 0.0
        %1274 = vmatpush.xpose.msra.mxu0 0.0
        %1275 = vmatpush.xpose.msra.mxu0 0.0
        %1276 = vmatpush.xpose.msra.mxu0 0.0
        %1277 = vmatpush.xpose.msra.mxu0 0.0
        %1278 = vmatpush.xpose.msra.mxu0 0.0
        %1279 = vmatpush.xpose.msra.mxu0 0.0
        %1280 = vmatpush.xpose.msra.mxu0 0.0
        %1281 = vmatpush.xpose.msra.mxu0 0.0
        %1282 = vmatpush.xpose.msra.mxu0 0.0
        %1283 = vmatpush.xpose.msra.mxu0 0.0
        %1284 = vmatpush.xpose.msra.mxu0 0.0
        %1285 = vmatpush.xpose.msra.mxu0 0.0
        %1286 = vmatpush.xpose.msra.mxu0 %v1270
        %1287 = vmatpush.xpose.msra.mxu0 %v1268
        %1288 = vmatmul.f32.gmra.mxu0 %v1266
        %v1289 = vpop.f32.mrf.mxu0
        %v1290 = vadd.f32 0.0, %v1289
        %1291 = vdwg.mxu0
        %v1292 = vmul.f32 %v1290, 0.35355338
        %v1293 = vadd.f32 %v1292, %v453
        %v1294 = vsel %vm1032, %v1293, -inf
        %1295 = vmax.xlane.f32.xlu0 %v1294
        %v1296 = vpop.xlane.xlu0 %1295
        %v1297 = vsub.f32 %v1293, %v1296
        %v1298 = vmul.f32 %v1297, 1.442695
        %v1299 = vpow.pop %v1298
        %v1300 = vsel %vm1032, %v1299, 0.0
        %1301 = vadd.xlane.f32.xlu0 %v1300
        %v1302 = vpop.xlane.xlu0 %1301
        %v1303 = vrcp.pop %v1302
        %v1304 = vmul.f32 %v1302, %v1303
        %v1305 = vsub.f32 1.0, %v1304
        %v1306 = vmul.f32 %v1303, %v1305
        %v1307 = vadd.f32 %v1303, %v1306
        %vm1308 = vweird.f32 %v1302
        %vm1309 = vweird.f32 %v1303
        %vm1310 = vmor %vm1308, %vm1309
        %v1311 = vsel %vm1310, %v1303, %v1307
        %v1312 = vand.u32 2147483647, %v1302
        %vm1313 = vcmp.eq.f32.partialorder %v1312, 8.507059e+37
        %v1314 = vand.u32 %v1302, 2147483648
        %v1315 = vor.u32 1.1754944e-38, %v1314
        %v1316 = vsel %vm1313, %v1315, %v1311
        %v1317 = vmul.f32 %v1299, %v1316
        %1318 = vrot.lane.b32.xlu0 %v454, 72
        %v1319 = vpop.permute.xlu0 %1318
        %1320 = vrot.lane.b32.xlu0 %v455, 72
        %v1321 = vpop.permute.xlu0 %1320
        %v1325 = vsel %vm894, %v1317, 0
        %1327 = vmatpush.msra.mxu0 0.0
        %1328 = vmatpush.msra.mxu0 0.0
        %1329 = vmatpush.msra.mxu0 0.0
        %1330 = vmatpush.msra.mxu0 0.0
        %1331 = vmatpush.msra.mxu0 0.0
        %1332 = vmatpush.msra.mxu0 0.0
        %1333 = vmatpush.msra.mxu0 0.0
        %1334 = vmatpush.msra.mxu0 0.0
        %1335 = vmatpush.msra.mxu0 0.0
        %1336 = vmatpush.msra.mxu0 0.0
        %1337 = vmatpush.msra.mxu0 0.0
        %1338 = vmatpush.msra.mxu0 0.0
        %1339 = vmatpush.msra.mxu0 0.0
        %1340 = vmatpush.msra.mxu0 0.0
        %1341 = vmatpush.msra.mxu0 %v1321
        %1342 = vmatpush.msra.mxu0 %v1319
        %1343 = vmatmul.f32.gmra.mxu0 %v1325
        %v1344 = vpop.f32.mrf.mxu0
        %v1345 = vadd.f32 0.0, %v1344
        %1346 = vdwg.mxu0
        %1348 = vrot.lane.b32.xlu0 %v1171, 8
        %v1349 = vpop.permute.xlu0 %1348
        %1352 = vrot.lane.b32.xlu0 %v1258, 16
        %v1353 = vpop.permute.xlu0 %1352
        %1356 = vrot.lane.b32.xlu0 %v1345, 24
        %v1357 = vpop.permute.xlu0 %1356
        %v1359 = vsel %vm507, %v1084, %v1349
        %v1360 = vsel %vm894, %v1359, %v1353
        %v1361 = vsel %vm896, %v1360, %v1357
        %1366 = vrot.lane.b32.xlu0 %v457, 96
        %v1367 = vpop.permute.xlu0 %1366
        %1368 = vrot.lane.b32.xlu0 %v459, 96
        %v1369 = vpop.permute.xlu0 %1368
        %1370 = vrot.lane.b32.xlu0 %v461, 96
        %v1371 = vpop.permute.xlu0 %1370
        %1372 = vrot.lane.b32.xlu0 %v463, 96
        %v1373 = vpop.permute.xlu0 %1372
        %1378 = vrot.lane.b32.xlu0 %v899, 96
        %v1379 = vpop.permute.xlu0 %1378
        %v1382 = vsel %vm465, %v1361, 0
        %1384 = vmatpush.msra.mxu0 0.0
        %1385 = vmatpush.msra.mxu0 0.0
        %1386 = vmatpush.msra.mxu0 0.0
        %1387 = vmatpush.msra.mxu0 0.0
        %1388 = vmatpush.msra.mxu0 0.0
        %1389 = vmatpush.msra.mxu0 0.0
        %1390 = vmatpush.msra.mxu0 0.0
        %1391 = vmatpush.msra.mxu0 0.0
        %1392 = vmatpush.msra.mxu0 0.0
        %1393 = vmatpush.msra.mxu0 0.0
        %1394 = vmatpush.msra.mxu0 0.0
        %1395 = vmatpush.msra.mxu0 0.0
        %1396 = vmatpush.msra.mxu0 %v1373
        %1397 = vmatpush.msra.mxu0 %v1371
        %1398 = vmatpush.msra.mxu0 %v1369
        %1399 = vmatpush.msra.mxu0 %v1367
        %1400 = vmatmul.f32.gmra.mxu0 %v1382
        %v1401 = vpop.f32.mrf.mxu0
        %v1402 = vadd.f32 %v1379, %v1401
        %1403 = vdwg.mxu0
        %v1404 = vadd.f32 %v957, %v1402
        %v1405 = vld [vmem:[%s8 + $0x2] sm:$0x1]
        %v1406 = vld [vmem:[%s8 + $0x3] sm:$0x1]
        %v1407 = vsel %vm494, %v1404, 0.0
        %1408 = vadd.xlane.f32.xlu0 %v1407
        %v1409 = vpop.xlane.xlu0 %1408
        %v1410 = vmul.f32 %v1409, %v936
        %v1411 = vsub.f32 %v1404, %v1410
        %v1412 = vmul.f32 %v1411, %v1411
        %v1413 = vsel %vm494, %v1412, 0.0
        %1414 = vadd.xlane.f32.xlu0 %v1413
        %v1415 = vpop.xlane.xlu0 %1414
        %v1416 = vmul.f32 %v1415, %v936
        %v1417 = vadd.f32 %v1416, 1e-05
        %v1418 = vrsqrt.pop %v1417
        %v1419 = vmul.f32 %v1418, %v1417
        %v1420 = vmul.f32 %v1419, %v1418
        %v1421 = vmul.f32 0.5, %v1420
        %v1422 = vsub.f32 1.5, %v1421
        %v1423 = vmul.f32 %v1418, %v1422
        %vm1424 = vweird.f32 %v1417
        %vm1425 = vweird.f32 %v1418
        %vm1426 = vmor %vm1424, %vm1425
        %v1427 = vsel %vm1426, %v1418, %v1423
        %v1428 = vmul.f32 %v1411, %v1427
        %v1429 = vmul.f32 %v1428, %v1405
        %v1430 = vadd.f32 %v1429, %v1406
        %1431 = vrot.lane.b32.xlu0 %v457, 64
        %v1432 = vpop.permute.xlu0 %1431
        %1433 = vrot.lane.b32.xlu0 %v459, 64
        %v1434 = vpop.permute.xlu0 %1433
        %1435 = vrot.lane.b32.xlu0 %v461, 64
        %v1436 = vpop.permute.xlu0 %1435
        %1437 = vrot.lane.b32.xlu0 %v463, 64
        %v1438 = vpop.permute.xlu0 %1437
        %1443 = vrot.lane.b32.xlu0 %v899, 64
        %v1444 = vpop.permute.xlu0 %1443
        %v1447 = vsel %vm465, %v1430, 0
        %1449 = vmatpush.msra.mxu0 0.0
        %1450 = vmatpush.msra.mxu0 0.0
        %1451 = vmatpush.msra.mxu0 0.0
        %1452 = vmatpush.msra.mxu0 0.0
        %1453 = vmatpush.msra.mxu0 0.0
        %1454 = vmatpush.msra.mxu0 0.0
        %1455 = vmatpush.msra.mxu0 0.0
        %1456 = vmatpush.msra.mxu0 0.0
        %1457 = vmatpush.msra.mxu0 0.0
        %1458 = vmatpush.msra.mxu0 0.0
        %1459 = vmatpush.msra.mxu0 0.0
        %1460 = vmatpush.msra.mxu0 0.0
        %1461 = vmatpush.msra.mxu0 %v1438
        %1462 = vmatpush.msra.mxu0 %v1436
        %1463 = vmatpush.msra.mxu0 %v1434
        %1464 = vmatpush.msra.mxu0 %v1432
        %1465 = vmatmul.f32.gmra.mxu0 %v1447
        %v1466 = vpop.f32.mrf.mxu0
        %v1467 = vadd.f32 %v1444, %v1466
        %1468 = vdwg.mxu0
        %v1469 = vmax.f32 %v1467, 0.0
        %v1470 = vld [vmem:[%s6] sm:$0xff]
        %v1471 = vld [vmem:[%s6 + $0x8] sm:$0xff]
        %v1472 = vld [vmem:[%s6 + $0x10] sm:$0xff]
        %v1473 = vld [vmem:[%s6 + $0x18] sm:$0xff]
        %v1474 = vld [vmem:[%s6 + $0x20] sm:$0xff]
        %v1475 = vld [vmem:[%s6 + $0x28] sm:$0xff]
        %v1476 = vld [vmem:[%s6 + $0x30] sm:$0xff]
        %v1477 = vld [vmem:[%s6 + $0x38] sm:$0xff]
        %v1478 = vperm.slane %v464, 2
        %vm1480 = vcmask 523264
        %v1482 = vsel %vm1480, %v1469, 0
        %1484 = vmatpush.msra.mxu0 0.0
        %1485 = vmatpush.msra.mxu0 0.0
        %1486 = vmatpush.msra.mxu0 0.0
        %1487 = vmatpush.msra.mxu0 0.0
        %1488 = vmatpush.msra.mxu0 0.0
        %1489 = vmatpush.msra.mxu0 0.0
        %1490 = vmatpush.msra.mxu0 0.0
        %1491 = vmatpush.msra.mxu0 0.0
        %1492 = vmatpush.msra.mxu0 %v1477
        %1493 = vmatpush.msra.mxu0 %v1476
        %1494 = vmatpush.msra.mxu0 %v1475
        %1495 = vmatpush.msra.mxu0 %v1474
        %1496 = vmatpush.msra.mxu0 %v1473
        %1497 = vmatpush.msra.mxu0 %v1472
        %1498 = vmatpush.msra.mxu0 %v1471
        %1499 = vmatpush.msra.mxu0 %v1470
        %1500 = vmatmul.f32.gmra.mxu0 %v1482
        %v1501 = vpop.f32.mrf.mxu0
        %v1502 = vadd.f32 %v1478, %v1501
        %1503 = vdwg.mxu0
        %v1504 = vadd.f32 %v1430, %v1502
        %v1505 = vld [vmem:[%s8 + $0x4] sm:$0x1]
        %v1506 = vld [vmem:[%s8 + $0x5] sm:$0x1]
        %v1507 = vsel %vm494, %v1504, 0.0
        %1508 = vadd.xlane.f32.xlu0 %v1507
        %v1509 = vpop.xlane.xlu0 %1508
        %v1510 = vmul.f32 %v1509, %v936
        %v1511 = vsub.f32 %v1504, %v1510
        %v1512 = vmul.f32 %v1511, %v1511
        %v1513 = vsel %vm494, %v1512, 0.0
        %1514 = vadd.xlane.f32.xlu0 %v1513
        %v1515 = vpop.xlane.xlu0 %1514
        %v1516 = vmul.f32 %v1515, %v936
        %v1517 = vadd.f32 %v1516, 1e-05
        %v1518 = vrsqrt.pop %v1517
        %v1519 = vmul.f32 %v1518, %v1517
        %v1520 = vmul.f32 %v1519, %v1518
        %v1521 = vmul.f32 0.5, %v1520
        %v1522 = vsub.f32 1.5, %v1521
        %v1523 = vmul.f32 %v1518, %v1522
        %vm1524 = vweird.f32 %v1517
        %vm1525 = vweird.f32 %v1518
        %vm1526 = vmor %vm1524, %vm1525
        %v1527 = vsel %vm1526, %v1518, %v1523
        %v1528 = vmul.f32 %v1511, %v1527
        %v1529 = vmul.f32 %v1528, %v1505
        %v1530 = vadd.f32 %v1529, %v1506
        %s1531 = scalar_lea.vmem %s5, 64
        %v1532 = vld [vmem:[%s1531] sm:$0xff]
        %v1533 = vld [vmem:[%s1531 + $0x8] sm:$0xff]
        %v1534 = vld [vmem:[%s1531 + $0x10] sm:$0xff]
        %v1535 = vld [vmem:[%s1531 + $0x18] sm:$0xff]
        %v1536 = vld [vmem:[%s1531 + $0x20] sm:$0xff]
        %v1537 = vld [vmem:[%s1531 + $0x28] sm:$0xff]
        %v1538 = vld [vmem:[%s1531 + $0x30] sm:$0xff]
        %v1539 = vld [vmem:[%s1531 + $0x38] sm:$0xff]
        %s1540 = scalar_lea.vmem %s7, 3
        %v1541 = vld [vmem:[%s1540] sm:$0x7]
        %v1543 = vsel %vm465, %v1530, 0
        %1545 = vmatpush.msra.mxu0 0.0
        %1546 = vmatpush.msra.mxu0 0.0
        %1547 = vmatpush.msra.mxu0 0.0
        %1548 = vmatpush.msra.mxu0 0.0
        %1549 = vmatpush.msra.mxu0 0.0
        %1550 = vmatpush.msra.mxu0 0.0
        %1551 = vmatpush.msra.mxu0 0.0
        %1552 = vmatpush.msra.mxu0 0.0
        %1553 = vmatpush.msra.mxu0 0.0
        %1554 = vmatpush.msra.mxu0 0.0
        %1555 = vmatpush.msra.mxu0 0.0
        %1556 = vmatpush.msra.mxu0 0.0
        %1557 = vmatpush.msra.mxu0 %v1538
        %1558 = vmatpush.msra.mxu0 %v1536
        %1559 = vmatpush.msra.mxu0 %v1534
        %1560 = vmatpush.msra.mxu0 %v1532
        %1561 = vmatmul.f32.gmra.mxu0 %v1543
        %v1562 = vpop.f32.mrf.mxu0
        %v1563 = vadd.f32 %v1541, %v1562
        %1564 = vdwg.mxu0
        %1566 = vrot.lane.b32.xlu0 %v1563, 96
        %v1567 = vpop.permute.xlu0 %1566
        %s1569 = scalar_lea.vmem [#allocation4], %s36
        %1570 = vst.msk [vmem:[%s1569] sm:$0x1] %vm494, %v1567
        %1571 = vrot.lane.b32.xlu0 %v1563, 64
        %v1572 = vpop.permute.xlu0 %1571
        %s1574 = scalar_lea.vmem [#allocation5], %s36
        %1575 = vst.msk [vmem:[%s1574] sm:$0x1] %vm494, %v1572
        %v1576 = vld [vmem:[#allocation4] sm:$0xff]
        %v1577 = vld [vmem:[#allocation4 + $0x8] sm:$0xff]
        %v1578 = vld [vmem:[#allocation4 + $0x10] sm:$0xf]
        %v1579 = vld [vmem:[#allocation5] sm:$0xff]
        %v1580 = vld [vmem:[#allocation5 + $0x8] sm:$0xff]
        %v1581 = vld [vmem:[#allocation5 + $0x10] sm:$0xf]
        %v1582 = vsel %vm507, %v1563, 0
        %v1585 = vsel %vm507, %v1576, 0
        %v1588 = vsel %vm507, %v1577, 0
        %v1591 = vsel %vm507, %v1578, 0
        %1593 = vmatpush.xpose.msra.mxu0 0.0
        %1594 = vmatpush.xpose.msra.mxu0 0.0
        %1595 = vmatpush.xpose.msra.mxu0 0.0
        %1596 = vmatpush.xpose.msra.mxu0 0.0
        %1597 = vmatpush.xpose.msra.mxu0 0.0
        %1598 = vmatpush.xpose.msra.mxu0 0.0
        %1599 = vmatpush.xpose.msra.mxu0 0.0
        %1600 = vmatpush.xpose.msra.mxu0 0.0
        %1601 = vmatpush.xpose.msra.mxu0 0.0
        %1602 = vmatpush.xpose.msra.mxu0 0.0
        %1603 = vmatpush.xpose.msra.mxu0 0.0
        %1604 = vmatpush.xpose.msra.mxu0 0.0
        %1605 = vmatpush.xpose.msra.mxu0 0.0
        %1606 = vmatpush.xpose.msra.mxu0 %v1591
        %1607 = vmatpush.xpose.msra.mxu0 %v1588
        %1608 = vmatpush.xpose.msra.mxu0 %v1585
        %1609 = vmatmul.f32.gmra.mxu0 %v1582
        %v1610 = vpop.f32.mrf.mxu0
        %v1611 = vadd.f32 0.0, %v1610
        %1612 = vdwg.mxu0
        %v1613 = vmul.f32 %v1611, 0.35355338
        %v1614 = vadd.f32 %v1613, %v452
        %v1615 = vsel %vm541, %v1614, -inf
        %1616 = vmax.xlane.f32.xlu0 %v1615
        %v1617 = vpop.xlane.xlu0 %1616
        %v1618 = vsub.f32 %v1614, %v1617
        %v1619 = vmul.f32 %v1618, 1.442695
        %v1620 = vpow.pop %v1619
        %v1621 = vsel %vm541, %v1620, 0.0
        %1622 = vadd.xlane.f32.xlu0 %v1621
        %v1623 = vpop.xlane.xlu0 %1622
        %v1624 = vrcp.pop %v1623
        %v1625 = vmul.f32 %v1623, %v1624
        %v1626 = vsub.f32 1.0, %v1625
        %v1627 = vmul.f32 %v1624, %v1626
        %v1628 = vadd.f32 %v1624, %v1627
        %vm1629 = vweird.f32 %v1623
        %vm1630 = vweird.f32 %v1624
        %vm1631 = vmor %vm1629, %vm1630
        %v1632 = vsel %vm1631, %v1624, %v1628
        %v1633 = vand.u32 2147483647, %v1623
        %vm1634 = vcmp.eq.f32.partialorder %v1633, 8.507059e+37
        %v1635 = vand.u32 %v1623, 2147483648
        %v1636 = vor.u32 1.1754944e-38, %v1635
        %v1637 = vsel %vm1634, %v1636, %v1632
        %v1638 = vmul.f32 %v1620, %v1637
        %v1640 = vsel %vm566, %v1638, 0
        %v1643 = vsel %vm570, %v1581, 0
        %1645 = vmatpush.msra.mxu0 0.0
        %1646 = vmatpush.msra.mxu0 0.0
        %1647 = vmatpush.msra.mxu0 0.0
        %1648 = vmatpush.msra.mxu0 0.0
        %1649 = vmatpush.msra.mxu0 0.0
        %1650 = vmatpush.msra.mxu0 0.0
        %1651 = vmatpush.msra.mxu0 0.0
        %1652 = vmatpush.msra.mxu0 0.0
        %1653 = vmatpush.msra.mxu0 0.0
        %1654 = vmatpush.msra.mxu0 0.0
        %1655 = vmatpush.msra.mxu0 0.0
        %1656 = vmatpush.msra.mxu0 0.0
        %1657 = vmatpush.msra.mxu0 0.0
        %1658 = vmatpush.msra.mxu0 %v1643
        %1659 = vmatpush.msra.mxu0 %v1580
        %1660 = vmatpush.msra.mxu0 %v1579
        %1661 = vmatmul.f32.gmra.mxu0 %v1640
        %v1662 = vpop.f32.mrf.mxu0
        %v1663 = vadd.f32 0.0, %v1662
        %1664 = vdwg.mxu0
        %1665 = vrot.lane.b32.xlu0 %v1563, 120
        %v1666 = vpop.permute.xlu0 %1665
        %1667 = vrot.lane.b32.xlu0 %v1576, 120
        %v1668 = vpop.permute.xlu0 %1667
        %1669 = vrot.lane.b32.xlu0 %v1577, 120
        %v1670 = vpop.permute.xlu0 %1669
        %1671 = vrot.lane.b32.xlu0 %v1578, 120
        %v1672 = vpop.permute.xlu0 %1671
        %v1673 = vsel %vm507, %v1666, 0
        %v1675 = vsel %vm507, %v1668, 0
        %v1677 = vsel %vm507, %v1670, 0
        %v1679 = vsel %vm507, %v1672, 0
        %1681 = vmatpush.xpose.msra.mxu0 0.0
        %1682 = vmatpush.xpose.msra.mxu0 0.0
        %1683 = vmatpush.xpose.msra.mxu0 0.0
        %1684 = vmatpush.xpose.msra.mxu0 0.0
        %1685 = vmatpush.xpose.msra.mxu0 0.0
        %1686 = vmatpush.xpose.msra.mxu0 0.0
        %1687 = vmatpush.xpose.msra.mxu0 0.0
        %1688 = vmatpush.xpose.msra.mxu0 0.0
        %1689 = vmatpush.xpose.msra.mxu0 0.0
        %1690 = vmatpush.xpose.msra.mxu0 0.0
        %1691 = vmatpush.xpose.msra.mxu0 0.0
        %1692 = vmatpush.xpose.msra.mxu0 0.0
        %1693 = vmatpush.xpose.msra.mxu0 0.0
        %1694 = vmatpush.xpose.msra.mxu0 %v1679
        %1695 = vmatpush.xpose.msra.mxu0 %v1677
        %1696 = vmatpush.xpose.msra.mxu0 %v1675
        %1697 = vmatmul.f32.gmra.mxu0 %v1673
        %v1698 = vpop.f32.mrf.mxu0
        %v1699 = vadd.f32 0.0, %v1698
        %1700 = vdwg.mxu0
        %v1701 = vmul.f32 %v1699, 0.35355338
        %v1702 = vadd.f32 %v1701, %v452
        %v1703 = vsel %vm541, %v1702, -inf
        %1704 = vmax.xlane.f32.xlu0 %v1703
        %v1705 = vpop.xlane.xlu0 %1704
        %v1706 = vsub.f32 %v1702, %v1705
        %v1707 = vmul.f32 %v1706, 1.442695
        %v1708 = vpow.pop %v1707
        %v1709 = vsel %vm541, %v1708, 0.0
        %1710 = vadd.xlane.f32.xlu0 %v1709
        %v1711 = vpop.xlane.xlu0 %1710
        %v1712 = vrcp.pop %v1711
        %v1713 = vmul.f32 %v1711, %v1712
        %v1714 = vsub.f32 1.0, %v1713
        %v1715 = vmul.f32 %v1712, %v1714
        %v1716 = vadd.f32 %v1712, %v1715
        %vm1717 = vweird.f32 %v1711
        %vm1718 = vweird.f32 %v1712
        %vm1719 = vmor %vm1717, %vm1718
        %v1720 = vsel %vm1719, %v1712, %v1716
        %v1721 = vand.u32 2147483647, %v1711
        %vm1722 = vcmp.eq.f32.partialorder %v1721, 8.507059e+37
        %v1723 = vand.u32 %v1711, 2147483648
        %v1724 = vor.u32 1.1754944e-38, %v1723
        %v1725 = vsel %vm1722, %v1724, %v1720
        %v1726 = vmul.f32 %v1708, %v1725
        %1729 = vrot.lane.b32.xlu0 %v1579, 120
        %v1730 = vpop.permute.xlu0 %1729
        %1731 = vrot.lane.b32.xlu0 %v1580, 120
        %v1732 = vpop.permute.xlu0 %1731
        %1733 = vrot.lane.b32.xlu0 %v1581, 120
        %v1734 = vpop.permute.xlu0 %1733
        %v1738 = vsel %vm566, %v1726, 0
        %v1740 = vsel %vm570, %v1734, 0
        %1742 = vmatpush.msra.mxu0 0.0
        %1743 = vmatpush.msra.mxu0 0.0
        %1744 = vmatpush.msra.mxu0 0.0
        %1745 = vmatpush.msra.mxu0 0.0
        %1746 = vmatpush.msra.mxu0 0.0
        %1747 = vmatpush.msra.mxu0 0.0
        %1748 = vmatpush.msra.mxu0 0.0
        %1749 = vmatpush.msra.mxu0 0.0
        %1750 = vmatpush.msra.mxu0 0.0
        %1751 = vmatpush.msra.mxu0 0.0
        %1752 = vmatpush.msra.mxu0 0.0
        %1753 = vmatpush.msra.mxu0 0.0
        %1754 = vmatpush.msra.mxu0 0.0
        %1755 = vmatpush.msra.mxu0 %v1740
        %1756 = vmatpush.msra.mxu0 %v1732
        %1757 = vmatpush.msra.mxu0 %v1730
        %1758 = vmatmul.f32.gmra.mxu0 %v1738
        %v1759 = vpop.f32.mrf.mxu0
        %v1760 = vadd.f32 0.0, %v1759
        %1761 = vdwg.mxu0
        %1762 = vrot.lane.b32.xlu0 %v1563, 112
        %v1763 = vpop.permute.xlu0 %1762
        %1764 = vrot.lane.b32.xlu0 %v1576, 112
        %v1765 = vpop.permute.xlu0 %1764
        %1766 = vrot.lane.b32.xlu0 %v1577, 112
        %v1767 = vpop.permute.xlu0 %1766
        %1768 = vrot.lane.b32.xlu0 %v1578, 112
        %v1769 = vpop.permute.xlu0 %1768
        %v1770 = vsel %vm507, %v1763, 0
        %v1772 = vsel %vm507, %v1765, 0
        %v1774 = vsel %vm507, %v1767, 0
        %v1776 = vsel %vm507, %v1769, 0
        %1778 = vmatpush.xpose.msra.mxu0 0.0
        %1779 = vmatpush.xpose.msra.mxu0 0.0
        %1780 = vmatpush.xpose.msra.mxu0 0.0
        %1781 = vmatpush.xpose.msra.mxu0 0.0
        %1782 = vmatpush.xpose.msra.mxu0 0.0
        %1783 = vmatpush.xpose.msra.mxu0 0.0
        %1784 = vmatpush.xpose.msra.mxu0 0.0
        %1785 = vmatpush.xpose.msra.mxu0 0.0
        %1786 = vmatpush.xpose.msra.mxu0 0.0
        %1787 = vmatpush.xpose.msra.mxu0 0.0
        %1788 = vmatpush.xpose.msra.mxu0 0.0
        %1789 = vmatpush.xpose.msra.mxu0 0.0
        %1790 = vmatpush.xpose.msra.mxu0 0.0
        %1791 = vmatpush.xpose.msra.mxu0 %v1776
        %1792 = vmatpush.xpose.msra.mxu0 %v1774
        %1793 = vmatpush.xpose.msra.mxu0 %v1772
        %1794 = vmatmul.f32.gmra.mxu0 %v1770
        %v1795 = vpop.f32.mrf.mxu0
        %v1796 = vadd.f32 0.0, %v1795
        %1797 = vdwg.mxu0
        %v1798 = vmul.f32 %v1796, 0.35355338
        %v1799 = vadd.f32 %v1798, %v452
        %v1800 = vsel %vm541, %v1799, -inf
        %1801 = vmax.xlane.f32.xlu0 %v1800
        %v1802 = vpop.xlane.xlu0 %1801
        %v1803 = vsub.f32 %v1799, %v1802
        %v1804 = vmul.f32 %v1803, 1.442695
        %v1805 = vpow.pop %v1804
        %v1806 = vsel %vm541, %v1805, 0.0
        %1807 = vadd.xlane.f32.xlu0 %v1806
        %v1808 = vpop.xlane.xlu0 %1807
        %v1809 = vrcp.pop %v1808
        %v1810 = vmul.f32 %v1808, %v1809
        %v1811 = vsub.f32 1.0, %v1810
        %v1812 = vmul.f32 %v1809, %v1811
        %v1813 = vadd.f32 %v1809, %v1812
        %vm1814 = vweird.f32 %v1808
        %vm1815 = vweird.f32 %v1809
        %vm1816 = vmor %vm1814, %vm1815
        %v1817 = vsel %vm1816, %v1809, %v1813
        %v1818 = vand.u32 2147483647, %v1808
        %vm1819 = vcmp.eq.f32.partialorder %v1818, 8.507059e+37
        %v1820 = vand.u32 %v1808, 2147483648
        %v1821 = vor.u32 1.1754944e-38, %v1820
        %v1822 = vsel %vm1819, %v1821, %v1817
        %v1823 = vmul.f32 %v1805, %v1822
        %1824 = vrot.lane.b32.xlu0 %v1579, 112
        %v1825 = vpop.permute.xlu0 %1824
        %1826 = vrot.lane.b32.xlu0 %v1580, 112
        %v1827 = vpop.permute.xlu0 %1826
        %1828 = vrot.lane.b32.xlu0 %v1581, 112
        %v1829 = vpop.permute.xlu0 %1828
        %v1833 = vsel %vm566, %v1823, 0
        %v1835 = vsel %vm570, %v1829, 0
        %1837 = vmatpush.msra.mxu0 0.0
        %1838 = vmatpush.msra.mxu0 0.0
        %1839 = vmatpush.msra.mxu0 0.0
        %1840 = vmatpush.msra.mxu0 0.0
        %1841 = vmatpush.msra.mxu0 0.0
        %1842 = vmatpush.msra.mxu0 0.0
        %1843 = vmatpush.msra.mxu0 0.0
        %1844 = vmatpush.msra.mxu0 0.0
        %1845 = vmatpush.msra.mxu0 0.0
        %1846 = vmatpush.msra.mxu0 0.0
        %1847 = vmatpush.msra.mxu0 0.0
        %1848 = vmatpush.msra.mxu0 0.0
        %1849 = vmatpush.msra.mxu0 0.0
        %1850 = vmatpush.msra.mxu0 %v1835
        %1851 = vmatpush.msra.mxu0 %v1827
        %1852 = vmatpush.msra.mxu0 %v1825
        %1853 = vmatmul.f32.gmra.mxu0 %v1833
        %v1854 = vpop.f32.mrf.mxu0
        %v1855 = vadd.f32 0.0, %v1854
        %1856 = vdwg.mxu0
        %1857 = vrot.lane.b32.xlu0 %v1563, 104
        %v1858 = vpop.permute.xlu0 %1857
        %1859 = vrot.lane.b32.xlu0 %v1576, 104
        %v1860 = vpop.permute.xlu0 %1859
        %1861 = vrot.lane.b32.xlu0 %v1577, 104
        %v1862 = vpop.permute.xlu0 %1861
        %1863 = vrot.lane.b32.xlu0 %v1578, 104
        %v1864 = vpop.permute.xlu0 %1863
        %v1865 = vsel %vm507, %v1858, 0
        %v1867 = vsel %vm507, %v1860, 0
        %v1869 = vsel %vm507, %v1862, 0
        %v1871 = vsel %vm507, %v1864, 0
        %1873 = vmatpush.xpose.msra.mxu0 0.0
        %1874 = vmatpush.xpose.msra.mxu0 0.0
        %1875 = vmatpush.xpose.msra.mxu0 0.0
        %1876 = vmatpush.xpose.msra.mxu0 0.0
        %1877 = vmatpush.xpose.msra.mxu0 0.0
        %1878 = vmatpush.xpose.msra.mxu0 0.0
        %1879 = vmatpush.xpose.msra.mxu0 0.0
        %1880 = vmatpush.xpose.msra.mxu0 0.0
        %1881 = vmatpush.xpose.msra.mxu0 0.0
        %1882 = vmatpush.xpose.msra.mxu0 0.0
        %1883 = vmatpush.xpose.msra.mxu0 0.0
        %1884 = vmatpush.xpose.msra.mxu0 0.0
        %1885 = vmatpush.xpose.msra.mxu0 0.0
        %1886 = vmatpush.xpose.msra.mxu0 %v1871
        %1887 = vmatpush.xpose.msra.mxu0 %v1869
        %1888 = vmatpush.xpose.msra.mxu0 %v1867
        %1889 = vmatmul.f32.gmra.mxu0 %v1865
        %v1890 = vpop.f32.mrf.mxu0
        %v1891 = vadd.f32 0.0, %v1890
        %1892 = vdwg.mxu0
        %v1893 = vmul.f32 %v1891, 0.35355338
        %v1894 = vadd.f32 %v1893, %v452
        %v1895 = vsel %vm541, %v1894, -inf
        %1896 = vmax.xlane.f32.xlu0 %v1895
        %v1897 = vpop.xlane.xlu0 %1896
        %v1898 = vsub.f32 %v1894, %v1897
        %v1899 = vmul.f32 %v1898, 1.442695
        %v1900 = vpow.pop %v1899
        %v1901 = vsel %vm541, %v1900, 0.0
        %1902 = vadd.xlane.f32.xlu0 %v1901
        %v1903 = vpop.xlane.xlu0 %1902
        %v1904 = vrcp.pop %v1903
        %v1905 = vmul.f32 %v1903, %v1904
        %v1906 = vsub.f32 1.0, %v1905
        %v1907 = vmul.f32 %v1904, %v1906
        %v1908 = vadd.f32 %v1904, %v1907
        %vm1909 = vweird.f32 %v1903
        %vm1910 = vweird.f32 %v1904
        %vm1911 = vmor %vm1909, %vm1910
        %v1912 = vsel %vm1911, %v1904, %v1908
        %v1913 = vand.u32 2147483647, %v1903
        %vm1914 = vcmp.eq.f32.partialorder %v1913, 8.507059e+37
        %v1915 = vand.u32 %v1903, 2147483648
        %v1916 = vor.u32 1.1754944e-38, %v1915
        %v1917 = vsel %vm1914, %v1916, %v1912
        %v1918 = vmul.f32 %v1900, %v1917
        %1919 = vrot.lane.b32.xlu0 %v1579, 104
        %v1920 = vpop.permute.xlu0 %1919
        %1921 = vrot.lane.b32.xlu0 %v1580, 104
        %v1922 = vpop.permute.xlu0 %1921
        %1923 = vrot.lane.b32.xlu0 %v1581, 104
        %v1924 = vpop.permute.xlu0 %1923
        %v1928 = vsel %vm566, %v1918, 0
        %v1930 = vsel %vm570, %v1924, 0
        %1932 = vmatpush.msra.mxu0 0.0
        %1933 = vmatpush.msra.mxu0 0.0
        %1934 = vmatpush.msra.mxu0 0.0
        %1935 = vmatpush.msra.mxu0 0.0
        %1936 = vmatpush.msra.mxu0 0.0
        %1937 = vmatpush.msra.mxu0 0.0
        %1938 = vmatpush.msra.mxu0 0.0
        %1939 = vmatpush.msra.mxu0 0.0
        %1940 = vmatpush.msra.mxu0 0.0
        %1941 = vmatpush.msra.mxu0 0.0
        %1942 = vmatpush.msra.mxu0 0.0
        %1943 = vmatpush.msra.mxu0 0.0
        %1944 = vmatpush.msra.mxu0 0.0
        %1945 = vmatpush.msra.mxu0 %v1930
        %1946 = vmatpush.msra.mxu0 %v1922
        %1947 = vmatpush.msra.mxu0 %v1920
        %1948 = vmatmul.f32.gmra.mxu0 %v1928
        %v1949 = vpop.f32.mrf.mxu0
        %v1950 = vadd.f32 0.0, %v1949
        %1951 = vdwg.mxu0
        %1953 = vrot.lane.b32.xlu0 %v1760, 8
        %v1954 = vpop.permute.xlu0 %1953
        %1957 = vrot.lane.b32.xlu0 %v1855, 16
        %v1958 = vpop.permute.xlu0 %1957
        %1961 = vrot.lane.b32.xlu0 %v1950, 24
        %v1962 = vpop.permute.xlu0 %1961
        %v1964 = vsel %vm507, %v1663, %v1954
        %v1965 = vsel %vm894, %v1964, %v1958
        %v1966 = vsel %vm896, %v1965, %v1962
        %v1968 = vperm.slane %v1541, 1
        %v1971 = vsel %vm465, %v1966, 0
        %1973 = vmatpush.msra.mxu0 0.0
        %1974 = vmatpush.msra.mxu0 0.0
        %1975 = vmatpush.msra.mxu0 0.0
        %1976 = vmatpush.msra.mxu0 0.0
        %1977 = vmatpush.msra.mxu0 0.0
        %1978 = vmatpush.msra.mxu0 0.0
        %1979 = vmatpush.msra.mxu0 0.0
        %1980 = vmatpush.msra.mxu0 0.0
        %1981 = vmatpush.msra.mxu0 0.0
        %1982 = vmatpush.msra.mxu0 0.0
        %1983 = vmatpush.msra.mxu0 0.0
        %1984 = vmatpush.msra.mxu0 0.0
        %1985 = vmatpush.msra.mxu0 %v1539
        %1986 = vmatpush.msra.mxu0 %v1537
        %1987 = vmatpush.msra.mxu0 %v1535
        %1988 = vmatpush.msra.mxu0 %v1533
        %1989 = vmatmul.f32.gmra.mxu0 %v1971
        %v1990 = vpop.f32.mrf.mxu0
        %v1991 = vadd.f32 %v1968, %v1990
        %1992 = vdwg.mxu0
        %v1993 = vadd.f32 %v1530, %v1991
        %s1994 = scalar_lea.vmem %s8, 8
        %v1995 = vld [vmem:[%s1994] sm:$0x1]
        %v1996 = vld [vmem:[%s1994 + $0x1] sm:$0x1]
        %v1997 = vsel %vm494, %v1993, 0.0
        %1998 = vadd.xlane.f32.xlu0 %v1997
        %v1999 = vpop.xlane.xlu0 %1998
        %v2000 = vmul.f32 %v1999, %v936
        %v2001 = vsub.f32 %v1993, %v2000
        %v2002 = vmul.f32 %v2001, %v2001
        %v2003 = vsel %vm494, %v2002, 0.0
        %2004 = vadd.xlane.f32.xlu0 %v2003
        %v2005 = vpop.xlane.xlu0 %2004
        %v2006 = vmul.f32 %v2005, %v936
        %v2007 = vadd.f32 %v2006, 1e-05
        %v2008 = vrsqrt.pop %v2007
        %v2009 = vmul.f32 %v2008, %v2007
        %v2010 = vmul.f32 %v2009, %v2008
        %v2011 = vmul.f32 0.5, %v2010
        %v2012 = vsub.f32 1.5, %v2011
        %v2013 = vmul.f32 %v2008, %v2012
        %vm2014 = vweird.f32 %v2007
        %vm2015 = vweird.f32 %v2008
        %vm2016 = vmor %vm2014, %vm2015
        %v2017 = vsel %vm2016, %v2008, %v2013
        %v2018 = vmul.f32 %v2001, %v2017
        %v2019 = vmul.f32 %v2018, %v1995
        %v2020 = vadd.f32 %v2019, %v1996
        %2025 = vrot.lane.b32.xlu0 %v1532, 32
        %v2026 = vpop.permute.xlu0 %2025
        %2027 = vrot.lane.b32.xlu0 %v1534, 32
        %v2028 = vpop.permute.xlu0 %2027
        %2029 = vrot.lane.b32.xlu0 %v1536, 32
        %v2030 = vpop.permute.xlu0 %2029
        %2031 = vrot.lane.b32.xlu0 %v1538, 32
        %v2032 = vpop.permute.xlu0 %2031
        %v2037 = vperm.slane %v1541, 0
        %2038 = vrot.lane.b32.xlu0 %v2037, 32
        %v2039 = vpop.permute.xlu0 %2038
        %v2042 = vsel %vm465, %v2020, 0
        %2044 = vmatpush.msra.mxu0 0.0
        %2045 = vmatpush.msra.mxu0 0.0
        %2046 = vmatpush.msra.mxu0 0.0
        %2047 = vmatpush.msra.mxu0 0.0
        %2048 = vmatpush.msra.mxu0 0.0
        %2049 = vmatpush.msra.mxu0 0.0
        %2050 = vmatpush.msra.mxu0 0.0
        %2051 = vmatpush.msra.mxu0 0.0
        %2052 = vmatpush.msra.mxu0 0.0
        %2053 = vmatpush.msra.mxu0 0.0
        %2054 = vmatpush.msra.mxu0 0.0
        %2055 = vmatpush.msra.mxu0 0.0
        %2056 = vmatpush.msra.mxu0 %v2032
        %2057 = vmatpush.msra.mxu0 %v2030
        %2058 = vmatpush.msra.mxu0 %v2028
        %2059 = vmatpush.msra.mxu0 %v2026
        %2060 = vmatmul.f32.gmra.mxu0 %v2042
        %v2061 = vpop.f32.mrf.mxu0
        %v2062 = vadd.f32 %v2039, %v2061
        %2063 = vdwg.mxu0
        %2064 = vrot.lane.b32.xlu0 %v454, 64
        %v2065 = vpop.permute.xlu0 %2064
        %2066 = vrot.lane.b32.xlu0 %v455, 64
        %v2067 = vpop.permute.xlu0 %2066
        %v2069 = vsel %vm507, %v2062, 0
        %v2071 = vsel %vm507, %v2065, 0
        %v2073 = vsel %vm507, %v2067, 0
        %2075 = vmatpush.xpose.msra.mxu0 0.0
        %2076 = vmatpush.xpose.msra.mxu0 0.0
        %2077 = vmatpush.xpose.msra.mxu0 0.0
        %2078 = vmatpush.xpose.msra.mxu0 0.0
        %2079 = vmatpush.xpose.msra.mxu0 0.0
        %2080 = vmatpush.xpose.msra.mxu0 0.0
        %2081 = vmatpush.xpose.msra.mxu0 0.0
        %2082 = vmatpush.xpose.msra.mxu0 0.0
        %2083 = vmatpush.xpose.msra.mxu0 0.0
        %2084 = vmatpush.xpose.msra.mxu0 0.0
        %2085 = vmatpush.xpose.msra.mxu0 0.0
        %2086 = vmatpush.xpose.msra.mxu0 0.0
        %2087 = vmatpush.xpose.msra.mxu0 0.0
        %2088 = vmatpush.xpose.msra.mxu0 0.0
        %2089 = vmatpush.xpose.msra.mxu0 %v2073
        %2090 = vmatpush.xpose.msra.mxu0 %v2071
        %2091 = vmatmul.f32.gmra.mxu0 %v2069
        %v2092 = vpop.f32.mrf.mxu0
        %v2093 = vadd.f32 0.0, %v2092
        %2094 = vdwg.mxu0
        %v2095 = vmul.f32 %v2093, 0.35355338
        %v2096 = vadd.f32 %v2095, %v453
        %v2097 = vsel %vm1032, %v2096, -inf
        %2098 = vmax.xlane.f32.xlu0 %v2097
        %v2099 = vpop.xlane.xlu0 %2098
        %v2100 = vsub.f32 %v2096, %v2099
        %v2101 = vmul.f32 %v2100, 1.442695
        %v2102 = vpow.pop %v2101
        %v2103 = vsel %vm1032, %v2102, 0.0
        %2104 = vadd.xlane.f32.xlu0 %v2103
        %v2105 = vpop.xlane.xlu0 %2104
        %v2106 = vrcp.pop %v2105
        %v2107 = vmul.f32 %v2105, %v2106
        %v2108 = vsub.f32 1.0, %v2107
        %v2109 = vmul.f32 %v2106, %v2108
        %v2110 = vadd.f32 %v2106, %v2109
        %vm2111 = vweird.f32 %v2105
        %vm2112 = vweird.f32 %v2106
        %vm2113 = vmor %vm2111, %vm2112
        %v2114 = vsel %vm2113, %v2106, %v2110
        %v2115 = vand.u32 2147483647, %v2105
        %vm2116 = vcmp.eq.f32.partialorder %v2115, 8.507059e+37
        %v2117 = vand.u32 %v2105, 2147483648
        %v2118 = vor.u32 1.1754944e-38, %v2117
        %v2119 = vsel %vm2116, %v2118, %v2114
        %v2120 = vmul.f32 %v2102, %v2119
        %2121 = vrot.lane.b32.xlu0 %v454, 32
        %v2122 = vpop.permute.xlu0 %2121
        %2123 = vrot.lane.b32.xlu0 %v455, 32
        %v2124 = vpop.permute.xlu0 %2123
        %v2128 = vsel %vm894, %v2120, 0
        %2130 = vmatpush.msra.mxu0 0.0
        %2131 = vmatpush.msra.mxu0 0.0
        %2132 = vmatpush.msra.mxu0 0.0
        %2133 = vmatpush.msra.mxu0 0.0
        %2134 = vmatpush.msra.mxu0 0.0
        %2135 = vmatpush.msra.mxu0 0.0
        %2136 = vmatpush.msra.mxu0 0.0
        %2137 = vmatpush.msra.mxu0 0.0
        %2138 = vmatpush.msra.mxu0 0.0
        %2139 = vmatpush.msra.mxu0 0.0
        %2140 = vmatpush.msra.mxu0 0.0
        %2141 = vmatpush.msra.mxu0 0.0
        %2142 = vmatpush.msra.mxu0 0.0
        %2143 = vmatpush.msra.mxu0 0.0
        %2144 = vmatpush.msra.mxu0 %v2124
        %2145 = vmatpush.msra.mxu0 %v2122
        %2146 = vmatmul.f32.gmra.mxu0 %v2128
        %v2147 = vpop.f32.mrf.mxu0
        %v2148 = vadd.f32 0.0, %v2147
        %2149 = vdwg.mxu0
        %2150 = vrot.lane.b32.xlu0 %v2062, 120
        %v2151 = vpop.permute.xlu0 %2150
        %2152 = vrot.lane.b32.xlu0 %v454, 56
        %v2153 = vpop.permute.xlu0 %2152
        %2154 = vrot.lane.b32.xlu0 %v455, 56
        %v2155 = vpop.permute.xlu0 %2154
        %v2156 = vsel %vm507, %v2151, 0
        %v2158 = vsel %vm507, %v2153, 0
        %v2160 = vsel %vm507, %v2155, 0
        %2162 = vmatpush.xpose.msra.mxu0 0.0
        %2163 = vmatpush.xpose.msra.mxu0 0.0
        %2164 = vmatpush.xpose.msra.mxu0 0.0
        %2165 = vmatpush.xpose.msra.mxu0 0.0
        %2166 = vmatpush.xpose.msra.mxu0 0.0
        %2167 = vmatpush.xpose.msra.mxu0 0.0
        %2168 = vmatpush.xpose.msra.mxu0 0.0
        %2169 = vmatpush.xpose.msra.mxu0 0.0
        %2170 = vmatpush.xpose.msra.mxu0 0.0
        %2171 = vmatpush.xpose.msra.mxu0 0.0
        %2172 = vmatpush.xpose.msra.mxu0 0.0
        %2173 = vmatpush.xpose.msra.mxu0 0.0
        %2174 = vmatpush.xpose.msra.mxu0 0.0
        %2175 = vmatpush.xpose.msra.mxu0 0.0
        %2176 = vmatpush.xpose.msra.mxu0 %v2160
        %2177 = vmatpush.xpose.msra.mxu0 %v2158
        %2178 = vmatmul.f32.gmra.mxu0 %v2156
        %v2179 = vpop.f32.mrf.mxu0
        %v2180 = vadd.f32 0.0, %v2179
        %2181 = vdwg.mxu0
        %v2182 = vmul.f32 %v2180, 0.35355338
        %v2183 = vadd.f32 %v2182, %v453
        %v2184 = vsel %vm1032, %v2183, -inf
        %2185 = vmax.xlane.f32.xlu0 %v2184
        %v2186 = vpop.xlane.xlu0 %2185
        %v2187 = vsub.f32 %v2183, %v2186
        %v2188 = vmul.f32 %v2187, 1.442695
        %v2189 = vpow.pop %v2188
        %v2190 = vsel %vm1032, %v2189, 0.0
        %2191 = vadd.xlane.f32.xlu0 %v2190
        %v2192 = vpop.xlane.xlu0 %2191
        %v2193 = vrcp.pop %v2192
        %v2194 = vmul.f32 %v2192, %v2193
        %v2195 = vsub.f32 1.0, %v2194
        %v2196 = vmul.f32 %v2193, %v2195
        %v2197 = vadd.f32 %v2193, %v2196
        %vm2198 = vweird.f32 %v2192
        %vm2199 = vweird.f32 %v2193
        %vm2200 = vmor %vm2198, %vm2199
        %v2201 = vsel %vm2200, %v2193, %v2197
        %v2202 = vand.u32 2147483647, %v2192
        %vm2203 = vcmp.eq.f32.partialorder %v2202, 8.507059e+37
        %v2204 = vand.u32 %v2192, 2147483648
        %v2205 = vor.u32 1.1754944e-38, %v2204
        %v2206 = vsel %vm2203, %v2205, %v2201
        %v2207 = vmul.f32 %v2189, %v2206
        %2208 = vrot.lane.b32.xlu0 %v454, 24
        %v2209 = vpop.permute.xlu0 %2208
        %2210 = vrot.lane.b32.xlu0 %v455, 24
        %v2211 = vpop.permute.xlu0 %2210
        %v2215 = vsel %vm894, %v2207, 0
        %2217 = vmatpush.msra.mxu0 0.0
        %2218 = vmatpush.msra.mxu0 0.0
        %2219 = vmatpush.msra.mxu0 0.0
        %2220 = vmatpush.msra.mxu0 0.0
        %2221 = vmatpush.msra.mxu0 0.0
        %2222 = vmatpush.msra.mxu0 0.0
        %2223 = vmatpush.msra.mxu0 0.0
        %2224 = vmatpush.msra.mxu0 0.0
        %2225 = vmatpush.msra.mxu0 0.0
        %2226 = vmatpush.msra.mxu0 0.0
        %2227 = vmatpush.msra.mxu0 0.0
        %2228 = vmatpush.msra.mxu0 0.0
        %2229 = vmatpush.msra.mxu0 0.0
        %2230 = vmatpush.msra.mxu0 0.0
        %2231 = vmatpush.msra.mxu0 %v2211
        %2232 = vmatpush.msra.mxu0 %v2209
        %2233 = vmatmul.f32.gmra.mxu0 %v2215
        %v2234 = vpop.f32.mrf.mxu0
        %v2235 = vadd.f32 0.0, %v2234
        %2236 = vdwg.mxu0
        %2237 = vrot.lane.b32.xlu0 %v2062, 112
        %v2238 = vpop.permute.xlu0 %2237
        %2239 = vrot.lane.b32.xlu0 %v454, 48
        %v2240 = vpop.permute.xlu0 %2239
        %2241 = vrot.lane.b32.xlu0 %v455, 48
        %v2242 = vpop.permute.xlu0 %2241
        %v2243 = vsel %vm507, %v2238, 0
        %v2245 = vsel %vm507, %v2240, 0
        %v2247 = vsel %vm507, %v2242, 0
        %2249 = vmatpush.xpose.msra.mxu0 0.0
        %2250 = vmatpush.xpose.msra.mxu0 0.0
        %2251 = vmatpush.xpose.msra.mxu0 0.0
        %2252 = vmatpush.xpose.msra.mxu0 0.0
        %2253 = vmatpush.xpose.msra.mxu0 0.0
        %2254 = vmatpush.xpose.msra.mxu0 0.0
        %2255 = vmatpush.xpose.msra.mxu0 0.0
        %2256 = vmatpush.xpose.msra.mxu0 0.0
        %2257 = vmatpush.xpose.msra.mxu0 0.0
        %2258 = vmatpush.xpose.msra.mxu0 0.0
        %2259 = vmatpush.xpose.msra.mxu0 0.0
        %2260 = vmatpush.xpose.msra.mxu0 0.0
        %2261 = vmatpush.xpose.msra.mxu0 0.0
        %2262 = vmatpush.xpose.msra.mxu0 0.0
        %2263 = vmatpush.xpose.msra.mxu0 %v2247
        %2264 = vmatpush.xpose.msra.mxu0 %v2245
        %2265 = vmatmul.f32.gmra.mxu0 %v2243
        %v2266 = vpop.f32.mrf.mxu0
        %v2267 = vadd.f32 0.0, %v2266
        %2268 = vdwg.mxu0
        %v2269 = vmul.f32 %v2267, 0.35355338
        %v2270 = vadd.f32 %v2269, %v453
        %v2271 = vsel %vm1032, %v2270, -inf
        %2272 = vmax.xlane.f32.xlu0 %v2271
        %v2273 = vpop.xlane.xlu0 %2272
        %v2274 = vsub.f32 %v2270, %v2273
        %v2275 = vmul.f32 %v2274, 1.442695
        %v2276 = vpow.pop %v2275
        %v2277 = vsel %vm1032, %v2276, 0.0
        %2278 = vadd.xlane.f32.xlu0 %v2277
        %v2279 = vpop.xlane.xlu0 %2278
        %v2280 = vrcp.pop %v2279
        %v2281 = vmul.f32 %v2279, %v2280
        %v2282 = vsub.f32 1.0, %v2281
        %v2283 = vmul.f32 %v2280, %v2282
        %v2284 = vadd.f32 %v2280, %v2283
        %vm2285 = vweird.f32 %v2279
        %vm2286 = vweird.f32 %v2280
        %vm2287 = vmor %vm2285, %vm2286
        %v2288 = vsel %vm2287, %v2280, %v2284
        %v2289 = vand.u32 2147483647, %v2279
        %vm2290 = vcmp.eq.f32.partialorder %v2289, 8.507059e+37
        %v2291 = vand.u32 %v2279, 2147483648
        %v2292 = vor.u32 1.1754944e-38, %v2291
        %v2293 = vsel %vm2290, %v2292, %v2288
        %v2294 = vmul.f32 %v2276, %v2293
        %2295 = vrot.lane.b32.xlu0 %v454, 16
        %v2296 = vpop.permute.xlu0 %2295
        %2297 = vrot.lane.b32.xlu0 %v455, 16
        %v2298 = vpop.permute.xlu0 %2297
        %v2302 = vsel %vm894, %v2294, 0
        %2304 = vmatpush.msra.mxu0 0.0
        %2305 = vmatpush.msra.mxu0 0.0
        %2306 = vmatpush.msra.mxu0 0.0
        %2307 = vmatpush.msra.mxu0 0.0
        %2308 = vmatpush.msra.mxu0 0.0
        %2309 = vmatpush.msra.mxu0 0.0
        %2310 = vmatpush.msra.mxu0 0.0
        %2311 = vmatpush.msra.mxu0 0.0
        %2312 = vmatpush.msra.mxu0 0.0
        %2313 = vmatpush.msra.mxu0 0.0
        %2314 = vmatpush.msra.mxu0 0.0
        %2315 = vmatpush.msra.mxu0 0.0
        %2316 = vmatpush.msra.mxu0 0.0
        %2317 = vmatpush.msra.mxu0 0.0
        %2318 = vmatpush.msra.mxu0 %v2298
        %2319 = vmatpush.msra.mxu0 %v2296
        %2320 = vmatmul.f32.gmra.mxu0 %v2302
        %v2321 = vpop.f32.mrf.mxu0
        %v2322 = vadd.f32 0.0, %v2321
        %2323 = vdwg.mxu0
        %2324 = vrot.lane.b32.xlu0 %v2062, 104
        %v2325 = vpop.permute.xlu0 %2324
        %2326 = vrot.lane.b32.xlu0 %v454, 40
        %v2327 = vpop.permute.xlu0 %2326
        %2328 = vrot.lane.b32.xlu0 %v455, 40
        %v2329 = vpop.permute.xlu0 %2328
        %v2330 = vsel %vm507, %v2325, 0
        %v2332 = vsel %vm507, %v2327, 0
        %v2334 = vsel %vm507, %v2329, 0
        %2336 = vmatpush.xpose.msra.mxu0 0.0
        %2337 = vmatpush.xpose.msra.mxu0 0.0
        %2338 = vmatpush.xpose.msra.mxu0 0.0
        %2339 = vmatpush.xpose.msra.mxu0 0.0
        %2340 = vmatpush.xpose.msra.mxu0 0.0
        %2341 = vmatpush.xpose.msra.mxu0 0.0
        %2342 = vmatpush.xpose.msra.mxu0 0.0
        %2343 = vmatpush.xpose.msra.mxu0 0.0
        %2344 = vmatpush.xpose.msra.mxu0 0.0
        %2345 = vmatpush.xpose.msra.mxu0 0.0
        %2346 = vmatpush.xpose.msra.mxu0 0.0
        %2347 = vmatpush.xpose.msra.mxu0 0.0
        %2348 = vmatpush.xpose.msra.mxu0 0.0
        %2349 = vmatpush.xpose.msra.mxu0 0.0
        %2350 = vmatpush.xpose.msra.mxu0 %v2334
        %2351 = vmatpush.xpose.msra.mxu0 %v2332
        %2352 = vmatmul.f32.gmra.mxu0 %v2330
        %v2353 = vpop.f32.mrf.mxu0
        %v2354 = vadd.f32 0.0, %v2353
        %2355 = vdwg.mxu0
        %v2356 = vmul.f32 %v2354, 0.35355338
        %v2357 = vadd.f32 %v2356, %v453
        %v2358 = vsel %vm1032, %v2357, -inf
        %2359 = vmax.xlane.f32.xlu0 %v2358
        %v2360 = vpop.xlane.xlu0 %2359
        %v2361 = vsub.f32 %v2357, %v2360
        %v2362 = vmul.f32 %v2361, 1.442695
        %v2363 = vpow.pop %v2362
        %v2364 = vsel %vm1032, %v2363, 0.0
        %2365 = vadd.xlane.f32.xlu0 %v2364
        %v2366 = vpop.xlane.xlu0 %2365
        %v2367 = vrcp.pop %v2366
        %v2368 = vmul.f32 %v2366, %v2367
        %v2369 = vsub.f32 1.0, %v2368
        %v2370 = vmul.f32 %v2367, %v2369
        %v2371 = vadd.f32 %v2367, %v2370
        %vm2372 = vweird.f32 %v2366
        %vm2373 = vweird.f32 %v2367
        %vm2374 = vmor %vm2372, %vm2373
        %v2375 = vsel %vm2374, %v2367, %v2371
        %v2376 = vand.u32 2147483647, %v2366
        %vm2377 = vcmp.eq.f32.partialorder %v2376, 8.507059e+37
        %v2378 = vand.u32 %v2366, 2147483648
        %v2379 = vor.u32 1.1754944e-38, %v2378
        %v2380 = vsel %vm2377, %v2379, %v2375
        %v2381 = vmul.f32 %v2363, %v2380
        %2382 = vrot.lane.b32.xlu0 %v454, 8
        %v2383 = vpop.permute.xlu0 %2382
        %2384 = vrot.lane.b32.xlu0 %v455, 8
        %v2385 = vpop.permute.xlu0 %2384
        %v2389 = vsel %vm894, %v2381, 0
        %2391 = vmatpush.msra.mxu0 0.0
        %2392 = vmatpush.msra.mxu0 0.0
        %2393 = vmatpush.msra.mxu0 0.0
        %2394 = vmatpush.msra.mxu0 0.0
        %2395 = vmatpush.msra.mxu0 0.0
        %2396 = vmatpush.msra.mxu0 0.0
        %2397 = vmatpush.msra.mxu0 0.0
        %2398 = vmatpush.msra.mxu0 0.0
        %2399 = vmatpush.msra.mxu0 0.0
        %2400 = vmatpush.msra.mxu0 0.0
        %2401 = vmatpush.msra.mxu0 0.0
        %2402 = vmatpush.msra.mxu0 0.0
        %2403 = vmatpush.msra.mxu0 0.0
        %2404 = vmatpush.msra.mxu0 0.0
        %2405 = vmatpush.msra.mxu0 %v2385
        %2406 = vmatpush.msra.mxu0 %v2383
        %2407 = vmatmul.f32.gmra.mxu0 %v2389
        %v2408 = vpop.f32.mrf.mxu0
        %v2409 = vadd.f32 0.0, %v2408
        %2410 = vdwg.mxu0
        %2412 = vrot.lane.b32.xlu0 %v2235, 8
        %v2413 = vpop.permute.xlu0 %2412
        %2416 = vrot.lane.b32.xlu0 %v2322, 16
        %v2417 = vpop.permute.xlu0 %2416
        %2420 = vrot.lane.b32.xlu0 %v2409, 24
        %v2421 = vpop.permute.xlu0 %2420
        %v2423 = vsel %vm507, %v2148, %v2413
        %v2424 = vsel %vm894, %v2423, %v2417
        %v2425 = vsel %vm896, %v2424, %v2421
        %2430 = vrot.lane.b32.xlu0 %v1533, 96
        %v2431 = vpop.permute.xlu0 %2430
        %2432 = vrot.lane.b32.xlu0 %v1535, 96
        %v2433 = vpop.permute.xlu0 %2432
        %2434 = vrot.lane.b32.xlu0 %v1537, 96
        %v2435 = vpop.permute.xlu0 %2434
        %2436 = vrot.lane.b32.xlu0 %v1539, 96
        %v2437 = vpop.permute.xlu0 %2436
        %2442 = vrot.lane.b32.xlu0 %v1968, 96
        %v2443 = vpop.permute.xlu0 %2442
        %v2446 = vsel %vm465, %v2425, 0
        %2448 = vmatpush.msra.mxu0 0.0
        %2449 = vmatpush.msra.mxu0 0.0
        %2450 = vmatpush.msra.mxu0 0.0
        %2451 = vmatpush.msra.mxu0 0.0
        %2452 = vmatpush.msra.mxu0 0.0
        %2453 = vmatpush.msra.mxu0 0.0
        %2454 = vmatpush.msra.mxu0 0.0
        %2455 = vmatpush.msra.mxu0 0.0
        %2456 = vmatpush.msra.mxu0 0.0
        %2457 = vmatpush.msra.mxu0 0.0
        %2458 = vmatpush.msra.mxu0 0.0
        %2459 = vmatpush.msra.mxu0 0.0
        %2460 = vmatpush.msra.mxu0 %v2437
        %2461 = vmatpush.msra.mxu0 %v2435
        %2462 = vmatpush.msra.mxu0 %v2433
        %2463 = vmatpush.msra.mxu0 %v2431
        %2464 = vmatmul.f32.gmra.mxu0 %v2446
        %v2465 = vpop.f32.mrf.mxu0
        %v2466 = vadd.f32 %v2443, %v2465
        %2467 = vdwg.mxu0
        %v2468 = vadd.f32 %v2020, %v2466
        %v2469 = vld [vmem:[%s1994 + $0x2] sm:$0x1]
        %v2470 = vld [vmem:[%s1994 + $0x3] sm:$0x1]
        %v2471 = vsel %vm494, %v2468, 0.0
        %2472 = vadd.xlane.f32.xlu0 %v2471
        %v2473 = vpop.xlane.xlu0 %2472
        %v2474 = vmul.f32 %v2473, %v936
        %v2475 = vsub.f32 %v2468, %v2474
        %v2476 = vmul.f32 %v2475, %v2475
        %v2477 = vsel %vm494, %v2476, 0.0
        %2478 = vadd.xlane.f32.xlu0 %v2477
        %v2479 = vpop.xlane.xlu0 %2478
        %v2480 = vmul.f32 %v2479, %v936
        %v2481 = vadd.f32 %v2480, 1e-05
        %v2482 = vrsqrt.pop %v2481
        %v2483 = vmul.f32 %v2482, %v2481
        %v2484 = vmul.f32 %v2483, %v2482
        %v2485 = vmul.f32 0.5, %v2484
        %v2486 = vsub.f32 1.5, %v2485
        %v2487 = vmul.f32 %v2482, %v2486
        %vm2488 = vweird.f32 %v2481
        %vm2489 = vweird.f32 %v2482
        %vm2490 = vmor %vm2488, %vm2489
        %v2491 = vsel %vm2490, %v2482, %v2487
        %v2492 = vmul.f32 %v2475, %v2491
        %v2493 = vmul.f32 %v2492, %v2469
        %v2494 = vadd.f32 %v2493, %v2470
        %2495 = vrot.lane.b32.xlu0 %v1533, 64
        %v2496 = vpop.permute.xlu0 %2495
        %2497 = vrot.lane.b32.xlu0 %v1535, 64
        %v2498 = vpop.permute.xlu0 %2497
        %2499 = vrot.lane.b32.xlu0 %v1537, 64
        %v2500 = vpop.permute.xlu0 %2499
        %2501 = vrot.lane.b32.xlu0 %v1539, 64
        %v2502 = vpop.permute.xlu0 %2501
        %2507 = vrot.lane.b32.xlu0 %v1968, 64
        %v2508 = vpop.permute.xlu0 %2507
        %v2511 = vsel %vm465, %v2494, 0
        %2513 = vmatpush.msra.mxu0 0.0
        %2514 = vmatpush.msra.mxu0 0.0
        %2515 = vmatpush.msra.mxu0 0.0
        %2516 = vmatpush.msra.mxu0 0.0
        %2517 = vmatpush.msra.mxu0 0.0
        %2518 = vmatpush.msra.mxu0 0.0
        %2519 = vmatpush.msra.mxu0 0.0
        %2520 = vmatpush.msra.mxu0 0.0
        %2521 = vmatpush.msra.mxu0 0.0
        %2522 = vmatpush.msra.mxu0 0.0
        %2523 = vmatpush.msra.mxu0 0.0
        %2524 = vmatpush.msra.mxu0 0.0
        %2525 = vmatpush.msra.mxu0 %v2502
        %2526 = vmatpush.msra.mxu0 %v2500
        %2527 = vmatpush.msra.mxu0 %v2498
        %2528 = vmatpush.msra.mxu0 %v2496
        %2529 = vmatmul.f32.gmra.mxu0 %v2511
        %v2530 = vpop.f32.mrf.mxu0
        %v2531 = vadd.f32 %v2508, %v2530
        %2532 = vdwg.mxu0
        %v2533 = vmax.f32 %v2531, 0.0
        %s2534 = scalar_lea.vmem %s6, 64
        %v2535 = vld [vmem:[%s2534] sm:$0xff]
        %v2536 = vld [vmem:[%s2534 + $0x8] sm:$0xff]
        %v2537 = vld [vmem:[%s2534 + $0x10] sm:$0xff]
        %v2538 = vld [vmem:[%s2534 + $0x18] sm:$0xff]
        %v2539 = vld [vmem:[%s2534 + $0x20] sm:$0xff]
        %v2540 = vld [vmem:[%s2534 + $0x28] sm:$0xff]
        %v2541 = vld [vmem:[%s2534 + $0x30] sm:$0xff]
        %v2542 = vld [vmem:[%s2534 + $0x38] sm:$0xff]
        %v2543 = vperm.slane %v1541, 2
        %v2546 = vsel %vm1480, %v2533, 0
        %2548 = vmatpush.msra.mxu0 0.0
        %2549 = vmatpush.msra.mxu0 0.0
        %2550 = vmatpush.msra.mxu0 0.0
        %2551 = vmatpush.msra.mxu0 0.0
        %2552 = vmatpush.msra.mxu0 0.0
        %2553 = vmatpush.msra.mxu0 0.0
        %2554 = vmatpush.msra.mxu0 0.0
        %2555 = vmatpush.msra.mxu0 0.0
        %2556 = vmatpush.msra.mxu0 %v2542
        %2557 = vmatpush.msra.mxu0 %v2541
        %2558 = vmatpush.msra.mxu0 %v2540
        %2559 = vmatpush.msra.mxu0 %v2539
        %2560 = vmatpush.msra.mxu0 %v2538
        %2561 = vmatpush.msra.mxu0 %v2537
        %2562 = vmatpush.msra.mxu0 %v2536
        %2563 = vmatpush.msra.mxu0 %v2535
        %2564 = vmatmul.f32.gmra.mxu0 %v2546
        %v2565 = vpop.f32.mrf.mxu0
        %v2566 = vadd.f32 %v2543, %v2565
        %2567 = vdwg.mxu0
        %v2568 = vadd.f32 %v2494, %v2566
        %v2569 = vld [vmem:[%s1994 + $0x4] sm:$0x1]
        %v2570 = vld [vmem:[%s1994 + $0x5] sm:$0x1]
        %v2571 = vsel %vm494, %v2568, 0.0
        %2572 = vadd.xlane.f32.xlu0 %v2571
        %v2573 = vpop.xlane.xlu0 %2572
        %v2574 = vmul.f32 %v2573, %v936
        %v2575 = vsub.f32 %v2568, %v2574
        %v2576 = vmul.f32 %v2575, %v2575
        %v2577 = vsel %vm494, %v2576, 0.0
        %2578 = vadd.xlane.f32.xlu0 %v2577
        %v2579 = vpop.xlane.xlu0 %2578
        %v2580 = vmul.f32 %v2579, %v936
        %v2581 = vadd.f32 %v2580, 1e-05
        %v2582 = vrsqrt.pop %v2581
        %v2583 = vmul.f32 %v2582, %v2581
        %v2584 = vmul.f32 %v2583, %v2582
        %v2585 = vmul.f32 0.5, %v2584
        %v2586 = vsub.f32 1.5, %v2585
        %v2587 = vmul.f32 %v2582, %v2586
        %vm2588 = vweird.f32 %v2581
        %vm2589 = vweird.f32 %v2582
        %vm2590 = vmor %vm2588, %vm2589
        %v2591 = vsel %vm2590, %v2582, %v2587
        %v2592 = vmul.f32 %v2575, %v2591
        %v2593 = vmul.f32 %v2592, %v2569
        %v2594 = vadd.f32 %v2593, %v2570
        %v2595 = vld [vmem:[%s10] sm:$0x1]
        %v2596 = vld [vmem:[%s9] sm:$0xff]
        %v2597 = vld [vmem:[%s9 + $0x8] sm:$0xff]
        %v2598 = vld [vmem:[%s9 + $0x10] sm:$0xff]
        %v2599 = vld [vmem:[%s9 + $0x18] sm:$0xff]
        %2600 = vmatpush.msra.mxu0 0.0
        %2601 = vmatpush.msra.mxu0 0.0
        %2602 = vmatpush.msra.mxu0 0.0
        %2603 = vmatpush.msra.mxu0 0.0
        %2604 = vmatpush.msra.mxu0 0.0
        %2605 = vmatpush.msra.mxu0 0.0
        %2606 = vmatpush.msra.mxu0 0.0
        %2607 = vmatpush.msra.mxu0 0.0
        %2608 = vmatpush.msra.mxu0 0.0
        %2609 = vmatpush.msra.mxu0 0.0
        %2610 = vmatpush.msra.mxu0 0.0
        %2611 = vmatpush.msra.mxu0 0.0
        %2612 = vmatpush.msra.mxu0 %v2599
        %2613 = vmatpush.msra.mxu0 %v2598
        %2614 = vmatpush.msra.mxu0 %v2597
        %2615 = vmatpush.msra.mxu0 %v2596
        %2616 = vmatmul.f32.gmra.mxu0 %v1543
        %v2617 = vpop.f32.mrf.mxu0
        %v2618 = vadd.f32 0.0, %v2617
        %2619 = vdwg.mxu0
        %v2620 = vadd.f32 %v2595, %v2618
        %v2621 = vld [vmem:[%s9 + $0x20] sm:$0xff]
        %v2622 = vld [vmem:[%s9 + $0x28] sm:$0xff]
        %v2623 = vld [vmem:[%s9 + $0x30] sm:$0xff]
        %v2624 = vld [vmem:[%s9 + $0x38] sm:$0xff]
        %v2626 = vsel %vm465, %v2594, 0
        %2628 = vmatpush.msra.mxu0 0.0
        %2629 = vmatpush.msra.mxu0 0.0
        %2630 = vmatpush.msra.mxu0 0.0
        %2631 = vmatpush.msra.mxu0 0.0
        %2632 = vmatpush.msra.mxu0 0.0
        %2633 = vmatpush.msra.mxu0 0.0
        %2634 = vmatpush.msra.mxu0 0.0
        %2635 = vmatpush.msra.mxu0 0.0
        %2636 = vmatpush.msra.mxu0 0.0
        %2637 = vmatpush.msra.mxu0 0.0
        %2638 = vmatpush.msra.mxu0 0.0
        %2639 = vmatpush.msra.mxu0 0.0
        %2640 = vmatpush.msra.mxu0 %v2624
        %2641 = vmatpush.msra.mxu0 %v2623
        %2642 = vmatpush.msra.mxu0 %v2622
        %2643 = vmatpush.msra.mxu0 %v2621
        %2644 = vmatmul.f32.gmra.mxu0 %v2626
        %v2645 = vpop.f32.mrf.mxu0
        %v2646 = vadd.f32 0.0, %v2645
        %2647 = vdwg.mxu0
        %v2648 = vadd.f32 %v2620, %v2646
        %v2649 = vadd.f32 %v2594, %v2648
        %v2650 = vld [vmem:[%s10 + $0x1] sm:$0x1]
        %v2651 = vld [vmem:[%s10 + $0x2] sm:$0x1]
        %v2652 = vsel %vm494, %v2649, 0.0
        %2653 = vadd.xlane.f32.xlu0 %v2652
        %v2654 = vpop.xlane.xlu0 %2653
        %v2655 = vmul.f32 %v2654, %v936
        %v2656 = vsub.f32 %v2649, %v2655
        %v2657 = vmul.f32 %v2656, %v2656
        %v2658 = vsel %vm494, %v2657, 0.0
        %2659 = vadd.xlane.f32.xlu0 %v2658
        %v2660 = vpop.xlane.xlu0 %2659
        %v2661 = vmul.f32 %v2660, %v936
        %v2662 = vadd.f32 %v2661, 1e-05
        %v2663 = vrsqrt.pop %v2662
        %v2664 = vmul.f32 %v2663, %v2662
        %v2665 = vmul.f32 %v2664, %v2663
        %v2666 = vmul.f32 0.5, %v2665
        %v2667 = vsub.f32 1.5, %v2666
        %v2668 = vmul.f32 %v2663, %v2667
        %vm2669 = vweird.f32 %v2662
        %vm2670 = vweird.f32 %v2663
        %vm2671 = vmor %vm2669, %vm2670
        %v2672 = vsel %vm2671, %v2663, %v2668
        %v2673 = vmul.f32 %v2656, %v2672
        %v2674 = vmul.f32 %v2673, %v2650
        %v2675 = vadd.f32 %v2674, %v2651
        %v2676 = vld [vmem:[%s11] sm:$0xff]
        %v2677 = vld [vmem:[%s11 + $0x8] sm:$0xff]
        %v2678 = vld [vmem:[%s11 + $0x10] sm:$0xff]
        %v2679 = vld [vmem:[%s11 + $0x18] sm:$0xff]
        %v2680 = vld [vmem:[%s12] sm:$0x1]
        %v2682 = vsel %vm465, %v2675, 0
        %2684 = vmatpush.msra.mxu0 0.0
        %2685 = vmatpush.msra.mxu0 0.0
        %2686 = vmatpush.msra.mxu0 0.0
        %2687 = vmatpush.msra.mxu0 0.0
        %2688 = vmatpush.msra.mxu0 0.0
        %2689 = vmatpush.msra.mxu0 0.0
        %2690 = vmatpush.msra.mxu0 0.0
        %2691 = vmatpush.msra.mxu0 0.0
        %2692 = vmatpush.msra.mxu0 0.0
        %2693 = vmatpush.msra.mxu0 0.0
        %2694 = vmatpush.msra.mxu0 0.0
        %2695 = vmatpush.msra.mxu0 0.0
        %2696 = vmatpush.msra.mxu0 %v2679
        %2697 = vmatpush.msra.mxu0 %v2678
        %2698 = vmatpush.msra.mxu0 %v2677
        %2699 = vmatpush.msra.mxu0 %v2676
        %2700 = vmatmul.f32.gmra.mxu0 %v2682
        %v2701 = vpop.f32.mrf.mxu0
        %v2702 = vadd.f32 %v2680, %v2701
        %2703 = vdwg.mxu0
        %vm2704 = vcmask 1040384
        %v2705 = vsel %vm2704, %v2702, -inf
        %2706 = vmax.xlane.f32.xlu0 %v2705
        %v2707 = vpop.xlane.xlu0 %2706
        %v2708 = vsub.f32 %v2702, %v2707
        %v2709 = vmul.f32 %v2708, 1.442695
        %v2710 = vpow.pop %v2709
        %v2711 = vsel %vm2704, %v2710, 0.0
        %2712 = vadd.xlane.f32.xlu0 %v2711
        %v2713 = vpop.xlane.xlu0 %2712
        %v2714 = vlog2.pop %v2713
        %v2715 = vmul.f32 %v2714, 0.6931472
        %s2716 = vtos %v2715
        %s2717 = ssub.f32 0.0, %s2716
        %vm2718 = vcmp.ge.f32.partialorder %v2702, %v2707
        %v2719 = vsel %vm2718, %v449, 128
        %v2720 = vsel %vm2704, %v2719, 2147483647
        %v2721 = vand.u32 %v2720, 65535
        %v2722 = vshra.s32 %v2720, 16
        %v2723 = vcvt.s32.f32 %v2721
        %v2724 = vcvt.s32.f32 %v2722
        %2725 = vmin.xlane.f32.xlu0 %v2724
        %v2726 = vpop.xlane.xlu0 %2725
        %vm2727 = vcmp.eq.f32.partialorder %v2724, %v2726
        %v2728 = vsel %vm2727, %v2723, inf
        %2729 = vmin.xlane.f32.xlu0 %v2728
        %v2730 = vpop.xlane.xlu0 %2729
        %v2731 = vcvt.f32.s32 %v2730
        %v2732 = vcvt.f32.s32 %v2726
        %v2733 = vshll.u32 %v2732, 16
        %v2734 = vadd.s32 %v2733, %v2731
        %s2735 = vtos %v2734
        %s2736 = sld [smem:[#allocation7 + $0x1]]
        %s2737 = sadd.s32 %s2735, %s2736
        %s2738 = sadd.s32 %s36, 1
        %s2739 = scalar_lea.smem [#allocation8], %s2738
        %2740 = sst [smem:[%s2739]] %s2737
        %s2741 = scalar_lea.smem [#allocation10], %s2738
        %2742 = sst [smem:[%s2741]] %s2717
        // Predicated region
        $region73: #{forward.3} parent=67 // pred_check
          %p2743 = pneg %p301
        $region74: #{forward.3} parent=67 // pred_check_branch
          %2745 = sbr.rel (%p2743) target = $region76
        $region75: #{forward.3} parent=67 // pred_region
          %2747 = vsyncadd [#allocation9], 0
          %s2749 = sshll.u32 %s13, 4
          %s2750 = int_to_ptr.hbm [resolvable:$true] %s2749
          %2752 = dma.smem_to_hbm [#allocation8], 16, %s2750, [#allocation9]
        $region76: #{forward.3} parent=67 // pred_fallthru
          _
        // Predicated region
        $region77: #{forward.3} parent=67 // pred_check
          %p2753 = pneg %p322
        $region78: #{forward.3} parent=67 // pred_check_branch
          %2755 = sbr.rel (%p2753) target = $region80
        $region79: #{forward.3} parent=67 // pred_region
          %2757 = vsyncadd [#allocation11], 0
          %s2759 = sshll.u32 %s14, 4
          %s2760 = int_to_ptr.hbm [resolvable:$true] %s2759
          %2762 = dma.smem_to_hbm [#allocation10], 16, %s2760, [#allocation11]
        $region80: #{forward.3} parent=67 // pred_fallthru
          _
        // Predicated region
        $region81: #{forward.3} parent=67 // pred_check
          %p2763 = pneg %p301
        $region82: #{forward.3} parent=67 // pred_check_branch
          %2765 = sbr.rel (%p2763) target = $region84
        $region83: #{forward.3} parent=67 // pred_region
          %2767 = dma.done [#allocation9], 16
        $region84: #{forward.3} parent=67 // pred_fallthru
          _
        // Predicated region
        $region85: #{forward.3} parent=67 // pred_check
          %p2768 = pneg %p322
        $region86: #{forward.3} parent=67 // pred_check_branch
          %2770 = sbr.rel (%p2768) target = $region88
        $region87: #{forward.3} parent=67 // pred_region
          %2772 = dma.done [#allocation11], 16
        $region88: #{forward.3} parent=67 // pred_fallthru
          _
        %2773 = sfence
      $region68: #{forward.3} parent=5 // pred_fallthru
        _
      %p2774 = scmp.le.s32.totalorder 2, %s31
      // Predicated region
      $region89: #{forward.3} parent=5 // pred_check
        %p2775 = pneg %p2774
      $region90: #{forward.3} parent=5 // pred_check_branch
        %2777 = sbr.rel (%p2775) target = $region92
      $region91: #{forward.3} parent=5 // pred_region
        %s2778 = ssub.s32 %s31, 2
      $region92: #{forward.3} parent=5 // pred_fallthru
        _
    $region6: #{forward.3} parent=1 // loop_footer
      %s35 = sadd.s32 1, %s31
    $region7: #{forward.3} parent=1 // loop_footer_branch
      %30 = sbr.rel target = $region3
    $region8: #{forward.3} parent=1 // loop_exit
      _
    %2779 = vsyncpa [#allocation9], 1
    %s2780 = scalar_lea.sflag [#allocation9], 1
    %2781 = vsyncpa %s2780, 1
    %2782 = vsyncpa [#allocation11], 1

// kernel: forward.2
$region0: #{forward.2}
  #allocation0 [shape = 'u32[]', space=smem, size = 0x4, offset = 0x4, fixed_abs, tag = 'smem constant byte address 0x4 - core index']
  #allocation1 [shape = 'u32[72,128]{1,0:T(1,128)}', space=vmem, size = 0x9000, scoped, tag = 'internal scratch']
  %s0 = inlined_call_operand.vmem [shape: f32[16,48], index: 0, kind: input, shape index: {}]
  %s1 = inlined_call_operand.vmem [shape: f32[8,16], index: 1, kind: input, shape index: {}]
  %s2 = inlined_call_operand.vmem [shape: f32[16,8], index: 2, kind: input, shape index: {}]
  %s3 = inlined_call_operand.vmem [shape: f32[48,32], index: 3, kind: input, shape index: {}]
  %s4 = inlined_call_operand.vmem [shape: f32[32,224], index: 4, kind: input, shape index: {}]
  %s5 = inlined_call_operand.vmem [shape: f32[64,32], index: 5, kind: input, shape index: {}]
  %s6 = inlined_call_operand.vmem [shape: f32[10,32], index: 6, kind: input, shape index: {}]
  %s7 = inlined_call_operand.vmem [shape: f32[1,96], index: 7, kind: input, shape index: {}]
  %s8 = inlined_call_operand.vmem [shape: f32[1,64], index: 8, kind: input, shape index: {}]
  %s9 = inlined_call_operand.vmem [shape: f32[2,8,32], index: 9, kind: input, shape index: {}]
  %s10 = inlined_call_operand.vmem [shape: f32[2,2,32,96], index: 10, kind: input, shape index: {}]
  %s11 = inlined_call_operand.vmem [shape: f32[2,2,1,96], index: 11, kind: input, shape index: {}]
  %s12 = inlined_call_operand.vmem [shape: f32[2,2,32,32], index: 12, kind: input, shape index: {}]
  %s13 = inlined_call_operand.vmem [shape: f32[2,2,1,32], index: 13, kind: input, shape index: {}]
  %s14 = inlined_call_operand.vmem [shape: f32[2,32,64], index: 14, kind: input, shape index: {}]
  %s15 = inlined_call_operand.vmem [shape: f32[2,1,64], index: 15, kind: input, shape index: {}]
  %s16 = inlined_call_operand.vmem [shape: f32[2,64,32], index: 16, kind: input, shape index: {}]
  %s17 = inlined_call_operand.vmem [shape: f32[2,1,32], index: 17, kind: input, shape index: {}]
  %s18 = inlined_call_operand.vmem [shape: f32[2,4,32], index: 18, kind: input, shape index: {}]
  %s19 = inlined_call_operand.vmem [shape: f32[64,32], index: 19, kind: input, shape index: {}]
  %s20 = inlined_call_operand.vmem [shape: f32[3,32], index: 20, kind: input, shape index: {}]
  %s21 = inlined_call_operand.vmem [shape: f32[2,32,64], index: 21, kind: input, shape index: {}]
  %s22 = inlined_call_operand.vmem [shape: f32[2,1,64], index: 22, kind: input, shape index: {}]
  %s23 = inlined_call_operand.vmem [shape: f32[16,128], index: 23, kind: output, shape index: {}]
  %s24 = sld [smem:[#allocation0]]
  $region102: #{forward.2} parent=0
    _
  %s26 = ssub.s32 1, %s24
  %s27 = scalar_select 0, %s26, %s24
  // Predicated region
  $region2: #{forward.2} parent=0 // pred_check
    _
  $region3: #{forward.2} parent=0 // pred_check_branch
    %29 = sbr.rel (0) target = $region5
  $region4: #{forward.2} parent=0 // pred_region
    _
  $region5: #{forward.2} parent=0 // pred_fallthru
    _
  // Predicated region
  $region6: #{forward.2} parent=0 // pred_check
    _
  $region7: #{forward.2} parent=0 // pred_check_branch
    %31 = sbr.rel (0) target = $region9
  $region8: #{forward.2} parent=0 // pred_region
    _
  $region9: #{forward.2} parent=0 // pred_fallthru
    _
  // Predicated region
  $region10: #{forward.2} parent=0 // pred_check
    _
  $region11: #{forward.2} parent=0 // pred_check_branch
    %33 = sbr.rel (0) target = $region13
  $region12: #{forward.2} parent=0 // pred_region
    _
  $region13: #{forward.2} parent=0 // pred_fallthru
    _
  // Predicated region
  $region14: #{forward.2} parent=0 // pred_check
    _
  $region15: #{forward.2} parent=0 // pred_check_branch
    %35 = sbr.rel (0) target = $region17
  $region16: #{forward.2} parent=0 // pred_region
    _
  $region17: #{forward.2} parent=0 // pred_fallthru
    _
  // Predicated region
  $region18: #{forward.2} parent=0 // pred_check
    _
  $region19: #{forward.2} parent=0 // pred_check_branch
    %37 = sbr.rel (0) target = $region21
  $region20: #{forward.2} parent=0 // pred_region
    _
  $region21: #{forward.2} parent=0 // pred_fallthru
    _
  // Predicated region
  $region22: #{forward.2} parent=0 // pred_check
    _
  $region23: #{forward.2} parent=0 // pred_check_branch
    %39 = sbr.rel (0) target = $region25
  $region24: #{forward.2} parent=0 // pred_region
    _
  $region25: #{forward.2} parent=0 // pred_fallthru
    _
  // Predicated region
  $region26: #{forward.2} parent=0 // pred_check
    _
  $region27: #{forward.2} parent=0 // pred_check_branch
    %41 = sbr.rel (0) target = $region29
  $region28: #{forward.2} parent=0 // pred_region
    _
  $region29: #{forward.2} parent=0 // pred_fallthru
    _
  // Predicated region
  $region30: #{forward.2} parent=0 // pred_check
    _
  $region31: #{forward.2} parent=0 // pred_check_branch
    %43 = sbr.rel (0) target = $region33
  $region32: #{forward.2} parent=0 // pred_region
    _
  $region33: #{forward.2} parent=0 // pred_fallthru
    _
  // Predicated region
  $region34: #{forward.2} parent=0 // pred_check
    _
  $region35: #{forward.2} parent=0 // pred_check_branch
    %45 = sbr.rel (0) target = $region37
  $region36: #{forward.2} parent=0 // pred_region
    _
  $region37: #{forward.2} parent=0 // pred_fallthru
    _
  // Predicated region
  $region38: #{forward.2} parent=0 // pred_check
    _
  $region39: #{forward.2} parent=0 // pred_check_branch
    %47 = sbr.rel (0) target = $region41
  $region40: #{forward.2} parent=0 // pred_region
    _
  $region41: #{forward.2} parent=0 // pred_fallthru
    _
  // Predicated region
  $region42: #{forward.2} parent=0 // pred_check
    _
  $region43: #{forward.2} parent=0 // pred_check_branch
    %49 = sbr.rel (0) target = $region45
  $region44: #{forward.2} parent=0 // pred_region
    _
  $region45: #{forward.2} parent=0 // pred_fallthru
    _
  // Predicated region
  $region46: #{forward.2} parent=0 // pred_check
    _
  $region47: #{forward.2} parent=0 // pred_check_branch
    %51 = sbr.rel (0) target = $region49
  $region48: #{forward.2} parent=0 // pred_region
    _
  $region49: #{forward.2} parent=0 // pred_fallthru
    _
  // Predicated region
  $region50: #{forward.2} parent=0 // pred_check
    _
  $region51: #{forward.2} parent=0 // pred_check_branch
    %53 = sbr.rel (0) target = $region53
  $region52: #{forward.2} parent=0 // pred_region
    _
  $region53: #{forward.2} parent=0 // pred_fallthru
    _
  // Predicated region
  $region54: #{forward.2} parent=0 // pred_check
    _
  $region55: #{forward.2} parent=0 // pred_check_branch
    %55 = sbr.rel (0) target = $region57
  $region56: #{forward.2} parent=0 // pred_region
    _
  $region57: #{forward.2} parent=0 // pred_fallthru
    _
  // Predicated region
  $region58: #{forward.2} parent=0 // pred_check
    _
  $region59: #{forward.2} parent=0 // pred_check_branch
    %57 = sbr.rel (0) target = $region61
  $region60: #{forward.2} parent=0 // pred_region
    _
  $region61: #{forward.2} parent=0 // pred_fallthru
    _
  // Predicated region
  $region62: #{forward.2} parent=0 // pred_check
    _
  $region63: #{forward.2} parent=0 // pred_check_branch
    %59 = sbr.rel (0) target = $region65
  $region64: #{forward.2} parent=0 // pred_region
    _
  $region65: #{forward.2} parent=0 // pred_fallthru
    _
  // Predicated region
  $region66: #{forward.2} parent=0 // pred_check
    _
  $region67: #{forward.2} parent=0 // pred_check_branch
    %61 = sbr.rel (0) target = $region69
  $region68: #{forward.2} parent=0 // pred_region
    _
  $region69: #{forward.2} parent=0 // pred_fallthru
    _
  // Predicated region
  $region70: #{forward.2} parent=0 // pred_check
    _
  $region71: #{forward.2} parent=0 // pred_check_branch
    %63 = sbr.rel (0) target = $region73
  $region72: #{forward.2} parent=0 // pred_region
    _
  $region73: #{forward.2} parent=0 // pred_fallthru
    _
  // Predicated region
  $region74: #{forward.2} parent=0 // pred_check
    _
  $region75: #{forward.2} parent=0 // pred_check_branch
    %65 = sbr.rel (0) target = $region77
  $region76: #{forward.2} parent=0 // pred_region
    _
  $region77: #{forward.2} parent=0 // pred_fallthru
    _
  // Predicated region
  $region78: #{forward.2} parent=0 // pred_check
    _
  $region79: #{forward.2} parent=0 // pred_check_branch
    %67 = sbr.rel (0) target = $region81
  $region80: #{forward.2} parent=0 // pred_region
    _
  $region81: #{forward.2} parent=0 // pred_fallthru
    _
  // Predicated region
  $region82: #{forward.2} parent=0 // pred_check
    _
  $region83: #{forward.2} parent=0 // pred_check_branch
    %69 = sbr.rel (0) target = $region85
  $region84: #{forward.2} parent=0 // pred_region
    _
  $region85: #{forward.2} parent=0 // pred_fallthru
    _
  // Predicated region
  $region86: #{forward.2} parent=0 // pred_check
    _
  $region87: #{forward.2} parent=0 // pred_check_branch
    %71 = sbr.rel (0) target = $region89
  $region88: #{forward.2} parent=0 // pred_region
    _
  $region89: #{forward.2} parent=0 // pred_fallthru
    _
  // Predicated region
  $region90: #{forward.2} parent=0 // pred_check
    _
  $region91: #{forward.2} parent=0 // pred_check_branch
    %73 = sbr.rel (0) target = $region93
  $region92: #{forward.2} parent=0 // pred_region
    _
  $region93: #{forward.2} parent=0 // pred_fallthru
    _
  %v74 = vld [vmem:[%s4] sm:$0xff]
  %v75 = vld [vmem:[%s4 + $0x8] sm:$0xff]
  %v76 = vld [vmem:[%s4 + $0x10] sm:$0xff]
  %v77 = vld [vmem:[%s4 + $0x18] sm:$0xff]
  %v78 = vld [vmem:[%s4 + $0x20] sm:$0xff]
  %v79 = vld [vmem:[%s4 + $0x28] sm:$0xff]
  %v80 = vld [vmem:[%s4 + $0x30] sm:$0xff]
  %v81 = vld [vmem:[%s4 + $0x38] sm:$0xff]
  %v82 = vld [vmem:[%s6] sm:$0xff]
  %v83 = vld [vmem:[%s6 + $0x8] sm:$0x3]
  %v84 = vld [vmem:[%s0] sm:$0xff]
  %v85 = vld [vmem:[%s0 + $0x8] sm:$0xff]
  %v86 = vld [vmem:[%s3] sm:$0xff]
  %v87 = vld [vmem:[%s3 + $0x8] sm:$0xff]
  %v88 = vld [vmem:[%s3 + $0x10] sm:$0xff]
  %v89 = vld [vmem:[%s3 + $0x18] sm:$0xff]
  %v90 = vld [vmem:[%s3 + $0x20] sm:$0xff]
  %v91 = vld [vmem:[%s3 + $0x28] sm:$0xff]
  %v92 = vperm.slane %v82, 0
  %vm93 = vcmask 392192
  %v95 = vsel %vm93, %v84, 0
  %v98 = vsel %vm93, %v85, 0
  %100 = vmatpush.msra.mxu0 0.0
  %101 = vmatpush.msra.mxu0 0.0
  %102 = vmatpush.msra.mxu0 0.0
  %103 = vmatpush.msra.mxu0 0.0
  %104 = vmatpush.msra.mxu0 0.0
  %105 = vmatpush.msra.mxu0 0.0
  %106 = vmatpush.msra.mxu0 0.0
  %107 = vmatpush.msra.mxu0 0.0
  %108 = vmatpush.msra.mxu0 0.0
  %109 = vmatpush.msra.mxu0 0.0
  %110 = vmatpush.msra.mxu0 %v91
  %111 = vmatpush.msra.mxu0 %v90
  %112 = vmatpush.msra.mxu0 %v89
  %113 = vmatpush.msra.mxu0 %v88
  %114 = vmatpush.msra.mxu0 %v87
  %115 = vmatpush.msra.mxu0 %v86
  %116 = vmatmul.f32.gmra.mxu0 %v95
  %v117 = vpop.f32.mrf.mxu0
  %v118 = vadd.f32 %v92, %v117
  %119 = vmatmul.f32.gmra.mxu0 %v98
  %v120 = vpop.f32.mrf.mxu0
  %v121 = vadd.f32 %v92, %v120
  %122 = vdwg.mxu0
  %vm123 = vcmask 261120
  %v124 = vsel %vm123, %v118, 0.0
  %125 = vadd.xlane.f32.xlu0 %v124
  %v126 = vpop.xlane.xlu0 %125
  %v127 = vsel %vm123, %v121, 0.0
  %128 = vadd.xlane.f32.xlu0 %v127
  %v129 = vpop.xlane.xlu0 %128
  %v130 = vrcp.pop 32.0
  %v131 = vmul.f32 32.0, %v130
  %v132 = vsub.f32 1.0, %v131
  %v133 = vmul.f32 %v130, %v132
  %v134 = vadd.f32 %v130, %v133
  %vm135 = vweird.f32 %v130
  %v136 = vsel %vm135, %v130, %v134
  %v137 = vmul.f32 %v126, %v136
  %v138 = vmul.f32 %v129, %v136
  %v139 = vsub.f32 %v118, %v137
  %v140 = vsub.f32 %v121, %v138
  %v141 = vmul.f32 %v139, %v139
  %v142 = vmul.f32 %v140, %v140
  %v143 = vsel %vm123, %v141, 0.0
  %144 = vadd.xlane.f32.xlu0 %v143
  %v145 = vpop.xlane.xlu0 %144
  %v146 = vsel %vm123, %v142, 0.0
  %147 = vadd.xlane.f32.xlu0 %v146
  %v148 = vpop.xlane.xlu0 %147
  %v149 = vmul.f32 %v145, %v136
  %v150 = vmul.f32 %v148, %v136
  %v151 = vadd.f32 %v149, 1e-05
  %v152 = vadd.f32 %v150, 1e-05
  %v153 = vrsqrt.pop %v151
  %v154 = vmul.f32 %v153, %v151
  %v155 = vmul.f32 %v154, %v153
  %v156 = vmul.f32 0.5, %v155
  %v157 = vsub.f32 1.5, %v156
  %v158 = vmul.f32 %v153, %v157
  %vm159 = vweird.f32 %v151
  %vm160 = vweird.f32 %v153
  %vm161 = vmor %vm159, %vm160
  %v162 = vsel %vm161, %v153, %v158
  %v163 = vrsqrt.pop %v152
  %v164 = vmul.f32 %v163, %v152
  %v165 = vmul.f32 %v164, %v163
  %v166 = vmul.f32 0.5, %v165
  %v167 = vsub.f32 1.5, %v166
  %v168 = vmul.f32 %v163, %v167
  %vm169 = vweird.f32 %v152
  %vm170 = vweird.f32 %v163
  %vm171 = vmor %vm169, %vm170
  %v172 = vsel %vm171, %v163, %v168
  %v173 = vmul.f32 %v139, %v162
  %v174 = vmul.f32 %v140, %v172
  %v175 = vperm.slane %v82, 1
  %v176 = vmul.f32 %v173, %v175
  %v177 = vmul.f32 %v174, %v175
  %v178 = vperm.slane %v82, 2
  %v179 = vadd.f32 %v176, %v178
  %v180 = vadd.f32 %v177, %v178
  %v181 = vld [vmem:[%s7] sm:$0x1]
  %v183 = vperm.slane %v181, 0
  %v186 = vsel %vm123, %v179, 0
  %v189 = vsel %vm123, %v180, 0
  %191 = vmatpush.msra.mxu0 0.0
  %192 = vmatpush.msra.mxu0 0.0
  %193 = vmatpush.msra.mxu0 0.0
  %194 = vmatpush.msra.mxu0 0.0
  %195 = vmatpush.msra.mxu0 0.0
  %196 = vmatpush.msra.mxu0 0.0
  %197 = vmatpush.msra.mxu0 0.0
  %198 = vmatpush.msra.mxu0 0.0
  %199 = vmatpush.msra.mxu0 0.0
  %200 = vmatpush.msra.mxu0 0.0
  %201 = vmatpush.msra.mxu0 0.0
  %202 = vmatpush.msra.mxu0 0.0
  %203 = vmatpush.msra.mxu0 %v80
  %204 = vmatpush.msra.mxu0 %v78
  %205 = vmatpush.msra.mxu0 %v76
  %206 = vmatpush.msra.mxu0 %v74
  %207 = vmatmul.f32.gmra.mxu0 %v186
  %v208 = vpop.f32.mrf.mxu0
  %v209 = vadd.f32 %v183, %v208
  %210 = vmatmul.f32.gmra.mxu0 %v189
  %v211 = vpop.f32.mrf.mxu0
  %v212 = vadd.f32 %v183, %v211
  %213 = vdwg.mxu0
  %218 = vrot.lane.b32.xlu0 %v74, 96
  %v219 = vpop.permute.xlu0 %218
  %220 = vrot.lane.b32.xlu0 %v76, 96
  %v221 = vpop.permute.xlu0 %220
  %222 = vrot.lane.b32.xlu0 %v78, 96
  %v223 = vpop.permute.xlu0 %222
  %224 = vrot.lane.b32.xlu0 %v80, 96
  %v225 = vpop.permute.xlu0 %224
  %230 = vrot.lane.b32.xlu0 %v183, 96
  %v231 = vpop.permute.xlu0 %230
  %233 = vmatpush.msra.mxu0 0.0
  %234 = vmatpush.msra.mxu0 0.0
  %235 = vmatpush.msra.mxu0 0.0
  %236 = vmatpush.msra.mxu0 0.0
  %237 = vmatpush.msra.mxu0 0.0
  %238 = vmatpush.msra.mxu0 0.0
  %239 = vmatpush.msra.mxu0 0.0
  %240 = vmatpush.msra.mxu0 0.0
  %241 = vmatpush.msra.mxu0 0.0
  %242 = vmatpush.msra.mxu0 0.0
  %243 = vmatpush.msra.mxu0 0.0
  %244 = vmatpush.msra.mxu0 0.0
  %245 = vmatpush.msra.mxu0 %v225
  %246 = vmatpush.msra.mxu0 %v223
  %247 = vmatpush.msra.mxu0 %v221
  %248 = vmatpush.msra.mxu0 %v219
  %249 = vmatmul.f32.gmra.mxu0 %v186
  %v250 = vpop.f32.mrf.mxu0
  %v251 = vadd.f32 %v231, %v250
  %252 = vmatmul.f32.gmra.mxu0 %v189
  %v253 = vpop.f32.mrf.mxu0
  %v254 = vadd.f32 %v231, %v253
  %255 = vdwg.mxu0
  %vm256 = vcmask 64512
  %v258 = vsel %vm256, %v209, 0
  %v261 = vsel %vm256, %v212, 0
  %v264 = vsel %vm256, %v251, 0
  %v267 = vsel %vm256, %v254, 0
  %269 = vmatpush.xpose.msra.mxu0 0.0
  %270 = vmatpush.xpose.msra.mxu0 0.0
  %271 = vmatpush.xpose.msra.mxu0 0.0
  %272 = vmatpush.xpose.msra.mxu0 0.0
  %273 = vmatpush.xpose.msra.mxu0 0.0
  %274 = vmatpush.xpose.msra.mxu0 0.0
  %275 = vmatpush.xpose.msra.mxu0 0.0
  %276 = vmatpush.xpose.msra.mxu0 0.0
  %277 = vmatpush.xpose.msra.mxu0 0.0
  %278 = vmatpush.xpose.msra.mxu0 0.0
  %279 = vmatpush.xpose.msra.mxu0 0.0
  %280 = vmatpush.xpose.msra.mxu0 0.0
  %281 = vmatpush.xpose.msra.mxu0 0.0
  %282 = vmatpush.xpose.msra.mxu0 0.0
  %283 = vmatpush.xpose.msra.mxu0 %v267
  %284 = vmatpush.xpose.msra.mxu0 %v264
  %285 = vmatmul.f32.gmra.mxu0 %v258
  %v286 = vpop.f32.mrf.mxu0
  %v287 = vadd.f32 0.0, %v286
  %288 = vmatmul.f32.gmra.mxu0 %v261
  %v289 = vpop.f32.mrf.mxu0
  %v290 = vadd.f32 0.0, %v289
  %291 = vdwg.mxu0
  %v292 = vmul.f32 %v287, 0.35355338
  %v293 = vmul.f32 %v290, 0.35355338
  %v294 = vadd.f32 %v292, 0.0
  %v295 = vadd.f32 %v293, 0.0
  %vm296 = vcmask 130048
  %v297 = vsel %vm296, %v294, -inf
  %298 = vmax.xlane.f32.xlu0 %v297
  %v299 = vpop.xlane.xlu0 %298
  %v300 = vsel %vm296, %v295, -inf
  %301 = vmax.xlane.f32.xlu0 %v300
  %v302 = vpop.xlane.xlu0 %301
  %v303 = vsub.f32 %v294, %v299
  %v304 = vsub.f32 %v295, %v302
  %v305 = vmul.f32 %v303, 1.442695
  %v306 = vpow.pop %v305
  %v307 = vmul.f32 %v304, 1.442695
  %v308 = vpow.pop %v307
  %v309 = vsel %vm296, %v306, 0.0
  %310 = vadd.xlane.f32.xlu0 %v309
  %v311 = vpop.xlane.xlu0 %310
  %v312 = vsel %vm296, %v308, 0.0
  %313 = vadd.xlane.f32.xlu0 %v312
  %v314 = vpop.xlane.xlu0 %313
  %v315 = vrcp.pop %v311
  %v316 = vmul.f32 %v311, %v315
  %v317 = vsub.f32 1.0, %v316
  %v318 = vmul.f32 %v315, %v317
  %v319 = vadd.f32 %v315, %v318
  %vm320 = vweird.f32 %v311
  %vm321 = vweird.f32 %v315
  %vm322 = vmor %vm320, %vm321
  %v323 = vsel %vm322, %v315, %v319
  %v324 = vand.u32 2147483647, %v311
  %vm325 = vcmp.eq.f32.partialorder %v324, 8.507059e+37
  %v326 = vand.u32 %v311, 2147483648
  %v327 = vor.u32 1.1754944e-38, %v326
  %v328 = vsel %vm325, %v327, %v323
  %v329 = vmul.f32 %v306, %v328
  %v330 = vrcp.pop %v314
  %v331 = vmul.f32 %v314, %v330
  %v332 = vsub.f32 1.0, %v331
  %v333 = vmul.f32 %v330, %v332
  %v334 = vadd.f32 %v330, %v333
  %vm335 = vweird.f32 %v314
  %vm336 = vweird.f32 %v330
  %vm337 = vmor %vm335, %vm336
  %v338 = vsel %vm337, %v330, %v334
  %v339 = vand.u32 2147483647, %v314
  %vm340 = vcmp.eq.f32.partialorder %v339, 8.507059e+37
  %v341 = vand.u32 %v314, 2147483648
  %v342 = vor.u32 1.1754944e-38, %v341
  %v343 = vsel %vm340, %v342, %v338
  %v344 = vmul.f32 %v308, %v343
  %345 = vrot.lane.b32.xlu0 %v251, 96
  %v346 = vpop.permute.xlu0 %345
  %347 = vrot.lane.b32.xlu0 %v254, 96
  %v348 = vpop.permute.xlu0 %347
  %v352 = vsel %vm296, %v329, 0
  %v355 = vsel %vm296, %v344, 0
  %357 = vmatpush.msra.mxu0 0.0
  %358 = vmatpush.msra.mxu0 0.0
  %359 = vmatpush.msra.mxu0 0.0
  %360 = vmatpush.msra.mxu0 0.0
  %361 = vmatpush.msra.mxu0 0.0
  %362 = vmatpush.msra.mxu0 0.0
  %363 = vmatpush.msra.mxu0 0.0
  %364 = vmatpush.msra.mxu0 0.0
  %365 = vmatpush.msra.mxu0 0.0
  %366 = vmatpush.msra.mxu0 0.0
  %367 = vmatpush.msra.mxu0 0.0
  %368 = vmatpush.msra.mxu0 0.0
  %369 = vmatpush.msra.mxu0 0.0
  %370 = vmatpush.msra.mxu0 0.0
  %371 = vmatpush.msra.mxu0 %v348
  %372 = vmatpush.msra.mxu0 %v346
  %373 = vmatmul.f32.gmra.mxu0 %v352
  %v374 = vpop.f32.mrf.mxu0
  %v375 = vadd.f32 0.0, %v374
  %376 = vmatmul.f32.gmra.mxu0 %v355
  %v377 = vpop.f32.mrf.mxu0
  %v378 = vadd.f32 0.0, %v377
  %379 = vdwg.mxu0
  %380 = vrot.lane.b32.xlu0 %v209, 120
  %v381 = vpop.permute.xlu0 %380
  %382 = vrot.lane.b32.xlu0 %v212, 120
  %v383 = vpop.permute.xlu0 %382
  %384 = vrot.lane.b32.xlu0 %v251, 120
  %v385 = vpop.permute.xlu0 %384
  %386 = vrot.lane.b32.xlu0 %v254, 120
  %v387 = vpop.permute.xlu0 %386
  %v388 = vsel %vm256, %v381, 0
  %v390 = vsel %vm256, %v383, 0
  %v392 = vsel %vm256, %v385, 0
  %v394 = vsel %vm256, %v387, 0
  %396 = vmatpush.xpose.msra.mxu0 0.0
  %397 = vmatpush.xpose.msra.mxu0 0.0
  %398 = vmatpush.xpose.msra.mxu0 0.0
  %399 = vmatpush.xpose.msra.mxu0 0.0
  %400 = vmatpush.xpose.msra.mxu0 0.0
  %401 = vmatpush.xpose.msra.mxu0 0.0
  %402 = vmatpush.xpose.msra.mxu0 0.0
  %403 = vmatpush.xpose.msra.mxu0 0.0
  %404 = vmatpush.xpose.msra.mxu0 0.0
  %405 = vmatpush.xpose.msra.mxu0 0.0
  %406 = vmatpush.xpose.msra.mxu0 0.0
  %407 = vmatpush.xpose.msra.mxu0 0.0
  %408 = vmatpush.xpose.msra.mxu0 0.0
  %409 = vmatpush.xpose.msra.mxu0 0.0
  %410 = vmatpush.xpose.msra.mxu0 %v394
  %411 = vmatpush.xpose.msra.mxu0 %v392
  %412 = vmatmul.f32.gmra.mxu0 %v388
  %v413 = vpop.f32.mrf.mxu0
  %v414 = vadd.f32 0.0, %v413
  %415 = vmatmul.f32.gmra.mxu0 %v390
  %v416 = vpop.f32.mrf.mxu0
  %v417 = vadd.f32 0.0, %v416
  %418 = vdwg.mxu0
  %v419 = vmul.f32 %v414, 0.35355338
  %v420 = vmul.f32 %v417, 0.35355338
  %v421 = vadd.f32 %v419, 0.0
  %v422 = vadd.f32 %v420, 0.0
  %v423 = vsel %vm296, %v421, -inf
  %424 = vmax.xlane.f32.xlu0 %v423
  %v425 = vpop.xlane.xlu0 %424
  %v426 = vsel %vm296, %v422, -inf
  %427 = vmax.xlane.f32.xlu0 %v426
  %v428 = vpop.xlane.xlu0 %427
  %v429 = vsub.f32 %v421, %v425
  %v430 = vsub.f32 %v422, %v428
  %v431 = vmul.f32 %v429, 1.442695
  %v432 = vpow.pop %v431
  %v433 = vmul.f32 %v430, 1.442695
  %v434 = vpow.pop %v433
  %v435 = vsel %vm296, %v432, 0.0
  %436 = vadd.xlane.f32.xlu0 %v435
  %v437 = vpop.xlane.xlu0 %436
  %v438 = vsel %vm296, %v434, 0.0
  %439 = vadd.xlane.f32.xlu0 %v438
  %v440 = vpop.xlane.xlu0 %439
  %v441 = vrcp.pop %v437
  %v442 = vmul.f32 %v437, %v441
  %v443 = vsub.f32 1.0, %v442
  %v444 = vmul.f32 %v441, %v443
  %v445 = vadd.f32 %v441, %v444
  %vm446 = vweird.f32 %v437
  %vm447 = vweird.f32 %v441
  %vm448 = vmor %vm446, %vm447
  %v449 = vsel %vm448, %v441, %v445
  %v450 = vand.u32 2147483647, %v437
  %vm451 = vcmp.eq.f32.partialorder %v450, 8.507059e+37
  %v452 = vand.u32 %v437, 2147483648
  %v453 = vor.u32 1.1754944e-38, %v452
  %v454 = vsel %vm451, %v453, %v449
  %v455 = vmul.f32 %v432, %v454
  %v456 = vrcp.pop %v440
  %v457 = vmul.f32 %v440, %v456
  %v458 = vsub.f32 1.0, %v457
  %v459 = vmul.f32 %v456, %v458
  %v460 = vadd.f32 %v456, %v459
  %vm461 = vweird.f32 %v440
  %vm462 = vweird.f32 %v456
  %vm463 = vmor %vm461, %vm462
  %v464 = vsel %vm463, %v456, %v460
  %v465 = vand.u32 2147483647, %v440
  %vm466 = vcmp.eq.f32.partialorder %v465, 8.507059e+37
  %v467 = vand.u32 %v440, 2147483648
  %v468 = vor.u32 1.1754944e-38, %v467
  %v469 = vsel %vm466, %v468, %v464
  %v470 = vmul.f32 %v434, %v469
  %471 = vrot.lane.b32.xlu0 %v251, 88
  %v472 = vpop.permute.xlu0 %471
  %473 = vrot.lane.b32.xlu0 %v254, 88
  %v474 = vpop.permute.xlu0 %473
  %v478 = vsel %vm296, %v455, 0
  %v481 = vsel %vm296, %v470, 0
  %483 = vmatpush.msra.mxu0 0.0
  %484 = vmatpush.msra.mxu0 0.0
  %485 = vmatpush.msra.mxu0 0.0
  %486 = vmatpush.msra.mxu0 0.0
  %487 = vmatpush.msra.mxu0 0.0
  %488 = vmatpush.msra.mxu0 0.0
  %489 = vmatpush.msra.mxu0 0.0
  %490 = vmatpush.msra.mxu0 0.0
  %491 = vmatpush.msra.mxu0 0.0
  %492 = vmatpush.msra.mxu0 0.0
  %493 = vmatpush.msra.mxu0 0.0
  %494 = vmatpush.msra.mxu0 0.0
  %495 = vmatpush.msra.mxu0 0.0
  %496 = vmatpush.msra.mxu0 0.0
  %497 = vmatpush.msra.mxu0 %v474
  %498 = vmatpush.msra.mxu0 %v472
  %499 = vmatmul.f32.gmra.mxu0 %v478
  %v500 = vpop.f32.mrf.mxu0
  %v501 = vadd.f32 0.0, %v500
  %502 = vmatmul.f32.gmra.mxu0 %v481
  %v503 = vpop.f32.mrf.mxu0
  %v504 = vadd.f32 0.0, %v503
  %505 = vdwg.mxu0
  %506 = vrot.lane.b32.xlu0 %v209, 112
  %v507 = vpop.permute.xlu0 %506
  %508 = vrot.lane.b32.xlu0 %v212, 112
  %v509 = vpop.permute.xlu0 %508
  %510 = vrot.lane.b32.xlu0 %v251, 112
  %v511 = vpop.permute.xlu0 %510
  %512 = vrot.lane.b32.xlu0 %v254, 112
  %v513 = vpop.permute.xlu0 %512
  %v514 = vsel %vm256, %v507, 0
  %v516 = vsel %vm256, %v509, 0
  %v518 = vsel %vm256, %v511, 0
  %v520 = vsel %vm256, %v513, 0
  %522 = vmatpush.xpose.msra.mxu0 0.0
  %523 = vmatpush.xpose.msra.mxu0 0.0
  %524 = vmatpush.xpose.msra.mxu0 0.0
  %525 = vmatpush.xpose.msra.mxu0 0.0
  %526 = vmatpush.xpose.msra.mxu0 0.0
  %527 = vmatpush.xpose.msra.mxu0 0.0
  %528 = vmatpush.xpose.msra.mxu0 0.0
  %529 = vmatpush.xpose.msra.mxu0 0.0
  %530 = vmatpush.xpose.msra.mxu0 0.0
  %531 = vmatpush.xpose.msra.mxu0 0.0
  %532 = vmatpush.xpose.msra.mxu0 0.0
  %533 = vmatpush.xpose.msra.mxu0 0.0
  %534 = vmatpush.xpose.msra.mxu0 0.0
  %535 = vmatpush.xpose.msra.mxu0 0.0
  %536 = vmatpush.xpose.msra.mxu0 %v520
  %537 = vmatpush.xpose.msra.mxu0 %v518
  %538 = vmatmul.f32.gmra.mxu0 %v514
  %v539 = vpop.f32.mrf.mxu0
  %v540 = vadd.f32 0.0, %v539
  %541 = vmatmul.f32.gmra.mxu0 %v516
  %v542 = vpop.f32.mrf.mxu0
  %v543 = vadd.f32 0.0, %v542
  %544 = vdwg.mxu0
  %v545 = vmul.f32 %v540, 0.35355338
  %v546 = vmul.f32 %v543, 0.35355338
  %v547 = vadd.f32 %v545, 0.0
  %v548 = vadd.f32 %v546, 0.0
  %v549 = vsel %vm296, %v547, -inf
  %550 = vmax.xlane.f32.xlu0 %v549
  %v551 = vpop.xlane.xlu0 %550
  %v552 = vsel %vm296, %v548, -inf
  %553 = vmax.xlane.f32.xlu0 %v552
  %v554 = vpop.xlane.xlu0 %553
  %v555 = vsub.f32 %v547, %v551
  %v556 = vsub.f32 %v548, %v554
  %v557 = vmul.f32 %v555, 1.442695
  %v558 = vpow.pop %v557
  %v559 = vmul.f32 %v556, 1.442695
  %v560 = vpow.pop %v559
  %v561 = vsel %vm296, %v558, 0.0
  %562 = vadd.xlane.f32.xlu0 %v561
  %v563 = vpop.xlane.xlu0 %562
  %v564 = vsel %vm296, %v560, 0.0
  %565 = vadd.xlane.f32.xlu0 %v564
  %v566 = vpop.xlane.xlu0 %565
  %v567 = vrcp.pop %v563
  %v568 = vmul.f32 %v563, %v567
  %v569 = vsub.f32 1.0, %v568
  %v570 = vmul.f32 %v567, %v569
  %v571 = vadd.f32 %v567, %v570
  %vm572 = vweird.f32 %v563
  %vm573 = vweird.f32 %v567
  %vm574 = vmor %vm572, %vm573
  %v575 = vsel %vm574, %v567, %v571
  %v576 = vand.u32 2147483647, %v563
  %vm577 = vcmp.eq.f32.partialorder %v576, 8.507059e+37
  %v578 = vand.u32 %v563, 2147483648
  %v579 = vor.u32 1.1754944e-38, %v578
  %v580 = vsel %vm577, %v579, %v575
  %v581 = vmul.f32 %v558, %v580
  %v582 = vrcp.pop %v566
  %v583 = vmul.f32 %v566, %v582
  %v584 = vsub.f32 1.0, %v583
  %v585 = vmul.f32 %v582, %v584
  %v586 = vadd.f32 %v582, %v585
  %vm587 = vweird.f32 %v566
  %vm588 = vweird.f32 %v582
  %vm589 = vmor %vm587, %vm588
  %v590 = vsel %vm589, %v582, %v586
  %v591 = vand.u32 2147483647, %v566
  %vm592 = vcmp.eq.f32.partialorder %v591, 8.507059e+37
  %v593 = vand.u32 %v566, 2147483648
  %v594 = vor.u32 1.1754944e-38, %v593
  %v595 = vsel %vm592, %v594, %v590
  %v596 = vmul.f32 %v560, %v595
  %597 = vrot.lane.b32.xlu0 %v251, 80
  %v598 = vpop.permute.xlu0 %597
  %599 = vrot.lane.b32.xlu0 %v254, 80
  %v600 = vpop.permute.xlu0 %599
  %v604 = vsel %vm296, %v581, 0
  %v607 = vsel %vm296, %v596, 0
  %609 = vmatpush.msra.mxu0 0.0
  %610 = vmatpush.msra.mxu0 0.0
  %611 = vmatpush.msra.mxu0 0.0
  %612 = vmatpush.msra.mxu0 0.0
  %613 = vmatpush.msra.mxu0 0.0
  %614 = vmatpush.msra.mxu0 0.0
  %615 = vmatpush.msra.mxu0 0.0
  %616 = vmatpush.msra.mxu0 0.0
  %617 = vmatpush.msra.mxu0 0.0
  %618 = vmatpush.msra.mxu0 0.0
  %619 = vmatpush.msra.mxu0 0.0
  %620 = vmatpush.msra.mxu0 0.0
  %621 = vmatpush.msra.mxu0 0.0
  %622 = vmatpush.msra.mxu0 0.0
  %623 = vmatpush.msra.mxu0 %v600
  %624 = vmatpush.msra.mxu0 %v598
  %625 = vmatmul.f32.gmra.mxu0 %v604
  %v626 = vpop.f32.mrf.mxu0
  %v627 = vadd.f32 0.0, %v626
  %628 = vmatmul.f32.gmra.mxu0 %v607
  %v629 = vpop.f32.mrf.mxu0
  %v630 = vadd.f32 0.0, %v629
  %631 = vdwg.mxu0
  %632 = vrot.lane.b32.xlu0 %v209, 104
  %v633 = vpop.permute.xlu0 %632
  %634 = vrot.lane.b32.xlu0 %v212, 104
  %v635 = vpop.permute.xlu0 %634
  %636 = vrot.lane.b32.xlu0 %v251, 104
  %v637 = vpop.permute.xlu0 %636
  %638 = vrot.lane.b32.xlu0 %v254, 104
  %v639 = vpop.permute.xlu0 %638
  %v640 = vsel %vm256, %v633, 0
  %v642 = vsel %vm256, %v635, 0
  %v644 = vsel %vm256, %v637, 0
  %v646 = vsel %vm256, %v639, 0
  %648 = vmatpush.xpose.msra.mxu0 0.0
  %649 = vmatpush.xpose.msra.mxu0 0.0
  %650 = vmatpush.xpose.msra.mxu0 0.0
  %651 = vmatpush.xpose.msra.mxu0 0.0
  %652 = vmatpush.xpose.msra.mxu0 0.0
  %653 = vmatpush.xpose.msra.mxu0 0.0
  %654 = vmatpush.xpose.msra.mxu0 0.0
  %655 = vmatpush.xpose.msra.mxu0 0.0
  %656 = vmatpush.xpose.msra.mxu0 0.0
  %657 = vmatpush.xpose.msra.mxu0 0.0
  %658 = vmatpush.xpose.msra.mxu0 0.0
  %659 = vmatpush.xpose.msra.mxu0 0.0
  %660 = vmatpush.xpose.msra.mxu0 0.0
  %661 = vmatpush.xpose.msra.mxu0 0.0
  %662 = vmatpush.xpose.msra.mxu0 %v646
  %663 = vmatpush.xpose.msra.mxu0 %v644
  %664 = vmatmul.f32.gmra.mxu0 %v640
  %v665 = vpop.f32.mrf.mxu0
  %v666 = vadd.f32 0.0, %v665
  %667 = vmatmul.f32.gmra.mxu0 %v642
  %v668 = vpop.f32.mrf.mxu0
  %v669 = vadd.f32 0.0, %v668
  %670 = vdwg.mxu0
  %v671 = vmul.f32 %v666, 0.35355338
  %v672 = vmul.f32 %v669, 0.35355338
  %v673 = vadd.f32 %v671, 0.0
  %v674 = vadd.f32 %v672, 0.0
  %v675 = vsel %vm296, %v673, -inf
  %676 = vmax.xlane.f32.xlu0 %v675
  %v677 = vpop.xlane.xlu0 %676
  %v678 = vsel %vm296, %v674, -inf
  %679 = vmax.xlane.f32.xlu0 %v678
  %v680 = vpop.xlane.xlu0 %679
  %v681 = vsub.f32 %v673, %v677
  %v682 = vsub.f32 %v674, %v680
  %v683 = vmul.f32 %v681, 1.442695
  %v684 = vpow.pop %v683
  %v685 = vmul.f32 %v682, 1.442695
  %v686 = vpow.pop %v685
  %v687 = vsel %vm296, %v684, 0.0
  %688 = vadd.xlane.f32.xlu0 %v687
  %v689 = vpop.xlane.xlu0 %688
  %v690 = vsel %vm296, %v686, 0.0
  %691 = vadd.xlane.f32.xlu0 %v690
  %v692 = vpop.xlane.xlu0 %691
  %v693 = vrcp.pop %v689
  %v694 = vmul.f32 %v689, %v693
  %v695 = vsub.f32 1.0, %v694
  %v696 = vmul.f32 %v693, %v695
  %v697 = vadd.f32 %v693, %v696
  %vm698 = vweird.f32 %v689
  %vm699 = vweird.f32 %v693
  %vm700 = vmor %vm698, %vm699
  %v701 = vsel %vm700, %v693, %v697
  %v702 = vand.u32 2147483647, %v689
  %vm703 = vcmp.eq.f32.partialorder %v702, 8.507059e+37
  %v704 = vand.u32 %v689, 2147483648
  %v705 = vor.u32 1.1754944e-38, %v704
  %v706 = vsel %vm703, %v705, %v701
  %v707 = vmul.f32 %v684, %v706
  %v708 = vrcp.pop %v692
  %v709 = vmul.f32 %v692, %v708
  %v710 = vsub.f32 1.0, %v709
  %v711 = vmul.f32 %v708, %v710
  %v712 = vadd.f32 %v708, %v711
  %vm713 = vweird.f32 %v692
  %vm714 = vweird.f32 %v708
  %vm715 = vmor %vm713, %vm714
  %v716 = vsel %vm715, %v708, %v712
  %v717 = vand.u32 2147483647, %v692
  %vm718 = vcmp.eq.f32.partialorder %v717, 8.507059e+37
  %v719 = vand.u32 %v692, 2147483648
  %v720 = vor.u32 1.1754944e-38, %v719
  %v721 = vsel %vm718, %v720, %v716
  %v722 = vmul.f32 %v686, %v721
  %723 = vrot.lane.b32.xlu0 %v251, 72
  %v724 = vpop.permute.xlu0 %723
  %725 = vrot.lane.b32.xlu0 %v254, 72
  %v726 = vpop.permute.xlu0 %725
  %v730 = vsel %vm296, %v707, 0
  %v733 = vsel %vm296, %v722, 0
  %735 = vmatpush.msra.mxu0 0.0
  %736 = vmatpush.msra.mxu0 0.0
  %737 = vmatpush.msra.mxu0 0.0
  %738 = vmatpush.msra.mxu0 0.0
  %739 = vmatpush.msra.mxu0 0.0
  %740 = vmatpush.msra.mxu0 0.0
  %741 = vmatpush.msra.mxu0 0.0
  %742 = vmatpush.msra.mxu0 0.0
  %743 = vmatpush.msra.mxu0 0.0
  %744 = vmatpush.msra.mxu0 0.0
  %745 = vmatpush.msra.mxu0 0.0
  %746 = vmatpush.msra.mxu0 0.0
  %747 = vmatpush.msra.mxu0 0.0
  %748 = vmatpush.msra.mxu0 0.0
  %749 = vmatpush.msra.mxu0 %v726
  %750 = vmatpush.msra.mxu0 %v724
  %751 = vmatmul.f32.gmra.mxu0 %v730
  %v752 = vpop.f32.mrf.mxu0
  %v753 = vadd.f32 0.0, %v752
  %754 = vmatmul.f32.gmra.mxu0 %v733
  %v755 = vpop.f32.mrf.mxu0
  %v756 = vadd.f32 0.0, %v755
  %757 = vdwg.mxu0
  %760 = vrot.lane.b32.xlu0 %v501, 8
  %v761 = vpop.permute.xlu0 %760
  %762 = vrot.lane.b32.xlu0 %v504, 8
  %v763 = vpop.permute.xlu0 %762
  %768 = vrot.lane.b32.xlu0 %v627, 16
  %v769 = vpop.permute.xlu0 %768
  %770 = vrot.lane.b32.xlu0 %v630, 16
  %v771 = vpop.permute.xlu0 %770
  %776 = vrot.lane.b32.xlu0 %v753, 24
  %v777 = vpop.permute.xlu0 %776
  %778 = vrot.lane.b32.xlu0 %v756, 24
  %v779 = vpop.permute.xlu0 %778
  %v782 = vsel %vm256, %v375, %v761
  %v783 = vsel %vm256, %v378, %v763
  %v784 = vsel %vm296, %v782, %v769
  %v785 = vsel %vm296, %v783, %v771
  %vm786 = vcmask 195584
  %v787 = vsel %vm786, %v784, %v777
  %v788 = vsel %vm786, %v785, %v779
  %v789 = vperm.slane %v82, 3
  %790 = vrot.lane.b32.xlu0 %v74, 32
  %v791 = vpop.permute.xlu0 %790
  %792 = vrot.lane.b32.xlu0 %v76, 32
  %v793 = vpop.permute.xlu0 %792
  %794 = vrot.lane.b32.xlu0 %v78, 32
  %v795 = vpop.permute.xlu0 %794
  %796 = vrot.lane.b32.xlu0 %v80, 32
  %v797 = vpop.permute.xlu0 %796
  %v803 = vsel %vm123, %v787, 0
  %v806 = vsel %vm123, %v788, 0
  %808 = vmatpush.msra.mxu0 0.0
  %809 = vmatpush.msra.mxu0 0.0
  %810 = vmatpush.msra.mxu0 0.0
  %811 = vmatpush.msra.mxu0 0.0
  %812 = vmatpush.msra.mxu0 0.0
  %813 = vmatpush.msra.mxu0 0.0
  %814 = vmatpush.msra.mxu0 0.0
  %815 = vmatpush.msra.mxu0 0.0
  %816 = vmatpush.msra.mxu0 0.0
  %817 = vmatpush.msra.mxu0 0.0
  %818 = vmatpush.msra.mxu0 0.0
  %819 = vmatpush.msra.mxu0 0.0
  %820 = vmatpush.msra.mxu0 %v797
  %821 = vmatpush.msra.mxu0 %v795
  %822 = vmatpush.msra.mxu0 %v793
  %823 = vmatpush.msra.mxu0 %v791
  %824 = vmatmul.f32.gmra.mxu0 %v803
  %v825 = vpop.f32.mrf.mxu0
  %v826 = vadd.f32 %v789, %v825
  %827 = vmatmul.f32.gmra.mxu0 %v806
  %v828 = vpop.f32.mrf.mxu0
  %v829 = vadd.f32 %v789, %v828
  %830 = vdwg.mxu0
  %v831 = vadd.f32 %v179, %v826
  %v832 = vadd.f32 %v180, %v829
  %v833 = vsel %vm123, %v831, 0.0
  %834 = vadd.xlane.f32.xlu0 %v833
  %v835 = vpop.xlane.xlu0 %834
  %v836 = vsel %vm123, %v832, 0.0
  %837 = vadd.xlane.f32.xlu0 %v836
  %v838 = vpop.xlane.xlu0 %837
  %v839 = vmul.f32 %v835, %v136
  %v840 = vmul.f32 %v838, %v136
  %v841 = vsub.f32 %v831, %v839
  %v842 = vsub.f32 %v832, %v840
  %v843 = vmul.f32 %v841, %v841
  %v844 = vmul.f32 %v842, %v842
  %v845 = vsel %vm123, %v843, 0.0
  %846 = vadd.xlane.f32.xlu0 %v845
  %v847 = vpop.xlane.xlu0 %846
  %v848 = vsel %vm123, %v844, 0.0
  %849 = vadd.xlane.f32.xlu0 %v848
  %v850 = vpop.xlane.xlu0 %849
  %v851 = vmul.f32 %v847, %v136
  %v852 = vmul.f32 %v850, %v136
  %v853 = vadd.f32 %v851, 1e-05
  %v854 = vadd.f32 %v852, 1e-05
  %v855 = vrsqrt.pop %v853
  %v856 = vmul.f32 %v855, %v853
  %v857 = vmul.f32 %v856, %v855
  %v858 = vmul.f32 0.5, %v857
  %v859 = vsub.f32 1.5, %v858
  %v860 = vmul.f32 %v855, %v859
  %vm861 = vweird.f32 %v853
  %vm862 = vweird.f32 %v855
  %vm863 = vmor %vm861, %vm862
  %v864 = vsel %vm863, %v855, %v860
  %v865 = vrsqrt.pop %v854
  %v866 = vmul.f32 %v865, %v854
  %v867 = vmul.f32 %v866, %v865
  %v868 = vmul.f32 0.5, %v867
  %v869 = vsub.f32 1.5, %v868
  %v870 = vmul.f32 %v865, %v869
  %vm871 = vweird.f32 %v854
  %vm872 = vweird.f32 %v865
  %vm873 = vmor %vm871, %vm872
  %v874 = vsel %vm873, %v865, %v870
  %v875 = vmul.f32 %v841, %v864
  %v876 = vmul.f32 %v842, %v874
  %v877 = vperm.slane %v82, 4
  %v878 = vmul.f32 %v875, %v877
  %v879 = vmul.f32 %v876, %v877
  %v880 = vperm.slane %v82, 5
  %v881 = vadd.f32 %v878, %v880
  %v882 = vadd.f32 %v879, %v880
  %v883 = vld [vmem:[%s8] sm:$0x1]
  %v885 = vperm.slane %v883, 0
  %v888 = vsel %vm123, %v881, 0
  %v891 = vsel %vm123, %v882, 0
  %893 = vmatpush.msra.mxu0 0.0
  %894 = vmatpush.msra.mxu0 0.0
  %895 = vmatpush.msra.mxu0 0.0
  %896 = vmatpush.msra.mxu0 0.0
  %897 = vmatpush.msra.mxu0 0.0
  %898 = vmatpush.msra.mxu0 0.0
  %899 = vmatpush.msra.mxu0 0.0
  %900 = vmatpush.msra.mxu0 0.0
  %901 = vmatpush.msra.mxu0 0.0
  %902 = vmatpush.msra.mxu0 0.0
  %903 = vmatpush.msra.mxu0 0.0
  %904 = vmatpush.msra.mxu0 0.0
  %905 = vmatpush.msra.mxu0 %v81
  %906 = vmatpush.msra.mxu0 %v79
  %907 = vmatpush.msra.mxu0 %v77
  %908 = vmatpush.msra.mxu0 %v75
  %909 = vmatmul.f32.gmra.mxu0 %v888
  %v910 = vpop.f32.mrf.mxu0
  %v911 = vadd.f32 %v885, %v910
  %912 = vmatmul.f32.gmra.mxu0 %v891
  %v913 = vpop.f32.mrf.mxu0
  %v914 = vadd.f32 %v885, %v913
  %915 = vdwg.mxu0
  %v916 = vmax.f32 %v911, 0.0
  %v917 = vmax.f32 %v914, 0.0
  %v918 = vld [vmem:[%s5] sm:$0xff]
  %v919 = vld [vmem:[%s5 + $0x8] sm:$0xff]
  %v920 = vld [vmem:[%s5 + $0x10] sm:$0xff]
  %v921 = vld [vmem:[%s5 + $0x18] sm:$0xff]
  %v922 = vld [vmem:[%s5 + $0x20] sm:$0xff]
  %v923 = vld [vmem:[%s5 + $0x28] sm:$0xff]
  %v924 = vld [vmem:[%s5 + $0x30] sm:$0xff]
  %v925 = vld [vmem:[%s5 + $0x38] sm:$0xff]
  %v926 = vperm.slane %v82, 6
  %vm927 = vcmask 523264
  %v929 = vsel %vm927, %v916, 0
  %v932 = vsel %vm927, %v917, 0
  %934 = vmatpush.msra.mxu0 0.0
  %935 = vmatpush.msra.mxu0 0.0
  %936 = vmatpush.msra.mxu0 0.0
  %937 = vmatpush.msra.mxu0 0.0
  %938 = vmatpush.msra.mxu0 0.0
  %939 = vmatpush.msra.mxu0 0.0
  %940 = vmatpush.msra.mxu0 0.0
  %941 = vmatpush.msra.mxu0 0.0
  %942 = vmatpush.msra.mxu0 %v925
  %943 = vmatpush.msra.mxu0 %v924
  %944 = vmatpush.msra.mxu0 %v923
  %945 = vmatpush.msra.mxu0 %v922
  %946 = vmatpush.msra.mxu0 %v921
  %947 = vmatpush.msra.mxu0 %v920
  %948 = vmatpush.msra.mxu0 %v919
  %949 = vmatpush.msra.mxu0 %v918
  %950 = vmatmul.f32.gmra.mxu0 %v929
  %v951 = vpop.f32.mrf.mxu0
  %v952 = vadd.f32 %v926, %v951
  %953 = vmatmul.f32.gmra.mxu0 %v932
  %v954 = vpop.f32.mrf.mxu0
  %v955 = vadd.f32 %v926, %v954
  %956 = vdwg.mxu0
  %v957 = vadd.f32 %v881, %v952
  %v958 = vadd.f32 %v882, %v955
  %v959 = vsel %vm123, %v957, 0.0
  %960 = vadd.xlane.f32.xlu0 %v959
  %v961 = vpop.xlane.xlu0 %960
  %v962 = vsel %vm123, %v958, 0.0
  %963 = vadd.xlane.f32.xlu0 %v962
  %v964 = vpop.xlane.xlu0 %963
  %v965 = vmul.f32 %v961, %v136
  %v966 = vmul.f32 %v964, %v136
  %v967 = vsub.f32 %v957, %v965
  %v968 = vsub.f32 %v958, %v966
  %v969 = vmul.f32 %v967, %v967
  %v970 = vmul.f32 %v968, %v968
  %v971 = vsel %vm123, %v969, 0.0
  %972 = vadd.xlane.f32.xlu0 %v971
  %v973 = vpop.xlane.xlu0 %972
  %v974 = vsel %vm123, %v970, 0.0
  %975 = vadd.xlane.f32.xlu0 %v974
  %v976 = vpop.xlane.xlu0 %975
  %v977 = vmul.f32 %v973, %v136
  %v978 = vmul.f32 %v976, %v136
  %v979 = vadd.f32 %v977, 1e-05
  %v980 = vadd.f32 %v978, 1e-05
  %v981 = vrsqrt.pop %v979
  %v982 = vmul.f32 %v981, %v979
  %v983 = vmul.f32 %v982, %v981
  %v984 = vmul.f32 0.5, %v983
  %v985 = vsub.f32 1.5, %v984
  %v986 = vmul.f32 %v981, %v985
  %vm987 = vweird.f32 %v979
  %vm988 = vweird.f32 %v981
  %vm989 = vmor %vm987, %vm988
  %v990 = vsel %vm989, %v981, %v986
  %v991 = vrsqrt.pop %v980
  %v992 = vmul.f32 %v991, %v980
  %v993 = vmul.f32 %v992, %v991
  %v994 = vmul.f32 0.5, %v993
  %v995 = vsub.f32 1.5, %v994
  %v996 = vmul.f32 %v991, %v995
  %vm997 = vweird.f32 %v980
  %vm998 = vweird.f32 %v991
  %vm999 = vmor %vm997, %vm998
  %v1000 = vsel %vm999, %v991, %v996
  %v1001 = vmul.f32 %v967, %v990
  %v1002 = vmul.f32 %v968, %v1000
  %v1003 = vperm.slane %v82, 7
  %v1004 = vmul.f32 %v1001, %v1003
  %v1005 = vmul.f32 %v1002, %v1003
  %v1006 = vperm.slane %v83, 0
  %v1007 = vadd.f32 %v1004, %v1006
  %v1008 = vadd.f32 %v1005, %v1006
  %v1009 = vperm.slane %v83, 1
  %1014 = vrot.lane.b32.xlu0 %v75, 64
  %v1015 = vpop.permute.xlu0 %1014
  %1016 = vrot.lane.b32.xlu0 %v77, 64
  %v1017 = vpop.permute.xlu0 %1016
  %1018 = vrot.lane.b32.xlu0 %v79, 64
  %v1019 = vpop.permute.xlu0 %1018
  %1020 = vrot.lane.b32.xlu0 %v81, 64
  %v1021 = vpop.permute.xlu0 %1020
  %v1027 = vsel %vm123, %v1007, 0
  %v1030 = vsel %vm123, %v1008, 0
  %1032 = vmatpush.msra.mxu0 0.0
  %1033 = vmatpush.msra.mxu0 0.0
  %1034 = vmatpush.msra.mxu0 0.0
  %1035 = vmatpush.msra.mxu0 0.0
  %1036 = vmatpush.msra.mxu0 0.0
  %1037 = vmatpush.msra.mxu0 0.0
  %1038 = vmatpush.msra.mxu0 0.0
  %1039 = vmatpush.msra.mxu0 0.0
  %1040 = vmatpush.msra.mxu0 0.0
  %1041 = vmatpush.msra.mxu0 0.0
  %1042 = vmatpush.msra.mxu0 0.0
  %1043 = vmatpush.msra.mxu0 0.0
  %1044 = vmatpush.msra.mxu0 %v1021
  %1045 = vmatpush.msra.mxu0 %v1019
  %1046 = vmatpush.msra.mxu0 %v1017
  %1047 = vmatpush.msra.mxu0 %v1015
  %1048 = vmatmul.f32.gmra.mxu0 %v1027
  %v1049 = vpop.f32.mrf.mxu0
  %v1050 = vadd.f32 %v1009, %v1049
  %1051 = vmatmul.f32.gmra.mxu0 %v1030
  %v1052 = vpop.f32.mrf.mxu0
  %v1053 = vadd.f32 %v1009, %v1052
  %1054 = vdwg.mxu0
  %v1055 = vld [vmem:[%s1] sm:$0xff]
  %v1056 = vld [vmem:[%s2] sm:$0xff]
  %v1057 = vld [vmem:[%s2 + $0x8] sm:$0xff]
  %v1058 = vld [vmem:[%s9] sm:$0xff]
  %v1059 = vld [vmem:[%s10] sm:$0xff]
  %v1060 = vld [vmem:[%s10 + $0x8] sm:$0xff]
  %v1061 = vld [vmem:[%s10 + $0x10] sm:$0xff]
  %v1062 = vld [vmem:[%s10 + $0x18] sm:$0xff]
  %v1063 = vld [vmem:[%s11] sm:$0x1]
  %v1064 = vld [vmem:[%s12] sm:$0xff]
  %v1065 = vld [vmem:[%s12 + $0x8] sm:$0xff]
  %v1066 = vld [vmem:[%s12 + $0x10] sm:$0xff]
  %v1067 = vld [vmem:[%s12 + $0x18] sm:$0xff]
  %v1068 = vld [vmem:[%s13] sm:$0x1]
  %v1070 = vperm.slane %v1063, 0
  %v1073 = vsel %vm123, %v1058, 0
  %1075 = vmatpush.msra.mxu0 0.0
  %1076 = vmatpush.msra.mxu0 0.0
  %1077 = vmatpush.msra.mxu0 0.0
  %1078 = vmatpush.msra.mxu0 0.0
  %1079 = vmatpush.msra.mxu0 0.0
  %1080 = vmatpush.msra.mxu0 0.0
  %1081 = vmatpush.msra.mxu0 0.0
  %1082 = vmatpush.msra.mxu0 0.0
  %1083 = vmatpush.msra.mxu0 0.0
  %1084 = vmatpush.msra.mxu0 0.0
  %1085 = vmatpush.msra.mxu0 0.0
  %1086 = vmatpush.msra.mxu0 0.0
  %1087 = vmatpush.msra.mxu0 %v1062
  %1088 = vmatpush.msra.mxu0 %v1061
  %1089 = vmatpush.msra.mxu0 %v1060
  %1090 = vmatpush.msra.mxu0 %v1059
  %1091 = vmatmul.f32.gmra.mxu0 %v1073
  %v1092 = vpop.f32.mrf.mxu0
  %v1093 = vadd.f32 %v1070, %v1092
  %1094 = vdwg.mxu0
  %1099 = vrot.lane.b32.xlu0 %v1059, 96
  %v1100 = vpop.permute.xlu0 %1099
  %1101 = vrot.lane.b32.xlu0 %v1060, 96
  %v1102 = vpop.permute.xlu0 %1101
  %1103 = vrot.lane.b32.xlu0 %v1061, 96
  %v1104 = vpop.permute.xlu0 %1103
  %1105 = vrot.lane.b32.xlu0 %v1062, 96
  %v1106 = vpop.permute.xlu0 %1105
  %1111 = vrot.lane.b32.xlu0 %v1070, 96
  %v1112 = vpop.permute.xlu0 %1111
  %v1115 = vsel %vm123, %v1050, 0
  %v1118 = vsel %vm123, %v1053, 0
  %1120 = vmatpush.msra.mxu0 0.0
  %1121 = vmatpush.msra.mxu0 0.0
  %1122 = vmatpush.msra.mxu0 0.0
  %1123 = vmatpush.msra.mxu0 0.0
  %1124 = vmatpush.msra.mxu0 0.0
  %1125 = vmatpush.msra.mxu0 0.0
  %1126 = vmatpush.msra.mxu0 0.0
  %1127 = vmatpush.msra.mxu0 0.0
  %1128 = vmatpush.msra.mxu0 0.0
  %1129 = vmatpush.msra.mxu0 0.0
  %1130 = vmatpush.msra.mxu0 0.0
  %1131 = vmatpush.msra.mxu0 0.0
  %1132 = vmatpush.msra.mxu0 %v1106
  %1133 = vmatpush.msra.mxu0 %v1104
  %1134 = vmatpush.msra.mxu0 %v1102
  %1135 = vmatpush.msra.mxu0 %v1100
  %1136 = vmatmul.f32.gmra.mxu0 %v1115
  %v1137 = vpop.f32.mrf.mxu0
  %v1138 = vadd.f32 %v1112, %v1137
  %1139 = vmatmul.f32.gmra.mxu0 %v1118
  %v1140 = vpop.f32.mrf.mxu0
  %v1141 = vadd.f32 %v1112, %v1140
  %1142 = vdwg.mxu0
  %v1144 = vsel %vm256, %v1093, 0
  %v1147 = vsel %vm256, %v1138, 0
  %v1150 = vsel %vm256, %v1141, 0
  %1152 = vmatpush.xpose.msra.mxu0 0.0
  %1153 = vmatpush.xpose.msra.mxu0 0.0
  %1154 = vmatpush.xpose.msra.mxu0 0.0
  %1155 = vmatpush.xpose.msra.mxu0 0.0
  %1156 = vmatpush.xpose.msra.mxu0 0.0
  %1157 = vmatpush.xpose.msra.mxu0 0.0
  %1158 = vmatpush.xpose.msra.mxu0 0.0
  %1159 = vmatpush.xpose.msra.mxu0 0.0
  %1160 = vmatpush.xpose.msra.mxu0 0.0
  %1161 = vmatpush.xpose.msra.mxu0 0.0
  %1162 = vmatpush.xpose.msra.mxu0 0.0
  %1163 = vmatpush.xpose.msra.mxu0 0.0
  %1164 = vmatpush.xpose.msra.mxu0 0.0
  %1165 = vmatpush.xpose.msra.mxu0 0.0
  %1166 = vmatpush.xpose.msra.mxu0 %v1150
  %1167 = vmatpush.xpose.msra.mxu0 %v1147
  %1168 = vmatmul.f32.gmra.mxu0 %v1144
  %v1169 = vpop.f32.mrf.mxu0
  %v1170 = vadd.f32 0.0, %v1169
  %1171 = vdwg.mxu0
  %v1172 = vmul.f32 %v1170, 0.35355338
  %v1173 = vadd.f32 %v1172, %v1055
  %v1174 = vsel %vm296, %v1173, -inf
  %1175 = vmax.xlane.f32.xlu0 %v1174
  %v1176 = vpop.xlane.xlu0 %1175
  %v1177 = vsub.f32 %v1173, %v1176
  %v1178 = vmul.f32 %v1177, 1.442695
  %v1179 = vpow.pop %v1178
  %v1180 = vsel %vm296, %v1179, 0.0
  %1181 = vadd.xlane.f32.xlu0 %v1180
  %v1182 = vpop.xlane.xlu0 %1181
  %v1183 = vrcp.pop %v1182
  %v1184 = vmul.f32 %v1182, %v1183
  %v1185 = vsub.f32 1.0, %v1184
  %v1186 = vmul.f32 %v1183, %v1185
  %v1187 = vadd.f32 %v1183, %v1186
  %vm1188 = vweird.f32 %v1182
  %vm1189 = vweird.f32 %v1183
  %vm1190 = vmor %vm1188, %vm1189
  %v1191 = vsel %vm1190, %v1183, %v1187
  %v1192 = vand.u32 2147483647, %v1182
  %vm1193 = vcmp.eq.f32.partialorder %v1192, 8.507059e+37
  %v1194 = vand.u32 %v1182, 2147483648
  %v1195 = vor.u32 1.1754944e-38, %v1194
  %v1196 = vsel %vm1193, %v1195, %v1191
  %v1197 = vmul.f32 %v1179, %v1196
  %1198 = vrot.lane.b32.xlu0 %v1138, 96
  %v1199 = vpop.permute.xlu0 %1198
  %1200 = vrot.lane.b32.xlu0 %v1141, 96
  %v1201 = vpop.permute.xlu0 %1200
  %v1205 = vsel %vm296, %v1197, 0
  %1207 = vmatpush.msra.mxu0 0.0
  %1208 = vmatpush.msra.mxu0 0.0
  %1209 = vmatpush.msra.mxu0 0.0
  %1210 = vmatpush.msra.mxu0 0.0
  %1211 = vmatpush.msra.mxu0 0.0
  %1212 = vmatpush.msra.mxu0 0.0
  %1213 = vmatpush.msra.mxu0 0.0
  %1214 = vmatpush.msra.mxu0 0.0
  %1215 = vmatpush.msra.mxu0 0.0
  %1216 = vmatpush.msra.mxu0 0.0
  %1217 = vmatpush.msra.mxu0 0.0
  %1218 = vmatpush.msra.mxu0 0.0
  %1219 = vmatpush.msra.mxu0 0.0
  %1220 = vmatpush.msra.mxu0 0.0
  %1221 = vmatpush.msra.mxu0 %v1201
  %1222 = vmatpush.msra.mxu0 %v1199
  %1223 = vmatmul.f32.gmra.mxu0 %v1205
  %v1224 = vpop.f32.mrf.mxu0
  %v1225 = vadd.f32 0.0, %v1224
  %1226 = vdwg.mxu0
  %1227 = vrot.lane.b32.xlu0 %v1093, 120
  %v1228 = vpop.permute.xlu0 %1227
  %1229 = vrot.lane.b32.xlu0 %v1138, 120
  %v1230 = vpop.permute.xlu0 %1229
  %1231 = vrot.lane.b32.xlu0 %v1141, 120
  %v1232 = vpop.permute.xlu0 %1231
  %v1233 = vsel %vm256, %v1228, 0
  %v1235 = vsel %vm256, %v1230, 0
  %v1237 = vsel %vm256, %v1232, 0
  %1239 = vmatpush.xpose.msra.mxu0 0.0
  %1240 = vmatpush.xpose.msra.mxu0 0.0
  %1241 = vmatpush.xpose.msra.mxu0 0.0
  %1242 = vmatpush.xpose.msra.mxu0 0.0
  %1243 = vmatpush.xpose.msra.mxu0 0.0
  %1244 = vmatpush.xpose.msra.mxu0 0.0
  %1245 = vmatpush.xpose.msra.mxu0 0.0
  %1246 = vmatpush.xpose.msra.mxu0 0.0
  %1247 = vmatpush.xpose.msra.mxu0 0.0
  %1248 = vmatpush.xpose.msra.mxu0 0.0
  %1249 = vmatpush.xpose.msra.mxu0 0.0
  %1250 = vmatpush.xpose.msra.mxu0 0.0
  %1251 = vmatpush.xpose.msra.mxu0 0.0
  %1252 = vmatpush.xpose.msra.mxu0 0.0
  %1253 = vmatpush.xpose.msra.mxu0 %v1237
  %1254 = vmatpush.xpose.msra.mxu0 %v1235
  %1255 = vmatmul.f32.gmra.mxu0 %v1233
  %v1256 = vpop.f32.mrf.mxu0
  %v1257 = vadd.f32 0.0, %v1256
  %1258 = vdwg.mxu0
  %v1259 = vmul.f32 %v1257, 0.35355338
  %v1260 = vadd.f32 %v1259, %v1055
  %v1261 = vsel %vm296, %v1260, -inf
  %1262 = vmax.xlane.f32.xlu0 %v1261
  %v1263 = vpop.xlane.xlu0 %1262
  %v1264 = vsub.f32 %v1260, %v1263
  %v1265 = vmul.f32 %v1264, 1.442695
  %v1266 = vpow.pop %v1265
  %v1267 = vsel %vm296, %v1266, 0.0
  %1268 = vadd.xlane.f32.xlu0 %v1267
  %v1269 = vpop.xlane.xlu0 %1268
  %v1270 = vrcp.pop %v1269
  %v1271 = vmul.f32 %v1269, %v1270
  %v1272 = vsub.f32 1.0, %v1271
  %v1273 = vmul.f32 %v1270, %v1272
  %v1274 = vadd.f32 %v1270, %v1273
  %vm1275 = vweird.f32 %v1269
  %vm1276 = vweird.f32 %v1270
  %vm1277 = vmor %vm1275, %vm1276
  %v1278 = vsel %vm1277, %v1270, %v1274
  %v1279 = vand.u32 2147483647, %v1269
  %vm1280 = vcmp.eq.f32.partialorder %v1279, 8.507059e+37
  %v1281 = vand.u32 %v1269, 2147483648
  %v1282 = vor.u32 1.1754944e-38, %v1281
  %v1283 = vsel %vm1280, %v1282, %v1278
  %v1284 = vmul.f32 %v1266, %v1283
  %1285 = vrot.lane.b32.xlu0 %v1138, 88
  %v1286 = vpop.permute.xlu0 %1285
  %1287 = vrot.lane.b32.xlu0 %v1141, 88
  %v1288 = vpop.permute.xlu0 %1287
  %v1292 = vsel %vm296, %v1284, 0
  %1294 = vmatpush.msra.mxu0 0.0
  %1295 = vmatpush.msra.mxu0 0.0
  %1296 = vmatpush.msra.mxu0 0.0
  %1297 = vmatpush.msra.mxu0 0.0
  %1298 = vmatpush.msra.mxu0 0.0
  %1299 = vmatpush.msra.mxu0 0.0
  %1300 = vmatpush.msra.mxu0 0.0
  %1301 = vmatpush.msra.mxu0 0.0
  %1302 = vmatpush.msra.mxu0 0.0
  %1303 = vmatpush.msra.mxu0 0.0
  %1304 = vmatpush.msra.mxu0 0.0
  %1305 = vmatpush.msra.mxu0 0.0
  %1306 = vmatpush.msra.mxu0 0.0
  %1307 = vmatpush.msra.mxu0 0.0
  %1308 = vmatpush.msra.mxu0 %v1288
  %1309 = vmatpush.msra.mxu0 %v1286
  %1310 = vmatmul.f32.gmra.mxu0 %v1292
  %v1311 = vpop.f32.mrf.mxu0
  %v1312 = vadd.f32 0.0, %v1311
  %1313 = vdwg.mxu0
  %1314 = vrot.lane.b32.xlu0 %v1093, 112
  %v1315 = vpop.permute.xlu0 %1314
  %1316 = vrot.lane.b32.xlu0 %v1138, 112
  %v1317 = vpop.permute.xlu0 %1316
  %1318 = vrot.lane.b32.xlu0 %v1141, 112
  %v1319 = vpop.permute.xlu0 %1318
  %v1320 = vsel %vm256, %v1315, 0
  %v1322 = vsel %vm256, %v1317, 0
  %v1324 = vsel %vm256, %v1319, 0
  %1326 = vmatpush.xpose.msra.mxu0 0.0
  %1327 = vmatpush.xpose.msra.mxu0 0.0
  %1328 = vmatpush.xpose.msra.mxu0 0.0
  %1329 = vmatpush.xpose.msra.mxu0 0.0
  %1330 = vmatpush.xpose.msra.mxu0 0.0
  %1331 = vmatpush.xpose.msra.mxu0 0.0
  %1332 = vmatpush.xpose.msra.mxu0 0.0
  %1333 = vmatpush.xpose.msra.mxu0 0.0
  %1334 = vmatpush.xpose.msra.mxu0 0.0
  %1335 = vmatpush.xpose.msra.mxu0 0.0
  %1336 = vmatpush.xpose.msra.mxu0 0.0
  %1337 = vmatpush.xpose.msra.mxu0 0.0
  %1338 = vmatpush.xpose.msra.mxu0 0.0
  %1339 = vmatpush.xpose.msra.mxu0 0.0
  %1340 = vmatpush.xpose.msra.mxu0 %v1324
  %1341 = vmatpush.xpose.msra.mxu0 %v1322
  %1342 = vmatmul.f32.gmra.mxu0 %v1320
  %v1343 = vpop.f32.mrf.mxu0
  %v1344 = vadd.f32 0.0, %v1343
  %1345 = vdwg.mxu0
  %v1346 = vmul.f32 %v1344, 0.35355338
  %v1347 = vadd.f32 %v1346, %v1055
  %v1348 = vsel %vm296, %v1347, -inf
  %1349 = vmax.xlane.f32.xlu0 %v1348
  %v1350 = vpop.xlane.xlu0 %1349
  %v1351 = vsub.f32 %v1347, %v1350
  %v1352 = vmul.f32 %v1351, 1.442695
  %v1353 = vpow.pop %v1352
  %v1354 = vsel %vm296, %v1353, 0.0
  %1355 = vadd.xlane.f32.xlu0 %v1354
  %v1356 = vpop.xlane.xlu0 %1355
  %v1357 = vrcp.pop %v1356
  %v1358 = vmul.f32 %v1356, %v1357
  %v1359 = vsub.f32 1.0, %v1358
  %v1360 = vmul.f32 %v1357, %v1359
  %v1361 = vadd.f32 %v1357, %v1360
  %vm1362 = vweird.f32 %v1356
  %vm1363 = vweird.f32 %v1357
  %vm1364 = vmor %vm1362, %vm1363
  %v1365 = vsel %vm1364, %v1357, %v1361
  %v1366 = vand.u32 2147483647, %v1356
  %vm1367 = vcmp.eq.f32.partialorder %v1366, 8.507059e+37
  %v1368 = vand.u32 %v1356, 2147483648
  %v1369 = vor.u32 1.1754944e-38, %v1368
  %v1370 = vsel %vm1367, %v1369, %v1365
  %v1371 = vmul.f32 %v1353, %v1370
  %1372 = vrot.lane.b32.xlu0 %v1138, 80
  %v1373 = vpop.permute.xlu0 %1372
  %1374 = vrot.lane.b32.xlu0 %v1141, 80
  %v1375 = vpop.permute.xlu0 %1374
  %v1379 = vsel %vm296, %v1371, 0
  %1381 = vmatpush.msra.mxu0 0.0
  %1382 = vmatpush.msra.mxu0 0.0
  %1383 = vmatpush.msra.mxu0 0.0
  %1384 = vmatpush.msra.mxu0 0.0
  %1385 = vmatpush.msra.mxu0 0.0
  %1386 = vmatpush.msra.mxu0 0.0
  %1387 = vmatpush.msra.mxu0 0.0
  %1388 = vmatpush.msra.mxu0 0.0
  %1389 = vmatpush.msra.mxu0 0.0
  %1390 = vmatpush.msra.mxu0 0.0
  %1391 = vmatpush.msra.mxu0 0.0
  %1392 = vmatpush.msra.mxu0 0.0
  %1393 = vmatpush.msra.mxu0 0.0
  %1394 = vmatpush.msra.mxu0 0.0
  %1395 = vmatpush.msra.mxu0 %v1375
  %1396 = vmatpush.msra.mxu0 %v1373
  %1397 = vmatmul.f32.gmra.mxu0 %v1379
  %v1398 = vpop.f32.mrf.mxu0
  %v1399 = vadd.f32 0.0, %v1398
  %1400 = vdwg.mxu0
  %1401 = vrot.lane.b32.xlu0 %v1093, 104
  %v1402 = vpop.permute.xlu0 %1401
  %1403 = vrot.lane.b32.xlu0 %v1138, 104
  %v1404 = vpop.permute.xlu0 %1403
  %1405 = vrot.lane.b32.xlu0 %v1141, 104
  %v1406 = vpop.permute.xlu0 %1405
  %v1407 = vsel %vm256, %v1402, 0
  %v1409 = vsel %vm256, %v1404, 0
  %v1411 = vsel %vm256, %v1406, 0
  %1413 = vmatpush.xpose.msra.mxu0 0.0
  %1414 = vmatpush.xpose.msra.mxu0 0.0
  %1415 = vmatpush.xpose.msra.mxu0 0.0
  %1416 = vmatpush.xpose.msra.mxu0 0.0
  %1417 = vmatpush.xpose.msra.mxu0 0.0
  %1418 = vmatpush.xpose.msra.mxu0 0.0
  %1419 = vmatpush.xpose.msra.mxu0 0.0
  %1420 = vmatpush.xpose.msra.mxu0 0.0
  %1421 = vmatpush.xpose.msra.mxu0 0.0
  %1422 = vmatpush.xpose.msra.mxu0 0.0
  %1423 = vmatpush.xpose.msra.mxu0 0.0
  %1424 = vmatpush.xpose.msra.mxu0 0.0
  %1425 = vmatpush.xpose.msra.mxu0 0.0
  %1426 = vmatpush.xpose.msra.mxu0 0.0
  %1427 = vmatpush.xpose.msra.mxu0 %v1411
  %1428 = vmatpush.xpose.msra.mxu0 %v1409
  %1429 = vmatmul.f32.gmra.mxu0 %v1407
  %v1430 = vpop.f32.mrf.mxu0
  %v1431 = vadd.f32 0.0, %v1430
  %1432 = vdwg.mxu0
  %v1433 = vmul.f32 %v1431, 0.35355338
  %v1434 = vadd.f32 %v1433, %v1055
  %v1435 = vsel %vm296, %v1434, -inf
  %1436 = vmax.xlane.f32.xlu0 %v1435
  %v1437 = vpop.xlane.xlu0 %1436
  %v1438 = vsub.f32 %v1434, %v1437
  %v1439 = vmul.f32 %v1438, 1.442695
  %v1440 = vpow.pop %v1439
  %v1441 = vsel %vm296, %v1440, 0.0
  %1442 = vadd.xlane.f32.xlu0 %v1441
  %v1443 = vpop.xlane.xlu0 %1442
  %v1444 = vrcp.pop %v1443
  %v1445 = vmul.f32 %v1443, %v1444
  %v1446 = vsub.f32 1.0, %v1445
  %v1447 = vmul.f32 %v1444, %v1446
  %v1448 = vadd.f32 %v1444, %v1447
  %vm1449 = vweird.f32 %v1443
  %vm1450 = vweird.f32 %v1444
  %vm1451 = vmor %vm1449, %vm1450
  %v1452 = vsel %vm1451, %v1444, %v1448
  %v1453 = vand.u32 2147483647, %v1443
  %vm1454 = vcmp.eq.f32.partialorder %v1453, 8.507059e+37
  %v1455 = vand.u32 %v1443, 2147483648
  %v1456 = vor.u32 1.1754944e-38, %v1455
  %v1457 = vsel %vm1454, %v1456, %v1452
  %v1458 = vmul.f32 %v1440, %v1457
  %1459 = vrot.lane.b32.xlu0 %v1138, 72
  %v1460 = vpop.permute.xlu0 %1459
  %1461 = vrot.lane.b32.xlu0 %v1141, 72
  %v1462 = vpop.permute.xlu0 %1461
  %v1466 = vsel %vm296, %v1458, 0
  %1468 = vmatpush.msra.mxu0 0.0
  %1469 = vmatpush.msra.mxu0 0.0
  %1470 = vmatpush.msra.mxu0 0.0
  %1471 = vmatpush.msra.mxu0 0.0
  %1472 = vmatpush.msra.mxu0 0.0
  %1473 = vmatpush.msra.mxu0 0.0
  %1474 = vmatpush.msra.mxu0 0.0
  %1475 = vmatpush.msra.mxu0 0.0
  %1476 = vmatpush.msra.mxu0 0.0
  %1477 = vmatpush.msra.mxu0 0.0
  %1478 = vmatpush.msra.mxu0 0.0
  %1479 = vmatpush.msra.mxu0 0.0
  %1480 = vmatpush.msra.mxu0 0.0
  %1481 = vmatpush.msra.mxu0 0.0
  %1482 = vmatpush.msra.mxu0 %v1462
  %1483 = vmatpush.msra.mxu0 %v1460
  %1484 = vmatmul.f32.gmra.mxu0 %v1466
  %v1485 = vpop.f32.mrf.mxu0
  %v1486 = vadd.f32 0.0, %v1485
  %1487 = vdwg.mxu0
  %1489 = vrot.lane.b32.xlu0 %v1312, 8
  %v1490 = vpop.permute.xlu0 %1489
  %1493 = vrot.lane.b32.xlu0 %v1399, 16
  %v1494 = vpop.permute.xlu0 %1493
  %1497 = vrot.lane.b32.xlu0 %v1486, 24
  %v1498 = vpop.permute.xlu0 %1497
  %v1500 = vsel %vm256, %v1225, %v1490
  %v1501 = vsel %vm296, %v1500, %v1494
  %v1502 = vsel %vm786, %v1501, %v1498
  %v1504 = vperm.slane %v1068, 0
  %v1507 = vsel %vm123, %v1502, 0
  %1509 = vmatpush.msra.mxu0 0.0
  %1510 = vmatpush.msra.mxu0 0.0
  %1511 = vmatpush.msra.mxu0 0.0
  %1512 = vmatpush.msra.mxu0 0.0
  %1513 = vmatpush.msra.mxu0 0.0
  %1514 = vmatpush.msra.mxu0 0.0
  %1515 = vmatpush.msra.mxu0 0.0
  %1516 = vmatpush.msra.mxu0 0.0
  %1517 = vmatpush.msra.mxu0 0.0
  %1518 = vmatpush.msra.mxu0 0.0
  %1519 = vmatpush.msra.mxu0 0.0
  %1520 = vmatpush.msra.mxu0 0.0
  %1521 = vmatpush.msra.mxu0 %v1067
  %1522 = vmatpush.msra.mxu0 %v1066
  %1523 = vmatpush.msra.mxu0 %v1065
  %1524 = vmatpush.msra.mxu0 %v1064
  %1525 = vmatmul.f32.gmra.mxu0 %v1507
  %v1526 = vpop.f32.mrf.mxu0
  %v1527 = vadd.f32 %v1504, %v1526
  %1528 = vdwg.mxu0
  %s1529 = scalar_lea.vmem %s10, 32
  %v1530 = vld [vmem:[%s1529] sm:$0xff]
  %v1531 = vld [vmem:[%s1529 + $0x8] sm:$0xff]
  %v1532 = vld [vmem:[%s1529 + $0x10] sm:$0xff]
  %v1533 = vld [vmem:[%s1529 + $0x18] sm:$0xff]
  %s1534 = scalar_lea.vmem %s11, 1
  %v1535 = vld [vmem:[%s1534] sm:$0x1]
  %s1536 = scalar_lea.vmem %s12, 32
  %v1537 = vld [vmem:[%s1536] sm:$0xff]
  %v1538 = vld [vmem:[%s1536 + $0x8] sm:$0xff]
  %v1539 = vld [vmem:[%s1536 + $0x10] sm:$0xff]
  %v1540 = vld [vmem:[%s1536 + $0x18] sm:$0xff]
  %s1541 = scalar_lea.vmem %s13, 1
  %v1542 = vld [vmem:[%s1541] sm:$0x1]
  %v1544 = vperm.slane %v1535, 0
  %1546 = vmatpush.msra.mxu0 0.0
  %1547 = vmatpush.msra.mxu0 0.0
  %1548 = vmatpush.msra.mxu0 0.0
  %1549 = vmatpush.msra.mxu0 0.0
  %1550 = vmatpush.msra.mxu0 0.0
  %1551 = vmatpush.msra.mxu0 0.0
  %1552 = vmatpush.msra.mxu0 0.0
  %1553 = vmatpush.msra.mxu0 0.0
  %1554 = vmatpush.msra.mxu0 0.0
  %1555 = vmatpush.msra.mxu0 0.0
  %1556 = vmatpush.msra.mxu0 0.0
  %1557 = vmatpush.msra.mxu0 0.0
  %1558 = vmatpush.msra.mxu0 %v1533
  %1559 = vmatpush.msra.mxu0 %v1532
  %1560 = vmatpush.msra.mxu0 %v1531
  %1561 = vmatpush.msra.mxu0 %v1530
  %1562 = vmatmul.f32.gmra.mxu0 %v1115
  %v1563 = vpop.f32.mrf.mxu0
  %v1564 = vadd.f32 %v1544, %v1563
  %1565 = vmatmul.f32.gmra.mxu0 %v1118
  %v1566 = vpop.f32.mrf.mxu0
  %v1567 = vadd.f32 %v1544, %v1566
  %1568 = vdwg.mxu0
  %1573 = vrot.lane.b32.xlu0 %v1530, 96
  %v1574 = vpop.permute.xlu0 %1573
  %1575 = vrot.lane.b32.xlu0 %v1531, 96
  %v1576 = vpop.permute.xlu0 %1575
  %1577 = vrot.lane.b32.xlu0 %v1532, 96
  %v1578 = vpop.permute.xlu0 %1577
  %1579 = vrot.lane.b32.xlu0 %v1533, 96
  %v1580 = vpop.permute.xlu0 %1579
  %1585 = vrot.lane.b32.xlu0 %v1544, 96
  %v1586 = vpop.permute.xlu0 %1585
  %v1589 = vsel %vm123, %v1527, 0
  %1591 = vmatpush.msra.mxu0 0.0
  %1592 = vmatpush.msra.mxu0 0.0
  %1593 = vmatpush.msra.mxu0 0.0
  %1594 = vmatpush.msra.mxu0 0.0
  %1595 = vmatpush.msra.mxu0 0.0
  %1596 = vmatpush.msra.mxu0 0.0
  %1597 = vmatpush.msra.mxu0 0.0
  %1598 = vmatpush.msra.mxu0 0.0
  %1599 = vmatpush.msra.mxu0 0.0
  %1600 = vmatpush.msra.mxu0 0.0
  %1601 = vmatpush.msra.mxu0 0.0
  %1602 = vmatpush.msra.mxu0 0.0
  %1603 = vmatpush.msra.mxu0 %v1580
  %1604 = vmatpush.msra.mxu0 %v1578
  %1605 = vmatpush.msra.mxu0 %v1576
  %1606 = vmatpush.msra.mxu0 %v1574
  %1607 = vmatmul.f32.gmra.mxu0 %v1589
  %v1608 = vpop.f32.mrf.mxu0
  %v1609 = vadd.f32 %v1586, %v1608
  %1610 = vdwg.mxu0
  %v1612 = vsel %vm256, %v1564, 0
  %v1615 = vsel %vm256, %v1567, 0
  %v1618 = vsel %vm256, %v1609, 0
  %1620 = vmatpush.xpose.msra.mxu0 0.0
  %1621 = vmatpush.xpose.msra.mxu0 0.0
  %1622 = vmatpush.xpose.msra.mxu0 0.0
  %1623 = vmatpush.xpose.msra.mxu0 0.0
  %1624 = vmatpush.xpose.msra.mxu0 0.0
  %1625 = vmatpush.xpose.msra.mxu0 0.0
  %1626 = vmatpush.xpose.msra.mxu0 0.0
  %1627 = vmatpush.xpose.msra.mxu0 0.0
  %1628 = vmatpush.xpose.msra.mxu0 0.0
  %1629 = vmatpush.xpose.msra.mxu0 0.0
  %1630 = vmatpush.xpose.msra.mxu0 0.0
  %1631 = vmatpush.xpose.msra.mxu0 0.0
  %1632 = vmatpush.xpose.msra.mxu0 0.0
  %1633 = vmatpush.xpose.msra.mxu0 0.0
  %1634 = vmatpush.xpose.msra.mxu0 0.0
  %1635 = vmatpush.xpose.msra.mxu0 %v1618
  %1636 = vmatmul.f32.gmra.mxu0 %v1612
  %v1637 = vpop.f32.mrf.mxu0
  %v1638 = vadd.f32 0.0, %v1637
  %1639 = vmatmul.f32.gmra.mxu0 %v1615
  %v1640 = vpop.f32.mrf.mxu0
  %v1641 = vadd.f32 0.0, %v1640
  %1642 = vdwg.mxu0
  %v1643 = vmul.f32 %v1638, 0.35355338
  %v1644 = vmul.f32 %v1641, 0.35355338
  %v1645 = vadd.f32 %v1643, %v1056
  %v1646 = vadd.f32 %v1644, %v1057
  %v1647 = vsel %vm256, %v1645, -inf
  %1648 = vmax.xlane.f32.xlu0 %v1647
  %v1649 = vpop.xlane.xlu0 %1648
  %v1650 = vsel %vm256, %v1646, -inf
  %1651 = vmax.xlane.f32.xlu0 %v1650
  %v1652 = vpop.xlane.xlu0 %1651
  %v1653 = vsub.f32 %v1645, %v1649
  %v1654 = vsub.f32 %v1646, %v1652
  %v1655 = vmul.f32 %v1653, 1.442695
  %v1656 = vpow.pop %v1655
  %v1657 = vmul.f32 %v1654, 1.442695
  %v1658 = vpow.pop %v1657
  %v1659 = vsel %vm256, %v1656, 0.0
  %1660 = vadd.xlane.f32.xlu0 %v1659
  %v1661 = vpop.xlane.xlu0 %1660
  %v1662 = vsel %vm256, %v1658, 0.0
  %1663 = vadd.xlane.f32.xlu0 %v1662
  %v1664 = vpop.xlane.xlu0 %1663
  %v1665 = vrcp.pop %v1661
  %v1666 = vmul.f32 %v1661, %v1665
  %v1667 = vsub.f32 1.0, %v1666
  %v1668 = vmul.f32 %v1665, %v1667
  %v1669 = vadd.f32 %v1665, %v1668
  %vm1670 = vweird.f32 %v1661
  %vm1671 = vweird.f32 %v1665
  %vm1672 = vmor %vm1670, %vm1671
  %v1673 = vsel %vm1672, %v1665, %v1669
  %v1674 = vand.u32 2147483647, %v1661
  %vm1675 = vcmp.eq.f32.partialorder %v1674, 8.507059e+37
  %v1676 = vand.u32 %v1661, 2147483648
  %v1677 = vor.u32 1.1754944e-38, %v1676
  %v1678 = vsel %vm1675, %v1677, %v1673
  %v1679 = vmul.f32 %v1656, %v1678
  %v1680 = vrcp.pop %v1664
  %v1681 = vmul.f32 %v1664, %v1680
  %v1682 = vsub.f32 1.0, %v1681
  %v1683 = vmul.f32 %v1680, %v1682
  %v1684 = vadd.f32 %v1680, %v1683
  %vm1685 = vweird.f32 %v1664
  %vm1686 = vweird.f32 %v1680
  %vm1687 = vmor %vm1685, %vm1686
  %v1688 = vsel %vm1687, %v1680, %v1684
  %v1689 = vand.u32 2147483647, %v1664
  %vm1690 = vcmp.eq.f32.partialorder %v1689, 8.507059e+37
  %v1691 = vand.u32 %v1664, 2147483648
  %v1692 = vor.u32 1.1754944e-38, %v1691
  %v1693 = vsel %vm1690, %v1692, %v1688
  %v1694 = vmul.f32 %v1658, %v1693
  %1695 = vrot.lane.b32.xlu0 %v1609, 96
  %v1696 = vpop.permute.xlu0 %1695
  %v1699 = vsel %vm256, %v1679, 0
  %v1702 = vsel %vm256, %v1694, 0
  %1704 = vmatpush.msra.mxu0 0.0
  %1705 = vmatpush.msra.mxu0 0.0
  %1706 = vmatpush.msra.mxu0 0.0
  %1707 = vmatpush.msra.mxu0 0.0
  %1708 = vmatpush.msra.mxu0 0.0
  %1709 = vmatpush.msra.mxu0 0.0
  %1710 = vmatpush.msra.mxu0 0.0
  %1711 = vmatpush.msra.mxu0 0.0
  %1712 = vmatpush.msra.mxu0 0.0
  %1713 = vmatpush.msra.mxu0 0.0
  %1714 = vmatpush.msra.mxu0 0.0
  %1715 = vmatpush.msra.mxu0 0.0
  %1716 = vmatpush.msra.mxu0 0.0
  %1717 = vmatpush.msra.mxu0 0.0
  %1718 = vmatpush.msra.mxu0 0.0
  %1719 = vmatpush.msra.mxu0 %v1696
  %1720 = vmatmul.f32.gmra.mxu0 %v1699
  %v1721 = vpop.f32.mrf.mxu0
  %v1722 = vadd.f32 0.0, %v1721
  %1723 = vmatmul.f32.gmra.mxu0 %v1702
  %v1724 = vpop.f32.mrf.mxu0
  %v1725 = vadd.f32 0.0, %v1724
  %1726 = vdwg.mxu0
  %1727 = vrot.lane.b32.xlu0 %v1564, 120
  %v1728 = vpop.permute.xlu0 %1727
  %1729 = vrot.lane.b32.xlu0 %v1567, 120
  %v1730 = vpop.permute.xlu0 %1729
  %1731 = vrot.lane.b32.xlu0 %v1609, 120
  %v1732 = vpop.permute.xlu0 %1731
  %v1733 = vsel %vm256, %v1728, 0
  %v1735 = vsel %vm256, %v1730, 0
  %v1737 = vsel %vm256, %v1732, 0
  %1739 = vmatpush.xpose.msra.mxu0 0.0
  %1740 = vmatpush.xpose.msra.mxu0 0.0
  %1741 = vmatpush.xpose.msra.mxu0 0.0
  %1742 = vmatpush.xpose.msra.mxu0 0.0
  %1743 = vmatpush.xpose.msra.mxu0 0.0
  %1744 = vmatpush.xpose.msra.mxu0 0.0
  %1745 = vmatpush.xpose.msra.mxu0 0.0
  %1746 = vmatpush.xpose.msra.mxu0 0.0
  %1747 = vmatpush.xpose.msra.mxu0 0.0
  %1748 = vmatpush.xpose.msra.mxu0 0.0
  %1749 = vmatpush.xpose.msra.mxu0 0.0
  %1750 = vmatpush.xpose.msra.mxu0 0.0
  %1751 = vmatpush.xpose.msra.mxu0 0.0
  %1752 = vmatpush.xpose.msra.mxu0 0.0
  %1753 = vmatpush.xpose.msra.mxu0 0.0
  %1754 = vmatpush.xpose.msra.mxu0 %v1737
  %1755 = vmatmul.f32.gmra.mxu0 %v1733
  %v1756 = vpop.f32.mrf.mxu0
  %v1757 = vadd.f32 0.0, %v1756
  %1758 = vmatmul.f32.gmra.mxu0 %v1735
  %v1759 = vpop.f32.mrf.mxu0
  %v1760 = vadd.f32 0.0, %v1759
  %1761 = vdwg.mxu0
  %v1762 = vmul.f32 %v1757, 0.35355338
  %v1763 = vmul.f32 %v1760, 0.35355338
  %v1764 = vadd.f32 %v1762, %v1056
  %v1765 = vadd.f32 %v1763, %v1057
  %v1766 = vsel %vm256, %v1764, -inf
  %1767 = vmax.xlane.f32.xlu0 %v1766
  %v1768 = vpop.xlane.xlu0 %1767
  %v1769 = vsel %vm256, %v1765, -inf
  %1770 = vmax.xlane.f32.xlu0 %v1769
  %v1771 = vpop.xlane.xlu0 %1770
  %v1772 = vsub.f32 %v1764, %v1768
  %v1773 = vsub.f32 %v1765, %v1771
  %v1774 = vmul.f32 %v1772, 1.442695
  %v1775 = vpow.pop %v1774
  %v1776 = vmul.f32 %v1773, 1.442695
  %v1777 = vpow.pop %v1776
  %v1778 = vsel %vm256, %v1775, 0.0
  %1779 = vadd.xlane.f32.xlu0 %v1778
  %v1780 = vpop.xlane.xlu0 %1779
  %v1781 = vsel %vm256, %v1777, 0.0
  %1782 = vadd.xlane.f32.xlu0 %v1781
  %v1783 = vpop.xlane.xlu0 %1782
  %v1784 = vrcp.pop %v1780
  %v1785 = vmul.f32 %v1780, %v1784
  %v1786 = vsub.f32 1.0, %v1785
  %v1787 = vmul.f32 %v1784, %v1786
  %v1788 = vadd.f32 %v1784, %v1787
  %vm1789 = vweird.f32 %v1780
  %vm1790 = vweird.f32 %v1784
  %vm1791 = vmor %vm1789, %vm1790
  %v1792 = vsel %vm1791, %v1784, %v1788
  %v1793 = vand.u32 2147483647, %v1780
  %vm1794 = vcmp.eq.f32.partialorder %v1793, 8.507059e+37
  %v1795 = vand.u32 %v1780, 2147483648
  %v1796 = vor.u32 1.1754944e-38, %v1795
  %v1797 = vsel %vm1794, %v1796, %v1792
  %v1798 = vmul.f32 %v1775, %v1797
  %v1799 = vrcp.pop %v1783
  %v1800 = vmul.f32 %v1783, %v1799
  %v1801 = vsub.f32 1.0, %v1800
  %v1802 = vmul.f32 %v1799, %v1801
  %v1803 = vadd.f32 %v1799, %v1802
  %vm1804 = vweird.f32 %v1783
  %vm1805 = vweird.f32 %v1799
  %vm1806 = vmor %vm1804, %vm1805
  %v1807 = vsel %vm1806, %v1799, %v1803
  %v1808 = vand.u32 2147483647, %v1783
  %vm1809 = vcmp.eq.f32.partialorder %v1808, 8.507059e+37
  %v1810 = vand.u32 %v1783, 2147483648
  %v1811 = vor.u32 1.1754944e-38, %v1810
  %v1812 = vsel %vm1809, %v1811, %v1807
  %v1813 = vmul.f32 %v1777, %v1812
  %1814 = vrot.lane.b32.xlu0 %v1609, 88
  %v1815 = vpop.permute.xlu0 %1814
  %v1818 = vsel %vm256, %v1798, 0
  %v1821 = vsel %vm256, %v1813, 0
  %1823 = vmatpush.msra.mxu0 0.0
  %1824 = vmatpush.msra.mxu0 0.0
  %1825 = vmatpush.msra.mxu0 0.0
  %1826 = vmatpush.msra.mxu0 0.0
  %1827 = vmatpush.msra.mxu0 0.0
  %1828 = vmatpush.msra.mxu0 0.0
  %1829 = vmatpush.msra.mxu0 0.0
  %1830 = vmatpush.msra.mxu0 0.0
  %1831 = vmatpush.msra.mxu0 0.0
  %1832 = vmatpush.msra.mxu0 0.0
  %1833 = vmatpush.msra.mxu0 0.0
  %1834 = vmatpush.msra.mxu0 0.0
  %1835 = vmatpush.msra.mxu0 0.0
  %1836 = vmatpush.msra.mxu0 0.0
  %1837 = vmatpush.msra.mxu0 0.0
  %1838 = vmatpush.msra.mxu0 %v1815
  %1839 = vmatmul.f32.gmra.mxu0 %v1818
  %v1840 = vpop.f32.mrf.mxu0
  %v1841 = vadd.f32 0.0, %v1840
  %1842 = vmatmul.f32.gmra.mxu0 %v1821
  %v1843 = vpop.f32.mrf.mxu0
  %v1844 = vadd.f32 0.0, %v1843
  %1845 = vdwg.mxu0
  %1846 = vrot.lane.b32.xlu0 %v1564, 112
  %v1847 = vpop.permute.xlu0 %1846
  %1848 = vrot.lane.b32.xlu0 %v1567, 112
  %v1849 = vpop.permute.xlu0 %1848
  %1850 = vrot.lane.b32.xlu0 %v1609, 112
  %v1851 = vpop.permute.xlu0 %1850
  %v1852 = vsel %vm256, %v1847, 0
  %v1854 = vsel %vm256, %v1849, 0
  %v1856 = vsel %vm256, %v1851, 0
  %1858 = vmatpush.xpose.msra.mxu0 0.0
  %1859 = vmatpush.xpose.msra.mxu0 0.0
  %1860 = vmatpush.xpose.msra.mxu0 0.0
  %1861 = vmatpush.xpose.msra.mxu0 0.0
  %1862 = vmatpush.xpose.msra.mxu0 0.0
  %1863 = vmatpush.xpose.msra.mxu0 0.0
  %1864 = vmatpush.xpose.msra.mxu0 0.0
  %1865 = vmatpush.xpose.msra.mxu0 0.0
  %1866 = vmatpush.xpose.msra.mxu0 0.0
  %1867 = vmatpush.xpose.msra.mxu0 0.0
  %1868 = vmatpush.xpose.msra.mxu0 0.0
  %1869 = vmatpush.xpose.msra.mxu0 0.0
  %1870 = vmatpush.xpose.msra.mxu0 0.0
  %1871 = vmatpush.xpose.msra.mxu0 0.0
  %1872 = vmatpush.xpose.msra.mxu0 0.0
  %1873 = vmatpush.xpose.msra.mxu0 %v1856
  %1874 = vmatmul.f32.gmra.mxu0 %v1852
  %v1875 = vpop.f32.mrf.mxu0
  %v1876 = vadd.f32 0.0, %v1875
  %1877 = vmatmul.f32.gmra.mxu0 %v1854
  %v1878 = vpop.f32.mrf.mxu0
  %v1879 = vadd.f32 0.0, %v1878
  %1880 = vdwg.mxu0
  %v1881 = vmul.f32 %v1876, 0.35355338
  %v1882 = vmul.f32 %v1879, 0.35355338
  %v1883 = vadd.f32 %v1881, %v1056
  %v1884 = vadd.f32 %v1882, %v1057
  %v1885 = vsel %vm256, %v1883, -inf
  %1886 = vmax.xlane.f32.xlu0 %v1885
  %v1887 = vpop.xlane.xlu0 %1886
  %v1888 = vsel %vm256, %v1884, -inf
  %1889 = vmax.xlane.f32.xlu0 %v1888
  %v1890 = vpop.xlane.xlu0 %1889
  %v1891 = vsub.f32 %v1883, %v1887
  %v1892 = vsub.f32 %v1884, %v1890
  %v1893 = vmul.f32 %v1891, 1.442695
  %v1894 = vpow.pop %v1893
  %v1895 = vmul.f32 %v1892, 1.442695
  %v1896 = vpow.pop %v1895
  %v1897 = vsel %vm256, %v1894, 0.0
  %1898 = vadd.xlane.f32.xlu0 %v1897
  %v1899 = vpop.xlane.xlu0 %1898
  %v1900 = vsel %vm256, %v1896, 0.0
  %1901 = vadd.xlane.f32.xlu0 %v1900
  %v1902 = vpop.xlane.xlu0 %1901
  %v1903 = vrcp.pop %v1899
  %v1904 = vmul.f32 %v1899, %v1903
  %v1905 = vsub.f32 1.0, %v1904
  %v1906 = vmul.f32 %v1903, %v1905
  %v1907 = vadd.f32 %v1903, %v1906
  %vm1908 = vweird.f32 %v1899
  %vm1909 = vweird.f32 %v1903
  %vm1910 = vmor %vm1908, %vm1909
  %v1911 = vsel %vm1910, %v1903, %v1907
  %v1912 = vand.u32 2147483647, %v1899
  %vm1913 = vcmp.eq.f32.partialorder %v1912, 8.507059e+37
  %v1914 = vand.u32 %v1899, 2147483648
  %v1915 = vor.u32 1.1754944e-38, %v1914
  %v1916 = vsel %vm1913, %v1915, %v1911
  %v1917 = vmul.f32 %v1894, %v1916
  %v1918 = vrcp.pop %v1902
  %v1919 = vmul.f32 %v1902, %v1918
  %v1920 = vsub.f32 1.0, %v1919
  %v1921 = vmul.f32 %v1918, %v1920
  %v1922 = vadd.f32 %v1918, %v1921
  %vm1923 = vweird.f32 %v1902
  %vm1924 = vweird.f32 %v1918
  %vm1925 = vmor %vm1923, %vm1924
  %v1926 = vsel %vm1925, %v1918, %v1922
  %v1927 = vand.u32 2147483647, %v1902
  %vm1928 = vcmp.eq.f32.partialorder %v1927, 8.507059e+37
  %v1929 = vand.u32 %v1902, 2147483648
  %v1930 = vor.u32 1.1754944e-38, %v1929
  %v1931 = vsel %vm1928, %v1930, %v1926
  %v1932 = vmul.f32 %v1896, %v1931
  %1933 = vrot.lane.b32.xlu0 %v1609, 80
  %v1934 = vpop.permute.xlu0 %1933
  %v1937 = vsel %vm256, %v1917, 0
  %v1940 = vsel %vm256, %v1932, 0
  %1942 = vmatpush.msra.mxu0 0.0
  %1943 = vmatpush.msra.mxu0 0.0
  %1944 = vmatpush.msra.mxu0 0.0
  %1945 = vmatpush.msra.mxu0 0.0
  %1946 = vmatpush.msra.mxu0 0.0
  %1947 = vmatpush.msra.mxu0 0.0
  %1948 = vmatpush.msra.mxu0 0.0
  %1949 = vmatpush.msra.mxu0 0.0
  %1950 = vmatpush.msra.mxu0 0.0
  %1951 = vmatpush.msra.mxu0 0.0
  %1952 = vmatpush.msra.mxu0 0.0
  %1953 = vmatpush.msra.mxu0 0.0
  %1954 = vmatpush.msra.mxu0 0.0
  %1955 = vmatpush.msra.mxu0 0.0
  %1956 = vmatpush.msra.mxu0 0.0
  %1957 = vmatpush.msra.mxu0 %v1934
  %1958 = vmatmul.f32.gmra.mxu0 %v1937
  %v1959 = vpop.f32.mrf.mxu0
  %v1960 = vadd.f32 0.0, %v1959
  %1961 = vmatmul.f32.gmra.mxu0 %v1940
  %v1962 = vpop.f32.mrf.mxu0
  %v1963 = vadd.f32 0.0, %v1962
  %1964 = vdwg.mxu0
  %1965 = vrot.lane.b32.xlu0 %v1564, 104
  %v1966 = vpop.permute.xlu0 %1965
  %1967 = vrot.lane.b32.xlu0 %v1567, 104
  %v1968 = vpop.permute.xlu0 %1967
  %1969 = vrot.lane.b32.xlu0 %v1609, 104
  %v1970 = vpop.permute.xlu0 %1969
  %v1971 = vsel %vm256, %v1966, 0
  %v1973 = vsel %vm256, %v1968, 0
  %v1975 = vsel %vm256, %v1970, 0
  %1977 = vmatpush.xpose.msra.mxu0 0.0
  %1978 = vmatpush.xpose.msra.mxu0 0.0
  %1979 = vmatpush.xpose.msra.mxu0 0.0
  %1980 = vmatpush.xpose.msra.mxu0 0.0
  %1981 = vmatpush.xpose.msra.mxu0 0.0
  %1982 = vmatpush.xpose.msra.mxu0 0.0
  %1983 = vmatpush.xpose.msra.mxu0 0.0
  %1984 = vmatpush.xpose.msra.mxu0 0.0
  %1985 = vmatpush.xpose.msra.mxu0 0.0
  %1986 = vmatpush.xpose.msra.mxu0 0.0
  %1987 = vmatpush.xpose.msra.mxu0 0.0
  %1988 = vmatpush.xpose.msra.mxu0 0.0
  %1989 = vmatpush.xpose.msra.mxu0 0.0
  %1990 = vmatpush.xpose.msra.mxu0 0.0
  %1991 = vmatpush.xpose.msra.mxu0 0.0
  %1992 = vmatpush.xpose.msra.mxu0 %v1975
  %1993 = vmatmul.f32.gmra.mxu0 %v1971
  %v1994 = vpop.f32.mrf.mxu0
  %v1995 = vadd.f32 0.0, %v1994
  %1996 = vmatmul.f32.gmra.mxu0 %v1973
  %v1997 = vpop.f32.mrf.mxu0
  %v1998 = vadd.f32 0.0, %v1997
  %1999 = vdwg.mxu0
  %v2000 = vmul.f32 %v1995, 0.35355338
  %v2001 = vmul.f32 %v1998, 0.35355338
  %v2002 = vadd.f32 %v2000, %v1056
  %v2003 = vadd.f32 %v2001, %v1057
  %v2004 = vsel %vm256, %v2002, -inf
  %2005 = vmax.xlane.f32.xlu0 %v2004
  %v2006 = vpop.xlane.xlu0 %2005
  %v2007 = vsel %vm256, %v2003, -inf
  %2008 = vmax.xlane.f32.xlu0 %v2007
  %v2009 = vpop.xlane.xlu0 %2008
  %v2010 = vsub.f32 %v2002, %v2006
  %v2011 = vsub.f32 %v2003, %v2009
  %v2012 = vmul.f32 %v2010, 1.442695
  %v2013 = vpow.pop %v2012
  %v2014 = vmul.f32 %v2011, 1.442695
  %v2015 = vpow.pop %v2014
  %v2016 = vsel %vm256, %v2013, 0.0
  %2017 = vadd.xlane.f32.xlu0 %v2016
  %v2018 = vpop.xlane.xlu0 %2017
  %v2019 = vsel %vm256, %v2015, 0.0
  %2020 = vadd.xlane.f32.xlu0 %v2019
  %v2021 = vpop.xlane.xlu0 %2020
  %v2022 = vrcp.pop %v2018
  %v2023 = vmul.f32 %v2018, %v2022
  %v2024 = vsub.f32 1.0, %v2023
  %v2025 = vmul.f32 %v2022, %v2024
  %v2026 = vadd.f32 %v2022, %v2025
  %vm2027 = vweird.f32 %v2018
  %vm2028 = vweird.f32 %v2022
  %vm2029 = vmor %vm2027, %vm2028
  %v2030 = vsel %vm2029, %v2022, %v2026
  %v2031 = vand.u32 2147483647, %v2018
  %vm2032 = vcmp.eq.f32.partialorder %v2031, 8.507059e+37
  %v2033 = vand.u32 %v2018, 2147483648
  %v2034 = vor.u32 1.1754944e-38, %v2033
  %v2035 = vsel %vm2032, %v2034, %v2030
  %v2036 = vmul.f32 %v2013, %v2035
  %v2037 = vrcp.pop %v2021
  %v2038 = vmul.f32 %v2021, %v2037
  %v2039 = vsub.f32 1.0, %v2038
  %v2040 = vmul.f32 %v2037, %v2039
  %v2041 = vadd.f32 %v2037, %v2040
  %vm2042 = vweird.f32 %v2021
  %vm2043 = vweird.f32 %v2037
  %vm2044 = vmor %vm2042, %vm2043
  %v2045 = vsel %vm2044, %v2037, %v2041
  %v2046 = vand.u32 2147483647, %v2021
  %vm2047 = vcmp.eq.f32.partialorder %v2046, 8.507059e+37
  %v2048 = vand.u32 %v2021, 2147483648
  %v2049 = vor.u32 1.1754944e-38, %v2048
  %v2050 = vsel %vm2047, %v2049, %v2045
  %v2051 = vmul.f32 %v2015, %v2050
  %2052 = vrot.lane.b32.xlu0 %v1609, 72
  %v2053 = vpop.permute.xlu0 %2052
  %v2056 = vsel %vm256, %v2036, 0
  %v2059 = vsel %vm256, %v2051, 0
  %2061 = vmatpush.msra.mxu0 0.0
  %2062 = vmatpush.msra.mxu0 0.0
  %2063 = vmatpush.msra.mxu0 0.0
  %2064 = vmatpush.msra.mxu0 0.0
  %2065 = vmatpush.msra.mxu0 0.0
  %2066 = vmatpush.msra.mxu0 0.0
  %2067 = vmatpush.msra.mxu0 0.0
  %2068 = vmatpush.msra.mxu0 0.0
  %2069 = vmatpush.msra.mxu0 0.0
  %2070 = vmatpush.msra.mxu0 0.0
  %2071 = vmatpush.msra.mxu0 0.0
  %2072 = vmatpush.msra.mxu0 0.0
  %2073 = vmatpush.msra.mxu0 0.0
  %2074 = vmatpush.msra.mxu0 0.0
  %2075 = vmatpush.msra.mxu0 0.0
  %2076 = vmatpush.msra.mxu0 %v2053
  %2077 = vmatmul.f32.gmra.mxu0 %v2056
  %v2078 = vpop.f32.mrf.mxu0
  %v2079 = vadd.f32 0.0, %v2078
  %2080 = vmatmul.f32.gmra.mxu0 %v2059
  %v2081 = vpop.f32.mrf.mxu0
  %v2082 = vadd.f32 0.0, %v2081
  %2083 = vdwg.mxu0
  %2086 = vrot.lane.b32.xlu0 %v1841, 8
  %v2087 = vpop.permute.xlu0 %2086
  %2088 = vrot.lane.b32.xlu0 %v1844, 8
  %v2089 = vpop.permute.xlu0 %2088
  %2094 = vrot.lane.b32.xlu0 %v1960, 16
  %v2095 = vpop.permute.xlu0 %2094
  %2096 = vrot.lane.b32.xlu0 %v1963, 16
  %v2097 = vpop.permute.xlu0 %2096
  %2102 = vrot.lane.b32.xlu0 %v2079, 24
  %v2103 = vpop.permute.xlu0 %2102
  %2104 = vrot.lane.b32.xlu0 %v2082, 24
  %v2105 = vpop.permute.xlu0 %2104
  %v2108 = vsel %vm256, %v1722, %v2087
  %v2109 = vsel %vm256, %v1725, %v2089
  %v2110 = vsel %vm296, %v2108, %v2095
  %v2111 = vsel %vm296, %v2109, %v2097
  %v2112 = vsel %vm786, %v2110, %v2103
  %v2113 = vsel %vm786, %v2111, %v2105
  %v2115 = vperm.slane %v1542, 0
  %v2118 = vsel %vm123, %v2112, 0
  %v2121 = vsel %vm123, %v2113, 0
  %2123 = vmatpush.msra.mxu0 0.0
  %2124 = vmatpush.msra.mxu0 0.0
  %2125 = vmatpush.msra.mxu0 0.0
  %2126 = vmatpush.msra.mxu0 0.0
  %2127 = vmatpush.msra.mxu0 0.0
  %2128 = vmatpush.msra.mxu0 0.0
  %2129 = vmatpush.msra.mxu0 0.0
  %2130 = vmatpush.msra.mxu0 0.0
  %2131 = vmatpush.msra.mxu0 0.0
  %2132 = vmatpush.msra.mxu0 0.0
  %2133 = vmatpush.msra.mxu0 0.0
  %2134 = vmatpush.msra.mxu0 0.0
  %2135 = vmatpush.msra.mxu0 %v1540
  %2136 = vmatpush.msra.mxu0 %v1539
  %2137 = vmatpush.msra.mxu0 %v1538
  %2138 = vmatpush.msra.mxu0 %v1537
  %2139 = vmatmul.f32.gmra.mxu0 %v2118
  %v2140 = vpop.f32.mrf.mxu0
  %v2141 = vadd.f32 %v2115, %v2140
  %2142 = vmatmul.f32.gmra.mxu0 %v2121
  %v2143 = vpop.f32.mrf.mxu0
  %v2144 = vadd.f32 %v2115, %v2143
  %2145 = vdwg.mxu0
  %v2146 = vadd.f32 %v1050, %v2141
  %v2147 = vadd.f32 %v1053, %v2144
  %v2148 = vld [vmem:[%s18] sm:$0x1]
  %v2149 = vld [vmem:[%s18 + $0x1] sm:$0x1]
  %v2150 = vsel %vm123, %v2146, 0.0
  %2151 = vadd.xlane.f32.xlu0 %v2150
  %v2152 = vpop.xlane.xlu0 %2151
  %v2153 = vsel %vm123, %v2147, 0.0
  %2154 = vadd.xlane.f32.xlu0 %v2153
  %v2155 = vpop.xlane.xlu0 %2154
  %v2156 = vmul.f32 %v2152, %v136
  %v2157 = vmul.f32 %v2155, %v136
  %v2158 = vsub.f32 %v2146, %v2156
  %v2159 = vsub.f32 %v2147, %v2157
  %v2160 = vmul.f32 %v2158, %v2158
  %v2161 = vmul.f32 %v2159, %v2159
  %v2162 = vsel %vm123, %v2160, 0.0
  %2163 = vadd.xlane.f32.xlu0 %v2162
  %v2164 = vpop.xlane.xlu0 %2163
  %v2165 = vsel %vm123, %v2161, 0.0
  %2166 = vadd.xlane.f32.xlu0 %v2165
  %v2167 = vpop.xlane.xlu0 %2166
  %v2168 = vmul.f32 %v2164, %v136
  %v2169 = vmul.f32 %v2167, %v136
  %v2170 = vadd.f32 %v2168, 1e-05
  %v2171 = vadd.f32 %v2169, 1e-05
  %v2172 = vrsqrt.pop %v2170
  %v2173 = vmul.f32 %v2172, %v2170
  %v2174 = vmul.f32 %v2173, %v2172
  %v2175 = vmul.f32 0.5, %v2174
  %v2176 = vsub.f32 1.5, %v2175
  %v2177 = vmul.f32 %v2172, %v2176
  %vm2178 = vweird.f32 %v2170
  %vm2179 = vweird.f32 %v2172
  %vm2180 = vmor %vm2178, %vm2179
  %v2181 = vsel %vm2180, %v2172, %v2177
  %v2182 = vrsqrt.pop %v2171
  %v2183 = vmul.f32 %v2182, %v2171
  %v2184 = vmul.f32 %v2183, %v2182
  %v2185 = vmul.f32 0.5, %v2184
  %v2186 = vsub.f32 1.5, %v2185
  %v2187 = vmul.f32 %v2182, %v2186
  %vm2188 = vweird.f32 %v2171
  %vm2189 = vweird.f32 %v2182
  %vm2190 = vmor %vm2188, %vm2189
  %v2191 = vsel %vm2190, %v2182, %v2187
  %v2192 = vmul.f32 %v2158, %v2181
  %v2193 = vmul.f32 %v2159, %v2191
  %v2194 = vperm.slane %v2148, 0
  %v2195 = vmul.f32 %v2192, %v2194
  %v2196 = vmul.f32 %v2193, %v2194
  %v2197 = vperm.slane %v2149, 0
  %v2198 = vadd.f32 %v2195, %v2197
  %v2199 = vadd.f32 %v2196, %v2197
  %v2200 = vld [vmem:[%s14] sm:$0xff]
  %v2201 = vld [vmem:[%s14 + $0x8] sm:$0xff]
  %v2202 = vld [vmem:[%s14 + $0x10] sm:$0xff]
  %v2203 = vld [vmem:[%s14 + $0x18] sm:$0xff]
  %v2204 = vld [vmem:[%s15] sm:$0x1]
  %v2206 = vperm.slane %v2204, 0
  %v2209 = vsel %vm123, %v2198, 0
  %v2212 = vsel %vm123, %v2199, 0
  %2214 = vmatpush.msra.mxu0 0.0
  %2215 = vmatpush.msra.mxu0 0.0
  %2216 = vmatpush.msra.mxu0 0.0
  %2217 = vmatpush.msra.mxu0 0.0
  %2218 = vmatpush.msra.mxu0 0.0
  %2219 = vmatpush.msra.mxu0 0.0
  %2220 = vmatpush.msra.mxu0 0.0
  %2221 = vmatpush.msra.mxu0 0.0
  %2222 = vmatpush.msra.mxu0 0.0
  %2223 = vmatpush.msra.mxu0 0.0
  %2224 = vmatpush.msra.mxu0 0.0
  %2225 = vmatpush.msra.mxu0 0.0
  %2226 = vmatpush.msra.mxu0 %v2203
  %2227 = vmatpush.msra.mxu0 %v2202
  %2228 = vmatpush.msra.mxu0 %v2201
  %2229 = vmatpush.msra.mxu0 %v2200
  %2230 = vmatmul.f32.gmra.mxu0 %v2209
  %v2231 = vpop.f32.mrf.mxu0
  %v2232 = vadd.f32 %v2206, %v2231
  %2233 = vmatmul.f32.gmra.mxu0 %v2212
  %v2234 = vpop.f32.mrf.mxu0
  %v2235 = vadd.f32 %v2206, %v2234
  %2236 = vdwg.mxu0
  %v2237 = vmax.f32 %v2232, 0.0
  %v2238 = vmax.f32 %v2235, 0.0
  %v2239 = vld [vmem:[%s16] sm:$0xff]
  %v2240 = vld [vmem:[%s16 + $0x8] sm:$0xff]
  %v2241 = vld [vmem:[%s16 + $0x10] sm:$0xff]
  %v2242 = vld [vmem:[%s16 + $0x18] sm:$0xff]
  %v2243 = vld [vmem:[%s16 + $0x20] sm:$0xff]
  %v2244 = vld [vmem:[%s16 + $0x28] sm:$0xff]
  %v2245 = vld [vmem:[%s16 + $0x30] sm:$0xff]
  %v2246 = vld [vmem:[%s16 + $0x38] sm:$0xff]
  %v2247 = vld [vmem:[%s17] sm:$0x1]
  %v2249 = vperm.slane %v2247, 0
  %v2252 = vsel %vm927, %v2237, 0
  %v2255 = vsel %vm927, %v2238, 0
  %2257 = vmatpush.msra.mxu0 0.0
  %2258 = vmatpush.msra.mxu0 0.0
  %2259 = vmatpush.msra.mxu0 0.0
  %2260 = vmatpush.msra.mxu0 0.0
  %2261 = vmatpush.msra.mxu0 0.0
  %2262 = vmatpush.msra.mxu0 0.0
  %2263 = vmatpush.msra.mxu0 0.0
  %2264 = vmatpush.msra.mxu0 0.0
  %2265 = vmatpush.msra.mxu0 %v2246
  %2266 = vmatpush.msra.mxu0 %v2245
  %2267 = vmatpush.msra.mxu0 %v2244
  %2268 = vmatpush.msra.mxu0 %v2243
  %2269 = vmatpush.msra.mxu0 %v2242
  %2270 = vmatpush.msra.mxu0 %v2241
  %2271 = vmatpush.msra.mxu0 %v2240
  %2272 = vmatpush.msra.mxu0 %v2239
  %2273 = vmatmul.f32.gmra.mxu0 %v2252
  %v2274 = vpop.f32.mrf.mxu0
  %v2275 = vadd.f32 %v2249, %v2274
  %2276 = vmatmul.f32.gmra.mxu0 %v2255
  %v2277 = vpop.f32.mrf.mxu0
  %v2278 = vadd.f32 %v2249, %v2277
  %2279 = vdwg.mxu0
  %v2280 = vadd.f32 %v2198, %v2275
  %v2281 = vadd.f32 %v2199, %v2278
  %v2282 = vld [vmem:[%s18 + $0x2] sm:$0x1]
  %v2283 = vld [vmem:[%s18 + $0x3] sm:$0x1]
  %v2284 = vsel %vm123, %v2280, 0.0
  %2285 = vadd.xlane.f32.xlu0 %v2284
  %v2286 = vpop.xlane.xlu0 %2285
  %v2287 = vsel %vm123, %v2281, 0.0
  %2288 = vadd.xlane.f32.xlu0 %v2287
  %v2289 = vpop.xlane.xlu0 %2288
  %v2290 = vmul.f32 %v2286, %v136
  %v2291 = vmul.f32 %v2289, %v136
  %v2292 = vsub.f32 %v2280, %v2290
  %v2293 = vsub.f32 %v2281, %v2291
  %v2294 = vmul.f32 %v2292, %v2292
  %v2295 = vmul.f32 %v2293, %v2293
  %v2296 = vsel %vm123, %v2294, 0.0
  %2297 = vadd.xlane.f32.xlu0 %v2296
  %v2298 = vpop.xlane.xlu0 %2297
  %v2299 = vsel %vm123, %v2295, 0.0
  %2300 = vadd.xlane.f32.xlu0 %v2299
  %v2301 = vpop.xlane.xlu0 %2300
  %v2302 = vmul.f32 %v2298, %v136
  %v2303 = vmul.f32 %v2301, %v136
  %v2304 = vadd.f32 %v2302, 1e-05
  %v2305 = vadd.f32 %v2303, 1e-05
  %v2306 = vrsqrt.pop %v2304
  %v2307 = vmul.f32 %v2306, %v2304
  %v2308 = vmul.f32 %v2307, %v2306
  %v2309 = vmul.f32 0.5, %v2308
  %v2310 = vsub.f32 1.5, %v2309
  %v2311 = vmul.f32 %v2306, %v2310
  %vm2312 = vweird.f32 %v2304
  %vm2313 = vweird.f32 %v2306
  %vm2314 = vmor %vm2312, %vm2313
  %v2315 = vsel %vm2314, %v2306, %v2311
  %v2316 = vrsqrt.pop %v2305
  %v2317 = vmul.f32 %v2316, %v2305
  %v2318 = vmul.f32 %v2317, %v2316
  %v2319 = vmul.f32 0.5, %v2318
  %v2320 = vsub.f32 1.5, %v2319
  %v2321 = vmul.f32 %v2316, %v2320
  %vm2322 = vweird.f32 %v2305
  %vm2323 = vweird.f32 %v2316
  %vm2324 = vmor %vm2322, %vm2323
  %v2325 = vsel %vm2324, %v2316, %v2321
  %v2326 = vmul.f32 %v2292, %v2315
  %v2327 = vmul.f32 %v2293, %v2325
  %v2328 = vperm.slane %v2282, 0
  %v2329 = vmul.f32 %v2326, %v2328
  %v2330 = vmul.f32 %v2327, %v2328
  %v2331 = vperm.slane %v2283, 0
  %v2332 = vadd.f32 %v2329, %v2331
  %v2333 = vadd.f32 %v2330, %v2331
  %s2334 = scalar_lea.vmem %s9, 8
  %v2335 = vld [vmem:[%s2334] sm:$0xff]
  %s2336 = scalar_lea.vmem %s10, 64
  %v2337 = vld [vmem:[%s2336] sm:$0xff]
  %v2338 = vld [vmem:[%s2336 + $0x8] sm:$0xff]
  %v2339 = vld [vmem:[%s2336 + $0x10] sm:$0xff]
  %v2340 = vld [vmem:[%s2336 + $0x18] sm:$0xff]
  %s2341 = scalar_lea.vmem %s11, 2
  %v2342 = vld [vmem:[%s2341] sm:$0x1]
  %s2343 = scalar_lea.vmem %s12, 64
  %v2344 = vld [vmem:[%s2343] sm:$0xff]
  %v2345 = vld [vmem:[%s2343 + $0x8] sm:$0xff]
  %v2346 = vld [vmem:[%s2343 + $0x10] sm:$0xff]
  %v2347 = vld [vmem:[%s2343 + $0x18] sm:$0xff]
  %s2348 = scalar_lea.vmem %s13, 2
  %v2349 = vld [vmem:[%s2348] sm:$0x1]
  %v2351 = vperm.slane %v2342, 0
  %v2354 = vsel %vm123, %v2335, 0
  %2356 = vmatpush.msra.mxu0 0.0
  %2357 = vmatpush.msra.mxu0 0.0
  %2358 = vmatpush.msra.mxu0 0.0
  %2359 = vmatpush.msra.mxu0 0.0
  %2360 = vmatpush.msra.mxu0 0.0
  %2361 = vmatpush.msra.mxu0 0.0
  %2362 = vmatpush.msra.mxu0 0.0
  %2363 = vmatpush.msra.mxu0 0.0
  %2364 = vmatpush.msra.mxu0 0.0
  %2365 = vmatpush.msra.mxu0 0.0
  %2366 = vmatpush.msra.mxu0 0.0
  %2367 = vmatpush.msra.mxu0 0.0
  %2368 = vmatpush.msra.mxu0 %v2340
  %2369 = vmatpush.msra.mxu0 %v2339
  %2370 = vmatpush.msra.mxu0 %v2338
  %2371 = vmatpush.msra.mxu0 %v2337
  %2372 = vmatmul.f32.gmra.mxu0 %v2354
  %v2373 = vpop.f32.mrf.mxu0
  %v2374 = vadd.f32 %v2351, %v2373
  %2375 = vdwg.mxu0
  %2380 = vrot.lane.b32.xlu0 %v2337, 96
  %v2381 = vpop.permute.xlu0 %2380
  %2382 = vrot.lane.b32.xlu0 %v2338, 96
  %v2383 = vpop.permute.xlu0 %2382
  %2384 = vrot.lane.b32.xlu0 %v2339, 96
  %v2385 = vpop.permute.xlu0 %2384
  %2386 = vrot.lane.b32.xlu0 %v2340, 96
  %v2387 = vpop.permute.xlu0 %2386
  %2392 = vrot.lane.b32.xlu0 %v2351, 96
  %v2393 = vpop.permute.xlu0 %2392
  %v2396 = vsel %vm123, %v2332, 0
  %v2399 = vsel %vm123, %v2333, 0
  %2401 = vmatpush.msra.mxu0 0.0
  %2402 = vmatpush.msra.mxu0 0.0
  %2403 = vmatpush.msra.mxu0 0.0
  %2404 = vmatpush.msra.mxu0 0.0
  %2405 = vmatpush.msra.mxu0 0.0
  %2406 = vmatpush.msra.mxu0 0.0
  %2407 = vmatpush.msra.mxu0 0.0
  %2408 = vmatpush.msra.mxu0 0.0
  %2409 = vmatpush.msra.mxu0 0.0
  %2410 = vmatpush.msra.mxu0 0.0
  %2411 = vmatpush.msra.mxu0 0.0
  %2412 = vmatpush.msra.mxu0 0.0
  %2413 = vmatpush.msra.mxu0 %v2387
  %2414 = vmatpush.msra.mxu0 %v2385
  %2415 = vmatpush.msra.mxu0 %v2383
  %2416 = vmatpush.msra.mxu0 %v2381
  %2417 = vmatmul.f32.gmra.mxu0 %v2396
  %v2418 = vpop.f32.mrf.mxu0
  %v2419 = vadd.f32 %v2393, %v2418
  %2420 = vmatmul.f32.gmra.mxu0 %v2399
  %v2421 = vpop.f32.mrf.mxu0
  %v2422 = vadd.f32 %v2393, %v2421
  %2423 = vdwg.mxu0
  %v2425 = vsel %vm256, %v2374, 0
  %v2428 = vsel %vm256, %v2419, 0
  %v2431 = vsel %vm256, %v2422, 0
  %2433 = vmatpush.xpose.msra.mxu0 0.0
  %2434 = vmatpush.xpose.msra.mxu0 0.0
  %2435 = vmatpush.xpose.msra.mxu0 0.0
  %2436 = vmatpush.xpose.msra.mxu0 0.0
  %2437 = vmatpush.xpose.msra.mxu0 0.0
  %2438 = vmatpush.xpose.msra.mxu0 0.0
  %2439 = vmatpush.xpose.msra.mxu0 0.0
  %2440 = vmatpush.xpose.msra.mxu0 0.0
  %2441 = vmatpush.xpose.msra.mxu0 0.0
  %2442 = vmatpush.xpose.msra.mxu0 0.0
  %2443 = vmatpush.xpose.msra.mxu0 0.0
  %2444 = vmatpush.xpose.msra.mxu0 0.0
  %2445 = vmatpush.xpose.msra.mxu0 0.0
  %2446 = vmatpush.xpose.msra.mxu0 0.0
  %2447 = vmatpush.xpose.msra.mxu0 %v2431
  %2448 = vmatpush.xpose.msra.mxu0 %v2428
  %2449 = vmatmul.f32.gmra.mxu0 %v2425
  %v2450 = vpop.f32.mrf.mxu0
  %v2451 = vadd.f32 0.0, %v2450
  %2452 = vdwg.mxu0
  %v2453 = vmul.f32 %v2451, 0.35355338
  %v2454 = vadd.f32 %v2453, %v1055
  %v2455 = vsel %vm296, %v2454, -inf
  %2456 = vmax.xlane.f32.xlu0 %v2455
  %v2457 = vpop.xlane.xlu0 %2456
  %v2458 = vsub.f32 %v2454, %v2457
  %v2459 = vmul.f32 %v2458, 1.442695
  %v2460 = vpow.pop %v2459
  %v2461 = vsel %vm296, %v2460, 0.0
  %2462 = vadd.xlane.f32.xlu0 %v2461
  %v2463 = vpop.xlane.xlu0 %2462
  %v2464 = vrcp.pop %v2463
  %v2465 = vmul.f32 %v2463, %v2464
  %v2466 = vsub.f32 1.0, %v2465
  %v2467 = vmul.f32 %v2464, %v2466
  %v2468 = vadd.f32 %v2464, %v2467
  %vm2469 = vweird.f32 %v2463
  %vm2470 = vweird.f32 %v2464
  %vm2471 = vmor %vm2469, %vm2470
  %v2472 = vsel %vm2471, %v2464, %v2468
  %v2473 = vand.u32 2147483647, %v2463
  %vm2474 = vcmp.eq.f32.partialorder %v2473, 8.507059e+37
  %v2475 = vand.u32 %v2463, 2147483648
  %v2476 = vor.u32 1.1754944e-38, %v2475
  %v2477 = vsel %vm2474, %v2476, %v2472
  %v2478 = vmul.f32 %v2460, %v2477
  %2479 = vrot.lane.b32.xlu0 %v2419, 96
  %v2480 = vpop.permute.xlu0 %2479
  %2481 = vrot.lane.b32.xlu0 %v2422, 96
  %v2482 = vpop.permute.xlu0 %2481
  %v2486 = vsel %vm296, %v2478, 0
  %2488 = vmatpush.msra.mxu0 0.0
  %2489 = vmatpush.msra.mxu0 0.0
  %2490 = vmatpush.msra.mxu0 0.0
  %2491 = vmatpush.msra.mxu0 0.0
  %2492 = vmatpush.msra.mxu0 0.0
  %2493 = vmatpush.msra.mxu0 0.0
  %2494 = vmatpush.msra.mxu0 0.0
  %2495 = vmatpush.msra.mxu0 0.0
  %2496 = vmatpush.msra.mxu0 0.0
  %2497 = vmatpush.msra.mxu0 0.0
  %2498 = vmatpush.msra.mxu0 0.0
  %2499 = vmatpush.msra.mxu0 0.0
  %2500 = vmatpush.msra.mxu0 0.0
  %2501 = vmatpush.msra.mxu0 0.0
  %2502 = vmatpush.msra.mxu0 %v2482
  %2503 = vmatpush.msra.mxu0 %v2480
  %2504 = vmatmul.f32.gmra.mxu0 %v2486
  %v2505 = vpop.f32.mrf.mxu0
  %v2506 = vadd.f32 0.0, %v2505
  %2507 = vdwg.mxu0
  %2508 = vrot.lane.b32.xlu0 %v2374, 120
  %v2509 = vpop.permute.xlu0 %2508
  %2510 = vrot.lane.b32.xlu0 %v2419, 120
  %v2511 = vpop.permute.xlu0 %2510
  %2512 = vrot.lane.b32.xlu0 %v2422, 120
  %v2513 = vpop.permute.xlu0 %2512
  %v2514 = vsel %vm256, %v2509, 0
  %v2516 = vsel %vm256, %v2511, 0
  %v2518 = vsel %vm256, %v2513, 0
  %2520 = vmatpush.xpose.msra.mxu0 0.0
  %2521 = vmatpush.xpose.msra.mxu0 0.0
  %2522 = vmatpush.xpose.msra.mxu0 0.0
  %2523 = vmatpush.xpose.msra.mxu0 0.0
  %2524 = vmatpush.xpose.msra.mxu0 0.0
  %2525 = vmatpush.xpose.msra.mxu0 0.0
  %2526 = vmatpush.xpose.msra.mxu0 0.0
  %2527 = vmatpush.xpose.msra.mxu0 0.0
  %2528 = vmatpush.xpose.msra.mxu0 0.0
  %2529 = vmatpush.xpose.msra.mxu0 0.0
  %2530 = vmatpush.xpose.msra.mxu0 0.0
  %2531 = vmatpush.xpose.msra.mxu0 0.0
  %2532 = vmatpush.xpose.msra.mxu0 0.0
  %2533 = vmatpush.xpose.msra.mxu0 0.0
  %2534 = vmatpush.xpose.msra.mxu0 %v2518
  %2535 = vmatpush.xpose.msra.mxu0 %v2516
  %2536 = vmatmul.f32.gmra.mxu0 %v2514
  %v2537 = vpop.f32.mrf.mxu0
  %v2538 = vadd.f32 0.0, %v2537
  %2539 = vdwg.mxu0
  %v2540 = vmul.f32 %v2538, 0.35355338
  %v2541 = vadd.f32 %v2540, %v1055
  %v2542 = vsel %vm296, %v2541, -inf
  %2543 = vmax.xlane.f32.xlu0 %v2542
  %v2544 = vpop.xlane.xlu0 %2543
  %v2545 = vsub.f32 %v2541, %v2544
  %v2546 = vmul.f32 %v2545, 1.442695
  %v2547 = vpow.pop %v2546
  %v2548 = vsel %vm296, %v2547, 0.0
  %2549 = vadd.xlane.f32.xlu0 %v2548
  %v2550 = vpop.xlane.xlu0 %2549
  %v2551 = vrcp.pop %v2550
  %v2552 = vmul.f32 %v2550, %v2551
  %v2553 = vsub.f32 1.0, %v2552
  %v2554 = vmul.f32 %v2551, %v2553
  %v2555 = vadd.f32 %v2551, %v2554
  %vm2556 = vweird.f32 %v2550
  %vm2557 = vweird.f32 %v2551
  %vm2558 = vmor %vm2556, %vm2557
  %v2559 = vsel %vm2558, %v2551, %v2555
  %v2560 = vand.u32 2147483647, %v2550
  %vm2561 = vcmp.eq.f32.partialorder %v2560, 8.507059e+37
  %v2562 = vand.u32 %v2550, 2147483648
  %v2563 = vor.u32 1.1754944e-38, %v2562
  %v2564 = vsel %vm2561, %v2563, %v2559
  %v2565 = vmul.f32 %v2547, %v2564
  %2566 = vrot.lane.b32.xlu0 %v2419, 88
  %v2567 = vpop.permute.xlu0 %2566
  %2568 = vrot.lane.b32.xlu0 %v2422, 88
  %v2569 = vpop.permute.xlu0 %2568
  %v2573 = vsel %vm296, %v2565, 0
  %2575 = vmatpush.msra.mxu0 0.0
  %2576 = vmatpush.msra.mxu0 0.0
  %2577 = vmatpush.msra.mxu0 0.0
  %2578 = vmatpush.msra.mxu0 0.0
  %2579 = vmatpush.msra.mxu0 0.0
  %2580 = vmatpush.msra.mxu0 0.0
  %2581 = vmatpush.msra.mxu0 0.0
  %2582 = vmatpush.msra.mxu0 0.0
  %2583 = vmatpush.msra.mxu0 0.0
  %2584 = vmatpush.msra.mxu0 0.0
  %2585 = vmatpush.msra.mxu0 0.0
  %2586 = vmatpush.msra.mxu0 0.0
  %2587 = vmatpush.msra.mxu0 0.0
  %2588 = vmatpush.msra.mxu0 0.0
  %2589 = vmatpush.msra.mxu0 %v2569
  %2590 = vmatpush.msra.mxu0 %v2567
  %2591 = vmatmul.f32.gmra.mxu0 %v2573
  %v2592 = vpop.f32.mrf.mxu0
  %v2593 = vadd.f32 0.0, %v2592
  %2594 = vdwg.mxu0
  %2595 = vrot.lane.b32.xlu0 %v2374, 112
  %v2596 = vpop.permute.xlu0 %2595
  %2597 = vrot.lane.b32.xlu0 %v2419, 112
  %v2598 = vpop.permute.xlu0 %2597
  %2599 = vrot.lane.b32.xlu0 %v2422, 112
  %v2600 = vpop.permute.xlu0 %2599
  %v2601 = vsel %vm256, %v2596, 0
  %v2603 = vsel %vm256, %v2598, 0
  %v2605 = vsel %vm256, %v2600, 0
  %2607 = vmatpush.xpose.msra.mxu0 0.0
  %2608 = vmatpush.xpose.msra.mxu0 0.0
  %2609 = vmatpush.xpose.msra.mxu0 0.0
  %2610 = vmatpush.xpose.msra.mxu0 0.0
  %2611 = vmatpush.xpose.msra.mxu0 0.0
  %2612 = vmatpush.xpose.msra.mxu0 0.0
  %2613 = vmatpush.xpose.msra.mxu0 0.0
  %2614 = vmatpush.xpose.msra.mxu0 0.0
  %2615 = vmatpush.xpose.msra.mxu0 0.0
  %2616 = vmatpush.xpose.msra.mxu0 0.0
  %2617 = vmatpush.xpose.msra.mxu0 0.0
  %2618 = vmatpush.xpose.msra.mxu0 0.0
  %2619 = vmatpush.xpose.msra.mxu0 0.0
  %2620 = vmatpush.xpose.msra.mxu0 0.0
  %2621 = vmatpush.xpose.msra.mxu0 %v2605
  %2622 = vmatpush.xpose.msra.mxu0 %v2603
  %2623 = vmatmul.f32.gmra.mxu0 %v2601
  %v2624 = vpop.f32.mrf.mxu0
  %v2625 = vadd.f32 0.0, %v2624
  %2626 = vdwg.mxu0
  %v2627 = vmul.f32 %v2625, 0.35355338
  %v2628 = vadd.f32 %v2627, %v1055
  %v2629 = vsel %vm296, %v2628, -inf
  %2630 = vmax.xlane.f32.xlu0 %v2629
  %v2631 = vpop.xlane.xlu0 %2630
  %v2632 = vsub.f32 %v2628, %v2631
  %v2633 = vmul.f32 %v2632, 1.442695
  %v2634 = vpow.pop %v2633
  %v2635 = vsel %vm296, %v2634, 0.0
  %2636 = vadd.xlane.f32.xlu0 %v2635
  %v2637 = vpop.xlane.xlu0 %2636
  %v2638 = vrcp.pop %v2637
  %v2639 = vmul.f32 %v2637, %v2638
  %v2640 = vsub.f32 1.0, %v2639
  %v2641 = vmul.f32 %v2638, %v2640
  %v2642 = vadd.f32 %v2638, %v2641
  %vm2643 = vweird.f32 %v2637
  %vm2644 = vweird.f32 %v2638
  %vm2645 = vmor %vm2643, %vm2644
  %v2646 = vsel %vm2645, %v2638, %v2642
  %v2647 = vand.u32 2147483647, %v2637
  %vm2648 = vcmp.eq.f32.partialorder %v2647, 8.507059e+37
  %v2649 = vand.u32 %v2637, 2147483648
  %v2650 = vor.u32 1.1754944e-38, %v2649
  %v2651 = vsel %vm2648, %v2650, %v2646
  %v2652 = vmul.f32 %v2634, %v2651
  %2653 = vrot.lane.b32.xlu0 %v2419, 80
  %v2654 = vpop.permute.xlu0 %2653
  %2655 = vrot.lane.b32.xlu0 %v2422, 80
  %v2656 = vpop.permute.xlu0 %2655
  %v2660 = vsel %vm296, %v2652, 0
  %2662 = vmatpush.msra.mxu0 0.0
  %2663 = vmatpush.msra.mxu0 0.0
  %2664 = vmatpush.msra.mxu0 0.0
  %2665 = vmatpush.msra.mxu0 0.0
  %2666 = vmatpush.msra.mxu0 0.0
  %2667 = vmatpush.msra.mxu0 0.0
  %2668 = vmatpush.msra.mxu0 0.0
  %2669 = vmatpush.msra.mxu0 0.0
  %2670 = vmatpush.msra.mxu0 0.0
  %2671 = vmatpush.msra.mxu0 0.0
  %2672 = vmatpush.msra.mxu0 0.0
  %2673 = vmatpush.msra.mxu0 0.0
  %2674 = vmatpush.msra.mxu0 0.0
  %2675 = vmatpush.msra.mxu0 0.0
  %2676 = vmatpush.msra.mxu0 %v2656
  %2677 = vmatpush.msra.mxu0 %v2654
  %2678 = vmatmul.f32.gmra.mxu0 %v2660
  %v2679 = vpop.f32.mrf.mxu0
  %v2680 = vadd.f32 0.0, %v2679
  %2681 = vdwg.mxu0
  %2682 = vrot.lane.b32.xlu0 %v2374, 104
  %v2683 = vpop.permute.xlu0 %2682
  %2684 = vrot.lane.b32.xlu0 %v2419, 104
  %v2685 = vpop.permute.xlu0 %2684
  %2686 = vrot.lane.b32.xlu0 %v2422, 104
  %v2687 = vpop.permute.xlu0 %2686
  %v2688 = vsel %vm256, %v2683, 0
  %v2690 = vsel %vm256, %v2685, 0
  %v2692 = vsel %vm256, %v2687, 0
  %2694 = vmatpush.xpose.msra.mxu0 0.0
  %2695 = vmatpush.xpose.msra.mxu0 0.0
  %2696 = vmatpush.xpose.msra.mxu0 0.0
  %2697 = vmatpush.xpose.msra.mxu0 0.0
  %2698 = vmatpush.xpose.msra.mxu0 0.0
  %2699 = vmatpush.xpose.msra.mxu0 0.0
  %2700 = vmatpush.xpose.msra.mxu0 0.0
  %2701 = vmatpush.xpose.msra.mxu0 0.0
  %2702 = vmatpush.xpose.msra.mxu0 0.0
  %2703 = vmatpush.xpose.msra.mxu0 0.0
  %2704 = vmatpush.xpose.msra.mxu0 0.0
  %2705 = vmatpush.xpose.msra.mxu0 0.0
  %2706 = vmatpush.xpose.msra.mxu0 0.0
  %2707 = vmatpush.xpose.msra.mxu0 0.0
  %2708 = vmatpush.xpose.msra.mxu0 %v2692
  %2709 = vmatpush.xpose.msra.mxu0 %v2690
  %2710 = vmatmul.f32.gmra.mxu0 %v2688
  %v2711 = vpop.f32.mrf.mxu0
  %v2712 = vadd.f32 0.0, %v2711
  %2713 = vdwg.mxu0
  %v2714 = vmul.f32 %v2712, 0.35355338
  %v2715 = vadd.f32 %v2714, %v1055
  %v2716 = vsel %vm296, %v2715, -inf
  %2717 = vmax.xlane.f32.xlu0 %v2716
  %v2718 = vpop.xlane.xlu0 %2717
  %v2719 = vsub.f32 %v2715, %v2718
  %v2720 = vmul.f32 %v2719, 1.442695
  %v2721 = vpow.pop %v2720
  %v2722 = vsel %vm296, %v2721, 0.0
  %2723 = vadd.xlane.f32.xlu0 %v2722
  %v2724 = vpop.xlane.xlu0 %2723
  %v2725 = vrcp.pop %v2724
  %v2726 = vmul.f32 %v2724, %v2725
  %v2727 = vsub.f32 1.0, %v2726
  %v2728 = vmul.f32 %v2725, %v2727
  %v2729 = vadd.f32 %v2725, %v2728
  %vm2730 = vweird.f32 %v2724
  %vm2731 = vweird.f32 %v2725
  %vm2732 = vmor %vm2730, %vm2731
  %v2733 = vsel %vm2732, %v2725, %v2729
  %v2734 = vand.u32 2147483647, %v2724
  %vm2735 = vcmp.eq.f32.partialorder %v2734, 8.507059e+37
  %v2736 = vand.u32 %v2724, 2147483648
  %v2737 = vor.u32 1.1754944e-38, %v2736
  %v2738 = vsel %vm2735, %v2737, %v2733
  %v2739 = vmul.f32 %v2721, %v2738
  %2740 = vrot.lane.b32.xlu0 %v2419, 72
  %v2741 = vpop.permute.xlu0 %2740
  %2742 = vrot.lane.b32.xlu0 %v2422, 72
  %v2743 = vpop.permute.xlu0 %2742
  %v2747 = vsel %vm296, %v2739, 0
  %2749 = vmatpush.msra.mxu0 0.0
  %2750 = vmatpush.msra.mxu0 0.0
  %2751 = vmatpush.msra.mxu0 0.0
  %2752 = vmatpush.msra.mxu0 0.0
  %2753 = vmatpush.msra.mxu0 0.0
  %2754 = vmatpush.msra.mxu0 0.0
  %2755 = vmatpush.msra.mxu0 0.0
  %2756 = vmatpush.msra.mxu0 0.0
  %2757 = vmatpush.msra.mxu0 0.0
  %2758 = vmatpush.msra.mxu0 0.0
  %2759 = vmatpush.msra.mxu0 0.0
  %2760 = vmatpush.msra.mxu0 0.0
  %2761 = vmatpush.msra.mxu0 0.0
  %2762 = vmatpush.msra.mxu0 0.0
  %2763 = vmatpush.msra.mxu0 %v2743
  %2764 = vmatpush.msra.mxu0 %v2741
  %2765 = vmatmul.f32.gmra.mxu0 %v2747
  %v2766 = vpop.f32.mrf.mxu0
  %v2767 = vadd.f32 0.0, %v2766
  %2768 = vdwg.mxu0
  %2770 = vrot.lane.b32.xlu0 %v2593, 8
  %v2771 = vpop.permute.xlu0 %2770
  %2774 = vrot.lane.b32.xlu0 %v2680, 16
  %v2775 = vpop.permute.xlu0 %2774
  %2778 = vrot.lane.b32.xlu0 %v2767, 24
  %v2779 = vpop.permute.xlu0 %2778
  %v2781 = vsel %vm256, %v2506, %v2771
  %v2782 = vsel %vm296, %v2781, %v2775
  %v2783 = vsel %vm786, %v2782, %v2779
  %v2785 = vperm.slane %v2349, 0
  %v2788 = vsel %vm123, %v2783, 0
  %2790 = vmatpush.msra.mxu0 0.0
  %2791 = vmatpush.msra.mxu0 0.0
  %2792 = vmatpush.msra.mxu0 0.0
  %2793 = vmatpush.msra.mxu0 0.0
  %2794 = vmatpush.msra.mxu0 0.0
  %2795 = vmatpush.msra.mxu0 0.0
  %2796 = vmatpush.msra.mxu0 0.0
  %2797 = vmatpush.msra.mxu0 0.0
  %2798 = vmatpush.msra.mxu0 0.0
  %2799 = vmatpush.msra.mxu0 0.0
  %2800 = vmatpush.msra.mxu0 0.0
  %2801 = vmatpush.msra.mxu0 0.0
  %2802 = vmatpush.msra.mxu0 %v2347
  %2803 = vmatpush.msra.mxu0 %v2346
  %2804 = vmatpush.msra.mxu0 %v2345
  %2805 = vmatpush.msra.mxu0 %v2344
  %2806 = vmatmul.f32.gmra.mxu0 %v2788
  %v2807 = vpop.f32.mrf.mxu0
  %v2808 = vadd.f32 %v2785, %v2807
  %2809 = vdwg.mxu0
  %s2810 = scalar_lea.vmem %s10, 96
  %v2811 = vld [vmem:[%s2810] sm:$0xff]
  %v2812 = vld [vmem:[%s2810 + $0x8] sm:$0xff]
  %v2813 = vld [vmem:[%s2810 + $0x10] sm:$0xff]
  %v2814 = vld [vmem:[%s2810 + $0x18] sm:$0xff]
  %s2815 = scalar_lea.vmem %s11, 3
  %v2816 = vld [vmem:[%s2815] sm:$0x1]
  %s2817 = scalar_lea.vmem %s12, 96
  %v2818 = vld [vmem:[%s2817] sm:$0xff]
  %v2819 = vld [vmem:[%s2817 + $0x8] sm:$0xff]
  %v2820 = vld [vmem:[%s2817 + $0x10] sm:$0xff]
  %v2821 = vld [vmem:[%s2817 + $0x18] sm:$0xff]
  %s2822 = scalar_lea.vmem %s13, 3
  %v2823 = vld [vmem:[%s2822] sm:$0x1]
  %v2825 = vperm.slane %v2816, 0
  %2827 = vmatpush.msra.mxu0 0.0
  %2828 = vmatpush.msra.mxu0 0.0
  %2829 = vmatpush.msra.mxu0 0.0
  %2830 = vmatpush.msra.mxu0 0.0
  %2831 = vmatpush.msra.mxu0 0.0
  %2832 = vmatpush.msra.mxu0 0.0
  %2833 = vmatpush.msra.mxu0 0.0
  %2834 = vmatpush.msra.mxu0 0.0
  %2835 = vmatpush.msra.mxu0 0.0
  %2836 = vmatpush.msra.mxu0 0.0
  %2837 = vmatpush.msra.mxu0 0.0
  %2838 = vmatpush.msra.mxu0 0.0
  %2839 = vmatpush.msra.mxu0 %v2814
  %2840 = vmatpush.msra.mxu0 %v2813
  %2841 = vmatpush.msra.mxu0 %v2812
  %2842 = vmatpush.msra.mxu0 %v2811
  %2843 = vmatmul.f32.gmra.mxu0 %v2396
  %v2844 = vpop.f32.mrf.mxu0
  %v2845 = vadd.f32 %v2825, %v2844
  %2846 = vmatmul.f32.gmra.mxu0 %v2399
  %v2847 = vpop.f32.mrf.mxu0
  %v2848 = vadd.f32 %v2825, %v2847
  %2849 = vdwg.mxu0
  %2854 = vrot.lane.b32.xlu0 %v2811, 96
  %v2855 = vpop.permute.xlu0 %2854
  %2856 = vrot.lane.b32.xlu0 %v2812, 96
  %v2857 = vpop.permute.xlu0 %2856
  %2858 = vrot.lane.b32.xlu0 %v2813, 96
  %v2859 = vpop.permute.xlu0 %2858
  %2860 = vrot.lane.b32.xlu0 %v2814, 96
  %v2861 = vpop.permute.xlu0 %2860
  %2866 = vrot.lane.b32.xlu0 %v2825, 96
  %v2867 = vpop.permute.xlu0 %2866
  %v2870 = vsel %vm123, %v2808, 0
  %2872 = vmatpush.msra.mxu0 0.0
  %2873 = vmatpush.msra.mxu0 0.0
  %2874 = vmatpush.msra.mxu0 0.0
  %2875 = vmatpush.msra.mxu0 0.0
  %2876 = vmatpush.msra.mxu0 0.0
  %2877 = vmatpush.msra.mxu0 0.0
  %2878 = vmatpush.msra.mxu0 0.0
  %2879 = vmatpush.msra.mxu0 0.0
  %2880 = vmatpush.msra.mxu0 0.0
  %2881 = vmatpush.msra.mxu0 0.0
  %2882 = vmatpush.msra.mxu0 0.0
  %2883 = vmatpush.msra.mxu0 0.0
  %2884 = vmatpush.msra.mxu0 %v2861
  %2885 = vmatpush.msra.mxu0 %v2859
  %2886 = vmatpush.msra.mxu0 %v2857
  %2887 = vmatpush.msra.mxu0 %v2855
  %2888 = vmatmul.f32.gmra.mxu0 %v2870
  %v2889 = vpop.f32.mrf.mxu0
  %v2890 = vadd.f32 %v2867, %v2889
  %2891 = vdwg.mxu0
  %v2893 = vsel %vm256, %v2845, 0
  %v2896 = vsel %vm256, %v2848, 0
  %v2899 = vsel %vm256, %v2890, 0
  %2901 = vmatpush.xpose.msra.mxu0 0.0
  %2902 = vmatpush.xpose.msra.mxu0 0.0
  %2903 = vmatpush.xpose.msra.mxu0 0.0
  %2904 = vmatpush.xpose.msra.mxu0 0.0
  %2905 = vmatpush.xpose.msra.mxu0 0.0
  %2906 = vmatpush.xpose.msra.mxu0 0.0
  %2907 = vmatpush.xpose.msra.mxu0 0.0
  %2908 = vmatpush.xpose.msra.mxu0 0.0
  %2909 = vmatpush.xpose.msra.mxu0 0.0
  %2910 = vmatpush.xpose.msra.mxu0 0.0
  %2911 = vmatpush.xpose.msra.mxu0 0.0
  %2912 = vmatpush.xpose.msra.mxu0 0.0
  %2913 = vmatpush.xpose.msra.mxu0 0.0
  %2914 = vmatpush.xpose.msra.mxu0 0.0
  %2915 = vmatpush.xpose.msra.mxu0 0.0
  %2916 = vmatpush.xpose.msra.mxu0 %v2899
  %2917 = vmatmul.f32.gmra.mxu0 %v2893
  %v2918 = vpop.f32.mrf.mxu0
  %v2919 = vadd.f32 0.0, %v2918
  %2920 = vmatmul.f32.gmra.mxu0 %v2896
  %v2921 = vpop.f32.mrf.mxu0
  %v2922 = vadd.f32 0.0, %v2921
  %2923 = vdwg.mxu0
  %v2924 = vmul.f32 %v2919, 0.35355338
  %v2925 = vmul.f32 %v2922, 0.35355338
  %v2926 = vadd.f32 %v2924, %v1056
  %v2927 = vadd.f32 %v2925, %v1057
  %v2928 = vsel %vm256, %v2926, -inf
  %2929 = vmax.xlane.f32.xlu0 %v2928
  %v2930 = vpop.xlane.xlu0 %2929
  %v2931 = vsel %vm256, %v2927, -inf
  %2932 = vmax.xlane.f32.xlu0 %v2931
  %v2933 = vpop.xlane.xlu0 %2932
  %v2934 = vsub.f32 %v2926, %v2930
  %v2935 = vsub.f32 %v2927, %v2933
  %v2936 = vmul.f32 %v2934, 1.442695
  %v2937 = vpow.pop %v2936
  %v2938 = vmul.f32 %v2935, 1.442695
  %v2939 = vpow.pop %v2938
  %v2940 = vsel %vm256, %v2937, 0.0
  %2941 = vadd.xlane.f32.xlu0 %v2940
  %v2942 = vpop.xlane.xlu0 %2941
  %v2943 = vsel %vm256, %v2939, 0.0
  %2944 = vadd.xlane.f32.xlu0 %v2943
  %v2945 = vpop.xlane.xlu0 %2944
  %v2946 = vrcp.pop %v2942
  %v2947 = vmul.f32 %v2942, %v2946
  %v2948 = vsub.f32 1.0, %v2947
  %v2949 = vmul.f32 %v2946, %v2948
  %v2950 = vadd.f32 %v2946, %v2949
  %vm2951 = vweird.f32 %v2942
  %vm2952 = vweird.f32 %v2946
  %vm2953 = vmor %vm2951, %vm2952
  %v2954 = vsel %vm2953, %v2946, %v2950
  %v2955 = vand.u32 2147483647, %v2942
  %vm2956 = vcmp.eq.f32.partialorder %v2955, 8.507059e+37
  %v2957 = vand.u32 %v2942, 2147483648
  %v2958 = vor.u32 1.1754944e-38, %v2957
  %v2959 = vsel %vm2956, %v2958, %v2954
  %v2960 = vmul.f32 %v2937, %v2959
  %v2961 = vrcp.pop %v2945
  %v2962 = vmul.f32 %v2945, %v2961
  %v2963 = vsub.f32 1.0, %v2962
  %v2964 = vmul.f32 %v2961, %v2963
  %v2965 = vadd.f32 %v2961, %v2964
  %vm2966 = vweird.f32 %v2945
  %vm2967 = vweird.f32 %v2961
  %vm2968 = vmor %vm2966, %vm2967
  %v2969 = vsel %vm2968, %v2961, %v2965
  %v2970 = vand.u32 2147483647, %v2945
  %vm2971 = vcmp.eq.f32.partialorder %v2970, 8.507059e+37
  %v2972 = vand.u32 %v2945, 2147483648
  %v2973 = vor.u32 1.1754944e-38, %v2972
  %v2974 = vsel %vm2971, %v2973, %v2969
  %v2975 = vmul.f32 %v2939, %v2974
  %2976 = vrot.lane.b32.xlu0 %v2890, 96
  %v2977 = vpop.permute.xlu0 %2976
  %v2980 = vsel %vm256, %v2960, 0
  %v2983 = vsel %vm256, %v2975, 0
  %2985 = vmatpush.msra.mxu0 0.0
  %2986 = vmatpush.msra.mxu0 0.0
  %2987 = vmatpush.msra.mxu0 0.0
  %2988 = vmatpush.msra.mxu0 0.0
  %2989 = vmatpush.msra.mxu0 0.0
  %2990 = vmatpush.msra.mxu0 0.0
  %2991 = vmatpush.msra.mxu0 0.0
  %2992 = vmatpush.msra.mxu0 0.0
  %2993 = vmatpush.msra.mxu0 0.0
  %2994 = vmatpush.msra.mxu0 0.0
  %2995 = vmatpush.msra.mxu0 0.0
  %2996 = vmatpush.msra.mxu0 0.0
  %2997 = vmatpush.msra.mxu0 0.0
  %2998 = vmatpush.msra.mxu0 0.0
  %2999 = vmatpush.msra.mxu0 0.0
  %3000 = vmatpush.msra.mxu0 %v2977
  %3001 = vmatmul.f32.gmra.mxu0 %v2980
  %v3002 = vpop.f32.mrf.mxu0
  %v3003 = vadd.f32 0.0, %v3002
  %3004 = vmatmul.f32.gmra.mxu0 %v2983
  %v3005 = vpop.f32.mrf.mxu0
  %v3006 = vadd.f32 0.0, %v3005
  %3007 = vdwg.mxu0
  %3008 = vrot.lane.b32.xlu0 %v2845, 120
  %v3009 = vpop.permute.xlu0 %3008
  %3010 = vrot.lane.b32.xlu0 %v2848, 120
  %v3011 = vpop.permute.xlu0 %3010
  %3012 = vrot.lane.b32.xlu0 %v2890, 120
  %v3013 = vpop.permute.xlu0 %3012
  %v3014 = vsel %vm256, %v3009, 0
  %v3016 = vsel %vm256, %v3011, 0
  %v3018 = vsel %vm256, %v3013, 0
  %3020 = vmatpush.xpose.msra.mxu0 0.0
  %3021 = vmatpush.xpose.msra.mxu0 0.0
  %3022 = vmatpush.xpose.msra.mxu0 0.0
  %3023 = vmatpush.xpose.msra.mxu0 0.0
  %3024 = vmatpush.xpose.msra.mxu0 0.0
  %3025 = vmatpush.xpose.msra.mxu0 0.0
  %3026 = vmatpush.xpose.msra.mxu0 0.0
  %3027 = vmatpush.xpose.msra.mxu0 0.0
  %3028 = vmatpush.xpose.msra.mxu0 0.0
  %3029 = vmatpush.xpose.msra.mxu0 0.0
  %3030 = vmatpush.xpose.msra.mxu0 0.0
  %3031 = vmatpush.xpose.msra.mxu0 0.0
  %3032 = vmatpush.xpose.msra.mxu0 0.0
  %3033 = vmatpush.xpose.msra.mxu0 0.0
  %3034 = vmatpush.xpose.msra.mxu0 0.0
  %3035 = vmatpush.xpose.msra.mxu0 %v3018
  %3036 = vmatmul.f32.gmra.mxu0 %v3014
  %v3037 = vpop.f32.mrf.mxu0
  %v3038 = vadd.f32 0.0, %v3037
  %3039 = vmatmul.f32.gmra.mxu0 %v3016
  %v3040 = vpop.f32.mrf.mxu0
  %v3041 = vadd.f32 0.0, %v3040
  %3042 = vdwg.mxu0
  %v3043 = vmul.f32 %v3038, 0.35355338
  %v3044 = vmul.f32 %v3041, 0.35355338
  %v3045 = vadd.f32 %v3043, %v1056
  %v3046 = vadd.f32 %v3044, %v1057
  %v3047 = vsel %vm256, %v3045, -inf
  %3048 = vmax.xlane.f32.xlu0 %v3047
  %v3049 = vpop.xlane.xlu0 %3048
  %v3050 = vsel %vm256, %v3046, -inf
  %3051 = vmax.xlane.f32.xlu0 %v3050
  %v3052 = vpop.xlane.xlu0 %3051
  %v3053 = vsub.f32 %v3045, %v3049
  %v3054 = vsub.f32 %v3046, %v3052
  %v3055 = vmul.f32 %v3053, 1.442695
  %v3056 = vpow.pop %v3055
  %v3057 = vmul.f32 %v3054, 1.442695
  %v3058 = vpow.pop %v3057
  %v3059 = vsel %vm256, %v3056, 0.0
  %3060 = vadd.xlane.f32.xlu0 %v3059
  %v3061 = vpop.xlane.xlu0 %3060
  %v3062 = vsel %vm256, %v3058, 0.0
  %3063 = vadd.xlane.f32.xlu0 %v3062
  %v3064 = vpop.xlane.xlu0 %3063
  %v3065 = vrcp.pop %v3061
  %v3066 = vmul.f32 %v3061, %v3065
  %v3067 = vsub.f32 1.0, %v3066
  %v3068 = vmul.f32 %v3065, %v3067
  %v3069 = vadd.f32 %v3065, %v3068
  %vm3070 = vweird.f32 %v3061
  %vm3071 = vweird.f32 %v3065
  %vm3072 = vmor %vm3070, %vm3071
  %v3073 = vsel %vm3072, %v3065, %v3069
  %v3074 = vand.u32 2147483647, %v3061
  %vm3075 = vcmp.eq.f32.partialorder %v3074, 8.507059e+37
  %v3076 = vand.u32 %v3061, 2147483648
  %v3077 = vor.u32 1.1754944e-38, %v3076
  %v3078 = vsel %vm3075, %v3077, %v3073
  %v3079 = vmul.f32 %v3056, %v3078
  %v3080 = vrcp.pop %v3064
  %v3081 = vmul.f32 %v3064, %v3080
  %v3082 = vsub.f32 1.0, %v3081
  %v3083 = vmul.f32 %v3080, %v3082
  %v3084 = vadd.f32 %v3080, %v3083
  %vm3085 = vweird.f32 %v3064
  %vm3086 = vweird.f32 %v3080
  %vm3087 = vmor %vm3085, %vm3086
  %v3088 = vsel %vm3087, %v3080, %v3084
  %v3089 = vand.u32 2147483647, %v3064
  %vm3090 = vcmp.eq.f32.partialorder %v3089, 8.507059e+37
  %v3091 = vand.u32 %v3064, 2147483648
  %v3092 = vor.u32 1.1754944e-38, %v3091
  %v3093 = vsel %vm3090, %v3092, %v3088
  %v3094 = vmul.f32 %v3058, %v3093
  %3095 = vrot.lane.b32.xlu0 %v2890, 88
  %v3096 = vpop.permute.xlu0 %3095
  %v3099 = vsel %vm256, %v3079, 0
  %v3102 = vsel %vm256, %v3094, 0
  %3104 = vmatpush.msra.mxu0 0.0
  %3105 = vmatpush.msra.mxu0 0.0
  %3106 = vmatpush.msra.mxu0 0.0
  %3107 = vmatpush.msra.mxu0 0.0
  %3108 = vmatpush.msra.mxu0 0.0
  %3109 = vmatpush.msra.mxu0 0.0
  %3110 = vmatpush.msra.mxu0 0.0
  %3111 = vmatpush.msra.mxu0 0.0
  %3112 = vmatpush.msra.mxu0 0.0
  %3113 = vmatpush.msra.mxu0 0.0
  %3114 = vmatpush.msra.mxu0 0.0
  %3115 = vmatpush.msra.mxu0 0.0
  %3116 = vmatpush.msra.mxu0 0.0
  %3117 = vmatpush.msra.mxu0 0.0
  %3118 = vmatpush.msra.mxu0 0.0
  %3119 = vmatpush.msra.mxu0 %v3096
  %3120 = vmatmul.f32.gmra.mxu0 %v3099
  %v3121 = vpop.f32.mrf.mxu0
  %v3122 = vadd.f32 0.0, %v3121
  %3123 = vmatmul.f32.gmra.mxu0 %v3102
  %v3124 = vpop.f32.mrf.mxu0
  %v3125 = vadd.f32 0.0, %v3124
  %3126 = vdwg.mxu0
  %3127 = vrot.lane.b32.xlu0 %v2845, 112
  %v3128 = vpop.permute.xlu0 %3127
  %3129 = vrot.lane.b32.xlu0 %v2848, 112
  %v3130 = vpop.permute.xlu0 %3129
  %3131 = vrot.lane.b32.xlu0 %v2890, 112
  %v3132 = vpop.permute.xlu0 %3131
  %v3133 = vsel %vm256, %v3128, 0
  %v3135 = vsel %vm256, %v3130, 0
  %v3137 = vsel %vm256, %v3132, 0
  %3139 = vmatpush.xpose.msra.mxu0 0.0
  %3140 = vmatpush.xpose.msra.mxu0 0.0
  %3141 = vmatpush.xpose.msra.mxu0 0.0
  %3142 = vmatpush.xpose.msra.mxu0 0.0
  %3143 = vmatpush.xpose.msra.mxu0 0.0
  %3144 = vmatpush.xpose.msra.mxu0 0.0
  %3145 = vmatpush.xpose.msra.mxu0 0.0
  %3146 = vmatpush.xpose.msra.mxu0 0.0
  %3147 = vmatpush.xpose.msra.mxu0 0.0
  %3148 = vmatpush.xpose.msra.mxu0 0.0
  %3149 = vmatpush.xpose.msra.mxu0 0.0
  %3150 = vmatpush.xpose.msra.mxu0 0.0
  %3151 = vmatpush.xpose.msra.mxu0 0.0
  %3152 = vmatpush.xpose.msra.mxu0 0.0
  %3153 = vmatpush.xpose.msra.mxu0 0.0
  %3154 = vmatpush.xpose.msra.mxu0 %v3137
  %3155 = vmatmul.f32.gmra.mxu0 %v3133
  %v3156 = vpop.f32.mrf.mxu0
  %v3157 = vadd.f32 0.0, %v3156
  %3158 = vmatmul.f32.gmra.mxu0 %v3135
  %v3159 = vpop.f32.mrf.mxu0
  %v3160 = vadd.f32 0.0, %v3159
  %3161 = vdwg.mxu0
  %v3162 = vmul.f32 %v3157, 0.35355338
  %v3163 = vmul.f32 %v3160, 0.35355338
  %v3164 = vadd.f32 %v3162, %v1056
  %v3165 = vadd.f32 %v3163, %v1057
  %v3166 = vsel %vm256, %v3164, -inf
  %3167 = vmax.xlane.f32.xlu0 %v3166
  %v3168 = vpop.xlane.xlu0 %3167
  %v3169 = vsel %vm256, %v3165, -inf
  %3170 = vmax.xlane.f32.xlu0 %v3169
  %v3171 = vpop.xlane.xlu0 %3170
  %v3172 = vsub.f32 %v3164, %v3168
  %v3173 = vsub.f32 %v3165, %v3171
  %v3174 = vmul.f32 %v3172, 1.442695
  %v3175 = vpow.pop %v3174
  %v3176 = vmul.f32 %v3173, 1.442695
  %v3177 = vpow.pop %v3176
  %v3178 = vsel %vm256, %v3175, 0.0
  %3179 = vadd.xlane.f32.xlu0 %v3178
  %v3180 = vpop.xlane.xlu0 %3179
  %v3181 = vsel %vm256, %v3177, 0.0
  %3182 = vadd.xlane.f32.xlu0 %v3181
  %v3183 = vpop.xlane.xlu0 %3182
  %v3184 = vrcp.pop %v3180
  %v3185 = vmul.f32 %v3180, %v3184
  %v3186 = vsub.f32 1.0, %v3185
  %v3187 = vmul.f32 %v3184, %v3186
  %v3188 = vadd.f32 %v3184, %v3187
  %vm3189 = vweird.f32 %v3180
  %vm3190 = vweird.f32 %v3184
  %vm3191 = vmor %vm3189, %vm3190
  %v3192 = vsel %vm3191, %v3184, %v3188
  %v3193 = vand.u32 2147483647, %v3180
  %vm3194 = vcmp.eq.f32.partialorder %v3193, 8.507059e+37
  %v3195 = vand.u32 %v3180, 2147483648
  %v3196 = vor.u32 1.1754944e-38, %v3195
  %v3197 = vsel %vm3194, %v3196, %v3192
  %v3198 = vmul.f32 %v3175, %v3197
  %v3199 = vrcp.pop %v3183
  %v3200 = vmul.f32 %v3183, %v3199
  %v3201 = vsub.f32 1.0, %v3200
  %v3202 = vmul.f32 %v3199, %v3201
  %v3203 = vadd.f32 %v3199, %v3202
  %vm3204 = vweird.f32 %v3183
  %vm3205 = vweird.f32 %v3199
  %vm3206 = vmor %vm3204, %vm3205
  %v3207 = vsel %vm3206, %v3199, %v3203
  %v3208 = vand.u32 2147483647, %v3183
  %vm3209 = vcmp.eq.f32.partialorder %v3208, 8.507059e+37
  %v3210 = vand.u32 %v3183, 2147483648
  %v3211 = vor.u32 1.1754944e-38, %v3210
  %v3212 = vsel %vm3209, %v3211, %v3207
  %v3213 = vmul.f32 %v3177, %v3212
  %3214 = vrot.lane.b32.xlu0 %v2890, 80
  %v3215 = vpop.permute.xlu0 %3214
  %v3218 = vsel %vm256, %v3198, 0
  %v3221 = vsel %vm256, %v3213, 0
  %3223 = vmatpush.msra.mxu0 0.0
  %3224 = vmatpush.msra.mxu0 0.0
  %3225 = vmatpush.msra.mxu0 0.0
  %3226 = vmatpush.msra.mxu0 0.0
  %3227 = vmatpush.msra.mxu0 0.0
  %3228 = vmatpush.msra.mxu0 0.0
  %3229 = vmatpush.msra.mxu0 0.0
  %3230 = vmatpush.msra.mxu0 0.0
  %3231 = vmatpush.msra.mxu0 0.0
  %3232 = vmatpush.msra.mxu0 0.0
  %3233 = vmatpush.msra.mxu0 0.0
  %3234 = vmatpush.msra.mxu0 0.0
  %3235 = vmatpush.msra.mxu0 0.0
  %3236 = vmatpush.msra.mxu0 0.0
  %3237 = vmatpush.msra.mxu0 0.0
  %3238 = vmatpush.msra.mxu0 %v3215
  %3239 = vmatmul.f32.gmra.mxu0 %v3218
  %v3240 = vpop.f32.mrf.mxu0
  %v3241 = vadd.f32 0.0, %v3240
  %3242 = vmatmul.f32.gmra.mxu0 %v3221
  %v3243 = vpop.f32.mrf.mxu0
  %v3244 = vadd.f32 0.0, %v3243
  %3245 = vdwg.mxu0
  %3246 = vrot.lane.b32.xlu0 %v2845, 104
  %v3247 = vpop.permute.xlu0 %3246
  %3248 = vrot.lane.b32.xlu0 %v2848, 104
  %v3249 = vpop.permute.xlu0 %3248
  %3250 = vrot.lane.b32.xlu0 %v2890, 104
  %v3251 = vpop.permute.xlu0 %3250
  %v3252 = vsel %vm256, %v3247, 0
  %v3254 = vsel %vm256, %v3249, 0
  %v3256 = vsel %vm256, %v3251, 0
  %3258 = vmatpush.xpose.msra.mxu0 0.0
  %3259 = vmatpush.xpose.msra.mxu0 0.0
  %3260 = vmatpush.xpose.msra.mxu0 0.0
  %3261 = vmatpush.xpose.msra.mxu0 0.0
  %3262 = vmatpush.xpose.msra.mxu0 0.0
  %3263 = vmatpush.xpose.msra.mxu0 0.0
  %3264 = vmatpush.xpose.msra.mxu0 0.0
  %3265 = vmatpush.xpose.msra.mxu0 0.0
  %3266 = vmatpush.xpose.msra.mxu0 0.0
  %3267 = vmatpush.xpose.msra.mxu0 0.0
  %3268 = vmatpush.xpose.msra.mxu0 0.0
  %3269 = vmatpush.xpose.msra.mxu0 0.0
  %3270 = vmatpush.xpose.msra.mxu0 0.0
  %3271 = vmatpush.xpose.msra.mxu0 0.0
  %3272 = vmatpush.xpose.msra.mxu0 0.0
  %3273 = vmatpush.xpose.msra.mxu0 %v3256
  %3274 = vmatmul.f32.gmra.mxu0 %v3252
  %v3275 = vpop.f32.mrf.mxu0
  %v3276 = vadd.f32 0.0, %v3275
  %3277 = vmatmul.f32.gmra.mxu0 %v3254
  %v3278 = vpop.f32.mrf.mxu0
  %v3279 = vadd.f32 0.0, %v3278
  %3280 = vdwg.mxu0
  %v3281 = vmul.f32 %v3276, 0.35355338
  %v3282 = vmul.f32 %v3279, 0.35355338
  %v3283 = vadd.f32 %v3281, %v1056
  %v3284 = vadd.f32 %v3282, %v1057
  %v3285 = vsel %vm256, %v3283, -inf
  %3286 = vmax.xlane.f32.xlu0 %v3285
  %v3287 = vpop.xlane.xlu0 %3286
  %v3288 = vsel %vm256, %v3284, -inf
  %3289 = vmax.xlane.f32.xlu0 %v3288
  %v3290 = vpop.xlane.xlu0 %3289
  %v3291 = vsub.f32 %v3283, %v3287
  %v3292 = vsub.f32 %v3284, %v3290
  %v3293 = vmul.f32 %v3291, 1.442695
  %v3294 = vpow.pop %v3293
  %v3295 = vmul.f32 %v3292, 1.442695
  %v3296 = vpow.pop %v3295
  %v3297 = vsel %vm256, %v3294, 0.0
  %3298 = vadd.xlane.f32.xlu0 %v3297
  %v3299 = vpop.xlane.xlu0 %3298
  %v3300 = vsel %vm256, %v3296, 0.0
  %3301 = vadd.xlane.f32.xlu0 %v3300
  %v3302 = vpop.xlane.xlu0 %3301
  %v3303 = vrcp.pop %v3299
  %v3304 = vmul.f32 %v3299, %v3303
  %v3305 = vsub.f32 1.0, %v3304
  %v3306 = vmul.f32 %v3303, %v3305
  %v3307 = vadd.f32 %v3303, %v3306
  %vm3308 = vweird.f32 %v3299
  %vm3309 = vweird.f32 %v3303
  %vm3310 = vmor %vm3308, %vm3309
  %v3311 = vsel %vm3310, %v3303, %v3307
  %v3312 = vand.u32 2147483647, %v3299
  %vm3313 = vcmp.eq.f32.partialorder %v3312, 8.507059e+37
  %v3314 = vand.u32 %v3299, 2147483648
  %v3315 = vor.u32 1.1754944e-38, %v3314
  %v3316 = vsel %vm3313, %v3315, %v3311
  %v3317 = vmul.f32 %v3294, %v3316
  %v3318 = vrcp.pop %v3302
  %v3319 = vmul.f32 %v3302, %v3318
  %v3320 = vsub.f32 1.0, %v3319
  %v3321 = vmul.f32 %v3318, %v3320
  %v3322 = vadd.f32 %v3318, %v3321
  %vm3323 = vweird.f32 %v3302
  %vm3324 = vweird.f32 %v3318
  %vm3325 = vmor %vm3323, %vm3324
  %v3326 = vsel %vm3325, %v3318, %v3322
  %v3327 = vand.u32 2147483647, %v3302
  %vm3328 = vcmp.eq.f32.partialorder %v3327, 8.507059e+37
  %v3329 = vand.u32 %v3302, 2147483648
  %v3330 = vor.u32 1.1754944e-38, %v3329
  %v3331 = vsel %vm3328, %v3330, %v3326
  %v3332 = vmul.f32 %v3296, %v3331
  %3333 = vrot.lane.b32.xlu0 %v2890, 72
  %v3334 = vpop.permute.xlu0 %3333
  %v3337 = vsel %vm256, %v3317, 0
  %v3340 = vsel %vm256, %v3332, 0
  %3342 = vmatpush.msra.mxu0 0.0
  %3343 = vmatpush.msra.mxu0 0.0
  %3344 = vmatpush.msra.mxu0 0.0
  %3345 = vmatpush.msra.mxu0 0.0
  %3346 = vmatpush.msra.mxu0 0.0
  %3347 = vmatpush.msra.mxu0 0.0
  %3348 = vmatpush.msra.mxu0 0.0
  %3349 = vmatpush.msra.mxu0 0.0
  %3350 = vmatpush.msra.mxu0 0.0
  %3351 = vmatpush.msra.mxu0 0.0
  %3352 = vmatpush.msra.mxu0 0.0
  %3353 = vmatpush.msra.mxu0 0.0
  %3354 = vmatpush.msra.mxu0 0.0
  %3355 = vmatpush.msra.mxu0 0.0
  %3356 = vmatpush.msra.mxu0 0.0
  %3357 = vmatpush.msra.mxu0 %v3334
  %3358 = vmatmul.f32.gmra.mxu0 %v3337
  %v3359 = vpop.f32.mrf.mxu0
  %v3360 = vadd.f32 0.0, %v3359
  %3361 = vmatmul.f32.gmra.mxu0 %v3340
  %v3362 = vpop.f32.mrf.mxu0
  %v3363 = vadd.f32 0.0, %v3362
  %3364 = vdwg.mxu0
  %3367 = vrot.lane.b32.xlu0 %v3122, 8
  %v3368 = vpop.permute.xlu0 %3367
  %3369 = vrot.lane.b32.xlu0 %v3125, 8
  %v3370 = vpop.permute.xlu0 %3369
  %3375 = vrot.lane.b32.xlu0 %v3241, 16
  %v3376 = vpop.permute.xlu0 %3375
  %3377 = vrot.lane.b32.xlu0 %v3244, 16
  %v3378 = vpop.permute.xlu0 %3377
  %3383 = vrot.lane.b32.xlu0 %v3360, 24
  %v3384 = vpop.permute.xlu0 %3383
  %3385 = vrot.lane.b32.xlu0 %v3363, 24
  %v3386 = vpop.permute.xlu0 %3385
  %v3389 = vsel %vm256, %v3003, %v3368
  %v3390 = vsel %vm256, %v3006, %v3370
  %v3391 = vsel %vm296, %v3389, %v3376
  %v3392 = vsel %vm296, %v3390, %v3378
  %v3393 = vsel %vm786, %v3391, %v3384
  %v3394 = vsel %vm786, %v3392, %v3386
  %v3396 = vperm.slane %v2823, 0
  %v3399 = vsel %vm123, %v3393, 0
  %v3402 = vsel %vm123, %v3394, 0
  %3404 = vmatpush.msra.mxu0 0.0
  %3405 = vmatpush.msra.mxu0 0.0
  %3406 = vmatpush.msra.mxu0 0.0
  %3407 = vmatpush.msra.mxu0 0.0
  %3408 = vmatpush.msra.mxu0 0.0
  %3409 = vmatpush.msra.mxu0 0.0
  %3410 = vmatpush.msra.mxu0 0.0
  %3411 = vmatpush.msra.mxu0 0.0
  %3412 = vmatpush.msra.mxu0 0.0
  %3413 = vmatpush.msra.mxu0 0.0
  %3414 = vmatpush.msra.mxu0 0.0
  %3415 = vmatpush.msra.mxu0 0.0
  %3416 = vmatpush.msra.mxu0 %v2821
  %3417 = vmatpush.msra.mxu0 %v2820
  %3418 = vmatpush.msra.mxu0 %v2819
  %3419 = vmatpush.msra.mxu0 %v2818
  %3420 = vmatmul.f32.gmra.mxu0 %v3399
  %v3421 = vpop.f32.mrf.mxu0
  %v3422 = vadd.f32 %v3396, %v3421
  %3423 = vmatmul.f32.gmra.mxu0 %v3402
  %v3424 = vpop.f32.mrf.mxu0
  %v3425 = vadd.f32 %v3396, %v3424
  %3426 = vdwg.mxu0
  %v3427 = vadd.f32 %v2332, %v3422
  %v3428 = vadd.f32 %v2333, %v3425
  %s3429 = scalar_lea.vmem %s18, 4
  %v3430 = vld [vmem:[%s3429] sm:$0x1]
  %v3431 = vld [vmem:[%s3429 + $0x1] sm:$0x1]
  %v3432 = vsel %vm123, %v3427, 0.0
  %3433 = vadd.xlane.f32.xlu0 %v3432
  %v3434 = vpop.xlane.xlu0 %3433
  %v3435 = vsel %vm123, %v3428, 0.0
  %3436 = vadd.xlane.f32.xlu0 %v3435
  %v3437 = vpop.xlane.xlu0 %3436
  %v3438 = vmul.f32 %v3434, %v136
  %v3439 = vmul.f32 %v3437, %v136
  %v3440 = vsub.f32 %v3427, %v3438
  %v3441 = vsub.f32 %v3428, %v3439
  %v3442 = vmul.f32 %v3440, %v3440
  %v3443 = vmul.f32 %v3441, %v3441
  %v3444 = vsel %vm123, %v3442, 0.0
  %3445 = vadd.xlane.f32.xlu0 %v3444
  %v3446 = vpop.xlane.xlu0 %3445
  %v3447 = vsel %vm123, %v3443, 0.0
  %3448 = vadd.xlane.f32.xlu0 %v3447
  %v3449 = vpop.xlane.xlu0 %3448
  %v3450 = vmul.f32 %v3446, %v136
  %v3451 = vmul.f32 %v3449, %v136
  %v3452 = vadd.f32 %v3450, 1e-05
  %v3453 = vadd.f32 %v3451, 1e-05
  %v3454 = vrsqrt.pop %v3452
  %v3455 = vmul.f32 %v3454, %v3452
  %v3456 = vmul.f32 %v3455, %v3454
  %v3457 = vmul.f32 0.5, %v3456
  %v3458 = vsub.f32 1.5, %v3457
  %v3459 = vmul.f32 %v3454, %v3458
  %vm3460 = vweird.f32 %v3452
  %vm3461 = vweird.f32 %v3454
  %vm3462 = vmor %vm3460, %vm3461
  %v3463 = vsel %vm3462, %v3454, %v3459
  %v3464 = vrsqrt.pop %v3453
  %v3465 = vmul.f32 %v3464, %v3453
  %v3466 = vmul.f32 %v3465, %v3464
  %v3467 = vmul.f32 0.5, %v3466
  %v3468 = vsub.f32 1.5, %v3467
  %v3469 = vmul.f32 %v3464, %v3468
  %vm3470 = vweird.f32 %v3453
  %vm3471 = vweird.f32 %v3464
  %vm3472 = vmor %vm3470, %vm3471
  %v3473 = vsel %vm3472, %v3464, %v3469
  %v3474 = vmul.f32 %v3440, %v3463
  %v3475 = vmul.f32 %v3441, %v3473
  %v3476 = vperm.slane %v3430, 0
  %v3477 = vmul.f32 %v3474, %v3476
  %v3478 = vmul.f32 %v3475, %v3476
  %v3479 = vperm.slane %v3431, 0
  %v3480 = vadd.f32 %v3477, %v3479
  %v3481 = vadd.f32 %v3478, %v3479
  %s3482 = scalar_lea.vmem %s14, 32
  %v3483 = vld [vmem:[%s3482] sm:$0xff]
  %v3484 = vld [vmem:[%s3482 + $0x8] sm:$0xff]
  %v3485 = vld [vmem:[%s3482 + $0x10] sm:$0xff]
  %v3486 = vld [vmem:[%s3482 + $0x18] sm:$0xff]
  %s3487 = scalar_lea.vmem %s15, 1
  %v3488 = vld [vmem:[%s3487] sm:$0x1]
  %v3490 = vperm.slane %v3488, 0
  %v3493 = vsel %vm123, %v3480, 0
  %v3496 = vsel %vm123, %v3481, 0
  %3498 = vmatpush.msra.mxu0 0.0
  %3499 = vmatpush.msra.mxu0 0.0
  %3500 = vmatpush.msra.mxu0 0.0
  %3501 = vmatpush.msra.mxu0 0.0
  %3502 = vmatpush.msra.mxu0 0.0
  %3503 = vmatpush.msra.mxu0 0.0
  %3504 = vmatpush.msra.mxu0 0.0
  %3505 = vmatpush.msra.mxu0 0.0
  %3506 = vmatpush.msra.mxu0 0.0
  %3507 = vmatpush.msra.mxu0 0.0
  %3508 = vmatpush.msra.mxu0 0.0
  %3509 = vmatpush.msra.mxu0 0.0
  %3510 = vmatpush.msra.mxu0 %v3486
  %3511 = vmatpush.msra.mxu0 %v3485
  %3512 = vmatpush.msra.mxu0 %v3484
  %3513 = vmatpush.msra.mxu0 %v3483
  %3514 = vmatmul.f32.gmra.mxu0 %v3493
  %v3515 = vpop.f32.mrf.mxu0
  %v3516 = vadd.f32 %v3490, %v3515
  %3517 = vmatmul.f32.gmra.mxu0 %v3496
  %v3518 = vpop.f32.mrf.mxu0
  %v3519 = vadd.f32 %v3490, %v3518
  %3520 = vdwg.mxu0
  %v3521 = vmax.f32 %v3516, 0.0
  %v3522 = vmax.f32 %v3519, 0.0
  %s3523 = scalar_lea.vmem %s16, 64
  %v3524 = vld [vmem:[%s3523] sm:$0xff]
  %v3525 = vld [vmem:[%s3523 + $0x8] sm:$0xff]
  %v3526 = vld [vmem:[%s3523 + $0x10] sm:$0xff]
  %v3527 = vld [vmem:[%s3523 + $0x18] sm:$0xff]
  %v3528 = vld [vmem:[%s3523 + $0x20] sm:$0xff]
  %v3529 = vld [vmem:[%s3523 + $0x28] sm:$0xff]
  %v3530 = vld [vmem:[%s3523 + $0x30] sm:$0xff]
  %v3531 = vld [vmem:[%s3523 + $0x38] sm:$0xff]
  %s3532 = scalar_lea.vmem %s17, 1
  %v3533 = vld [vmem:[%s3532] sm:$0x1]
  %v3535 = vperm.slane %v3533, 0
  %v3538 = vsel %vm927, %v3521, 0
  %v3541 = vsel %vm927, %v3522, 0
  %3543 = vmatpush.msra.mxu0 0.0
  %3544 = vmatpush.msra.mxu0 0.0
  %3545 = vmatpush.msra.mxu0 0.0
  %3546 = vmatpush.msra.mxu0 0.0
  %3547 = vmatpush.msra.mxu0 0.0
  %3548 = vmatpush.msra.mxu0 0.0
  %3549 = vmatpush.msra.mxu0 0.0
  %3550 = vmatpush.msra.mxu0 0.0
  %3551 = vmatpush.msra.mxu0 %v3531
  %3552 = vmatpush.msra.mxu0 %v3530
  %3553 = vmatpush.msra.mxu0 %v3529
  %3554 = vmatpush.msra.mxu0 %v3528
  %3555 = vmatpush.msra.mxu0 %v3527
  %3556 = vmatpush.msra.mxu0 %v3526
  %3557 = vmatpush.msra.mxu0 %v3525
  %3558 = vmatpush.msra.mxu0 %v3524
  %3559 = vmatmul.f32.gmra.mxu0 %v3538
  %v3560 = vpop.f32.mrf.mxu0
  %v3561 = vadd.f32 %v3535, %v3560
  %3562 = vmatmul.f32.gmra.mxu0 %v3541
  %v3563 = vpop.f32.mrf.mxu0
  %v3564 = vadd.f32 %v3535, %v3563
  %3565 = vdwg.mxu0
  %v3566 = vadd.f32 %v3480, %v3561
  %v3567 = vadd.f32 %v3481, %v3564
  %v3568 = vld [vmem:[%s3429 + $0x2] sm:$0x1]
  %v3569 = vld [vmem:[%s3429 + $0x3] sm:$0x1]
  %v3570 = vsel %vm123, %v3566, 0.0
  %3571 = vadd.xlane.f32.xlu0 %v3570
  %v3572 = vpop.xlane.xlu0 %3571
  %v3573 = vsel %vm123, %v3567, 0.0
  %3574 = vadd.xlane.f32.xlu0 %v3573
  %v3575 = vpop.xlane.xlu0 %3574
  %v3576 = vmul.f32 %v3572, %v136
  %v3577 = vmul.f32 %v3575, %v136
  %v3578 = vsub.f32 %v3566, %v3576
  %v3579 = vsub.f32 %v3567, %v3577
  %v3580 = vmul.f32 %v3578, %v3578
  %v3581 = vmul.f32 %v3579, %v3579
  %v3582 = vsel %vm123, %v3580, 0.0
  %3583 = vadd.xlane.f32.xlu0 %v3582
  %v3584 = vpop.xlane.xlu0 %3583
  %v3585 = vsel %vm123, %v3581, 0.0
  %3586 = vadd.xlane.f32.xlu0 %v3585
  %v3587 = vpop.xlane.xlu0 %3586
  %v3588 = vmul.f32 %v3584, %v136
  %v3589 = vmul.f32 %v3587, %v136
  %v3590 = vadd.f32 %v3588, 1e-05
  %v3591 = vadd.f32 %v3589, 1e-05
  %v3592 = vrsqrt.pop %v3590
  %v3593 = vmul.f32 %v3592, %v3590
  %v3594 = vmul.f32 %v3593, %v3592
  %v3595 = vmul.f32 0.5, %v3594
  %v3596 = vsub.f32 1.5, %v3595
  %v3597 = vmul.f32 %v3592, %v3596
  %vm3598 = vweird.f32 %v3590
  %vm3599 = vweird.f32 %v3592
  %vm3600 = vmor %vm3598, %vm3599
  %v3601 = vsel %vm3600, %v3592, %v3597
  %v3602 = vrsqrt.pop %v3591
  %v3603 = vmul.f32 %v3602, %v3591
  %v3604 = vmul.f32 %v3603, %v3602
  %v3605 = vmul.f32 0.5, %v3604
  %v3606 = vsub.f32 1.5, %v3605
  %v3607 = vmul.f32 %v3602, %v3606
  %vm3608 = vweird.f32 %v3591
  %vm3609 = vweird.f32 %v3602
  %vm3610 = vmor %vm3608, %vm3609
  %v3611 = vsel %vm3610, %v3602, %v3607
  %v3612 = vmul.f32 %v3578, %v3601
  %v3613 = vmul.f32 %v3579, %v3611
  %v3614 = vperm.slane %v3568, 0
  %v3615 = vmul.f32 %v3612, %v3614
  %v3616 = vmul.f32 %v3613, %v3614
  %v3617 = vperm.slane %v3569, 0
  %v3618 = vadd.f32 %v3615, %v3617
  %v3619 = vadd.f32 %v3616, %v3617
  %v3620 = vld [vmem:[%s20] sm:$0x1]
  %v3621 = vld [vmem:[%s19] sm:$0xff]
  %v3622 = vld [vmem:[%s19 + $0x8] sm:$0xff]
  %v3623 = vld [vmem:[%s19 + $0x10] sm:$0xff]
  %v3624 = vld [vmem:[%s19 + $0x18] sm:$0xff]
  %3625 = vmatpush.msra.mxu0 0.0
  %3626 = vmatpush.msra.mxu0 0.0
  %3627 = vmatpush.msra.mxu0 0.0
  %3628 = vmatpush.msra.mxu0 0.0
  %3629 = vmatpush.msra.mxu0 0.0
  %3630 = vmatpush.msra.mxu0 0.0
  %3631 = vmatpush.msra.mxu0 0.0
  %3632 = vmatpush.msra.mxu0 0.0
  %3633 = vmatpush.msra.mxu0 0.0
  %3634 = vmatpush.msra.mxu0 0.0
  %3635 = vmatpush.msra.mxu0 0.0
  %3636 = vmatpush.msra.mxu0 0.0
  %3637 = vmatpush.msra.mxu0 %v3624
  %3638 = vmatpush.msra.mxu0 %v3623
  %3639 = vmatpush.msra.mxu0 %v3622
  %3640 = vmatpush.msra.mxu0 %v3621
  %3641 = vmatmul.f32.gmra.mxu0 %v2396
  %v3642 = vpop.f32.mrf.mxu0
  %v3643 = vadd.f32 0.0, %v3642
  %3644 = vmatmul.f32.gmra.mxu0 %v2399
  %v3645 = vpop.f32.mrf.mxu0
  %v3646 = vadd.f32 0.0, %v3645
  %3647 = vdwg.mxu0
  %v3648 = vperm.slane %v3620, 0
  %v3649 = vadd.f32 %v3648, %v3643
  %v3650 = vadd.f32 %v3648, %v3646
  %v3651 = vld [vmem:[%s19 + $0x20] sm:$0xff]
  %v3652 = vld [vmem:[%s19 + $0x28] sm:$0xff]
  %v3653 = vld [vmem:[%s19 + $0x30] sm:$0xff]
  %v3654 = vld [vmem:[%s19 + $0x38] sm:$0xff]
  %v3656 = vsel %vm123, %v3618, 0
  %v3659 = vsel %vm123, %v3619, 0
  %3661 = vmatpush.msra.mxu0 0.0
  %3662 = vmatpush.msra.mxu0 0.0
  %3663 = vmatpush.msra.mxu0 0.0
  %3664 = vmatpush.msra.mxu0 0.0
  %3665 = vmatpush.msra.mxu0 0.0
  %3666 = vmatpush.msra.mxu0 0.0
  %3667 = vmatpush.msra.mxu0 0.0
  %3668 = vmatpush.msra.mxu0 0.0
  %3669 = vmatpush.msra.mxu0 0.0
  %3670 = vmatpush.msra.mxu0 0.0
  %3671 = vmatpush.msra.mxu0 0.0
  %3672 = vmatpush.msra.mxu0 0.0
  %3673 = vmatpush.msra.mxu0 %v3654
  %3674 = vmatpush.msra.mxu0 %v3653
  %3675 = vmatpush.msra.mxu0 %v3652
  %3676 = vmatpush.msra.mxu0 %v3651
  %3677 = vmatmul.f32.gmra.mxu0 %v3656
  %v3678 = vpop.f32.mrf.mxu0
  %v3679 = vadd.f32 0.0, %v3678
  %3680 = vmatmul.f32.gmra.mxu0 %v3659
  %v3681 = vpop.f32.mrf.mxu0
  %v3682 = vadd.f32 0.0, %v3681
  %3683 = vdwg.mxu0
  %v3684 = vadd.f32 %v3649, %v3679
  %v3685 = vadd.f32 %v3650, %v3682
  %v3686 = vadd.f32 %v3618, %v3684
  %v3687 = vadd.f32 %v3619, %v3685
  %v3688 = vld [vmem:[%s20 + $0x1] sm:$0x1]
  %v3689 = vld [vmem:[%s20 + $0x2] sm:$0x1]
  %v3690 = vsel %vm123, %v3686, 0.0
  %3691 = vadd.xlane.f32.xlu0 %v3690
  %v3692 = vpop.xlane.xlu0 %3691
  %v3693 = vsel %vm123, %v3687, 0.0
  %3694 = vadd.xlane.f32.xlu0 %v3693
  %v3695 = vpop.xlane.xlu0 %3694
  %v3696 = vmul.f32 %v3692, %v136
  %v3697 = vmul.f32 %v3695, %v136
  %v3698 = vsub.f32 %v3686, %v3696
  %v3699 = vsub.f32 %v3687, %v3697
  %v3700 = vmul.f32 %v3698, %v3698
  %v3701 = vmul.f32 %v3699, %v3699
  %v3702 = vsel %vm123, %v3700, 0.0
  %3703 = vadd.xlane.f32.xlu0 %v3702
  %v3704 = vpop.xlane.xlu0 %3703
  %v3705 = vsel %vm123, %v3701, 0.0
  %3706 = vadd.xlane.f32.xlu0 %v3705
  %v3707 = vpop.xlane.xlu0 %3706
  %v3708 = vmul.f32 %v3704, %v136
  %v3709 = vmul.f32 %v3707, %v136
  %v3710 = vadd.f32 %v3708, 1e-05
  %v3711 = vadd.f32 %v3709, 1e-05
  %v3712 = vrsqrt.pop %v3710
  %v3713 = vmul.f32 %v3712, %v3710
  %v3714 = vmul.f32 %v3713, %v3712
  %v3715 = vmul.f32 0.5, %v3714
  %v3716 = vsub.f32 1.5, %v3715
  %v3717 = vmul.f32 %v3712, %v3716
  %vm3718 = vweird.f32 %v3710
  %vm3719 = vweird.f32 %v3712
  %vm3720 = vmor %vm3718, %vm3719
  %v3721 = vsel %vm3720, %v3712, %v3717
  %v3722 = vrsqrt.pop %v3711
  %v3723 = vmul.f32 %v3722, %v3711
  %v3724 = vmul.f32 %v3723, %v3722
  %v3725 = vmul.f32 0.5, %v3724
  %v3726 = vsub.f32 1.5, %v3725
  %v3727 = vmul.f32 %v3722, %v3726
  %vm3728 = vweird.f32 %v3711
  %vm3729 = vweird.f32 %v3722
  %vm3730 = vmor %vm3728, %vm3729
  %v3731 = vsel %vm3730, %v3722, %v3727
  %v3732 = vmul.f32 %v3698, %v3721
  %v3733 = vmul.f32 %v3699, %v3731
  %v3734 = vperm.slane %v3688, 0
  %v3735 = vmul.f32 %v3732, %v3734
  %v3736 = vmul.f32 %v3733, %v3734
  %v3737 = vperm.slane %v3689, 0
  %v3738 = vadd.f32 %v3735, %v3737
  %v3739 = vadd.f32 %v3736, %v3737
  %v3740 = vld [vmem:[%s21] sm:$0xff]
  %v3741 = vld [vmem:[%s21 + $0x8] sm:$0xff]
  %v3742 = vld [vmem:[%s21 + $0x10] sm:$0xff]
  %v3743 = vld [vmem:[%s21 + $0x18] sm:$0xff]
  %v3744 = vld [vmem:[%s22] sm:$0x1]
  %v3746 = vperm.slane %v3744, 0
  %v3749 = vsel %vm123, %v3738, 0
  %v3752 = vsel %vm123, %v3739, 0
  %3754 = vmatpush.msra.mxu0 0.0
  %3755 = vmatpush.msra.mxu0 0.0
  %3756 = vmatpush.msra.mxu0 0.0
  %3757 = vmatpush.msra.mxu0 0.0
  %3758 = vmatpush.msra.mxu0 0.0
  %3759 = vmatpush.msra.mxu0 0.0
  %3760 = vmatpush.msra.mxu0 0.0
  %3761 = vmatpush.msra.mxu0 0.0
  %3762 = vmatpush.msra.mxu0 0.0
  %3763 = vmatpush.msra.mxu0 0.0
  %3764 = vmatpush.msra.mxu0 0.0
  %3765 = vmatpush.msra.mxu0 0.0
  %3766 = vmatpush.msra.mxu0 %v3743
  %3767 = vmatpush.msra.mxu0 %v3742
  %3768 = vmatpush.msra.mxu0 %v3741
  %3769 = vmatpush.msra.mxu0 %v3740
  %3770 = vmatmul.f32.gmra.mxu0 %v3749
  %v3771 = vpop.f32.mrf.mxu0
  %v3772 = vadd.f32 %v3746, %v3771
  %3773 = vmatmul.f32.gmra.mxu0 %v3752
  %v3774 = vpop.f32.mrf.mxu0
  %v3775 = vadd.f32 %v3746, %v3774
  %3776 = vdwg.mxu0
  %s3777 = scalar_lea.vmem %s21, 32
  %v3778 = vld [vmem:[%s3777] sm:$0xff]
  %v3779 = vld [vmem:[%s3777 + $0x8] sm:$0xff]
  %v3780 = vld [vmem:[%s3777 + $0x10] sm:$0xff]
  %v3781 = vld [vmem:[%s3777 + $0x18] sm:$0xff]
  %s3782 = scalar_lea.vmem %s22, 1
  %v3783 = vld [vmem:[%s3782] sm:$0x1]
  %v3785 = vperm.slane %v3783, 0
  %3787 = vmatpush.msra.mxu0 0.0
  %3788 = vmatpush.msra.mxu0 0.0
  %3789 = vmatpush.msra.mxu0 0.0
  %3790 = vmatpush.msra.mxu0 0.0
  %3791 = vmatpush.msra.mxu0 0.0
  %3792 = vmatpush.msra.mxu0 0.0
  %3793 = vmatpush.msra.mxu0 0.0
  %3794 = vmatpush.msra.mxu0 0.0
  %3795 = vmatpush.msra.mxu0 0.0
  %3796 = vmatpush.msra.mxu0 0.0
  %3797 = vmatpush.msra.mxu0 0.0
  %3798 = vmatpush.msra.mxu0 0.0
  %3799 = vmatpush.msra.mxu0 %v3781
  %3800 = vmatpush.msra.mxu0 %v3780
  %3801 = vmatpush.msra.mxu0 %v3779
  %3802 = vmatpush.msra.mxu0 %v3778
  %3803 = vmatmul.f32.gmra.mxu0 %v3749
  %v3804 = vpop.f32.mrf.mxu0
  %v3805 = vadd.f32 %v3785, %v3804
  %3806 = vmatmul.f32.gmra.mxu0 %v3752
  %v3807 = vpop.f32.mrf.mxu0
  %v3808 = vadd.f32 %v3785, %v3807
  %3809 = vdwg.mxu0
  %3812 = vrot.lane.b32.xlu0 %v3805, 64
  %v3813 = vpop.permute.xlu0 %3812
  %3814 = vrot.lane.b32.xlu0 %v3808, 64
  %v3815 = vpop.permute.xlu0 %3814
  %v3818 = vsel %vm927, %v3772, %v3813
  %v3819 = vsel %vm927, %v3775, %v3815
  %3820 = vst [vmem:[%s23] sm:$0xff] %v3818
  %3821 = vst [vmem:[%s23 + $0x8] sm:$0xff] %v3819
  // Predicated region
  $region94: #{forward.2} parent=0 // pred_check
    _
  $region95: #{forward.2} parent=0 // pred_check_branch
    %3823 = sbr.rel (0) target = $region97
  $region96: #{forward.2} parent=0 // pred_region
    _
  $region97: #{forward.2} parent=0 // pred_fallthru
    _
  // Predicated region
  $region98: #{forward.2} parent=0 // pred_check
    _
  $region99: #{forward.2} parent=0 // pred_check_branch
    %3825 = sbr.rel (0) target = $region101
  $region100: #{forward.2} parent=0 // pred_region
    _
  $region101: #{forward.2} parent=0 // pred_fallthru
    _

</llo_original>
